<compile_context>
chip_gen: v5e
topology: v5e:2x2
jax: 0.10.0
libtpu: 0.0.40
codegen_flags: <defaults>
</compile_context>

<pallas_src>
import math

import jax
import jax.numpy as jnp
from jax.experimental import pallas as pl
from jax.experimental.pallas import tpu as pltpu

PRO_FEATS = 4834
K_PAD = pl.cdiv(PRO_FEATS, 128) * 128     # 4864: lane-aligned, minimal padding


def _leaky_relu(x, slope=0.2):
    return jnp.where(x > 0, x, slope * x)


def discriminator_kernel(
    pros_ref, mols_ref,
    wp_ref, bp_ref,            # pro_emb: K_PAD -> 512 (bf16, resident)
    wm_ref, bm_ref,            # mol_emb: max_atoms*num_class -> 512
    w1a_ref, w1b_ref, b1_ref,  # 1024 -> 512 (split into two 512 halves)
    w2_ref, b2_ref,            # 512 -> 128
    w3_ref, b3_ref,            # 128 -> 32
    w4_ref, b4_ref,            # 32 -> 1 (row vector, VPU path)
    out_ref,
):
    # In-kernel bf16 casts (VPU) keep HBM input traffic at 4 B/elem.
    pros = pros_ref[...].astype(jnp.bfloat16)
    mols = mols_ref[...].astype(jnp.bfloat16)

    pro_emb = jnp.dot(pros, wp_ref[...],
                      preferred_element_type=jnp.float32) + bp_ref[...]
    mol_emb = jnp.dot(mols, wm_ref[...],
                      preferred_element_type=jnp.float32) + bm_ref[...]

    # d_in = concat([pro_emb, mol_emb], -1); concat fused into layer 1.
    h = (jnp.dot(pro_emb.astype(jnp.bfloat16), w1a_ref[...],
                 preferred_element_type=jnp.float32)
         + jnp.dot(mol_emb.astype(jnp.bfloat16), w1b_ref[...],
                   preferred_element_type=jnp.float32)
         + b1_ref[...])
    h = _leaky_relu(h)

    h = jnp.dot(h.astype(jnp.bfloat16), w2_ref[...],
                preferred_element_type=jnp.float32) + b2_ref[...]
    # Dropout(0.4): identity in eval mode.
    h = _leaky_relu(h)

    h = jnp.dot(h.astype(jnp.bfloat16), w3_ref[...],
                preferred_element_type=jnp.float32) + b3_ref[...]
    # Dropout(0.4): identity in eval mode.
    h = _leaky_relu(h)

    # Final 32 -> 1: VPU multiply + lane reduction instead of a 1-column MXU op.
    logit = jnp.sum(h * w4_ref[...], axis=-1, keepdims=True) + b4_ref[...]
    out_ref[...] = jax.nn.sigmoid(logit)


def _pick_batch_tile(B):
    if B <= 128:
        return B          # single tile (demo sizes)
    if B <= 256:
        return 128        # >=2 tiles so both v7x TensorCores get work
    return 256            # fill v6e's 256-wide MXU at large B


def discriminator_forward(mols, conditional_pros, params):
    """mols: (B, max_atoms, num_class); conditional_pros: (B, 4834). Returns (B, 1)."""
    B = mols.shape[0]
    mols_flat = mols.reshape(B, -1)            # f32; cast to bf16 in-kernel
    mol_in = mols_flat.shape[1]

    # Pad protein features to the lane-aligned wp reduction size (4834 -> 4864).
    k_pad = params["wp"].shape[0]
    pros = conditional_pros
    if pros.shape[1] != k_pad:
        pros = jnp.pad(pros, ((0, 0), (0, k_pad - pros.shape[1])))

    # Batch tiling: weights stay VMEM-resident across batch tiles ("parallel"
    # batch axis shards over TensorCores when nb >= 2).
    tb = _pick_batch_tile(B)
    b_pad = pl.cdiv(B, tb) * tb
    if b_pad != B:
        pros = jnp.pad(pros, ((0, b_pad - B), (0, 0)))
        mols_flat = jnp.pad(mols_flat, ((0, b_pad - B), (0, 0)))
    nb = b_pad // tb

    args = (
        pros, mols_flat,
        params["wp"], params["bp"],
        params["wm"], params["bm"],
        params["w1a"], params["w1b"], params["b1"],
        params["w2"], params["b2"],
        params["w3"], params["b3"],
        params["w4"], params["b4"],
    )

    const = lambda b: (0, 0)   # resident: block index never changes => no re-DMA
    in_specs = [
        pl.BlockSpec((tb, k_pad), lambda b: (b, 0)),    # pros (f32, full K)
        pl.BlockSpec((tb, mol_in), lambda b: (b, 0)),   # mols (f32)
        pl.BlockSpec((k_pad, 512), const),              # wp (bf16, resident)
        pl.BlockSpec((1, 512), const),                  # bp
        pl.BlockSpec((mol_in, 512), const),             # wm
        pl.BlockSpec((1, 512), const),                  # bm
        pl.BlockSpec((512, 512), const),                # w1a
        pl.BlockSpec((512, 512), const),                # w1b
        pl.BlockSpec((1, 512), const),                  # b1
        pl.BlockSpec((512, 128), const),                # w2
        pl.BlockSpec((1, 128), const),                  # b2
        pl.BlockSpec((128, 32), const),                 # w3
        pl.BlockSpec((1, 32), const),                   # b3
        pl.BlockSpec((1, 32), const),                   # w4 (row vector)
        pl.BlockSpec((1, 1), const),                    # b4
    ]

    out = pl.pallas_call(
        discriminator_kernel,
        out_shape=jax.ShapeDtypeStruct((b_pad, 1), jnp.float32),
        grid_spec=pltpu.PrefetchScalarGridSpec(
            num_scalar_prefetch=0,
            grid=(nb,),
            in_specs=in_specs,
            out_specs=pl.BlockSpec((tb, 1), lambda b: (b, 0)),
        ),
        compiler_params=pltpu.CompilerParams(
            dimension_semantics=("parallel",),
            vmem_limit_bytes=40 << 20,
        ),
    )(*args)
    return out[:B]


def _linear_init(key, fan_in, fan_out):
    """Deterministic PyTorch-style uniform init, weight stored as (in, out)."""
    kw, kb = jax.random.split(key)
    bound = 1.0 / math.sqrt(fan_in)
    w = jax.random.uniform(kw, (fan_in, fan_out), jnp.float32, -bound, bound)
    b = jax.random.uniform(kb, (1, fan_out), jnp.float32, -bound, bound)
    return w, b


def make_params(key, max_atoms, num_class):
    """bf16 matmul weights (f32 biases); wp pre-padded to a 128-multiple K."""
    ks = jax.random.split(key, 6)
    wp, bp = _linear_init(ks[0], PRO_FEATS, 512)
    wm, bm = _linear_init(ks[1], max_atoms * num_class, 512)
    w1, b1 = _linear_init(ks[2], 1024, 512)
    w2, b2 = _linear_init(ks[3], 512, 128)
    w3, b3 = _linear_init(ks[4], 128, 32)
    w4, b4 = _linear_init(ks[5], 32, 1)

    wp = jnp.pad(wp, ((0, K_PAD - PRO_FEATS), (0, 0)))   # 4834 -> 4864

    bf = lambda w: w.astype(jnp.bfloat16)
    return {
        "wp": bf(wp), "bp": bp,
        "wm": bf(wm), "bm": bm,
        "w1a": bf(w1[:512]), "w1b": bf(w1[512:]), "b1": b1,
        "w2": bf(w2), "b2": b2,
        "w3": bf(w3), "b3": b3,
        "w4": w4.T, "b4": b4,      # (1, 32) f32 row for the VPU tail
    }


def reference_forward(mols, conditional_pros, p):
    """Plain-JAX reference of the same forward pass (eval mode, bf16 weights)."""
    B = mols.shape[0]
    k_pad = p["wp"].shape[0]
    pros = jnp.pad(conditional_pros,
                   ((0, 0), (0, k_pad - conditional_pros.shape[1])))
    mol = mols.reshape(B, -1)

    def dot(x, w):
        return jnp.dot(x.astype(jnp.bfloat16), w, preferred_element_type=jnp.float32)

    pro_emb = dot(pros, p["wp"]) + p["bp"]
    mol_emb = dot(mol, p["wm"]) + p["bm"]
    h = _leaky_relu(dot(pro_emb, p["w1a"]) + dot(mol_emb, p["w1b"]) + p["b1"])
    h = _leaky_relu(dot(h, p["w2"]) + p["b2"])
    h = _leaky_relu(dot(h, p["w3"]) + p["b3"])
    logit = jnp.sum(h * p["w4"], axis=-1, keepdims=True) + p["b4"]
    return jax.nn.sigmoid(logit)


if __name__ == "__main__":
    # Small shapes consistent with the module: opt.max_atoms=16, opt.num_class=8.
    B, MAX_ATOMS, NUM_CLASS = 2, 16, 8

    key = jax.random.PRNGKey(0)
    k_mols, k_pros, k_params = jax.random.split(key, 3)

    mols = jax.random.normal(k_mols, (B, MAX_ATOMS, NUM_CLASS), jnp.float32)
    conditional_pros = jax.random.normal(k_pros, (B, PRO_FEATS), jnp.float32)
    params = make_params(k_params, MAX_ATOMS, NUM_CLASS)

    # TODO(synk): training-mode Dropout (p=0.4) is not implemented; forward matches eval mode.
    validity = discriminator_forward(mols, conditional_pros, params)
    validity = jax.block_until_ready(validity)

    ref = reference_forward(mols, conditional_pros, params)
    assert validity.shape == (B, 1)
    assert jnp.allclose(validity, ref, atol=1e-3, rtol=1e-3), (
        f"mismatch: {validity} vs {ref}")

    print("KERNEL_OK")
</pallas_src>

<mosaic_0001>
module attributes {stable_mosaic.version = 11 : i64} {
  func.func @discriminator_kernel(%arg0: i32, %arg1: memref<2x4864xf32, #tpu.memory_space<vmem>>, %arg2: memref<2x128xf32, #tpu.memory_space<vmem>>, %arg3: memref<4864x512xbf16, #tpu.memory_space<vmem>>, %arg4: memref<1x512xf32, #tpu.memory_space<vmem>>, %arg5: memref<128x512xbf16, #tpu.memory_space<vmem>>, %arg6: memref<1x512xf32, #tpu.memory_space<vmem>>, %arg7: memref<512x512xbf16, #tpu.memory_space<vmem>>, %arg8: memref<512x512xbf16, #tpu.memory_space<vmem>>, %arg9: memref<1x512xf32, #tpu.memory_space<vmem>>, %arg10: memref<512x128xbf16, #tpu.memory_space<vmem>>, %arg11: memref<1x128xf32, #tpu.memory_space<vmem>>, %arg12: memref<128x32xbf16, #tpu.memory_space<vmem>>, %arg13: memref<1x32xf32, #tpu.memory_space<vmem>>, %arg14: memref<1x32xf32, #tpu.memory_space<vmem>>, %arg15: memref<1x1xf32, #tpu.memory_space<vmem>>, %arg16: memref<2x1xf32, #tpu.memory_space<vmem>>) attributes {dimension_semantics = [#tpu.dimension_semantics<parallel>], iteration_bounds = array<i64: 1>, scalar_prefetch = 0 : i64, scratch_operands = 0 : i64, tpu.core_type = #tpu.core_type<tc>, window_params = [{transform_indices = @transform_0, window_bounds = array<i64: 2, 4864>}, {transform_indices = @transform_1, window_bounds = array<i64: 2, 128>}, {pipeline_mode = #tpu.pipeline_mode<synchronous>, transform_indices = @transform_2, window_bounds = array<i64: 4864, 512>}, {pipeline_mode = #tpu.pipeline_mode<synchronous>, transform_indices = @transform_3, window_bounds = array<i64: 1, 512>}, {pipeline_mode = #tpu.pipeline_mode<synchronous>, transform_indices = @transform_4, window_bounds = array<i64: 128, 512>}, {pipeline_mode = #tpu.pipeline_mode<synchronous>, transform_indices = @transform_5, window_bounds = array<i64: 1, 512>}, {pipeline_mode = #tpu.pipeline_mode<synchronous>, transform_indices = @transform_6, window_bounds = array<i64: 512, 512>}, {pipeline_mode = #tpu.pipeline_mode<synchronous>, transform_indices = @transform_7, window_bounds = array<i64: 512, 512>}, {pipeline_mode = #tpu.pipeline_mode<synchronous>, transform_indices = @transform_8, window_bounds = array<i64: 1, 512>}, {pipeline_mode = #tpu.pipeline_mode<synchronous>, transform_indices = @transform_9, window_bounds = array<i64: 512, 128>}, {pipeline_mode = #tpu.pipeline_mode<synchronous>, transform_indices = @transform_10, window_bounds = array<i64: 1, 128>}, {pipeline_mode = #tpu.pipeline_mode<synchronous>, transform_indices = @transform_11, window_bounds = array<i64: 128, 32>}, {pipeline_mode = #tpu.pipeline_mode<synchronous>, transform_indices = @transform_12, window_bounds = array<i64: 1, 32>}, {pipeline_mode = #tpu.pipeline_mode<synchronous>, transform_indices = @transform_13, window_bounds = array<i64: 1, 32>}, {pipeline_mode = #tpu.pipeline_mode<synchronous>, transform_indices = @transform_14, window_bounds = array<i64: 1, 1>}, {transform_indices = @transform_15, window_bounds = array<i64: 2, 1>}]} {
    %c0 = arith.constant 0 : index
    %c0_0 = arith.constant 0 : index
    %0 = vector.load %arg1[%c0, %c0_0] : memref<2x4864xf32, #tpu.memory_space<vmem>>, vector<2x4864xf32>
    %1 = arith.truncf %0 : vector<2x4864xf32> to vector<2x4864xbf16>
    %c0_1 = arith.constant 0 : index
    %c0_2 = arith.constant 0 : index
    %2 = vector.load %arg2[%c0_1, %c0_2] : memref<2x128xf32, #tpu.memory_space<vmem>>, vector<2x128xf32>
    %3 = arith.truncf %2 : vector<2x128xf32> to vector<2x128xbf16>
    %c0_3 = arith.constant 0 : index
    %c0_4 = arith.constant 0 : index
    %4 = vector.load %arg3[%c0_3, %c0_4] : memref<4864x512xbf16, #tpu.memory_space<vmem>>, vector<4864x512xbf16>
    %cst = arith.constant dense<0.000000e+00> : vector<2x512xf32>
    %5 = tpu.matmul %1, %4, %cst {dimension_numbers = #tpu.dot_dimension_numbers<[1], [0], [0], [1], [0, 0, 1, 1], [], []>} : vector<2x4864xbf16>, vector<4864x512xbf16>, vector<2x512xf32> -> vector<2x512xf32>
    %c0_5 = arith.constant 0 : index
    %c0_6 = arith.constant 0 : index
    %6 = vector.load %arg4[%c0_5, %c0_6] : memref<1x512xf32, #tpu.memory_space<vmem>>, vector<1x512xf32>
    %7 = vector.broadcast %6 : vector<1x512xf32> to vector<2x512xf32>
    %8 = arith.addf %5, %7 : vector<2x512xf32>
    %c0_7 = arith.constant 0 : index
    %c0_8 = arith.constant 0 : index
    %9 = vector.load %arg5[%c0_7, %c0_8] : memref<128x512xbf16, #tpu.memory_space<vmem>>, vector<128x512xbf16>
    %cst_9 = arith.constant dense<0.000000e+00> : vector<2x512xf32>
    %10 = tpu.matmul %3, %9, %cst_9 {dimension_numbers = #tpu.dot_dimension_numbers<[1], [0], [0], [1], [0, 0, 1, 1], [], []>} : vector<2x128xbf16>, vector<128x512xbf16>, vector<2x512xf32> -> vector<2x512xf32>
    %c0_10 = arith.constant 0 : index
    %c0_11 = arith.constant 0 : index
    %11 = vector.load %arg6[%c0_10, %c0_11] : memref<1x512xf32, #tpu.memory_space<vmem>>, vector<1x512xf32>
    %12 = vector.broadcast %11 : vector<1x512xf32> to vector<2x512xf32>
    %13 = arith.addf %10, %12 : vector<2x512xf32>
    %14 = arith.truncf %8 : vector<2x512xf32> to vector<2x512xbf16>
    %c0_12 = arith.constant 0 : index
    %c0_13 = arith.constant 0 : index
    %15 = vector.load %arg7[%c0_12, %c0_13] : memref<512x512xbf16, #tpu.memory_space<vmem>>, vector<512x512xbf16>
    %cst_14 = arith.constant dense<0.000000e+00> : vector<2x512xf32>
    %16 = tpu.matmul %14, %15, %cst_14 {dimension_numbers = #tpu.dot_dimension_numbers<[1], [0], [0], [1], [0, 0, 1, 1], [], []>} : vector<2x512xbf16>, vector<512x512xbf16>, vector<2x512xf32> -> vector<2x512xf32>
    %17 = arith.truncf %13 : vector<2x512xf32> to vector<2x512xbf16>
    %c0_15 = arith.constant 0 : index
    %c0_16 = arith.constant 0 : index
    %18 = vector.load %arg8[%c0_15, %c0_16] : memref<512x512xbf16, #tpu.memory_space<vmem>>, vector<512x512xbf16>
    %cst_17 = arith.constant dense<0.000000e+00> : vector<2x512xf32>
    %19 = tpu.matmul %17, %18, %cst_17 {dimension_numbers = #tpu.dot_dimension_numbers<[1], [0], [0], [1], [0, 0, 1, 1], [], []>} : vector<2x512xbf16>, vector<512x512xbf16>, vector<2x512xf32> -> vector<2x512xf32>
    %20 = arith.addf %16, %19 : vector<2x512xf32>
    %c0_18 = arith.constant 0 : index
    %c0_19 = arith.constant 0 : index
    %21 = vector.load %arg9[%c0_18, %c0_19] : memref<1x512xf32, #tpu.memory_space<vmem>>, vector<1x512xf32>
    %22 = vector.broadcast %21 : vector<1x512xf32> to vector<2x512xf32>
    %23 = arith.addf %20, %22 : vector<2x512xf32>
    %cst_20 = arith.constant 0.000000e+00 : f32
    %24 = vector.broadcast %cst_20 : f32 to vector<2x512xf32>
    %25 = arith.cmpf ogt, %23, %24 : vector<2x512xf32>
    %cst_21 = arith.constant 2.000000e-01 : f32
    %26 = vector.broadcast %cst_21 : f32 to vector<2x512xf32>
    %27 = arith.mulf %26, %23 : vector<2x512xf32>
    %28 = arith.select %25, %23, %27 : vector<2x512xi1>, vector<2x512xf32>
    %29 = arith.truncf %28 : vector<2x512xf32> to vector<2x512xbf16>
    %c0_22 = arith.constant 0 : index
    %c0_23 = arith.constant 0 : index
    %30 = vector.load %arg10[%c0_22, %c0_23] : memref<512x128xbf16, #tpu.memory_space<vmem>>, vector<512x128xbf16>
    %cst_24 = arith.constant dense<0.000000e+00> : vector<2x128xf32>
    %31 = tpu.matmul %29, %30, %cst_24 {dimension_numbers = #tpu.dot_dimension_numbers<[1], [0], [0], [1], [0, 0, 1, 1], [], []>} : vector<2x512xbf16>, vector<512x128xbf16>, vector<2x128xf32> -> vector<2x128xf32>
    %c0_25 = arith.constant 0 : index
    %c0_26 = arith.constant 0 : index
    %32 = vector.load %arg11[%c0_25, %c0_26] : memref<1x128xf32, #tpu.memory_space<vmem>>, vector<1x128xf32>
    %33 = vector.broadcast %32 : vector<1x128xf32> to vector<2x128xf32>
    %34 = arith.addf %31, %33 : vector<2x128xf32>
    %cst_27 = arith.constant 0.000000e+00 : f32
    %35 = vector.broadcast %cst_27 : f32 to vector<2x128xf32>
    %36 = arith.cmpf ogt, %34, %35 : vector<2x128xf32>
    %cst_28 = arith.constant 2.000000e-01 : f32
    %37 = vector.broadcast %cst_28 : f32 to vector<2x128xf32>
    %38 = arith.mulf %37, %34 : vector<2x128xf32>
    %39 = arith.select %36, %34, %38 : vector<2x128xi1>, vector<2x128xf32>
    %40 = arith.truncf %39 : vector<2x128xf32> to vector<2x128xbf16>
    %c0_29 = arith.constant 0 : index
    %c0_30 = arith.constant 0 : index
    %41 = vector.load %arg12[%c0_29, %c0_30] : memref<128x32xbf16, #tpu.memory_space<vmem>>, vector<128x32xbf16>
    %cst_31 = arith.constant dense<0.000000e+00> : vector<2x32xf32>
    %42 = tpu.matmul %40, %41, %cst_31 {dimension_numbers = #tpu.dot_dimension_numbers<[1], [0], [0], [1], [0, 0, 1, 1], [], []>} : vector<2x128xbf16>, vector<128x32xbf16>, vector<2x32xf32> -> vector<2x32xf32>
    %c0_32 = arith.constant 0 : index
    %c0_33 = arith.constant 0 : index
    %43 = vector.load %arg13[%c0_32, %c0_33] : memref<1x32xf32, #tpu.memory_space<vmem>>, vector<1x32xf32>
    %44 = vector.broadcast %43 : vector<1x32xf32> to vector<2x32xf32>
    %45 = arith.addf %42, %44 : vector<2x32xf32>
    %cst_34 = arith.constant 0.000000e+00 : f32
    %46 = vector.broadcast %cst_34 : f32 to vector<2x32xf32>
    %47 = arith.cmpf ogt, %45, %46 : vector<2x32xf32>
    %cst_35 = arith.constant 2.000000e-01 : f32
    %48 = vector.broadcast %cst_35 : f32 to vector<2x32xf32>
    %49 = arith.mulf %48, %45 : vector<2x32xf32>
    %50 = arith.select %47, %45, %49 : vector<2x32xi1>, vector<2x32xf32>
    %c0_36 = arith.constant 0 : index
    %c0_37 = arith.constant 0 : index
    %51 = vector.load %arg14[%c0_36, %c0_37] : memref<1x32xf32, #tpu.memory_space<vmem>>, vector<1x32xf32>
    %52 = vector.broadcast %51 : vector<1x32xf32> to vector<2x32xf32>
    %53 = arith.mulf %50, %52 : vector<2x32xf32>
    %cst_38 = arith.constant dense<0.000000e+00> : vector<2xf32>
    %54 = vector.multi_reduction <add>, %53, %cst_38 [1] : vector<2x32xf32> to vector<2xf32>
    %55 = vector.shape_cast %54 : vector<2xf32> to vector<2x1xf32>
    %c0_39 = arith.constant 0 : index
    %c0_40 = arith.constant 0 : index
    %56 = vector.load %arg15[%c0_39, %c0_40] : memref<1x1xf32, #tpu.memory_space<vmem>>, vector<1x1xf32>
    %57 = vector.broadcast %56 : vector<1x1xf32> to vector<2x1xf32>
    %58 = arith.addf %55, %57 : vector<2x1xf32>
    %59 = arith.negf %58 : vector<2x1xf32>
    %60 = math.exp %59 : vector<2x1xf32>
    %cst_41 = arith.constant 1.000000e+00 : f32
    %61 = vector.broadcast %cst_41 : f32 to vector<2x1xf32>
    %62 = arith.addf %61, %60 : vector<2x1xf32>
    %63 = arith.divf %61, %62 : vector<2x1xf32>
    %c0_42 = arith.constant 0 : index
    %c0_43 = arith.constant 0 : index
    %64 = vector.load %arg16[%c0_42, %c0_43] : memref<2x1xf32, #tpu.memory_space<vmem>>, vector<2x1xf32>
    tpu.vector_store %arg16[%c0_42, %c0_43], %63 {strides = array<i32>} : memref<2x1xf32, #tpu.memory_space<vmem>>, vector<2x1xf32>,
    return
  }
  func.func @transform_0(%arg0: i32) -> (i32, i32) {
    %c0_i32 = arith.constant 0 : i32
    %c0_i32_0 = arith.constant 0 : i32
    return %arg0, %c0_i32 : i32, i32
  }
  func.func @transform_1(%arg0: i32) -> (i32, i32) {
    %c0_i32 = arith.constant 0 : i32
    %c0_i32_0 = arith.constant 0 : i32
    return %arg0, %c0_i32 : i32, i32
  }
  func.func @transform_2(%arg0: i32) -> (i32, i32) {
    %c0_i32 = arith.constant 0 : i32
    %c0_i32_0 = arith.constant 0 : i32
    %c0_i32_1 = arith.constant 0 : i32
    return %c0_i32, %c0_i32_0 : i32, i32
  }
  func.func @transform_3(%arg0: i32) -> (i32, i32) {
    %c0_i32 = arith.constant 0 : i32
    %c0_i32_0 = arith.constant 0 : i32
    %c0_i32_1 = arith.constant 0 : i32
    return %c0_i32, %c0_i32_0 : i32, i32
  }
  func.func @transform_4(%arg0: i32) -> (i32, i32) {
    %c0_i32 = arith.constant 0 : i32
    %c0_i32_0 = arith.constant 0 : i32
    %c0_i32_1 = arith.constant 0 : i32
    return %c0_i32, %c0_i32_0 : i32, i32
  }
  func.func @transform_5(%arg0: i32) -> (i32, i32) {
    %c0_i32 = arith.constant 0 : i32
    %c0_i32_0 = arith.constant 0 : i32
    %c0_i32_1 = arith.constant 0 : i32
    return %c0_i32, %c0_i32_0 : i32, i32
  }
  func.func @transform_6(%arg0: i32) -> (i32, i32) {
    %c0_i32 = arith.constant 0 : i32
    %c0_i32_0 = arith.constant 0 : i32
    %c0_i32_1 = arith.constant 0 : i32
    return %c0_i32, %c0_i32_0 : i32, i32
  }
  func.func @transform_7(%arg0: i32) -> (i32, i32) {
    %c0_i32 = arith.constant 0 : i32
    %c0_i32_0 = arith.constant 0 : i32
    %c0_i32_1 = arith.constant 0 : i32
    return %c0_i32, %c0_i32_0 : i32, i32
  }
  func.func @transform_8(%arg0: i32) -> (i32, i32) {
    %c0_i32 = arith.constant 0 : i32
    %c0_i32_0 = arith.constant 0 : i32
    %c0_i32_1 = arith.constant 0 : i32
    return %c0_i32, %c0_i32_0 : i32, i32
  }
  func.func @transform_9(%arg0: i32) -> (i32, i32) {
    %c0_i32 = arith.constant 0 : i32
    %c0_i32_0 = arith.constant 0 : i32
    %c0_i32_1 = arith.constant 0 : i32
    return %c0_i32, %c0_i32_0 : i32, i32
  }
  func.func @transform_10(%arg0: i32) -> (i32, i32) {
    %c0_i32 = arith.constant 0 : i32
    %c0_i32_0 = arith.constant 0 : i32
    %c0_i32_1 = arith.constant 0 : i32
    return %c0_i32, %c0_i32_0 : i32, i32
  }
  func.func @transform_11(%arg0: i32) -> (i32, i32) {
    %c0_i32 = arith.constant 0 : i32
    %c0_i32_0 = arith.constant 0 : i32
    %c0_i32_1 = arith.constant 0 : i32
    return %c0_i32, %c0_i32_0 : i32, i32
  }
  func.func @transform_12(%arg0: i32) -> (i32, i32) {
    %c0_i32 = arith.constant 0 : i32
    %c0_i32_0 = arith.constant 0 : i32
    %c0_i32_1 = arith.constant 0 : i32
    return %c0_i32, %c0_i32_0 : i32, i32
  }
  func.func @transform_13(%arg0: i32) -> (i32, i32) {
    %c0_i32 = arith.constant 0 : i32
    %c0_i32_0 = arith.constant 0 : i32
    %c0_i32_1 = arith.constant 0 : i32
    return %c0_i32, %c0_i32_0 : i32, i32
  }
  func.func @transform_14(%arg0: i32) -> (i32, i32) {
    %c0_i32 = arith.constant 0 : i32
    %c0_i32_0 = arith.constant 0 : i32
    %c0_i32_1 = arith.constant 0 : i32
    return %c0_i32, %c0_i32_0 : i32, i32
  }
  func.func @transform_15(%arg0: i32) -> (i32, i32) {
    %c0_i32 = arith.constant 0 : i32
    %c0_i32_0 = arith.constant 0 : i32
    return %arg0, %c0_i32 : i32, i32
  }
}

</mosaic_0001>

<llo_original>
// kernel: tpu_custom_call.1
$region0: #{tpu_custom_call.1}
  #allocation0 [shape = 'u32[]', space=smem, size = 0x4, offset = 0x4, fixed_abs, tag = 'smem constant byte address 0x4 - core index']
  #allocation1 [shape = 'u32[72,128]{1,0:T(1,128)}', space=vmem, size = 0x9000, scoped, tag = 'internal scratch']
  #allocation2 [shape = 'f32[1,1]{1,0:T(1,128)S(1)}', space=vmem, size = 0x200, scoped, tag = 'scoped memory for tpu_custom_call.1']
  %s0 = inlined_call_operand.hbm [shape: f32[2,4864], index: 0, kind: input, shape index: {}]
  %s1 = inlined_call_operand.hbm [shape: f32[2,128], index: 1, kind: input, shape index: {}]
  %s2 = inlined_call_operand.hbm [shape: bf16[4864,512], index: 2, kind: input, shape index: {}]
  %s3 = inlined_call_operand.hbm [shape: f32[1,512], index: 3, kind: input, shape index: {}]
  %s4 = inlined_call_operand.hbm [shape: bf16[128,512], index: 4, kind: input, shape index: {}]
  %s5 = inlined_call_operand.hbm [shape: f32[1,512], index: 5, kind: input, shape index: {}]
  %s6 = inlined_call_operand.hbm [shape: bf16[512,512], index: 6, kind: input, shape index: {}]
  %s7 = inlined_call_operand.hbm [shape: bf16[512,512], index: 7, kind: input, shape index: {}]
  %s8 = inlined_call_operand.hbm [shape: f32[1,512], index: 8, kind: input, shape index: {}]
  %s9 = inlined_call_operand.hbm [shape: bf16[512,128], index: 9, kind: input, shape index: {}]
  %s10 = inlined_call_operand.hbm [shape: f32[1,128], index: 10, kind: input, shape index: {}]
  %s11 = inlined_call_operand.vmem [shape: bf16[128,32], index: 11, kind: input, shape index: {}]
  %s12 = inlined_call_operand.hbm [shape: f32[1,32], index: 12, kind: input, shape index: {}]
  %s13 = inlined_call_operand.hbm [shape: f32[1,32], index: 13, kind: input, shape index: {}]
  %s14 = inlined_call_operand.<no memory space> [shape: f32[1,1], index: 14, kind: input, shape index: {}]
  %s15 = inlined_call_operand.vmem [shape: f32[2,1], index: 15, kind: output, shape index: {}]
  %s16 = sld [smem:[#allocation0]]
  $region122: #{tpu_custom_call.1} parent=0
    _
  %s18 = ssub.s32 1, %s16
  %s19 = scalar_select 0, %s18, %s16
  %v20 = vstv %s14
  %21 = vst [vmem:[#allocation2] sm:$0x1] %v20
  $region1: #{tpu_custom_call.1} parent=0
    #allocation3 [shape = 'u8[38912]{0}', space=vmem, size = 0x9800, scoped, tag = 'input window, operand 0, single buffered']
    #allocation4 [shape = 's32[1]{0}', space=sflag, size = 0x4, scoped, tag = 'scoped memory for tpu_custom_call.1']
    #allocation5 [shape = 'u8[1024]{0}', space=vmem, size = 0x400, scoped, tag = 'input window, operand 1, single buffered']
    #allocation6 [shape = 's32[1]{0}', space=sflag, size = 0x4, scoped, tag = 'scoped memory for tpu_custom_call.1']
    #allocation7 [shape = 'u8[4980736]{0}', space=vmem, size = 0x4c0000, scoped, tag = 'input window, operand 2, single buffered']
    #allocation8 [shape = 'u8[2048]{0}', space=vmem, size = 0x800, scoped, tag = 'input window, operand 3, single buffered']
    #allocation9 [shape = 's32[1]{0}', space=sflag, size = 0x4, scoped, tag = 'scoped memory for tpu_custom_call.1']
    #allocation10 [shape = 'u8[131072]{0}', space=vmem, size = 0x20000, scoped, tag = 'input window, operand 4, single buffered']
    #allocation11 [shape = 'u8[2048]{0}', space=vmem, size = 0x800, scoped, tag = 'input window, operand 5, single buffered']
    #allocation12 [shape = 's32[1]{0}', space=sflag, size = 0x4, scoped, tag = 'scoped memory for tpu_custom_call.1']
    #allocation13 [shape = 'u8[524288]{0}', space=vmem, size = 0x80000, scoped, tag = 'input window, operand 6, single buffered']
    #allocation14 [shape = 'u8[524288]{0}', space=vmem, size = 0x80000, scoped, tag = 'input window, operand 7, single buffered']
    #allocation15 [shape = 's32[1]{0}', space=sflag, size = 0x4, scoped, tag = 'scoped memory for tpu_custom_call.1']
    #allocation16 [shape = 'u8[2048]{0}', space=vmem, size = 0x800, scoped, tag = 'input window, operand 8, single buffered']
    #allocation17 [shape = 'u8[131072]{0}', space=vmem, size = 0x20000, scoped, tag = 'input window, operand 9, single buffered']
    #allocation18 [shape = 's32[1]{0}', space=sflag, size = 0x4, scoped, tag = 'scoped memory for tpu_custom_call.1']
    #allocation19 [shape = 'u8[512]{0}', space=vmem, size = 0x400, scoped, tag = 'input window, operand 10, single buffered']
    #allocation20 [shape = 'u8[512]{0}', space=vmem, size = 0x400, scoped, tag = 'input window, operand 12, single buffered']
    #allocation21 [shape = 's32[1]{0}', space=sflag, size = 0x4, scoped, tag = 'scoped memory for tpu_custom_call.1']
    #allocation22 [shape = 'u8[512]{0}', space=vmem, size = 0x400, scoped, tag = 'input window, operand 13, single buffered']
    %22 = vsyncpa [#allocation4], 0
    %23 = vsyncpa [#allocation6], 0
    %24 = vsyncpa [#allocation9], 0
    %25 = vsyncpa [#allocation12], 0
    %26 = vsyncpa [#allocation15], 0
    %27 = vsyncpa [#allocation18], 0
    %28 = vsyncpa [#allocation21], 0
    // Predicated region
    $region2: #{tpu_custom_call.1} parent=1 // pred_check
      _
    $region3: #{tpu_custom_call.1} parent=1 // pred_check_branch
      %30 = sbr.rel (0) target = $region5
    $region4: #{tpu_custom_call.1} parent=1 // pred_region
      %32 = vsyncadd [#allocation4], 0
      %s34 = sshll.u32 %s0, 4
      %s35 = int_to_ptr.hbm [resolvable:$true] %s34
      %s36 = sshll.u32 [#allocation3], 4
      %s37 = int_to_ptr.vmem [resolvable:$true] %s36
      %39 = dma.hbm_to_vmem [thread:$0]  %s35, 1216, %s37, [#allocation4]
    $region5: #{tpu_custom_call.1} parent=1 // pred_fallthru
      _
    // Predicated region
    $region6: #{tpu_custom_call.1} parent=1 // pred_check
      _
    $region7: #{tpu_custom_call.1} parent=1 // pred_check_branch
      %41 = sbr.rel (0) target = $region9
    $region8: #{tpu_custom_call.1} parent=1 // pred_region
      %43 = vsyncadd [#allocation6], 0
      %s45 = sshll.u32 %s1, 4
      %s46 = int_to_ptr.hbm [resolvable:$true] %s45
      %s47 = sshll.u32 [#allocation5], 4
      %s48 = int_to_ptr.vmem [resolvable:$true] %s47
      %50 = dma.hbm_to_vmem [thread:$0]  %s46, 32, %s48, [#allocation6]
    $region9: #{tpu_custom_call.1} parent=1 // pred_fallthru
      _
    // Predicated region
    $region10: #{tpu_custom_call.1} parent=1 // pred_check
      _
    $region11: #{tpu_custom_call.1} parent=1 // pred_check_branch
      %52 = sbr.rel (0) target = $region13
    $region12: #{tpu_custom_call.1} parent=1 // pred_region
      %54 = vsyncadd [#allocation6], 0
      %s55 = sshll.u32 %s2, 4
      %s56 = int_to_ptr.hbm [resolvable:$true] %s55
      %s57 = sshll.u32 [#allocation7], 4
      %s58 = int_to_ptr.vmem [resolvable:$true] %s57
      %63 = dma.hbm_to_vmem [thread:$0]  %s56, 155648, %s58, [#allocation6], 256, 256, 16
    $region13: #{tpu_custom_call.1} parent=1 // pred_fallthru
      _
    // Predicated region
    $region14: #{tpu_custom_call.1} parent=1 // pred_check
      _
    $region15: #{tpu_custom_call.1} parent=1 // pred_check_branch
      %65 = sbr.rel (0) target = $region17
    $region16: #{tpu_custom_call.1} parent=1 // pred_region
      %67 = vsyncadd [#allocation9], 0
      %s69 = sshll.u32 %s3, 4
      %s70 = int_to_ptr.hbm [resolvable:$true] %s69
      %s71 = sshll.u32 [#allocation8], 4
      %s72 = int_to_ptr.vmem [resolvable:$true] %s71
      %74 = dma.hbm_to_vmem [thread:$0]  %s70, 64, %s72, [#allocation9]
    $region17: #{tpu_custom_call.1} parent=1 // pred_fallthru
      _
    // Predicated region
    $region18: #{tpu_custom_call.1} parent=1 // pred_check
      _
    $region19: #{tpu_custom_call.1} parent=1 // pred_check_branch
      %76 = sbr.rel (0) target = $region21
    $region20: #{tpu_custom_call.1} parent=1 // pred_region
      %78 = vsyncadd [#allocation9], 0
      %s79 = sshll.u32 %s4, 4
      %s80 = int_to_ptr.hbm [resolvable:$true] %s79
      %s81 = sshll.u32 [#allocation10], 4
      %s82 = int_to_ptr.vmem [resolvable:$true] %s81
      %87 = dma.hbm_to_vmem [thread:$0]  %s80, 4096, %s82, [#allocation9], 256, 256, 16
    $region21: #{tpu_custom_call.1} parent=1 // pred_fallthru
      _
    // Predicated region
    $region22: #{tpu_custom_call.1} parent=1 // pred_check
      _
    $region23: #{tpu_custom_call.1} parent=1 // pred_check_branch
      %89 = sbr.rel (0) target = $region25
    $region24: #{tpu_custom_call.1} parent=1 // pred_region
      %91 = vsyncadd [#allocation12], 0
      %s93 = sshll.u32 %s5, 4
      %s94 = int_to_ptr.hbm [resolvable:$true] %s93
      %s95 = sshll.u32 [#allocation11], 4
      %s96 = int_to_ptr.vmem [resolvable:$true] %s95
      %98 = dma.hbm_to_vmem [thread:$0]  %s94, 64, %s96, [#allocation12]
    $region25: #{tpu_custom_call.1} parent=1 // pred_fallthru
      _
    // Predicated region
    $region26: #{tpu_custom_call.1} parent=1 // pred_check
      _
    $region27: #{tpu_custom_call.1} parent=1 // pred_check_branch
      %100 = sbr.rel (0) target = $region29
    $region28: #{tpu_custom_call.1} parent=1 // pred_region
      %102 = vsyncadd [#allocation12], 0
      %s103 = sshll.u32 %s6, 4
      %s104 = int_to_ptr.hbm [resolvable:$true] %s103
      %s105 = sshll.u32 [#allocation13], 4
      %s106 = int_to_ptr.vmem [resolvable:$true] %s105
      %111 = dma.hbm_to_vmem [thread:$0]  %s104, 16384, %s106, [#allocation12], 256, 256, 16
    $region29: #{tpu_custom_call.1} parent=1 // pred_fallthru
      _
    // Predicated region
    $region30: #{tpu_custom_call.1} parent=1 // pred_check
      _
    $region31: #{tpu_custom_call.1} parent=1 // pred_check_branch
      %113 = sbr.rel (0) target = $region33
    $region32: #{tpu_custom_call.1} parent=1 // pred_region
      %115 = vsyncadd [#allocation15], 0
      %s116 = sshll.u32 %s7, 4
      %s117 = int_to_ptr.hbm [resolvable:$true] %s116
      %s118 = sshll.u32 [#allocation14], 4
      %s119 = int_to_ptr.vmem [resolvable:$true] %s118
      %124 = dma.hbm_to_vmem [thread:$0]  %s117, 16384, %s119, [#allocation15], 256, 256, 16
    $region33: #{tpu_custom_call.1} parent=1 // pred_fallthru
      _
    // Predicated region
    $region34: #{tpu_custom_call.1} parent=1 // pred_check
      _
    $region35: #{tpu_custom_call.1} parent=1 // pred_check_branch
      %126 = sbr.rel (0) target = $region37
    $region36: #{tpu_custom_call.1} parent=1 // pred_region
      %128 = vsyncadd [#allocation15], 0
      %s130 = sshll.u32 %s8, 4
      %s131 = int_to_ptr.hbm [resolvable:$true] %s130
      %s132 = sshll.u32 [#allocation16], 4
      %s133 = int_to_ptr.vmem [resolvable:$true] %s132
      %135 = dma.hbm_to_vmem [thread:$0]  %s131, 64, %s133, [#allocation15]
    $region37: #{tpu_custom_call.1} parent=1 // pred_fallthru
      _
    // Predicated region
    $region38: #{tpu_custom_call.1} parent=1 // pred_check
      _
    $region39: #{tpu_custom_call.1} parent=1 // pred_check_branch
      %137 = sbr.rel (0) target = $region41
    $region40: #{tpu_custom_call.1} parent=1 // pred_region
      %139 = vsyncadd [#allocation18], 0
      %s140 = sshll.u32 %s9, 4
      %s141 = int_to_ptr.hbm [resolvable:$true] %s140
      %s142 = sshll.u32 [#allocation17], 4
      %s143 = int_to_ptr.vmem [resolvable:$true] %s142
      %148 = dma.hbm_to_vmem [thread:$0]  %s141, 4096, %s143, [#allocation18], 64, 64, 4
    $region41: #{tpu_custom_call.1} parent=1 // pred_fallthru
      _
    // Predicated region
    $region42: #{tpu_custom_call.1} parent=1 // pred_check
      _
    $region43: #{tpu_custom_call.1} parent=1 // pred_check_branch
      %150 = sbr.rel (0) target = $region45
    $region44: #{tpu_custom_call.1} parent=1 // pred_region
      %152 = vsyncadd [#allocation18], 0
      %s154 = sshll.u32 %s10, 4
      %s155 = int_to_ptr.hbm [resolvable:$true] %s154
      %s156 = sshll.u32 [#allocation19], 4
      %s157 = int_to_ptr.vmem [resolvable:$true] %s156
      %159 = dma.hbm_to_vmem [thread:$0]  %s155, 16, %s157, [#allocation18]
    $region45: #{tpu_custom_call.1} parent=1 // pred_fallthru
      _
    // Predicated region
    $region46: #{tpu_custom_call.1} parent=1 // pred_check
      _
    $region47: #{tpu_custom_call.1} parent=1 // pred_check_branch
      %161 = sbr.rel (0) target = $region49
    $region48: #{tpu_custom_call.1} parent=1 // pred_region
      _
    $region49: #{tpu_custom_call.1} parent=1 // pred_fallthru
      _
    // Predicated region
    $region50: #{tpu_custom_call.1} parent=1 // pred_check
      _
    $region51: #{tpu_custom_call.1} parent=1 // pred_check_branch
      %163 = sbr.rel (0) target = $region53
    $region52: #{tpu_custom_call.1} parent=1 // pred_region
      %165 = vsyncadd [#allocation21], 0
      %s167 = sshll.u32 %s12, 4
      %s168 = int_to_ptr.hbm [resolvable:$true] %s167
      %s169 = sshll.u32 [#allocation20], 4
      %s170 = int_to_ptr.vmem [resolvable:$true] %s169
      %172 = dma.hbm_to_vmem [thread:$0]  %s168, 16, %s170, [#allocation21]
    $region53: #{tpu_custom_call.1} parent=1 // pred_fallthru
      _
    // Predicated region
    $region54: #{tpu_custom_call.1} parent=1 // pred_check
      _
    $region55: #{tpu_custom_call.1} parent=1 // pred_check_branch
      %174 = sbr.rel (0) target = $region57
    $region56: #{tpu_custom_call.1} parent=1 // pred_region
      %176 = vsyncadd [#allocation21], 0
      %s178 = sshll.u32 %s13, 4
      %s179 = int_to_ptr.hbm [resolvable:$true] %s178
      %s180 = sshll.u32 [#allocation22], 4
      %s181 = int_to_ptr.vmem [resolvable:$true] %s180
      %183 = dma.hbm_to_vmem [thread:$0]  %s179, 16, %s181, [#allocation21]
    $region57: #{tpu_custom_call.1} parent=1 // pred_fallthru
      _
    // Predicated region
    $region58: #{tpu_custom_call.1} parent=1 // pred_check
      _
    $region59: #{tpu_custom_call.1} parent=1 // pred_check_branch
      %185 = sbr.rel (0) target = $region61
    $region60: #{tpu_custom_call.1} parent=1 // pred_region
      _
    $region61: #{tpu_custom_call.1} parent=1 // pred_fallthru
      _
    // Predicated region
    $region62: #{tpu_custom_call.1} parent=1 // pred_check
      _
    $region63: #{tpu_custom_call.1} parent=1 // pred_check_branch
      %187 = sbr.rel (0) target = $region65
    $region64: #{tpu_custom_call.1} parent=1 // pred_region
      %189 = dma.done [#allocation4], 1216
    $region65: #{tpu_custom_call.1} parent=1 // pred_fallthru
      _
    // Predicated region
    $region66: #{tpu_custom_call.1} parent=1 // pred_check
      _
    $region67: #{tpu_custom_call.1} parent=1 // pred_check_branch
      %191 = sbr.rel (0) target = $region69
    $region68: #{tpu_custom_call.1} parent=1 // pred_region
      %193 = dma.done [#allocation6], 32
    $region69: #{tpu_custom_call.1} parent=1 // pred_fallthru
      _
    // Predicated region
    $region70: #{tpu_custom_call.1} parent=1 // pred_check
      _
    $region71: #{tpu_custom_call.1} parent=1 // pred_check_branch
      %195 = sbr.rel (0) target = $region73
    $region72: #{tpu_custom_call.1} parent=1 // pred_region
      %197 = dma.done [#allocation6], 155648
    $region73: #{tpu_custom_call.1} parent=1 // pred_fallthru
      _
    // Predicated region
    $region74: #{tpu_custom_call.1} parent=1 // pred_check
      _
    $region75: #{tpu_custom_call.1} parent=1 // pred_check_branch
      %199 = sbr.rel (0) target = $region77
    $region76: #{tpu_custom_call.1} parent=1 // pred_region
      %201 = dma.done [#allocation9], 64
    $region77: #{tpu_custom_call.1} parent=1 // pred_fallthru
      _
    // Predicated region
    $region78: #{tpu_custom_call.1} parent=1 // pred_check
      _
    $region79: #{tpu_custom_call.1} parent=1 // pred_check_branch
      %203 = sbr.rel (0) target = $region81
    $region80: #{tpu_custom_call.1} parent=1 // pred_region
      %205 = dma.done [#allocation9], 4096
    $region81: #{tpu_custom_call.1} parent=1 // pred_fallthru
      _
    // Predicated region
    $region82: #{tpu_custom_call.1} parent=1 // pred_check
      _
    $region83: #{tpu_custom_call.1} parent=1 // pred_check_branch
      %207 = sbr.rel (0) target = $region85
    $region84: #{tpu_custom_call.1} parent=1 // pred_region
      %209 = dma.done [#allocation12], 64
    $region85: #{tpu_custom_call.1} parent=1 // pred_fallthru
      _
    // Predicated region
    $region86: #{tpu_custom_call.1} parent=1 // pred_check
      _
    $region87: #{tpu_custom_call.1} parent=1 // pred_check_branch
      %211 = sbr.rel (0) target = $region89
    $region88: #{tpu_custom_call.1} parent=1 // pred_region
      %213 = dma.done [#allocation12], 16384
    $region89: #{tpu_custom_call.1} parent=1 // pred_fallthru
      _
    // Predicated region
    $region90: #{tpu_custom_call.1} parent=1 // pred_check
      _
    $region91: #{tpu_custom_call.1} parent=1 // pred_check_branch
      %215 = sbr.rel (0) target = $region93
    $region92: #{tpu_custom_call.1} parent=1 // pred_region
      %217 = dma.done [#allocation15], 16384
    $region93: #{tpu_custom_call.1} parent=1 // pred_fallthru
      _
    // Predicated region
    $region94: #{tpu_custom_call.1} parent=1 // pred_check
      _
    $region95: #{tpu_custom_call.1} parent=1 // pred_check_branch
      %219 = sbr.rel (0) target = $region97
    $region96: #{tpu_custom_call.1} parent=1 // pred_region
      %221 = dma.done [#allocation15], 64
    $region97: #{tpu_custom_call.1} parent=1 // pred_fallthru
      _
    // Predicated region
    $region98: #{tpu_custom_call.1} parent=1 // pred_check
      _
    $region99: #{tpu_custom_call.1} parent=1 // pred_check_branch
      %223 = sbr.rel (0) target = $region101
    $region100: #{tpu_custom_call.1} parent=1 // pred_region
      %225 = dma.done [#allocation18], 4096
    $region101: #{tpu_custom_call.1} parent=1 // pred_fallthru
      _
    // Predicated region
    $region102: #{tpu_custom_call.1} parent=1 // pred_check
      _
    $region103: #{tpu_custom_call.1} parent=1 // pred_check_branch
      %227 = sbr.rel (0) target = $region105
    $region104: #{tpu_custom_call.1} parent=1 // pred_region
      %229 = dma.done [#allocation18], 16
    $region105: #{tpu_custom_call.1} parent=1 // pred_fallthru
      _
    // Predicated region
    $region106: #{tpu_custom_call.1} parent=1 // pred_check
      _
    $region107: #{tpu_custom_call.1} parent=1 // pred_check_branch
      %231 = sbr.rel (0) target = $region109
    $region108: #{tpu_custom_call.1} parent=1 // pred_region
      %233 = dma.done [#allocation21], 16
    $region109: #{tpu_custom_call.1} parent=1 // pred_fallthru
      _
    // Predicated region
    $region110: #{tpu_custom_call.1} parent=1 // pred_check
      _
    $region111: #{tpu_custom_call.1} parent=1 // pred_check_branch
      %235 = sbr.rel (0) target = $region113
    $region112: #{tpu_custom_call.1} parent=1 // pred_region
      %237 = dma.done [#allocation21], 16
    $region113: #{tpu_custom_call.1} parent=1 // pred_fallthru
      _
    %v238 = vld [vmem:[#allocation3] sm:$0xff]
    %v239 = vld [vmem:[#allocation3 + $0x8] sm:$0xff]
    %v240 = vld [vmem:[#allocation3 + $0x10] sm:$0xff]
    %v241 = vld [vmem:[#allocation3 + $0x18] sm:$0xff]
    %v242 = vld [vmem:[#allocation3 + $0x20] sm:$0xff]
    %v243 = vld [vmem:[#allocation3 + $0x28] sm:$0xff]
    %v244 = vld [vmem:[#allocation3 + $0x30] sm:$0xff]
    %v245 = vld [vmem:[#allocation3 + $0x38] sm:$0xff]
    %v246 = vld [vmem:[#allocation3 + $0x40] sm:$0xff]
    %v247 = vld [vmem:[#allocation3 + $0x48] sm:$0xf]
    %258 = vst [vmem:[#allocation1] ss:$4 sm:$0xff] %v238
    %s259 = scalar_lea.vmem [#allocation1], 32
    %260 = vst [vmem:[%s259] ss:$4 sm:$0xff] %v239
    %v261 = vld.sshfl [vmem:[#allocation1] sm:$0xff pattern:$0x73625140]
    %v262 = vld.sshfl [vmem:[#allocation1 + $0x8] sm:$0xff pattern:$0x73625140]
    %v263 = vld.sshfl [vmem:[#allocation1 + $0x10] sm:$0xff pattern:$0x73625140]
    %v264 = vld.sshfl [vmem:[#allocation1 + $0x18] sm:$0xff pattern:$0x73625140]
    %v265 = vld.sshfl [vmem:[#allocation1 + $0x20] sm:$0xff pattern:$0x73625140]
    %v266 = vld.sshfl [vmem:[#allocation1 + $0x28] sm:$0xff pattern:$0x73625140]
    %v267 = vld.sshfl [vmem:[#allocation1 + $0x30] sm:$0xff pattern:$0x73625140]
    %v268 = vld.sshfl [vmem:[#allocation1 + $0x38] sm:$0xff pattern:$0x73625140]
    %269 = vst [vmem:[#allocation1] ss:$4 sm:$0xff] %v240
    %270 = vst [vmem:[%s259] ss:$4 sm:$0xff] %v241
    %v271 = vld.sshfl [vmem:[#allocation1] sm:$0xff pattern:$0x73625140]
    %v272 = vld.sshfl [vmem:[#allocation1 + $0x8] sm:$0xff pattern:$0x73625140]
    %v273 = vld.sshfl [vmem:[#allocation1 + $0x10] sm:$0xff pattern:$0x73625140]
    %v274 = vld.sshfl [vmem:[#allocation1 + $0x18] sm:$0xff pattern:$0x73625140]
    %v275 = vld.sshfl [vmem:[#allocation1 + $0x20] sm:$0xff pattern:$0x73625140]
    %v276 = vld.sshfl [vmem:[#allocation1 + $0x28] sm:$0xff pattern:$0x73625140]
    %v277 = vld.sshfl [vmem:[#allocation1 + $0x30] sm:$0xff pattern:$0x73625140]
    %v278 = vld.sshfl [vmem:[#allocation1 + $0x38] sm:$0xff pattern:$0x73625140]
    %279 = vst [vmem:[#allocation1] ss:$4 sm:$0xff] %v242
    %280 = vst [vmem:[%s259] ss:$4 sm:$0xff] %v243
    %v281 = vld.sshfl [vmem:[#allocation1] sm:$0xff pattern:$0x73625140]
    %v282 = vld.sshfl [vmem:[#allocation1 + $0x8] sm:$0xff pattern:$0x73625140]
    %v283 = vld.sshfl [vmem:[#allocation1 + $0x10] sm:$0xff pattern:$0x73625140]
    %v284 = vld.sshfl [vmem:[#allocation1 + $0x18] sm:$0xff pattern:$0x73625140]
    %v285 = vld.sshfl [vmem:[#allocation1 + $0x20] sm:$0xff pattern:$0x73625140]
    %v286 = vld.sshfl [vmem:[#allocation1 + $0x28] sm:$0xff pattern:$0x73625140]
    %v287 = vld.sshfl [vmem:[#allocation1 + $0x30] sm:$0xff pattern:$0x73625140]
    %v288 = vld.sshfl [vmem:[#allocation1 + $0x38] sm:$0xff pattern:$0x73625140]
    %289 = vst [vmem:[#allocation1] ss:$4 sm:$0xff] %v244
    %290 = vst [vmem:[%s259] ss:$4 sm:$0xff] %v245
    %v291 = vld.sshfl [vmem:[#allocation1] sm:$0xff pattern:$0x73625140]
    %v292 = vld.sshfl [vmem:[#allocation1 + $0x8] sm:$0xff pattern:$0x73625140]
    %v293 = vld.sshfl [vmem:[#allocation1 + $0x10] sm:$0xff pattern:$0x73625140]
    %v294 = vld.sshfl [vmem:[#allocation1 + $0x18] sm:$0xff pattern:$0x73625140]
    %v295 = vld.sshfl [vmem:[#allocation1 + $0x20] sm:$0xff pattern:$0x73625140]
    %v296 = vld.sshfl [vmem:[#allocation1 + $0x28] sm:$0xff pattern:$0x73625140]
    %v297 = vld.sshfl [vmem:[#allocation1 + $0x30] sm:$0xff pattern:$0x73625140]
    %v298 = vld.sshfl [vmem:[#allocation1 + $0x38] sm:$0xff pattern:$0x73625140]
    %299 = vst [vmem:[#allocation1] ss:$4 sm:$0xff] %v246
    %300 = vst [vmem:[%s259] ss:$4 sm:$0xff] %v247
    %v301 = vld.sshfl [vmem:[#allocation1] sm:$0xff pattern:$0x73625140]
    %v302 = vld.sshfl [vmem:[#allocation1 + $0x8] sm:$0xff pattern:$0x73625140]
    %v303 = vld.sshfl [vmem:[#allocation1 + $0x10] sm:$0xff pattern:$0x73625140]
    %v304 = vld.sshfl [vmem:[#allocation1 + $0x18] sm:$0xff pattern:$0x73625140]
    %v305 = vld.sshfl [vmem:[#allocation1 + $0x20] sm:$0xff pattern:$0x73625140]
    %v306 = vld.sshfl [vmem:[#allocation1 + $0x28] sm:$0xff pattern:$0x73625140]
    %v345 = vpack.c.bf16 %v261, %v261
    %v346 = vpack.c.bf16 %v262, %v262
    %v347 = vpack.c.bf16 %v263, %v263
    %v348 = vpack.c.bf16 %v264, %v264
    %v349 = vpack.c.bf16 %v265, %v265
    %v350 = vpack.c.bf16 %v266, %v266
    %v351 = vpack.c.bf16 %v267, %v267
    %v352 = vpack.c.bf16 %v268, %v268
    %v353 = vpack.c.bf16 %v271, %v271
    %v354 = vpack.c.bf16 %v272, %v272
    %v355 = vpack.c.bf16 %v273, %v273
    %v356 = vpack.c.bf16 %v274, %v274
    %v357 = vpack.c.bf16 %v275, %v275
    %v358 = vpack.c.bf16 %v276, %v276
    %v359 = vpack.c.bf16 %v277, %v277
    %v360 = vpack.c.bf16 %v278, %v278
    %v361 = vpack.c.bf16 %v281, %v281
    %v362 = vpack.c.bf16 %v282, %v282
    %v363 = vpack.c.bf16 %v283, %v283
    %v364 = vpack.c.bf16 %v284, %v284
    %v365 = vpack.c.bf16 %v285, %v285
    %v366 = vpack.c.bf16 %v286, %v286
    %v367 = vpack.c.bf16 %v287, %v287
    %v368 = vpack.c.bf16 %v288, %v288
    %v369 = vpack.c.bf16 %v291, %v291
    %v370 = vpack.c.bf16 %v292, %v292
    %v371 = vpack.c.bf16 %v293, %v293
    %v372 = vpack.c.bf16 %v294, %v294
    %v373 = vpack.c.bf16 %v295, %v295
    %v374 = vpack.c.bf16 %v296, %v296
    %v375 = vpack.c.bf16 %v297, %v297
    %v376 = vpack.c.bf16 %v298, %v298
    %v377 = vpack.c.bf16 %v301, %v301
    %v378 = vpack.c.bf16 %v302, %v302
    %v379 = vpack.c.bf16 %v303, %v303
    %v380 = vpack.c.bf16 %v304, %v304
    %v381 = vpack.c.bf16 %v305, %v305
    %v382 = vpack.c.bf16 %v306, %v306
    %v383 = vld [vmem:[#allocation5] sm:$0x3]
    %v384 = vpack.c.bf16 %v383, %v383
    %v385 = vld [vmem:[#allocation7] sm:$0xff]
    %v386 = vld [vmem:[#allocation7 + $0x8] sm:$0xff]
    %v387 = vld [vmem:[#allocation7 + $0x10] sm:$0xff]
    %v388 = vld [vmem:[#allocation7 + $0x18] sm:$0xff]
    %v389 = vld [vmem:[#allocation7 + $0x20] sm:$0xff]
    %v390 = vld [vmem:[#allocation7 + $0x28] sm:$0xff]
    %v391 = vld [vmem:[#allocation7 + $0x30] sm:$0xff]
    %v392 = vld [vmem:[#allocation7 + $0x38] sm:$0xff]
    %v393 = vld [vmem:[#allocation7 + $0x40] sm:$0xff]
    %v394 = vld [vmem:[#allocation7 + $0x48] sm:$0xff]
    %v395 = vld [vmem:[#allocation7 + $0x50] sm:$0xff]
    %v396 = vld [vmem:[#allocation7 + $0x58] sm:$0xff]
    %v397 = vld [vmem:[#allocation7 + $0x60] sm:$0xff]
    %v398 = vld [vmem:[#allocation7 + $0x68] sm:$0xff]
    %v399 = vld [vmem:[#allocation7 + $0x70] sm:$0xff]
    %v400 = vld [vmem:[#allocation7 + $0x78] sm:$0xff]
    %v401 = vld [vmem:[#allocation7 + $0x80] sm:$0xff]
    %v402 = vld [vmem:[#allocation7 + $0x88] sm:$0xff]
    %v403 = vld [vmem:[#allocation7 + $0x90] sm:$0xff]
    %v404 = vld [vmem:[#allocation7 + $0x98] sm:$0xff]
    %v405 = vld [vmem:[#allocation7 + $0xa0] sm:$0xff]
    %v406 = vld [vmem:[#allocation7 + $0xa8] sm:$0xff]
    %v407 = vld [vmem:[#allocation7 + $0xb0] sm:$0xff]
    %v408 = vld [vmem:[#allocation7 + $0xb8] sm:$0xff]
    %v409 = vld [vmem:[#allocation7 + $0xc0] sm:$0xff]
    %v410 = vld [vmem:[#allocation7 + $0xc8] sm:$0xff]
    %v411 = vld [vmem:[#allocation7 + $0xd0] sm:$0xff]
    %v412 = vld [vmem:[#allocation7 + $0xd8] sm:$0xff]
    %v413 = vld [vmem:[#allocation7 + $0xe0] sm:$0xff]
    %v414 = vld [vmem:[#allocation7 + $0xe8] sm:$0xff]
    %v415 = vld [vmem:[#allocation7 + $0xf0] sm:$0xff]
    %v416 = vld [vmem:[#allocation7 + $0xf8] sm:$0xff]
    %v417 = vld [vmem:[#allocation7 + $0x100] sm:$0xff]
    %v418 = vld [vmem:[#allocation7 + $0x108] sm:$0xff]
    %v419 = vld [vmem:[#allocation7 + $0x110] sm:$0xff]
    %v420 = vld [vmem:[#allocation7 + $0x118] sm:$0xff]
    %v421 = vld [vmem:[#allocation7 + $0x120] sm:$0xff]
    %v422 = vld [vmem:[#allocation7 + $0x128] sm:$0xff]
    %v423 = vld [vmem:[#allocation7 + $0x130] sm:$0xff]
    %v424 = vld [vmem:[#allocation7 + $0x138] sm:$0xff]
    %v425 = vld [vmem:[#allocation7 + $0x140] sm:$0xff]
    %v426 = vld [vmem:[#allocation7 + $0x148] sm:$0xff]
    %v427 = vld [vmem:[#allocation7 + $0x150] sm:$0xff]
    %v428 = vld [vmem:[#allocation7 + $0x158] sm:$0xff]
    %v429 = vld [vmem:[#allocation7 + $0x160] sm:$0xff]
    %v430 = vld [vmem:[#allocation7 + $0x168] sm:$0xff]
    %v431 = vld [vmem:[#allocation7 + $0x170] sm:$0xff]
    %v432 = vld [vmem:[#allocation7 + $0x178] sm:$0xff]
    %v433 = vld [vmem:[#allocation7 + $0x180] sm:$0xff]
    %v434 = vld [vmem:[#allocation7 + $0x188] sm:$0xff]
    %v435 = vld [vmem:[#allocation7 + $0x190] sm:$0xff]
    %v436 = vld [vmem:[#allocation7 + $0x198] sm:$0xff]
    %v437 = vld [vmem:[#allocation7 + $0x1a0] sm:$0xff]
    %v438 = vld [vmem:[#allocation7 + $0x1a8] sm:$0xff]
    %v439 = vld [vmem:[#allocation7 + $0x1b0] sm:$0xff]
    %v440 = vld [vmem:[#allocation7 + $0x1b8] sm:$0xff]
    %v441 = vld [vmem:[#allocation7 + $0x1c0] sm:$0xff]
    %v442 = vld [vmem:[#allocation7 + $0x1c8] sm:$0xff]
    %v443 = vld [vmem:[#allocation7 + $0x1d0] sm:$0xff]
    %v444 = vld [vmem:[#allocation7 + $0x1d8] sm:$0xff]
    %v445 = vld [vmem:[#allocation7 + $0x1e0] sm:$0xff]
    %v446 = vld [vmem:[#allocation7 + $0x1e8] sm:$0xff]
    %v447 = vld [vmem:[#allocation7 + $0x1f0] sm:$0xff]
    %v448 = vld [vmem:[#allocation7 + $0x1f8] sm:$0xff]
    %v449 = vld [vmem:[#allocation7 + $0x200] sm:$0xff]
    %v450 = vld [vmem:[#allocation7 + $0x208] sm:$0xff]
    %v451 = vld [vmem:[#allocation7 + $0x210] sm:$0xff]
    %v452 = vld [vmem:[#allocation7 + $0x218] sm:$0xff]
    %v453 = vld [vmem:[#allocation7 + $0x220] sm:$0xff]
    %v454 = vld [vmem:[#allocation7 + $0x228] sm:$0xff]
    %v455 = vld [vmem:[#allocation7 + $0x230] sm:$0xff]
    %v456 = vld [vmem:[#allocation7 + $0x238] sm:$0xff]
    %v457 = vld [vmem:[#allocation7 + $0x240] sm:$0xff]
    %v458 = vld [vmem:[#allocation7 + $0x248] sm:$0xff]
    %v459 = vld [vmem:[#allocation7 + $0x250] sm:$0xff]
    %v460 = vld [vmem:[#allocation7 + $0x258] sm:$0xff]
    %v461 = vld [vmem:[#allocation7 + $0x260] sm:$0xff]
    %v462 = vld [vmem:[#allocation7 + $0x268] sm:$0xff]
    %v463 = vld [vmem:[#allocation7 + $0x270] sm:$0xff]
    %v464 = vld [vmem:[#allocation7 + $0x278] sm:$0xff]
    %v465 = vld [vmem:[#allocation7 + $0x280] sm:$0xff]
    %v466 = vld [vmem:[#allocation7 + $0x288] sm:$0xff]
    %v467 = vld [vmem:[#allocation7 + $0x290] sm:$0xff]
    %v468 = vld [vmem:[#allocation7 + $0x298] sm:$0xff]
    %v469 = vld [vmem:[#allocation7 + $0x2a0] sm:$0xff]
    %v470 = vld [vmem:[#allocation7 + $0x2a8] sm:$0xff]
    %v471 = vld [vmem:[#allocation7 + $0x2b0] sm:$0xff]
    %v472 = vld [vmem:[#allocation7 + $0x2b8] sm:$0xff]
    %v473 = vld [vmem:[#allocation7 + $0x2c0] sm:$0xff]
    %v474 = vld [vmem:[#allocation7 + $0x2c8] sm:$0xff]
    %v475 = vld [vmem:[#allocation7 + $0x2d0] sm:$0xff]
    %v476 = vld [vmem:[#allocation7 + $0x2d8] sm:$0xff]
    %v477 = vld [vmem:[#allocation7 + $0x2e0] sm:$0xff]
    %v478 = vld [vmem:[#allocation7 + $0x2e8] sm:$0xff]
    %v479 = vld [vmem:[#allocation7 + $0x2f0] sm:$0xff]
    %v480 = vld [vmem:[#allocation7 + $0x2f8] sm:$0xff]
    %v481 = vld [vmem:[#allocation7 + $0x300] sm:$0xff]
    %v482 = vld [vmem:[#allocation7 + $0x308] sm:$0xff]
    %v483 = vld [vmem:[#allocation7 + $0x310] sm:$0xff]
    %v484 = vld [vmem:[#allocation7 + $0x318] sm:$0xff]
    %v485 = vld [vmem:[#allocation7 + $0x320] sm:$0xff]
    %v486 = vld [vmem:[#allocation7 + $0x328] sm:$0xff]
    %v487 = vld [vmem:[#allocation7 + $0x330] sm:$0xff]
    %v488 = vld [vmem:[#allocation7 + $0x338] sm:$0xff]
    %v489 = vld [vmem:[#allocation7 + $0x340] sm:$0xff]
    %v490 = vld [vmem:[#allocation7 + $0x348] sm:$0xff]
    %v491 = vld [vmem:[#allocation7 + $0x350] sm:$0xff]
    %v492 = vld [vmem:[#allocation7 + $0x358] sm:$0xff]
    %v493 = vld [vmem:[#allocation7 + $0x360] sm:$0xff]
    %v494 = vld [vmem:[#allocation7 + $0x368] sm:$0xff]
    %v495 = vld [vmem:[#allocation7 + $0x370] sm:$0xff]
    %v496 = vld [vmem:[#allocation7 + $0x378] sm:$0xff]
    %v497 = vld [vmem:[#allocation7 + $0x380] sm:$0xff]
    %v498 = vld [vmem:[#allocation7 + $0x388] sm:$0xff]
    %v499 = vld [vmem:[#allocation7 + $0x390] sm:$0xff]
    %v500 = vld [vmem:[#allocation7 + $0x398] sm:$0xff]
    %v501 = vld [vmem:[#allocation7 + $0x3a0] sm:$0xff]
    %v502 = vld [vmem:[#allocation7 + $0x3a8] sm:$0xff]
    %v503 = vld [vmem:[#allocation7 + $0x3b0] sm:$0xff]
    %v504 = vld [vmem:[#allocation7 + $0x3b8] sm:$0xff]
    %v505 = vld [vmem:[#allocation7 + $0x3c0] sm:$0xff]
    %v506 = vld [vmem:[#allocation7 + $0x3c8] sm:$0xff]
    %v507 = vld [vmem:[#allocation7 + $0x3d0] sm:$0xff]
    %v508 = vld [vmem:[#allocation7 + $0x3d8] sm:$0xff]
    %v509 = vld [vmem:[#allocation7 + $0x3e0] sm:$0xff]
    %v510 = vld [vmem:[#allocation7 + $0x3e8] sm:$0xff]
    %v511 = vld [vmem:[#allocation7 + $0x3f0] sm:$0xff]
    %v512 = vld [vmem:[#allocation7 + $0x3f8] sm:$0xff]
    %v513 = vld [vmem:[#allocation7 + $0x400] sm:$0xff]
    %v514 = vld [vmem:[#allocation7 + $0x408] sm:$0xff]
    %v515 = vld [vmem:[#allocation7 + $0x410] sm:$0xff]
    %v516 = vld [vmem:[#allocation7 + $0x418] sm:$0xff]
    %v517 = vld [vmem:[#allocation7 + $0x420] sm:$0xff]
    %v518 = vld [vmem:[#allocation7 + $0x428] sm:$0xff]
    %v519 = vld [vmem:[#allocation7 + $0x430] sm:$0xff]
    %v520 = vld [vmem:[#allocation7 + $0x438] sm:$0xff]
    %v521 = vld [vmem:[#allocation7 + $0x440] sm:$0xff]
    %v522 = vld [vmem:[#allocation7 + $0x448] sm:$0xff]
    %v523 = vld [vmem:[#allocation7 + $0x450] sm:$0xff]
    %v524 = vld [vmem:[#allocation7 + $0x458] sm:$0xff]
    %v525 = vld [vmem:[#allocation7 + $0x460] sm:$0xff]
    %v526 = vld [vmem:[#allocation7 + $0x468] sm:$0xff]
    %v527 = vld [vmem:[#allocation7 + $0x470] sm:$0xff]
    %v528 = vld [vmem:[#allocation7 + $0x478] sm:$0xff]
    %v529 = vld [vmem:[#allocation7 + $0x480] sm:$0xff]
    %v530 = vld [vmem:[#allocation7 + $0x488] sm:$0xff]
    %v531 = vld [vmem:[#allocation7 + $0x490] sm:$0xff]
    %v532 = vld [vmem:[#allocation7 + $0x498] sm:$0xff]
    %v533 = vld [vmem:[#allocation7 + $0x4a0] sm:$0xff]
    %v534 = vld [vmem:[#allocation7 + $0x4a8] sm:$0xff]
    %v535 = vld [vmem:[#allocation7 + $0x4b0] sm:$0xff]
    %v536 = vld [vmem:[#allocation7 + $0x4b8] sm:$0xff]
    %v537 = vld [vmem:[#allocation7 + $0x4c0] sm:$0xff]
    %v538 = vld [vmem:[#allocation7 + $0x4c8] sm:$0xff]
    %v539 = vld [vmem:[#allocation7 + $0x4d0] sm:$0xff]
    %v540 = vld [vmem:[#allocation7 + $0x4d8] sm:$0xff]
    %v541 = vld [vmem:[#allocation7 + $0x4e0] sm:$0xff]
    %v542 = vld [vmem:[#allocation7 + $0x4e8] sm:$0xff]
    %v543 = vld [vmem:[#allocation7 + $0x4f0] sm:$0xff]
    %v544 = vld [vmem:[#allocation7 + $0x4f8] sm:$0xff]
    %v545 = vld [vmem:[#allocation7 + $0x500] sm:$0xff]
    %v546 = vld [vmem:[#allocation7 + $0x508] sm:$0xff]
    %v547 = vld [vmem:[#allocation7 + $0x510] sm:$0xff]
    %v548 = vld [vmem:[#allocation7 + $0x518] sm:$0xff]
    %v549 = vld [vmem:[#allocation7 + $0x520] sm:$0xff]
    %v550 = vld [vmem:[#allocation7 + $0x528] sm:$0xff]
    %v551 = vld [vmem:[#allocation7 + $0x530] sm:$0xff]
    %v552 = vld [vmem:[#allocation7 + $0x538] sm:$0xff]
    %v553 = vld [vmem:[#allocation7 + $0x540] sm:$0xff]
    %v554 = vld [vmem:[#allocation7 + $0x548] sm:$0xff]
    %v555 = vld [vmem:[#allocation7 + $0x550] sm:$0xff]
    %v556 = vld [vmem:[#allocation7 + $0x558] sm:$0xff]
    %v557 = vld [vmem:[#allocation7 + $0x560] sm:$0xff]
    %v558 = vld [vmem:[#allocation7 + $0x568] sm:$0xff]
    %v559 = vld [vmem:[#allocation7 + $0x570] sm:$0xff]
    %v560 = vld [vmem:[#allocation7 + $0x578] sm:$0xff]
    %v561 = vld [vmem:[#allocation7 + $0x580] sm:$0xff]
    %v562 = vld [vmem:[#allocation7 + $0x588] sm:$0xff]
    %v563 = vld [vmem:[#allocation7 + $0x590] sm:$0xff]
    %v564 = vld [vmem:[#allocation7 + $0x598] sm:$0xff]
    %v565 = vld [vmem:[#allocation7 + $0x5a0] sm:$0xff]
    %v566 = vld [vmem:[#allocation7 + $0x5a8] sm:$0xff]
    %v567 = vld [vmem:[#allocation7 + $0x5b0] sm:$0xff]
    %v568 = vld [vmem:[#allocation7 + $0x5b8] sm:$0xff]
    %v569 = vld [vmem:[#allocation7 + $0x5c0] sm:$0xff]
    %v570 = vld [vmem:[#allocation7 + $0x5c8] sm:$0xff]
    %v571 = vld [vmem:[#allocation7 + $0x5d0] sm:$0xff]
    %v572 = vld [vmem:[#allocation7 + $0x5d8] sm:$0xff]
    %v573 = vld [vmem:[#allocation7 + $0x5e0] sm:$0xff]
    %v574 = vld [vmem:[#allocation7 + $0x5e8] sm:$0xff]
    %v575 = vld [vmem:[#allocation7 + $0x5f0] sm:$0xff]
    %v576 = vld [vmem:[#allocation7 + $0x5f8] sm:$0xff]
    %v577 = vld [vmem:[#allocation7 + $0x600] sm:$0xff]
    %v578 = vld [vmem:[#allocation7 + $0x608] sm:$0xff]
    %v579 = vld [vmem:[#allocation7 + $0x610] sm:$0xff]
    %v580 = vld [vmem:[#allocation7 + $0x618] sm:$0xff]
    %v581 = vld [vmem:[#allocation7 + $0x620] sm:$0xff]
    %v582 = vld [vmem:[#allocation7 + $0x628] sm:$0xff]
    %v583 = vld [vmem:[#allocation7 + $0x630] sm:$0xff]
    %v584 = vld [vmem:[#allocation7 + $0x638] sm:$0xff]
    %v585 = vld [vmem:[#allocation7 + $0x640] sm:$0xff]
    %v586 = vld [vmem:[#allocation7 + $0x648] sm:$0xff]
    %v587 = vld [vmem:[#allocation7 + $0x650] sm:$0xff]
    %v588 = vld [vmem:[#allocation7 + $0x658] sm:$0xff]
    %v589 = vld [vmem:[#allocation7 + $0x660] sm:$0xff]
    %v590 = vld [vmem:[#allocation7 + $0x668] sm:$0xff]
    %v591 = vld [vmem:[#allocation7 + $0x670] sm:$0xff]
    %v592 = vld [vmem:[#allocation7 + $0x678] sm:$0xff]
    %v593 = vld [vmem:[#allocation7 + $0x680] sm:$0xff]
    %v594 = vld [vmem:[#allocation7 + $0x688] sm:$0xff]
    %v595 = vld [vmem:[#allocation7 + $0x690] sm:$0xff]
    %v596 = vld [vmem:[#allocation7 + $0x698] sm:$0xff]
    %v597 = vld [vmem:[#allocation7 + $0x6a0] sm:$0xff]
    %v598 = vld [vmem:[#allocation7 + $0x6a8] sm:$0xff]
    %v599 = vld [vmem:[#allocation7 + $0x6b0] sm:$0xff]
    %v600 = vld [vmem:[#allocation7 + $0x6b8] sm:$0xff]
    %v601 = vld [vmem:[#allocation7 + $0x6c0] sm:$0xff]
    %v602 = vld [vmem:[#allocation7 + $0x6c8] sm:$0xff]
    %v603 = vld [vmem:[#allocation7 + $0x6d0] sm:$0xff]
    %v604 = vld [vmem:[#allocation7 + $0x6d8] sm:$0xff]
    %v605 = vld [vmem:[#allocation7 + $0x6e0] sm:$0xff]
    %v606 = vld [vmem:[#allocation7 + $0x6e8] sm:$0xff]
    %v607 = vld [vmem:[#allocation7 + $0x6f0] sm:$0xff]
    %v608 = vld [vmem:[#allocation7 + $0x6f8] sm:$0xff]
    %v609 = vld [vmem:[#allocation7 + $0x700] sm:$0xff]
    %v610 = vld [vmem:[#allocation7 + $0x708] sm:$0xff]
    %v611 = vld [vmem:[#allocation7 + $0x710] sm:$0xff]
    %v612 = vld [vmem:[#allocation7 + $0x718] sm:$0xff]
    %v613 = vld [vmem:[#allocation7 + $0x720] sm:$0xff]
    %v614 = vld [vmem:[#allocation7 + $0x728] sm:$0xff]
    %v615 = vld [vmem:[#allocation7 + $0x730] sm:$0xff]
    %v616 = vld [vmem:[#allocation7 + $0x738] sm:$0xff]
    %v617 = vld [vmem:[#allocation7 + $0x740] sm:$0xff]
    %v618 = vld [vmem:[#allocation7 + $0x748] sm:$0xff]
    %v619 = vld [vmem:[#allocation7 + $0x750] sm:$0xff]
    %v620 = vld [vmem:[#allocation7 + $0x758] sm:$0xff]
    %v621 = vld [vmem:[#allocation7 + $0x760] sm:$0xff]
    %v622 = vld [vmem:[#allocation7 + $0x768] sm:$0xff]
    %v623 = vld [vmem:[#allocation7 + $0x770] sm:$0xff]
    %v624 = vld [vmem:[#allocation7 + $0x778] sm:$0xff]
    %v625 = vld [vmem:[#allocation7 + $0x780] sm:$0xff]
    %v626 = vld [vmem:[#allocation7 + $0x788] sm:$0xff]
    %v627 = vld [vmem:[#allocation7 + $0x790] sm:$0xff]
    %v628 = vld [vmem:[#allocation7 + $0x798] sm:$0xff]
    %v629 = vld [vmem:[#allocation7 + $0x7a0] sm:$0xff]
    %v630 = vld [vmem:[#allocation7 + $0x7a8] sm:$0xff]
    %v631 = vld [vmem:[#allocation7 + $0x7b0] sm:$0xff]
    %v632 = vld [vmem:[#allocation7 + $0x7b8] sm:$0xff]
    %v633 = vld [vmem:[#allocation7 + $0x7c0] sm:$0xff]
    %v634 = vld [vmem:[#allocation7 + $0x7c8] sm:$0xff]
    %v635 = vld [vmem:[#allocation7 + $0x7d0] sm:$0xff]
    %v636 = vld [vmem:[#allocation7 + $0x7d8] sm:$0xff]
    %v637 = vld [vmem:[#allocation7 + $0x7e0] sm:$0xff]
    %v638 = vld [vmem:[#allocation7 + $0x7e8] sm:$0xff]
    %v639 = vld [vmem:[#allocation7 + $0x7f0] sm:$0xff]
    %v640 = vld [vmem:[#allocation7 + $0x7f8] sm:$0xff]
    %v641 = vld [vmem:[#allocation7 + $0x800] sm:$0xff]
    %v642 = vld [vmem:[#allocation7 + $0x808] sm:$0xff]
    %v643 = vld [vmem:[#allocation7 + $0x810] sm:$0xff]
    %v644 = vld [vmem:[#allocation7 + $0x818] sm:$0xff]
    %v645 = vld [vmem:[#allocation7 + $0x820] sm:$0xff]
    %v646 = vld [vmem:[#allocation7 + $0x828] sm:$0xff]
    %v647 = vld [vmem:[#allocation7 + $0x830] sm:$0xff]
    %v648 = vld [vmem:[#allocation7 + $0x838] sm:$0xff]
    %v649 = vld [vmem:[#allocation7 + $0x840] sm:$0xff]
    %v650 = vld [vmem:[#allocation7 + $0x848] sm:$0xff]
    %v651 = vld [vmem:[#allocation7 + $0x850] sm:$0xff]
    %v652 = vld [vmem:[#allocation7 + $0x858] sm:$0xff]
    %v653 = vld [vmem:[#allocation7 + $0x860] sm:$0xff]
    %v654 = vld [vmem:[#allocation7 + $0x868] sm:$0xff]
    %v655 = vld [vmem:[#allocation7 + $0x870] sm:$0xff]
    %v656 = vld [vmem:[#allocation7 + $0x878] sm:$0xff]
    %v657 = vld [vmem:[#allocation7 + $0x880] sm:$0xff]
    %v658 = vld [vmem:[#allocation7 + $0x888] sm:$0xff]
    %v659 = vld [vmem:[#allocation7 + $0x890] sm:$0xff]
    %v660 = vld [vmem:[#allocation7 + $0x898] sm:$0xff]
    %v661 = vld [vmem:[#allocation7 + $0x8a0] sm:$0xff]
    %v662 = vld [vmem:[#allocation7 + $0x8a8] sm:$0xff]
    %v663 = vld [vmem:[#allocation7 + $0x8b0] sm:$0xff]
    %v664 = vld [vmem:[#allocation7 + $0x8b8] sm:$0xff]
    %v665 = vld [vmem:[#allocation7 + $0x8c0] sm:$0xff]
    %v666 = vld [vmem:[#allocation7 + $0x8c8] sm:$0xff]
    %v667 = vld [vmem:[#allocation7 + $0x8d0] sm:$0xff]
    %v668 = vld [vmem:[#allocation7 + $0x8d8] sm:$0xff]
    %v669 = vld [vmem:[#allocation7 + $0x8e0] sm:$0xff]
    %v670 = vld [vmem:[#allocation7 + $0x8e8] sm:$0xff]
    %v671 = vld [vmem:[#allocation7 + $0x8f0] sm:$0xff]
    %v672 = vld [vmem:[#allocation7 + $0x8f8] sm:$0xff]
    %v673 = vld [vmem:[#allocation7 + $0x900] sm:$0xff]
    %v674 = vld [vmem:[#allocation7 + $0x908] sm:$0xff]
    %v675 = vld [vmem:[#allocation7 + $0x910] sm:$0xff]
    %v676 = vld [vmem:[#allocation7 + $0x918] sm:$0xff]
    %v677 = vld [vmem:[#allocation7 + $0x920] sm:$0xff]
    %v678 = vld [vmem:[#allocation7 + $0x928] sm:$0xff]
    %v679 = vld [vmem:[#allocation7 + $0x930] sm:$0xff]
    %v680 = vld [vmem:[#allocation7 + $0x938] sm:$0xff]
    %v681 = vld [vmem:[#allocation7 + $0x940] sm:$0xff]
    %v682 = vld [vmem:[#allocation7 + $0x948] sm:$0xff]
    %v683 = vld [vmem:[#allocation7 + $0x950] sm:$0xff]
    %v684 = vld [vmem:[#allocation7 + $0x958] sm:$0xff]
    %v685 = vld [vmem:[#allocation7 + $0x960] sm:$0xff]
    %v686 = vld [vmem:[#allocation7 + $0x968] sm:$0xff]
    %v687 = vld [vmem:[#allocation7 + $0x970] sm:$0xff]
    %v688 = vld [vmem:[#allocation7 + $0x978] sm:$0xff]
    %v689 = vld [vmem:[#allocation7 + $0x980] sm:$0xff]
    %v690 = vld [vmem:[#allocation7 + $0x988] sm:$0xff]
    %v691 = vld [vmem:[#allocation7 + $0x990] sm:$0xff]
    %v692 = vld [vmem:[#allocation7 + $0x998] sm:$0xff]
    %v693 = vld [vmem:[#allocation7 + $0x9a0] sm:$0xff]
    %v694 = vld [vmem:[#allocation7 + $0x9a8] sm:$0xff]
    %v695 = vld [vmem:[#allocation7 + $0x9b0] sm:$0xff]
    %v696 = vld [vmem:[#allocation7 + $0x9b8] sm:$0xff]
    %v697 = vld [vmem:[#allocation7 + $0x9c0] sm:$0xff]
    %v698 = vld [vmem:[#allocation7 + $0x9c8] sm:$0xff]
    %v699 = vld [vmem:[#allocation7 + $0x9d0] sm:$0xff]
    %v700 = vld [vmem:[#allocation7 + $0x9d8] sm:$0xff]
    %v701 = vld [vmem:[#allocation7 + $0x9e0] sm:$0xff]
    %v702 = vld [vmem:[#allocation7 + $0x9e8] sm:$0xff]
    %v703 = vld [vmem:[#allocation7 + $0x9f0] sm:$0xff]
    %v704 = vld [vmem:[#allocation7 + $0x9f8] sm:$0xff]
    %v705 = vld [vmem:[#allocation7 + $0xa00] sm:$0xff]
    %v706 = vld [vmem:[#allocation7 + $0xa08] sm:$0xff]
    %v707 = vld [vmem:[#allocation7 + $0xa10] sm:$0xff]
    %v708 = vld [vmem:[#allocation7 + $0xa18] sm:$0xff]
    %v709 = vld [vmem:[#allocation7 + $0xa20] sm:$0xff]
    %v710 = vld [vmem:[#allocation7 + $0xa28] sm:$0xff]
    %v711 = vld [vmem:[#allocation7 + $0xa30] sm:$0xff]
    %v712 = vld [vmem:[#allocation7 + $0xa38] sm:$0xff]
    %v713 = vld [vmem:[#allocation7 + $0xa40] sm:$0xff]
    %v714 = vld [vmem:[#allocation7 + $0xa48] sm:$0xff]
    %v715 = vld [vmem:[#allocation7 + $0xa50] sm:$0xff]
    %v716 = vld [vmem:[#allocation7 + $0xa58] sm:$0xff]
    %v717 = vld [vmem:[#allocation7 + $0xa60] sm:$0xff]
    %v718 = vld [vmem:[#allocation7 + $0xa68] sm:$0xff]
    %v719 = vld [vmem:[#allocation7 + $0xa70] sm:$0xff]
    %v720 = vld [vmem:[#allocation7 + $0xa78] sm:$0xff]
    %v721 = vld [vmem:[#allocation7 + $0xa80] sm:$0xff]
    %v722 = vld [vmem:[#allocation7 + $0xa88] sm:$0xff]
    %v723 = vld [vmem:[#allocation7 + $0xa90] sm:$0xff]
    %v724 = vld [vmem:[#allocation7 + $0xa98] sm:$0xff]
    %v725 = vld [vmem:[#allocation7 + $0xaa0] sm:$0xff]
    %v726 = vld [vmem:[#allocation7 + $0xaa8] sm:$0xff]
    %v727 = vld [vmem:[#allocation7 + $0xab0] sm:$0xff]
    %v728 = vld [vmem:[#allocation7 + $0xab8] sm:$0xff]
    %v729 = vld [vmem:[#allocation7 + $0xac0] sm:$0xff]
    %v730 = vld [vmem:[#allocation7 + $0xac8] sm:$0xff]
    %v731 = vld [vmem:[#allocation7 + $0xad0] sm:$0xff]
    %v732 = vld [vmem:[#allocation7 + $0xad8] sm:$0xff]
    %v733 = vld [vmem:[#allocation7 + $0xae0] sm:$0xff]
    %v734 = vld [vmem:[#allocation7 + $0xae8] sm:$0xff]
    %v735 = vld [vmem:[#allocation7 + $0xaf0] sm:$0xff]
    %v736 = vld [vmem:[#allocation7 + $0xaf8] sm:$0xff]
    %v737 = vld [vmem:[#allocation7 + $0xb00] sm:$0xff]
    %v738 = vld [vmem:[#allocation7 + $0xb08] sm:$0xff]
    %v739 = vld [vmem:[#allocation7 + $0xb10] sm:$0xff]
    %v740 = vld [vmem:[#allocation7 + $0xb18] sm:$0xff]
    %v741 = vld [vmem:[#allocation7 + $0xb20] sm:$0xff]
    %v742 = vld [vmem:[#allocation7 + $0xb28] sm:$0xff]
    %v743 = vld [vmem:[#allocation7 + $0xb30] sm:$0xff]
    %v744 = vld [vmem:[#allocation7 + $0xb38] sm:$0xff]
    %v745 = vld [vmem:[#allocation7 + $0xb40] sm:$0xff]
    %v746 = vld [vmem:[#allocation7 + $0xb48] sm:$0xff]
    %v747 = vld [vmem:[#allocation7 + $0xb50] sm:$0xff]
    %v748 = vld [vmem:[#allocation7 + $0xb58] sm:$0xff]
    %v749 = vld [vmem:[#allocation7 + $0xb60] sm:$0xff]
    %v750 = vld [vmem:[#allocation7 + $0xb68] sm:$0xff]
    %v751 = vld [vmem:[#allocation7 + $0xb70] sm:$0xff]
    %v752 = vld [vmem:[#allocation7 + $0xb78] sm:$0xff]
    %v753 = vld [vmem:[#allocation7 + $0xb80] sm:$0xff]
    %v754 = vld [vmem:[#allocation7 + $0xb88] sm:$0xff]
    %v755 = vld [vmem:[#allocation7 + $0xb90] sm:$0xff]
    %v756 = vld [vmem:[#allocation7 + $0xb98] sm:$0xff]
    %v757 = vld [vmem:[#allocation7 + $0xba0] sm:$0xff]
    %v758 = vld [vmem:[#allocation7 + $0xba8] sm:$0xff]
    %v759 = vld [vmem:[#allocation7 + $0xbb0] sm:$0xff]
    %v760 = vld [vmem:[#allocation7 + $0xbb8] sm:$0xff]
    %v761 = vld [vmem:[#allocation7 + $0xbc0] sm:$0xff]
    %v762 = vld [vmem:[#allocation7 + $0xbc8] sm:$0xff]
    %v763 = vld [vmem:[#allocation7 + $0xbd0] sm:$0xff]
    %v764 = vld [vmem:[#allocation7 + $0xbd8] sm:$0xff]
    %v765 = vld [vmem:[#allocation7 + $0xbe0] sm:$0xff]
    %v766 = vld [vmem:[#allocation7 + $0xbe8] sm:$0xff]
    %v767 = vld [vmem:[#allocation7 + $0xbf0] sm:$0xff]
    %v768 = vld [vmem:[#allocation7 + $0xbf8] sm:$0xff]
    %v769 = vld [vmem:[#allocation7 + $0xc00] sm:$0xff]
    %v770 = vld [vmem:[#allocation7 + $0xc08] sm:$0xff]
    %v771 = vld [vmem:[#allocation7 + $0xc10] sm:$0xff]
    %v772 = vld [vmem:[#allocation7 + $0xc18] sm:$0xff]
    %v773 = vld [vmem:[#allocation7 + $0xc20] sm:$0xff]
    %v774 = vld [vmem:[#allocation7 + $0xc28] sm:$0xff]
    %v775 = vld [vmem:[#allocation7 + $0xc30] sm:$0xff]
    %v776 = vld [vmem:[#allocation7 + $0xc38] sm:$0xff]
    %v777 = vld [vmem:[#allocation7 + $0xc40] sm:$0xff]
    %v778 = vld [vmem:[#allocation7 + $0xc48] sm:$0xff]
    %v779 = vld [vmem:[#allocation7 + $0xc50] sm:$0xff]
    %v780 = vld [vmem:[#allocation7 + $0xc58] sm:$0xff]
    %v781 = vld [vmem:[#allocation7 + $0xc60] sm:$0xff]
    %v782 = vld [vmem:[#allocation7 + $0xc68] sm:$0xff]
    %v783 = vld [vmem:[#allocation7 + $0xc70] sm:$0xff]
    %v784 = vld [vmem:[#allocation7 + $0xc78] sm:$0xff]
    %v785 = vld [vmem:[#allocation7 + $0xc80] sm:$0xff]
    %v786 = vld [vmem:[#allocation7 + $0xc88] sm:$0xff]
    %v787 = vld [vmem:[#allocation7 + $0xc90] sm:$0xff]
    %v788 = vld [vmem:[#allocation7 + $0xc98] sm:$0xff]
    %v789 = vld [vmem:[#allocation7 + $0xca0] sm:$0xff]
    %v790 = vld [vmem:[#allocation7 + $0xca8] sm:$0xff]
    %v791 = vld [vmem:[#allocation7 + $0xcb0] sm:$0xff]
    %v792 = vld [vmem:[#allocation7 + $0xcb8] sm:$0xff]
    %v793 = vld [vmem:[#allocation7 + $0xcc0] sm:$0xff]
    %v794 = vld [vmem:[#allocation7 + $0xcc8] sm:$0xff]
    %v795 = vld [vmem:[#allocation7 + $0xcd0] sm:$0xff]
    %v796 = vld [vmem:[#allocation7 + $0xcd8] sm:$0xff]
    %v797 = vld [vmem:[#allocation7 + $0xce0] sm:$0xff]
    %v798 = vld [vmem:[#allocation7 + $0xce8] sm:$0xff]
    %v799 = vld [vmem:[#allocation7 + $0xcf0] sm:$0xff]
    %v800 = vld [vmem:[#allocation7 + $0xcf8] sm:$0xff]
    %v801 = vld [vmem:[#allocation7 + $0xd00] sm:$0xff]
    %v802 = vld [vmem:[#allocation7 + $0xd08] sm:$0xff]
    %v803 = vld [vmem:[#allocation7 + $0xd10] sm:$0xff]
    %v804 = vld [vmem:[#allocation7 + $0xd18] sm:$0xff]
    %v805 = vld [vmem:[#allocation7 + $0xd20] sm:$0xff]
    %v806 = vld [vmem:[#allocation7 + $0xd28] sm:$0xff]
    %v807 = vld [vmem:[#allocation7 + $0xd30] sm:$0xff]
    %v808 = vld [vmem:[#allocation7 + $0xd38] sm:$0xff]
    %v809 = vld [vmem:[#allocation7 + $0xd40] sm:$0xff]
    %v810 = vld [vmem:[#allocation7 + $0xd48] sm:$0xff]
    %v811 = vld [vmem:[#allocation7 + $0xd50] sm:$0xff]
    %v812 = vld [vmem:[#allocation7 + $0xd58] sm:$0xff]
    %v813 = vld [vmem:[#allocation7 + $0xd60] sm:$0xff]
    %v814 = vld [vmem:[#allocation7 + $0xd68] sm:$0xff]
    %v815 = vld [vmem:[#allocation7 + $0xd70] sm:$0xff]
    %v816 = vld [vmem:[#allocation7 + $0xd78] sm:$0xff]
    %v817 = vld [vmem:[#allocation7 + $0xd80] sm:$0xff]
    %v818 = vld [vmem:[#allocation7 + $0xd88] sm:$0xff]
    %v819 = vld [vmem:[#allocation7 + $0xd90] sm:$0xff]
    %v820 = vld [vmem:[#allocation7 + $0xd98] sm:$0xff]
    %v821 = vld [vmem:[#allocation7 + $0xda0] sm:$0xff]
    %v822 = vld [vmem:[#allocation7 + $0xda8] sm:$0xff]
    %v823 = vld [vmem:[#allocation7 + $0xdb0] sm:$0xff]
    %v824 = vld [vmem:[#allocation7 + $0xdb8] sm:$0xff]
    %v825 = vld [vmem:[#allocation7 + $0xdc0] sm:$0xff]
    %v826 = vld [vmem:[#allocation7 + $0xdc8] sm:$0xff]
    %v827 = vld [vmem:[#allocation7 + $0xdd0] sm:$0xff]
    %v828 = vld [vmem:[#allocation7 + $0xdd8] sm:$0xff]
    %v829 = vld [vmem:[#allocation7 + $0xde0] sm:$0xff]
    %v830 = vld [vmem:[#allocation7 + $0xde8] sm:$0xff]
    %v831 = vld [vmem:[#allocation7 + $0xdf0] sm:$0xff]
    %v832 = vld [vmem:[#allocation7 + $0xdf8] sm:$0xff]
    %v833 = vld [vmem:[#allocation7 + $0xe00] sm:$0xff]
    %v834 = vld [vmem:[#allocation7 + $0xe08] sm:$0xff]
    %v835 = vld [vmem:[#allocation7 + $0xe10] sm:$0xff]
    %v836 = vld [vmem:[#allocation7 + $0xe18] sm:$0xff]
    %v837 = vld [vmem:[#allocation7 + $0xe20] sm:$0xff]
    %v838 = vld [vmem:[#allocation7 + $0xe28] sm:$0xff]
    %v839 = vld [vmem:[#allocation7 + $0xe30] sm:$0xff]
    %v840 = vld [vmem:[#allocation7 + $0xe38] sm:$0xff]
    %v841 = vld [vmem:[#allocation7 + $0xe40] sm:$0xff]
    %v842 = vld [vmem:[#allocation7 + $0xe48] sm:$0xff]
    %v843 = vld [vmem:[#allocation7 + $0xe50] sm:$0xff]
    %v844 = vld [vmem:[#allocation7 + $0xe58] sm:$0xff]
    %v845 = vld [vmem:[#allocation7 + $0xe60] sm:$0xff]
    %v846 = vld [vmem:[#allocation7 + $0xe68] sm:$0xff]
    %v847 = vld [vmem:[#allocation7 + $0xe70] sm:$0xff]
    %v848 = vld [vmem:[#allocation7 + $0xe78] sm:$0xff]
    %v849 = vld [vmem:[#allocation7 + $0xe80] sm:$0xff]
    %v850 = vld [vmem:[#allocation7 + $0xe88] sm:$0xff]
    %v851 = vld [vmem:[#allocation7 + $0xe90] sm:$0xff]
    %v852 = vld [vmem:[#allocation7 + $0xe98] sm:$0xff]
    %v853 = vld [vmem:[#allocation7 + $0xea0] sm:$0xff]
    %v854 = vld [vmem:[#allocation7 + $0xea8] sm:$0xff]
    %v855 = vld [vmem:[#allocation7 + $0xeb0] sm:$0xff]
    %v856 = vld [vmem:[#allocation7 + $0xeb8] sm:$0xff]
    %v857 = vld [vmem:[#allocation7 + $0xec0] sm:$0xff]
    %v858 = vld [vmem:[#allocation7 + $0xec8] sm:$0xff]
    %v859 = vld [vmem:[#allocation7 + $0xed0] sm:$0xff]
    %v860 = vld [vmem:[#allocation7 + $0xed8] sm:$0xff]
    %v861 = vld [vmem:[#allocation7 + $0xee0] sm:$0xff]
    %v862 = vld [vmem:[#allocation7 + $0xee8] sm:$0xff]
    %v863 = vld [vmem:[#allocation7 + $0xef0] sm:$0xff]
    %v864 = vld [vmem:[#allocation7 + $0xef8] sm:$0xff]
    %v865 = vld [vmem:[#allocation7 + $0xf00] sm:$0xff]
    %v866 = vld [vmem:[#allocation7 + $0xf08] sm:$0xff]
    %v867 = vld [vmem:[#allocation7 + $0xf10] sm:$0xff]
    %v868 = vld [vmem:[#allocation7 + $0xf18] sm:$0xff]
    %v869 = vld [vmem:[#allocation7 + $0xf20] sm:$0xff]
    %v870 = vld [vmem:[#allocation7 + $0xf28] sm:$0xff]
    %v871 = vld [vmem:[#allocation7 + $0xf30] sm:$0xff]
    %v872 = vld [vmem:[#allocation7 + $0xf38] sm:$0xff]
    %v873 = vld [vmem:[#allocation7 + $0xf40] sm:$0xff]
    %v874 = vld [vmem:[#allocation7 + $0xf48] sm:$0xff]
    %v875 = vld [vmem:[#allocation7 + $0xf50] sm:$0xff]
    %v876 = vld [vmem:[#allocation7 + $0xf58] sm:$0xff]
    %v877 = vld [vmem:[#allocation7 + $0xf60] sm:$0xff]
    %v878 = vld [vmem:[#allocation7 + $0xf68] sm:$0xff]
    %v879 = vld [vmem:[#allocation7 + $0xf70] sm:$0xff]
    %v880 = vld [vmem:[#allocation7 + $0xf78] sm:$0xff]
    %v881 = vld [vmem:[#allocation7 + $0xf80] sm:$0xff]
    %v882 = vld [vmem:[#allocation7 + $0xf88] sm:$0xff]
    %v883 = vld [vmem:[#allocation7 + $0xf90] sm:$0xff]
    %v884 = vld [vmem:[#allocation7 + $0xf98] sm:$0xff]
    %v885 = vld [vmem:[#allocation7 + $0xfa0] sm:$0xff]
    %v886 = vld [vmem:[#allocation7 + $0xfa8] sm:$0xff]
    %v887 = vld [vmem:[#allocation7 + $0xfb0] sm:$0xff]
    %v888 = vld [vmem:[#allocation7 + $0xfb8] sm:$0xff]
    %v889 = vld [vmem:[#allocation7 + $0xfc0] sm:$0xff]
    %v890 = vld [vmem:[#allocation7 + $0xfc8] sm:$0xff]
    %v891 = vld [vmem:[#allocation7 + $0xfd0] sm:$0xff]
    %v892 = vld [vmem:[#allocation7 + $0xfd8] sm:$0xff]
    %v893 = vld [vmem:[#allocation7 + $0xfe0] sm:$0xff]
    %v894 = vld [vmem:[#allocation7 + $0xfe8] sm:$0xff]
    %v895 = vld [vmem:[#allocation7 + $0xff0] sm:$0xff]
    %v896 = vld [vmem:[#allocation7 + $0xff8] sm:$0xff]
    %v897 = vld [vmem:[#allocation7 + $0x1000] sm:$0xff]
    %v898 = vld [vmem:[#allocation7 + $0x1008] sm:$0xff]
    %v899 = vld [vmem:[#allocation7 + $0x1010] sm:$0xff]
    %v900 = vld [vmem:[#allocation7 + $0x1018] sm:$0xff]
    %v901 = vld [vmem:[#allocation7 + $0x1020] sm:$0xff]
    %v902 = vld [vmem:[#allocation7 + $0x1028] sm:$0xff]
    %v903 = vld [vmem:[#allocation7 + $0x1030] sm:$0xff]
    %v904 = vld [vmem:[#allocation7 + $0x1038] sm:$0xff]
    %v905 = vld [vmem:[#allocation7 + $0x1040] sm:$0xff]
    %v906 = vld [vmem:[#allocation7 + $0x1048] sm:$0xff]
    %v907 = vld [vmem:[#allocation7 + $0x1050] sm:$0xff]
    %v908 = vld [vmem:[#allocation7 + $0x1058] sm:$0xff]
    %v909 = vld [vmem:[#allocation7 + $0x1060] sm:$0xff]
    %v910 = vld [vmem:[#allocation7 + $0x1068] sm:$0xff]
    %v911 = vld [vmem:[#allocation7 + $0x1070] sm:$0xff]
    %v912 = vld [vmem:[#allocation7 + $0x1078] sm:$0xff]
    %v913 = vld [vmem:[#allocation7 + $0x1080] sm:$0xff]
    %v914 = vld [vmem:[#allocation7 + $0x1088] sm:$0xff]
    %v915 = vld [vmem:[#allocation7 + $0x1090] sm:$0xff]
    %v916 = vld [vmem:[#allocation7 + $0x1098] sm:$0xff]
    %v917 = vld [vmem:[#allocation7 + $0x10a0] sm:$0xff]
    %v918 = vld [vmem:[#allocation7 + $0x10a8] sm:$0xff]
    %v919 = vld [vmem:[#allocation7 + $0x10b0] sm:$0xff]
    %v920 = vld [vmem:[#allocation7 + $0x10b8] sm:$0xff]
    %v921 = vld [vmem:[#allocation7 + $0x10c0] sm:$0xff]
    %v922 = vld [vmem:[#allocation7 + $0x10c8] sm:$0xff]
    %v923 = vld [vmem:[#allocation7 + $0x10d0] sm:$0xff]
    %v924 = vld [vmem:[#allocation7 + $0x10d8] sm:$0xff]
    %v925 = vld [vmem:[#allocation7 + $0x10e0] sm:$0xff]
    %v926 = vld [vmem:[#allocation7 + $0x10e8] sm:$0xff]
    %v927 = vld [vmem:[#allocation7 + $0x10f0] sm:$0xff]
    %v928 = vld [vmem:[#allocation7 + $0x10f8] sm:$0xff]
    %v929 = vld [vmem:[#allocation7 + $0x1100] sm:$0xff]
    %v930 = vld [vmem:[#allocation7 + $0x1108] sm:$0xff]
    %v931 = vld [vmem:[#allocation7 + $0x1110] sm:$0xff]
    %v932 = vld [vmem:[#allocation7 + $0x1118] sm:$0xff]
    %v933 = vld [vmem:[#allocation7 + $0x1120] sm:$0xff]
    %v934 = vld [vmem:[#allocation7 + $0x1128] sm:$0xff]
    %v935 = vld [vmem:[#allocation7 + $0x1130] sm:$0xff]
    %v936 = vld [vmem:[#allocation7 + $0x1138] sm:$0xff]
    %v937 = vld [vmem:[#allocation7 + $0x1140] sm:$0xff]
    %v938 = vld [vmem:[#allocation7 + $0x1148] sm:$0xff]
    %v939 = vld [vmem:[#allocation7 + $0x1150] sm:$0xff]
    %v940 = vld [vmem:[#allocation7 + $0x1158] sm:$0xff]
    %v941 = vld [vmem:[#allocation7 + $0x1160] sm:$0xff]
    %v942 = vld [vmem:[#allocation7 + $0x1168] sm:$0xff]
    %v943 = vld [vmem:[#allocation7 + $0x1170] sm:$0xff]
    %v944 = vld [vmem:[#allocation7 + $0x1178] sm:$0xff]
    %v945 = vld [vmem:[#allocation7 + $0x1180] sm:$0xff]
    %v946 = vld [vmem:[#allocation7 + $0x1188] sm:$0xff]
    %v947 = vld [vmem:[#allocation7 + $0x1190] sm:$0xff]
    %v948 = vld [vmem:[#allocation7 + $0x1198] sm:$0xff]
    %v949 = vld [vmem:[#allocation7 + $0x11a0] sm:$0xff]
    %v950 = vld [vmem:[#allocation7 + $0x11a8] sm:$0xff]
    %v951 = vld [vmem:[#allocation7 + $0x11b0] sm:$0xff]
    %v952 = vld [vmem:[#allocation7 + $0x11b8] sm:$0xff]
    %v953 = vld [vmem:[#allocation7 + $0x11c0] sm:$0xff]
    %v954 = vld [vmem:[#allocation7 + $0x11c8] sm:$0xff]
    %v955 = vld [vmem:[#allocation7 + $0x11d0] sm:$0xff]
    %v956 = vld [vmem:[#allocation7 + $0x11d8] sm:$0xff]
    %v957 = vld [vmem:[#allocation7 + $0x11e0] sm:$0xff]
    %v958 = vld [vmem:[#allocation7 + $0x11e8] sm:$0xff]
    %v959 = vld [vmem:[#allocation7 + $0x11f0] sm:$0xff]
    %v960 = vld [vmem:[#allocation7 + $0x11f8] sm:$0xff]
    %v961 = vld [vmem:[#allocation7 + $0x1200] sm:$0xff]
    %v962 = vld [vmem:[#allocation7 + $0x1208] sm:$0xff]
    %v963 = vld [vmem:[#allocation7 + $0x1210] sm:$0xff]
    %v964 = vld [vmem:[#allocation7 + $0x1218] sm:$0xff]
    %v965 = vld [vmem:[#allocation7 + $0x1220] sm:$0xff]
    %v966 = vld [vmem:[#allocation7 + $0x1228] sm:$0xff]
    %v967 = vld [vmem:[#allocation7 + $0x1230] sm:$0xff]
    %v968 = vld [vmem:[#allocation7 + $0x1238] sm:$0xff]
    %v969 = vld [vmem:[#allocation7 + $0x1240] sm:$0xff]
    %v970 = vld [vmem:[#allocation7 + $0x1248] sm:$0xff]
    %v971 = vld [vmem:[#allocation7 + $0x1250] sm:$0xff]
    %v972 = vld [vmem:[#allocation7 + $0x1258] sm:$0xff]
    %v973 = vld [vmem:[#allocation7 + $0x1260] sm:$0xff]
    %v974 = vld [vmem:[#allocation7 + $0x1268] sm:$0xff]
    %v975 = vld [vmem:[#allocation7 + $0x1270] sm:$0xff]
    %v976 = vld [vmem:[#allocation7 + $0x1278] sm:$0xff]
    %v977 = vld [vmem:[#allocation7 + $0x1280] sm:$0xff]
    %v978 = vld [vmem:[#allocation7 + $0x1288] sm:$0xff]
    %v979 = vld [vmem:[#allocation7 + $0x1290] sm:$0xff]
    %v980 = vld [vmem:[#allocation7 + $0x1298] sm:$0xff]
    %v981 = vld [vmem:[#allocation7 + $0x12a0] sm:$0xff]
    %v982 = vld [vmem:[#allocation7 + $0x12a8] sm:$0xff]
    %v983 = vld [vmem:[#allocation7 + $0x12b0] sm:$0xff]
    %v984 = vld [vmem:[#allocation7 + $0x12b8] sm:$0xff]
    %v985 = vld [vmem:[#allocation7 + $0x12c0] sm:$0xff]
    %v986 = vld [vmem:[#allocation7 + $0x12c8] sm:$0xff]
    %v987 = vld [vmem:[#allocation7 + $0x12d0] sm:$0xff]
    %v988 = vld [vmem:[#allocation7 + $0x12d8] sm:$0xff]
    %v989 = vld [vmem:[#allocation7 + $0x12e0] sm:$0xff]
    %v990 = vld [vmem:[#allocation7 + $0x12e8] sm:$0xff]
    %v991 = vld [vmem:[#allocation7 + $0x12f0] sm:$0xff]
    %v992 = vld [vmem:[#allocation7 + $0x12f8] sm:$0xff]
    %v993 = vld [vmem:[#allocation7 + $0x1300] sm:$0xff]
    %v994 = vld [vmem:[#allocation7 + $0x1308] sm:$0xff]
    %v995 = vld [vmem:[#allocation7 + $0x1310] sm:$0xff]
    %v996 = vld [vmem:[#allocation7 + $0x1318] sm:$0xff]
    %v997 = vld [vmem:[#allocation7 + $0x1320] sm:$0xff]
    %v998 = vld [vmem:[#allocation7 + $0x1328] sm:$0xff]
    %v999 = vld [vmem:[#allocation7 + $0x1330] sm:$0xff]
    %v1000 = vld [vmem:[#allocation7 + $0x1338] sm:$0xff]
    %v1001 = vld [vmem:[#allocation7 + $0x1340] sm:$0xff]
    %v1002 = vld [vmem:[#allocation7 + $0x1348] sm:$0xff]
    %v1003 = vld [vmem:[#allocation7 + $0x1350] sm:$0xff]
    %v1004 = vld [vmem:[#allocation7 + $0x1358] sm:$0xff]
    %v1005 = vld [vmem:[#allocation7 + $0x1360] sm:$0xff]
    %v1006 = vld [vmem:[#allocation7 + $0x1368] sm:$0xff]
    %v1007 = vld [vmem:[#allocation7 + $0x1370] sm:$0xff]
    %v1008 = vld [vmem:[#allocation7 + $0x1378] sm:$0xff]
    %v1009 = vld [vmem:[#allocation7 + $0x1380] sm:$0xff]
    %v1010 = vld [vmem:[#allocation7 + $0x1388] sm:$0xff]
    %v1011 = vld [vmem:[#allocation7 + $0x1390] sm:$0xff]
    %v1012 = vld [vmem:[#allocation7 + $0x1398] sm:$0xff]
    %v1013 = vld [vmem:[#allocation7 + $0x13a0] sm:$0xff]
    %v1014 = vld [vmem:[#allocation7 + $0x13a8] sm:$0xff]
    %v1015 = vld [vmem:[#allocation7 + $0x13b0] sm:$0xff]
    %v1016 = vld [vmem:[#allocation7 + $0x13b8] sm:$0xff]
    %v1017 = vld [vmem:[#allocation7 + $0x13c0] sm:$0xff]
    %v1018 = vld [vmem:[#allocation7 + $0x13c8] sm:$0xff]
    %v1019 = vld [vmem:[#allocation7 + $0x13d0] sm:$0xff]
    %v1020 = vld [vmem:[#allocation7 + $0x13d8] sm:$0xff]
    %v1021 = vld [vmem:[#allocation7 + $0x13e0] sm:$0xff]
    %v1022 = vld [vmem:[#allocation7 + $0x13e8] sm:$0xff]
    %v1023 = vld [vmem:[#allocation7 + $0x13f0] sm:$0xff]
    %v1024 = vld [vmem:[#allocation7 + $0x13f8] sm:$0xff]
    %v1025 = vld [vmem:[#allocation7 + $0x1400] sm:$0xff]
    %v1026 = vld [vmem:[#allocation7 + $0x1408] sm:$0xff]
    %v1027 = vld [vmem:[#allocation7 + $0x1410] sm:$0xff]
    %v1028 = vld [vmem:[#allocation7 + $0x1418] sm:$0xff]
    %v1029 = vld [vmem:[#allocation7 + $0x1420] sm:$0xff]
    %v1030 = vld [vmem:[#allocation7 + $0x1428] sm:$0xff]
    %v1031 = vld [vmem:[#allocation7 + $0x1430] sm:$0xff]
    %v1032 = vld [vmem:[#allocation7 + $0x1438] sm:$0xff]
    %v1033 = vld [vmem:[#allocation7 + $0x1440] sm:$0xff]
    %v1034 = vld [vmem:[#allocation7 + $0x1448] sm:$0xff]
    %v1035 = vld [vmem:[#allocation7 + $0x1450] sm:$0xff]
    %v1036 = vld [vmem:[#allocation7 + $0x1458] sm:$0xff]
    %v1037 = vld [vmem:[#allocation7 + $0x1460] sm:$0xff]
    %v1038 = vld [vmem:[#allocation7 + $0x1468] sm:$0xff]
    %v1039 = vld [vmem:[#allocation7 + $0x1470] sm:$0xff]
    %v1040 = vld [vmem:[#allocation7 + $0x1478] sm:$0xff]
    %v1041 = vld [vmem:[#allocation7 + $0x1480] sm:$0xff]
    %v1042 = vld [vmem:[#allocation7 + $0x1488] sm:$0xff]
    %v1043 = vld [vmem:[#allocation7 + $0x1490] sm:$0xff]
    %v1044 = vld [vmem:[#allocation7 + $0x1498] sm:$0xff]
    %v1045 = vld [vmem:[#allocation7 + $0x14a0] sm:$0xff]
    %v1046 = vld [vmem:[#allocation7 + $0x14a8] sm:$0xff]
    %v1047 = vld [vmem:[#allocation7 + $0x14b0] sm:$0xff]
    %v1048 = vld [vmem:[#allocation7 + $0x14b8] sm:$0xff]
    %v1049 = vld [vmem:[#allocation7 + $0x14c0] sm:$0xff]
    %v1050 = vld [vmem:[#allocation7 + $0x14c8] sm:$0xff]
    %v1051 = vld [vmem:[#allocation7 + $0x14d0] sm:$0xff]
    %v1052 = vld [vmem:[#allocation7 + $0x14d8] sm:$0xff]
    %v1053 = vld [vmem:[#allocation7 + $0x14e0] sm:$0xff]
    %v1054 = vld [vmem:[#allocation7 + $0x14e8] sm:$0xff]
    %v1055 = vld [vmem:[#allocation7 + $0x14f0] sm:$0xff]
    %v1056 = vld [vmem:[#allocation7 + $0x14f8] sm:$0xff]
    %v1057 = vld [vmem:[#allocation7 + $0x1500] sm:$0xff]
    %v1058 = vld [vmem:[#allocation7 + $0x1508] sm:$0xff]
    %v1059 = vld [vmem:[#allocation7 + $0x1510] sm:$0xff]
    %v1060 = vld [vmem:[#allocation7 + $0x1518] sm:$0xff]
    %v1061 = vld [vmem:[#allocation7 + $0x1520] sm:$0xff]
    %v1062 = vld [vmem:[#allocation7 + $0x1528] sm:$0xff]
    %v1063 = vld [vmem:[#allocation7 + $0x1530] sm:$0xff]
    %v1064 = vld [vmem:[#allocation7 + $0x1538] sm:$0xff]
    %v1065 = vld [vmem:[#allocation7 + $0x1540] sm:$0xff]
    %v1066 = vld [vmem:[#allocation7 + $0x1548] sm:$0xff]
    %v1067 = vld [vmem:[#allocation7 + $0x1550] sm:$0xff]
    %v1068 = vld [vmem:[#allocation7 + $0x1558] sm:$0xff]
    %v1069 = vld [vmem:[#allocation7 + $0x1560] sm:$0xff]
    %v1070 = vld [vmem:[#allocation7 + $0x1568] sm:$0xff]
    %v1071 = vld [vmem:[#allocation7 + $0x1570] sm:$0xff]
    %v1072 = vld [vmem:[#allocation7 + $0x1578] sm:$0xff]
    %v1073 = vld [vmem:[#allocation7 + $0x1580] sm:$0xff]
    %v1074 = vld [vmem:[#allocation7 + $0x1588] sm:$0xff]
    %v1075 = vld [vmem:[#allocation7 + $0x1590] sm:$0xff]
    %v1076 = vld [vmem:[#allocation7 + $0x1598] sm:$0xff]
    %v1077 = vld [vmem:[#allocation7 + $0x15a0] sm:$0xff]
    %v1078 = vld [vmem:[#allocation7 + $0x15a8] sm:$0xff]
    %v1079 = vld [vmem:[#allocation7 + $0x15b0] sm:$0xff]
    %v1080 = vld [vmem:[#allocation7 + $0x15b8] sm:$0xff]
    %v1081 = vld [vmem:[#allocation7 + $0x15c0] sm:$0xff]
    %v1082 = vld [vmem:[#allocation7 + $0x15c8] sm:$0xff]
    %v1083 = vld [vmem:[#allocation7 + $0x15d0] sm:$0xff]
    %v1084 = vld [vmem:[#allocation7 + $0x15d8] sm:$0xff]
    %v1085 = vld [vmem:[#allocation7 + $0x15e0] sm:$0xff]
    %v1086 = vld [vmem:[#allocation7 + $0x15e8] sm:$0xff]
    %v1087 = vld [vmem:[#allocation7 + $0x15f0] sm:$0xff]
    %v1088 = vld [vmem:[#allocation7 + $0x15f8] sm:$0xff]
    %v1089 = vld [vmem:[#allocation7 + $0x1600] sm:$0xff]
    %v1090 = vld [vmem:[#allocation7 + $0x1608] sm:$0xff]
    %v1091 = vld [vmem:[#allocation7 + $0x1610] sm:$0xff]
    %v1092 = vld [vmem:[#allocation7 + $0x1618] sm:$0xff]
    %v1093 = vld [vmem:[#allocation7 + $0x1620] sm:$0xff]
    %v1094 = vld [vmem:[#allocation7 + $0x1628] sm:$0xff]
    %v1095 = vld [vmem:[#allocation7 + $0x1630] sm:$0xff]
    %v1096 = vld [vmem:[#allocation7 + $0x1638] sm:$0xff]
    %v1097 = vld [vmem:[#allocation7 + $0x1640] sm:$0xff]
    %v1098 = vld [vmem:[#allocation7 + $0x1648] sm:$0xff]
    %v1099 = vld [vmem:[#allocation7 + $0x1650] sm:$0xff]
    %v1100 = vld [vmem:[#allocation7 + $0x1658] sm:$0xff]
    %v1101 = vld [vmem:[#allocation7 + $0x1660] sm:$0xff]
    %v1102 = vld [vmem:[#allocation7 + $0x1668] sm:$0xff]
    %v1103 = vld [vmem:[#allocation7 + $0x1670] sm:$0xff]
    %v1104 = vld [vmem:[#allocation7 + $0x1678] sm:$0xff]
    %v1105 = vld [vmem:[#allocation7 + $0x1680] sm:$0xff]
    %v1106 = vld [vmem:[#allocation7 + $0x1688] sm:$0xff]
    %v1107 = vld [vmem:[#allocation7 + $0x1690] sm:$0xff]
    %v1108 = vld [vmem:[#allocation7 + $0x1698] sm:$0xff]
    %v1109 = vld [vmem:[#allocation7 + $0x16a0] sm:$0xff]
    %v1110 = vld [vmem:[#allocation7 + $0x16a8] sm:$0xff]
    %v1111 = vld [vmem:[#allocation7 + $0x16b0] sm:$0xff]
    %v1112 = vld [vmem:[#allocation7 + $0x16b8] sm:$0xff]
    %v1113 = vld [vmem:[#allocation7 + $0x16c0] sm:$0xff]
    %v1114 = vld [vmem:[#allocation7 + $0x16c8] sm:$0xff]
    %v1115 = vld [vmem:[#allocation7 + $0x16d0] sm:$0xff]
    %v1116 = vld [vmem:[#allocation7 + $0x16d8] sm:$0xff]
    %v1117 = vld [vmem:[#allocation7 + $0x16e0] sm:$0xff]
    %v1118 = vld [vmem:[#allocation7 + $0x16e8] sm:$0xff]
    %v1119 = vld [vmem:[#allocation7 + $0x16f0] sm:$0xff]
    %v1120 = vld [vmem:[#allocation7 + $0x16f8] sm:$0xff]
    %v1121 = vld [vmem:[#allocation7 + $0x1700] sm:$0xff]
    %v1122 = vld [vmem:[#allocation7 + $0x1708] sm:$0xff]
    %v1123 = vld [vmem:[#allocation7 + $0x1710] sm:$0xff]
    %v1124 = vld [vmem:[#allocation7 + $0x1718] sm:$0xff]
    %v1125 = vld [vmem:[#allocation7 + $0x1720] sm:$0xff]
    %v1126 = vld [vmem:[#allocation7 + $0x1728] sm:$0xff]
    %v1127 = vld [vmem:[#allocation7 + $0x1730] sm:$0xff]
    %v1128 = vld [vmem:[#allocation7 + $0x1738] sm:$0xff]
    %v1129 = vld [vmem:[#allocation7 + $0x1740] sm:$0xff]
    %v1130 = vld [vmem:[#allocation7 + $0x1748] sm:$0xff]
    %v1131 = vld [vmem:[#allocation7 + $0x1750] sm:$0xff]
    %v1132 = vld [vmem:[#allocation7 + $0x1758] sm:$0xff]
    %v1133 = vld [vmem:[#allocation7 + $0x1760] sm:$0xff]
    %v1134 = vld [vmem:[#allocation7 + $0x1768] sm:$0xff]
    %v1135 = vld [vmem:[#allocation7 + $0x1770] sm:$0xff]
    %v1136 = vld [vmem:[#allocation7 + $0x1778] sm:$0xff]
    %v1137 = vld [vmem:[#allocation7 + $0x1780] sm:$0xff]
    %v1138 = vld [vmem:[#allocation7 + $0x1788] sm:$0xff]
    %v1139 = vld [vmem:[#allocation7 + $0x1790] sm:$0xff]
    %v1140 = vld [vmem:[#allocation7 + $0x1798] sm:$0xff]
    %v1141 = vld [vmem:[#allocation7 + $0x17a0] sm:$0xff]
    %v1142 = vld [vmem:[#allocation7 + $0x17a8] sm:$0xff]
    %v1143 = vld [vmem:[#allocation7 + $0x17b0] sm:$0xff]
    %v1144 = vld [vmem:[#allocation7 + $0x17b8] sm:$0xff]
    %v1145 = vld [vmem:[#allocation7 + $0x17c0] sm:$0xff]
    %v1146 = vld [vmem:[#allocation7 + $0x17c8] sm:$0xff]
    %v1147 = vld [vmem:[#allocation7 + $0x17d0] sm:$0xff]
    %v1148 = vld [vmem:[#allocation7 + $0x17d8] sm:$0xff]
    %v1149 = vld [vmem:[#allocation7 + $0x17e0] sm:$0xff]
    %v1150 = vld [vmem:[#allocation7 + $0x17e8] sm:$0xff]
    %v1151 = vld [vmem:[#allocation7 + $0x17f0] sm:$0xff]
    %v1152 = vld [vmem:[#allocation7 + $0x17f8] sm:$0xff]
    %v1153 = vld [vmem:[#allocation7 + $0x1800] sm:$0xff]
    %v1154 = vld [vmem:[#allocation7 + $0x1808] sm:$0xff]
    %v1155 = vld [vmem:[#allocation7 + $0x1810] sm:$0xff]
    %v1156 = vld [vmem:[#allocation7 + $0x1818] sm:$0xff]
    %v1157 = vld [vmem:[#allocation7 + $0x1820] sm:$0xff]
    %v1158 = vld [vmem:[#allocation7 + $0x1828] sm:$0xff]
    %v1159 = vld [vmem:[#allocation7 + $0x1830] sm:$0xff]
    %v1160 = vld [vmem:[#allocation7 + $0x1838] sm:$0xff]
    %v1161 = vld [vmem:[#allocation7 + $0x1840] sm:$0xff]
    %v1162 = vld [vmem:[#allocation7 + $0x1848] sm:$0xff]
    %v1163 = vld [vmem:[#allocation7 + $0x1850] sm:$0xff]
    %v1164 = vld [vmem:[#allocation7 + $0x1858] sm:$0xff]
    %v1165 = vld [vmem:[#allocation7 + $0x1860] sm:$0xff]
    %v1166 = vld [vmem:[#allocation7 + $0x1868] sm:$0xff]
    %v1167 = vld [vmem:[#allocation7 + $0x1870] sm:$0xff]
    %v1168 = vld [vmem:[#allocation7 + $0x1878] sm:$0xff]
    %v1169 = vld [vmem:[#allocation7 + $0x1880] sm:$0xff]
    %v1170 = vld [vmem:[#allocation7 + $0x1888] sm:$0xff]
    %v1171 = vld [vmem:[#allocation7 + $0x1890] sm:$0xff]
    %v1172 = vld [vmem:[#allocation7 + $0x1898] sm:$0xff]
    %v1173 = vld [vmem:[#allocation7 + $0x18a0] sm:$0xff]
    %v1174 = vld [vmem:[#allocation7 + $0x18a8] sm:$0xff]
    %v1175 = vld [vmem:[#allocation7 + $0x18b0] sm:$0xff]
    %v1176 = vld [vmem:[#allocation7 + $0x18b8] sm:$0xff]
    %v1177 = vld [vmem:[#allocation7 + $0x18c0] sm:$0xff]
    %v1178 = vld [vmem:[#allocation7 + $0x18c8] sm:$0xff]
    %v1179 = vld [vmem:[#allocation7 + $0x18d0] sm:$0xff]
    %v1180 = vld [vmem:[#allocation7 + $0x18d8] sm:$0xff]
    %v1181 = vld [vmem:[#allocation7 + $0x18e0] sm:$0xff]
    %v1182 = vld [vmem:[#allocation7 + $0x18e8] sm:$0xff]
    %v1183 = vld [vmem:[#allocation7 + $0x18f0] sm:$0xff]
    %v1184 = vld [vmem:[#allocation7 + $0x18f8] sm:$0xff]
    %v1185 = vld [vmem:[#allocation7 + $0x1900] sm:$0xff]
    %v1186 = vld [vmem:[#allocation7 + $0x1908] sm:$0xff]
    %v1187 = vld [vmem:[#allocation7 + $0x1910] sm:$0xff]
    %v1188 = vld [vmem:[#allocation7 + $0x1918] sm:$0xff]
    %v1189 = vld [vmem:[#allocation7 + $0x1920] sm:$0xff]
    %v1190 = vld [vmem:[#allocation7 + $0x1928] sm:$0xff]
    %v1191 = vld [vmem:[#allocation7 + $0x1930] sm:$0xff]
    %v1192 = vld [vmem:[#allocation7 + $0x1938] sm:$0xff]
    %v1193 = vld [vmem:[#allocation7 + $0x1940] sm:$0xff]
    %v1194 = vld [vmem:[#allocation7 + $0x1948] sm:$0xff]
    %v1195 = vld [vmem:[#allocation7 + $0x1950] sm:$0xff]
    %v1196 = vld [vmem:[#allocation7 + $0x1958] sm:$0xff]
    %v1197 = vld [vmem:[#allocation7 + $0x1960] sm:$0xff]
    %v1198 = vld [vmem:[#allocation7 + $0x1968] sm:$0xff]
    %v1199 = vld [vmem:[#allocation7 + $0x1970] sm:$0xff]
    %v1200 = vld [vmem:[#allocation7 + $0x1978] sm:$0xff]
    %v1201 = vld [vmem:[#allocation7 + $0x1980] sm:$0xff]
    %v1202 = vld [vmem:[#allocation7 + $0x1988] sm:$0xff]
    %v1203 = vld [vmem:[#allocation7 + $0x1990] sm:$0xff]
    %v1204 = vld [vmem:[#allocation7 + $0x1998] sm:$0xff]
    %v1205 = vld [vmem:[#allocation7 + $0x19a0] sm:$0xff]
    %v1206 = vld [vmem:[#allocation7 + $0x19a8] sm:$0xff]
    %v1207 = vld [vmem:[#allocation7 + $0x19b0] sm:$0xff]
    %v1208 = vld [vmem:[#allocation7 + $0x19b8] sm:$0xff]
    %v1209 = vld [vmem:[#allocation7 + $0x19c0] sm:$0xff]
    %v1210 = vld [vmem:[#allocation7 + $0x19c8] sm:$0xff]
    %v1211 = vld [vmem:[#allocation7 + $0x19d0] sm:$0xff]
    %v1212 = vld [vmem:[#allocation7 + $0x19d8] sm:$0xff]
    %v1213 = vld [vmem:[#allocation7 + $0x19e0] sm:$0xff]
    %v1214 = vld [vmem:[#allocation7 + $0x19e8] sm:$0xff]
    %v1215 = vld [vmem:[#allocation7 + $0x19f0] sm:$0xff]
    %v1216 = vld [vmem:[#allocation7 + $0x19f8] sm:$0xff]
    %v1217 = vld [vmem:[#allocation7 + $0x1a00] sm:$0xff]
    %v1218 = vld [vmem:[#allocation7 + $0x1a08] sm:$0xff]
    %v1219 = vld [vmem:[#allocation7 + $0x1a10] sm:$0xff]
    %v1220 = vld [vmem:[#allocation7 + $0x1a18] sm:$0xff]
    %v1221 = vld [vmem:[#allocation7 + $0x1a20] sm:$0xff]
    %v1222 = vld [vmem:[#allocation7 + $0x1a28] sm:$0xff]
    %v1223 = vld [vmem:[#allocation7 + $0x1a30] sm:$0xff]
    %v1224 = vld [vmem:[#allocation7 + $0x1a38] sm:$0xff]
    %v1225 = vld [vmem:[#allocation7 + $0x1a40] sm:$0xff]
    %v1226 = vld [vmem:[#allocation7 + $0x1a48] sm:$0xff]
    %v1227 = vld [vmem:[#allocation7 + $0x1a50] sm:$0xff]
    %v1228 = vld [vmem:[#allocation7 + $0x1a58] sm:$0xff]
    %v1229 = vld [vmem:[#allocation7 + $0x1a60] sm:$0xff]
    %v1230 = vld [vmem:[#allocation7 + $0x1a68] sm:$0xff]
    %v1231 = vld [vmem:[#allocation7 + $0x1a70] sm:$0xff]
    %v1232 = vld [vmem:[#allocation7 + $0x1a78] sm:$0xff]
    %v1233 = vld [vmem:[#allocation7 + $0x1a80] sm:$0xff]
    %v1234 = vld [vmem:[#allocation7 + $0x1a88] sm:$0xff]
    %v1235 = vld [vmem:[#allocation7 + $0x1a90] sm:$0xff]
    %v1236 = vld [vmem:[#allocation7 + $0x1a98] sm:$0xff]
    %v1237 = vld [vmem:[#allocation7 + $0x1aa0] sm:$0xff]
    %v1238 = vld [vmem:[#allocation7 + $0x1aa8] sm:$0xff]
    %v1239 = vld [vmem:[#allocation7 + $0x1ab0] sm:$0xff]
    %v1240 = vld [vmem:[#allocation7 + $0x1ab8] sm:$0xff]
    %v1241 = vld [vmem:[#allocation7 + $0x1ac0] sm:$0xff]
    %v1242 = vld [vmem:[#allocation7 + $0x1ac8] sm:$0xff]
    %v1243 = vld [vmem:[#allocation7 + $0x1ad0] sm:$0xff]
    %v1244 = vld [vmem:[#allocation7 + $0x1ad8] sm:$0xff]
    %v1245 = vld [vmem:[#allocation7 + $0x1ae0] sm:$0xff]
    %v1246 = vld [vmem:[#allocation7 + $0x1ae8] sm:$0xff]
    %v1247 = vld [vmem:[#allocation7 + $0x1af0] sm:$0xff]
    %v1248 = vld [vmem:[#allocation7 + $0x1af8] sm:$0xff]
    %v1249 = vld [vmem:[#allocation7 + $0x1b00] sm:$0xff]
    %v1250 = vld [vmem:[#allocation7 + $0x1b08] sm:$0xff]
    %v1251 = vld [vmem:[#allocation7 + $0x1b10] sm:$0xff]
    %v1252 = vld [vmem:[#allocation7 + $0x1b18] sm:$0xff]
    %v1253 = vld [vmem:[#allocation7 + $0x1b20] sm:$0xff]
    %v1254 = vld [vmem:[#allocation7 + $0x1b28] sm:$0xff]
    %v1255 = vld [vmem:[#allocation7 + $0x1b30] sm:$0xff]
    %v1256 = vld [vmem:[#allocation7 + $0x1b38] sm:$0xff]
    %v1257 = vld [vmem:[#allocation7 + $0x1b40] sm:$0xff]
    %v1258 = vld [vmem:[#allocation7 + $0x1b48] sm:$0xff]
    %v1259 = vld [vmem:[#allocation7 + $0x1b50] sm:$0xff]
    %v1260 = vld [vmem:[#allocation7 + $0x1b58] sm:$0xff]
    %v1261 = vld [vmem:[#allocation7 + $0x1b60] sm:$0xff]
    %v1262 = vld [vmem:[#allocation7 + $0x1b68] sm:$0xff]
    %v1263 = vld [vmem:[#allocation7 + $0x1b70] sm:$0xff]
    %v1264 = vld [vmem:[#allocation7 + $0x1b78] sm:$0xff]
    %v1265 = vld [vmem:[#allocation7 + $0x1b80] sm:$0xff]
    %v1266 = vld [vmem:[#allocation7 + $0x1b88] sm:$0xff]
    %v1267 = vld [vmem:[#allocation7 + $0x1b90] sm:$0xff]
    %v1268 = vld [vmem:[#allocation7 + $0x1b98] sm:$0xff]
    %v1269 = vld [vmem:[#allocation7 + $0x1ba0] sm:$0xff]
    %v1270 = vld [vmem:[#allocation7 + $0x1ba8] sm:$0xff]
    %v1271 = vld [vmem:[#allocation7 + $0x1bb0] sm:$0xff]
    %v1272 = vld [vmem:[#allocation7 + $0x1bb8] sm:$0xff]
    %v1273 = vld [vmem:[#allocation7 + $0x1bc0] sm:$0xff]
    %v1274 = vld [vmem:[#allocation7 + $0x1bc8] sm:$0xff]
    %v1275 = vld [vmem:[#allocation7 + $0x1bd0] sm:$0xff]
    %v1276 = vld [vmem:[#allocation7 + $0x1bd8] sm:$0xff]
    %v1277 = vld [vmem:[#allocation7 + $0x1be0] sm:$0xff]
    %v1278 = vld [vmem:[#allocation7 + $0x1be8] sm:$0xff]
    %v1279 = vld [vmem:[#allocation7 + $0x1bf0] sm:$0xff]
    %v1280 = vld [vmem:[#allocation7 + $0x1bf8] sm:$0xff]
    %v1281 = vld [vmem:[#allocation7 + $0x1c00] sm:$0xff]
    %v1282 = vld [vmem:[#allocation7 + $0x1c08] sm:$0xff]
    %v1283 = vld [vmem:[#allocation7 + $0x1c10] sm:$0xff]
    %v1284 = vld [vmem:[#allocation7 + $0x1c18] sm:$0xff]
    %v1285 = vld [vmem:[#allocation7 + $0x1c20] sm:$0xff]
    %v1286 = vld [vmem:[#allocation7 + $0x1c28] sm:$0xff]
    %v1287 = vld [vmem:[#allocation7 + $0x1c30] sm:$0xff]
    %v1288 = vld [vmem:[#allocation7 + $0x1c38] sm:$0xff]
    %v1289 = vld [vmem:[#allocation7 + $0x1c40] sm:$0xff]
    %v1290 = vld [vmem:[#allocation7 + $0x1c48] sm:$0xff]
    %v1291 = vld [vmem:[#allocation7 + $0x1c50] sm:$0xff]
    %v1292 = vld [vmem:[#allocation7 + $0x1c58] sm:$0xff]
    %v1293 = vld [vmem:[#allocation7 + $0x1c60] sm:$0xff]
    %v1294 = vld [vmem:[#allocation7 + $0x1c68] sm:$0xff]
    %v1295 = vld [vmem:[#allocation7 + $0x1c70] sm:$0xff]
    %v1296 = vld [vmem:[#allocation7 + $0x1c78] sm:$0xff]
    %v1297 = vld [vmem:[#allocation7 + $0x1c80] sm:$0xff]
    %v1298 = vld [vmem:[#allocation7 + $0x1c88] sm:$0xff]
    %v1299 = vld [vmem:[#allocation7 + $0x1c90] sm:$0xff]
    %v1300 = vld [vmem:[#allocation7 + $0x1c98] sm:$0xff]
    %v1301 = vld [vmem:[#allocation7 + $0x1ca0] sm:$0xff]
    %v1302 = vld [vmem:[#allocation7 + $0x1ca8] sm:$0xff]
    %v1303 = vld [vmem:[#allocation7 + $0x1cb0] sm:$0xff]
    %v1304 = vld [vmem:[#allocation7 + $0x1cb8] sm:$0xff]
    %v1305 = vld [vmem:[#allocation7 + $0x1cc0] sm:$0xff]
    %v1306 = vld [vmem:[#allocation7 + $0x1cc8] sm:$0xff]
    %v1307 = vld [vmem:[#allocation7 + $0x1cd0] sm:$0xff]
    %v1308 = vld [vmem:[#allocation7 + $0x1cd8] sm:$0xff]
    %v1309 = vld [vmem:[#allocation7 + $0x1ce0] sm:$0xff]
    %v1310 = vld [vmem:[#allocation7 + $0x1ce8] sm:$0xff]
    %v1311 = vld [vmem:[#allocation7 + $0x1cf0] sm:$0xff]
    %v1312 = vld [vmem:[#allocation7 + $0x1cf8] sm:$0xff]
    %v1313 = vld [vmem:[#allocation7 + $0x1d00] sm:$0xff]
    %v1314 = vld [vmem:[#allocation7 + $0x1d08] sm:$0xff]
    %v1315 = vld [vmem:[#allocation7 + $0x1d10] sm:$0xff]
    %v1316 = vld [vmem:[#allocation7 + $0x1d18] sm:$0xff]
    %v1317 = vld [vmem:[#allocation7 + $0x1d20] sm:$0xff]
    %v1318 = vld [vmem:[#allocation7 + $0x1d28] sm:$0xff]
    %v1319 = vld [vmem:[#allocation7 + $0x1d30] sm:$0xff]
    %v1320 = vld [vmem:[#allocation7 + $0x1d38] sm:$0xff]
    %v1321 = vld [vmem:[#allocation7 + $0x1d40] sm:$0xff]
    %v1322 = vld [vmem:[#allocation7 + $0x1d48] sm:$0xff]
    %v1323 = vld [vmem:[#allocation7 + $0x1d50] sm:$0xff]
    %v1324 = vld [vmem:[#allocation7 + $0x1d58] sm:$0xff]
    %v1325 = vld [vmem:[#allocation7 + $0x1d60] sm:$0xff]
    %v1326 = vld [vmem:[#allocation7 + $0x1d68] sm:$0xff]
    %v1327 = vld [vmem:[#allocation7 + $0x1d70] sm:$0xff]
    %v1328 = vld [vmem:[#allocation7 + $0x1d78] sm:$0xff]
    %v1329 = vld [vmem:[#allocation7 + $0x1d80] sm:$0xff]
    %v1330 = vld [vmem:[#allocation7 + $0x1d88] sm:$0xff]
    %v1331 = vld [vmem:[#allocation7 + $0x1d90] sm:$0xff]
    %v1332 = vld [vmem:[#allocation7 + $0x1d98] sm:$0xff]
    %v1333 = vld [vmem:[#allocation7 + $0x1da0] sm:$0xff]
    %v1334 = vld [vmem:[#allocation7 + $0x1da8] sm:$0xff]
    %v1335 = vld [vmem:[#allocation7 + $0x1db0] sm:$0xff]
    %v1336 = vld [vmem:[#allocation7 + $0x1db8] sm:$0xff]
    %v1337 = vld [vmem:[#allocation7 + $0x1dc0] sm:$0xff]
    %v1338 = vld [vmem:[#allocation7 + $0x1dc8] sm:$0xff]
    %v1339 = vld [vmem:[#allocation7 + $0x1dd0] sm:$0xff]
    %v1340 = vld [vmem:[#allocation7 + $0x1dd8] sm:$0xff]
    %v1341 = vld [vmem:[#allocation7 + $0x1de0] sm:$0xff]
    %v1342 = vld [vmem:[#allocation7 + $0x1de8] sm:$0xff]
    %v1343 = vld [vmem:[#allocation7 + $0x1df0] sm:$0xff]
    %v1344 = vld [vmem:[#allocation7 + $0x1df8] sm:$0xff]
    %v1345 = vld [vmem:[#allocation7 + $0x1e00] sm:$0xff]
    %v1346 = vld [vmem:[#allocation7 + $0x1e08] sm:$0xff]
    %v1347 = vld [vmem:[#allocation7 + $0x1e10] sm:$0xff]
    %v1348 = vld [vmem:[#allocation7 + $0x1e18] sm:$0xff]
    %v1349 = vld [vmem:[#allocation7 + $0x1e20] sm:$0xff]
    %v1350 = vld [vmem:[#allocation7 + $0x1e28] sm:$0xff]
    %v1351 = vld [vmem:[#allocation7 + $0x1e30] sm:$0xff]
    %v1352 = vld [vmem:[#allocation7 + $0x1e38] sm:$0xff]
    %v1353 = vld [vmem:[#allocation7 + $0x1e40] sm:$0xff]
    %v1354 = vld [vmem:[#allocation7 + $0x1e48] sm:$0xff]
    %v1355 = vld [vmem:[#allocation7 + $0x1e50] sm:$0xff]
    %v1356 = vld [vmem:[#allocation7 + $0x1e58] sm:$0xff]
    %v1357 = vld [vmem:[#allocation7 + $0x1e60] sm:$0xff]
    %v1358 = vld [vmem:[#allocation7 + $0x1e68] sm:$0xff]
    %v1359 = vld [vmem:[#allocation7 + $0x1e70] sm:$0xff]
    %v1360 = vld [vmem:[#allocation7 + $0x1e78] sm:$0xff]
    %v1361 = vld [vmem:[#allocation7 + $0x1e80] sm:$0xff]
    %v1362 = vld [vmem:[#allocation7 + $0x1e88] sm:$0xff]
    %v1363 = vld [vmem:[#allocation7 + $0x1e90] sm:$0xff]
    %v1364 = vld [vmem:[#allocation7 + $0x1e98] sm:$0xff]
    %v1365 = vld [vmem:[#allocation7 + $0x1ea0] sm:$0xff]
    %v1366 = vld [vmem:[#allocation7 + $0x1ea8] sm:$0xff]
    %v1367 = vld [vmem:[#allocation7 + $0x1eb0] sm:$0xff]
    %v1368 = vld [vmem:[#allocation7 + $0x1eb8] sm:$0xff]
    %v1369 = vld [vmem:[#allocation7 + $0x1ec0] sm:$0xff]
    %v1370 = vld [vmem:[#allocation7 + $0x1ec8] sm:$0xff]
    %v1371 = vld [vmem:[#allocation7 + $0x1ed0] sm:$0xff]
    %v1372 = vld [vmem:[#allocation7 + $0x1ed8] sm:$0xff]
    %v1373 = vld [vmem:[#allocation7 + $0x1ee0] sm:$0xff]
    %v1374 = vld [vmem:[#allocation7 + $0x1ee8] sm:$0xff]
    %v1375 = vld [vmem:[#allocation7 + $0x1ef0] sm:$0xff]
    %v1376 = vld [vmem:[#allocation7 + $0x1ef8] sm:$0xff]
    %v1377 = vld [vmem:[#allocation7 + $0x1f00] sm:$0xff]
    %v1378 = vld [vmem:[#allocation7 + $0x1f08] sm:$0xff]
    %v1379 = vld [vmem:[#allocation7 + $0x1f10] sm:$0xff]
    %v1380 = vld [vmem:[#allocation7 + $0x1f18] sm:$0xff]
    %v1381 = vld [vmem:[#allocation7 + $0x1f20] sm:$0xff]
    %v1382 = vld [vmem:[#allocation7 + $0x1f28] sm:$0xff]
    %v1383 = vld [vmem:[#allocation7 + $0x1f30] sm:$0xff]
    %v1384 = vld [vmem:[#allocation7 + $0x1f38] sm:$0xff]
    %v1385 = vld [vmem:[#allocation7 + $0x1f40] sm:$0xff]
    %v1386 = vld [vmem:[#allocation7 + $0x1f48] sm:$0xff]
    %v1387 = vld [vmem:[#allocation7 + $0x1f50] sm:$0xff]
    %v1388 = vld [vmem:[#allocation7 + $0x1f58] sm:$0xff]
    %v1389 = vld [vmem:[#allocation7 + $0x1f60] sm:$0xff]
    %v1390 = vld [vmem:[#allocation7 + $0x1f68] sm:$0xff]
    %v1391 = vld [vmem:[#allocation7 + $0x1f70] sm:$0xff]
    %v1392 = vld [vmem:[#allocation7 + $0x1f78] sm:$0xff]
    %v1393 = vld [vmem:[#allocation7 + $0x1f80] sm:$0xff]
    %v1394 = vld [vmem:[#allocation7 + $0x1f88] sm:$0xff]
    %v1395 = vld [vmem:[#allocation7 + $0x1f90] sm:$0xff]
    %v1396 = vld [vmem:[#allocation7 + $0x1f98] sm:$0xff]
    %v1397 = vld [vmem:[#allocation7 + $0x1fa0] sm:$0xff]
    %v1398 = vld [vmem:[#allocation7 + $0x1fa8] sm:$0xff]
    %v1399 = vld [vmem:[#allocation7 + $0x1fb0] sm:$0xff]
    %v1400 = vld [vmem:[#allocation7 + $0x1fb8] sm:$0xff]
    %v1401 = vld [vmem:[#allocation7 + $0x1fc0] sm:$0xff]
    %v1402 = vld [vmem:[#allocation7 + $0x1fc8] sm:$0xff]
    %v1403 = vld [vmem:[#allocation7 + $0x1fd0] sm:$0xff]
    %v1404 = vld [vmem:[#allocation7 + $0x1fd8] sm:$0xff]
    %v1405 = vld [vmem:[#allocation7 + $0x1fe0] sm:$0xff]
    %v1406 = vld [vmem:[#allocation7 + $0x1fe8] sm:$0xff]
    %v1407 = vld [vmem:[#allocation7 + $0x1ff0] sm:$0xff]
    %v1408 = vld [vmem:[#allocation7 + $0x1ff8] sm:$0xff]
    %v1409 = vld [vmem:[#allocation7 + $0x2000] sm:$0xff]
    %v1410 = vld [vmem:[#allocation7 + $0x2008] sm:$0xff]
    %v1411 = vld [vmem:[#allocation7 + $0x2010] sm:$0xff]
    %v1412 = vld [vmem:[#allocation7 + $0x2018] sm:$0xff]
    %v1413 = vld [vmem:[#allocation7 + $0x2020] sm:$0xff]
    %v1414 = vld [vmem:[#allocation7 + $0x2028] sm:$0xff]
    %v1415 = vld [vmem:[#allocation7 + $0x2030] sm:$0xff]
    %v1416 = vld [vmem:[#allocation7 + $0x2038] sm:$0xff]
    %v1417 = vld [vmem:[#allocation7 + $0x2040] sm:$0xff]
    %v1418 = vld [vmem:[#allocation7 + $0x2048] sm:$0xff]
    %v1419 = vld [vmem:[#allocation7 + $0x2050] sm:$0xff]
    %v1420 = vld [vmem:[#allocation7 + $0x2058] sm:$0xff]
    %v1421 = vld [vmem:[#allocation7 + $0x2060] sm:$0xff]
    %v1422 = vld [vmem:[#allocation7 + $0x2068] sm:$0xff]
    %v1423 = vld [vmem:[#allocation7 + $0x2070] sm:$0xff]
    %v1424 = vld [vmem:[#allocation7 + $0x2078] sm:$0xff]
    %v1425 = vld [vmem:[#allocation7 + $0x2080] sm:$0xff]
    %v1426 = vld [vmem:[#allocation7 + $0x2088] sm:$0xff]
    %v1427 = vld [vmem:[#allocation7 + $0x2090] sm:$0xff]
    %v1428 = vld [vmem:[#allocation7 + $0x2098] sm:$0xff]
    %v1429 = vld [vmem:[#allocation7 + $0x20a0] sm:$0xff]
    %v1430 = vld [vmem:[#allocation7 + $0x20a8] sm:$0xff]
    %v1431 = vld [vmem:[#allocation7 + $0x20b0] sm:$0xff]
    %v1432 = vld [vmem:[#allocation7 + $0x20b8] sm:$0xff]
    %v1433 = vld [vmem:[#allocation7 + $0x20c0] sm:$0xff]
    %v1434 = vld [vmem:[#allocation7 + $0x20c8] sm:$0xff]
    %v1435 = vld [vmem:[#allocation7 + $0x20d0] sm:$0xff]
    %v1436 = vld [vmem:[#allocation7 + $0x20d8] sm:$0xff]
    %v1437 = vld [vmem:[#allocation7 + $0x20e0] sm:$0xff]
    %v1438 = vld [vmem:[#allocation7 + $0x20e8] sm:$0xff]
    %v1439 = vld [vmem:[#allocation7 + $0x20f0] sm:$0xff]
    %v1440 = vld [vmem:[#allocation7 + $0x20f8] sm:$0xff]
    %v1441 = vld [vmem:[#allocation7 + $0x2100] sm:$0xff]
    %v1442 = vld [vmem:[#allocation7 + $0x2108] sm:$0xff]
    %v1443 = vld [vmem:[#allocation7 + $0x2110] sm:$0xff]
    %v1444 = vld [vmem:[#allocation7 + $0x2118] sm:$0xff]
    %v1445 = vld [vmem:[#allocation7 + $0x2120] sm:$0xff]
    %v1446 = vld [vmem:[#allocation7 + $0x2128] sm:$0xff]
    %v1447 = vld [vmem:[#allocation7 + $0x2130] sm:$0xff]
    %v1448 = vld [vmem:[#allocation7 + $0x2138] sm:$0xff]
    %v1449 = vld [vmem:[#allocation7 + $0x2140] sm:$0xff]
    %v1450 = vld [vmem:[#allocation7 + $0x2148] sm:$0xff]
    %v1451 = vld [vmem:[#allocation7 + $0x2150] sm:$0xff]
    %v1452 = vld [vmem:[#allocation7 + $0x2158] sm:$0xff]
    %v1453 = vld [vmem:[#allocation7 + $0x2160] sm:$0xff]
    %v1454 = vld [vmem:[#allocation7 + $0x2168] sm:$0xff]
    %v1455 = vld [vmem:[#allocation7 + $0x2170] sm:$0xff]
    %v1456 = vld [vmem:[#allocation7 + $0x2178] sm:$0xff]
    %v1457 = vld [vmem:[#allocation7 + $0x2180] sm:$0xff]
    %v1458 = vld [vmem:[#allocation7 + $0x2188] sm:$0xff]
    %v1459 = vld [vmem:[#allocation7 + $0x2190] sm:$0xff]
    %v1460 = vld [vmem:[#allocation7 + $0x2198] sm:$0xff]
    %v1461 = vld [vmem:[#allocation7 + $0x21a0] sm:$0xff]
    %v1462 = vld [vmem:[#allocation7 + $0x21a8] sm:$0xff]
    %v1463 = vld [vmem:[#allocation7 + $0x21b0] sm:$0xff]
    %v1464 = vld [vmem:[#allocation7 + $0x21b8] sm:$0xff]
    %v1465 = vld [vmem:[#allocation7 + $0x21c0] sm:$0xff]
    %v1466 = vld [vmem:[#allocation7 + $0x21c8] sm:$0xff]
    %v1467 = vld [vmem:[#allocation7 + $0x21d0] sm:$0xff]
    %v1468 = vld [vmem:[#allocation7 + $0x21d8] sm:$0xff]
    %v1469 = vld [vmem:[#allocation7 + $0x21e0] sm:$0xff]
    %v1470 = vld [vmem:[#allocation7 + $0x21e8] sm:$0xff]
    %v1471 = vld [vmem:[#allocation7 + $0x21f0] sm:$0xff]
    %v1472 = vld [vmem:[#allocation7 + $0x21f8] sm:$0xff]
    %v1473 = vld [vmem:[#allocation7 + $0x2200] sm:$0xff]
    %v1474 = vld [vmem:[#allocation7 + $0x2208] sm:$0xff]
    %v1475 = vld [vmem:[#allocation7 + $0x2210] sm:$0xff]
    %v1476 = vld [vmem:[#allocation7 + $0x2218] sm:$0xff]
    %v1477 = vld [vmem:[#allocation7 + $0x2220] sm:$0xff]
    %v1478 = vld [vmem:[#allocation7 + $0x2228] sm:$0xff]
    %v1479 = vld [vmem:[#allocation7 + $0x2230] sm:$0xff]
    %v1480 = vld [vmem:[#allocation7 + $0x2238] sm:$0xff]
    %v1481 = vld [vmem:[#allocation7 + $0x2240] sm:$0xff]
    %v1482 = vld [vmem:[#allocation7 + $0x2248] sm:$0xff]
    %v1483 = vld [vmem:[#allocation7 + $0x2250] sm:$0xff]
    %v1484 = vld [vmem:[#allocation7 + $0x2258] sm:$0xff]
    %v1485 = vld [vmem:[#allocation7 + $0x2260] sm:$0xff]
    %v1486 = vld [vmem:[#allocation7 + $0x2268] sm:$0xff]
    %v1487 = vld [vmem:[#allocation7 + $0x2270] sm:$0xff]
    %v1488 = vld [vmem:[#allocation7 + $0x2278] sm:$0xff]
    %v1489 = vld [vmem:[#allocation7 + $0x2280] sm:$0xff]
    %v1490 = vld [vmem:[#allocation7 + $0x2288] sm:$0xff]
    %v1491 = vld [vmem:[#allocation7 + $0x2290] sm:$0xff]
    %v1492 = vld [vmem:[#allocation7 + $0x2298] sm:$0xff]
    %v1493 = vld [vmem:[#allocation7 + $0x22a0] sm:$0xff]
    %v1494 = vld [vmem:[#allocation7 + $0x22a8] sm:$0xff]
    %v1495 = vld [vmem:[#allocation7 + $0x22b0] sm:$0xff]
    %v1496 = vld [vmem:[#allocation7 + $0x22b8] sm:$0xff]
    %v1497 = vld [vmem:[#allocation7 + $0x22c0] sm:$0xff]
    %v1498 = vld [vmem:[#allocation7 + $0x22c8] sm:$0xff]
    %v1499 = vld [vmem:[#allocation7 + $0x22d0] sm:$0xff]
    %v1500 = vld [vmem:[#allocation7 + $0x22d8] sm:$0xff]
    %v1501 = vld [vmem:[#allocation7 + $0x22e0] sm:$0xff]
    %v1502 = vld [vmem:[#allocation7 + $0x22e8] sm:$0xff]
    %v1503 = vld [vmem:[#allocation7 + $0x22f0] sm:$0xff]
    %v1504 = vld [vmem:[#allocation7 + $0x22f8] sm:$0xff]
    %v1505 = vld [vmem:[#allocation7 + $0x2300] sm:$0xff]
    %v1506 = vld [vmem:[#allocation7 + $0x2308] sm:$0xff]
    %v1507 = vld [vmem:[#allocation7 + $0x2310] sm:$0xff]
    %v1508 = vld [vmem:[#allocation7 + $0x2318] sm:$0xff]
    %v1509 = vld [vmem:[#allocation7 + $0x2320] sm:$0xff]
    %v1510 = vld [vmem:[#allocation7 + $0x2328] sm:$0xff]
    %v1511 = vld [vmem:[#allocation7 + $0x2330] sm:$0xff]
    %v1512 = vld [vmem:[#allocation7 + $0x2338] sm:$0xff]
    %v1513 = vld [vmem:[#allocation7 + $0x2340] sm:$0xff]
    %v1514 = vld [vmem:[#allocation7 + $0x2348] sm:$0xff]
    %v1515 = vld [vmem:[#allocation7 + $0x2350] sm:$0xff]
    %v1516 = vld [vmem:[#allocation7 + $0x2358] sm:$0xff]
    %v1517 = vld [vmem:[#allocation7 + $0x2360] sm:$0xff]
    %v1518 = vld [vmem:[#allocation7 + $0x2368] sm:$0xff]
    %v1519 = vld [vmem:[#allocation7 + $0x2370] sm:$0xff]
    %v1520 = vld [vmem:[#allocation7 + $0x2378] sm:$0xff]
    %v1521 = vld [vmem:[#allocation7 + $0x2380] sm:$0xff]
    %v1522 = vld [vmem:[#allocation7 + $0x2388] sm:$0xff]
    %v1523 = vld [vmem:[#allocation7 + $0x2390] sm:$0xff]
    %v1524 = vld [vmem:[#allocation7 + $0x2398] sm:$0xff]
    %v1525 = vld [vmem:[#allocation7 + $0x23a0] sm:$0xff]
    %v1526 = vld [vmem:[#allocation7 + $0x23a8] sm:$0xff]
    %v1527 = vld [vmem:[#allocation7 + $0x23b0] sm:$0xff]
    %v1528 = vld [vmem:[#allocation7 + $0x23b8] sm:$0xff]
    %v1529 = vld [vmem:[#allocation7 + $0x23c0] sm:$0xff]
    %v1530 = vld [vmem:[#allocation7 + $0x23c8] sm:$0xff]
    %v1531 = vld [vmem:[#allocation7 + $0x23d0] sm:$0xff]
    %v1532 = vld [vmem:[#allocation7 + $0x23d8] sm:$0xff]
    %v1533 = vld [vmem:[#allocation7 + $0x23e0] sm:$0xff]
    %v1534 = vld [vmem:[#allocation7 + $0x23e8] sm:$0xff]
    %v1535 = vld [vmem:[#allocation7 + $0x23f0] sm:$0xff]
    %v1536 = vld [vmem:[#allocation7 + $0x23f8] sm:$0xff]
    %v1537 = vld [vmem:[#allocation7 + $0x2400] sm:$0xff]
    %v1538 = vld [vmem:[#allocation7 + $0x2408] sm:$0xff]
    %v1539 = vld [vmem:[#allocation7 + $0x2410] sm:$0xff]
    %v1540 = vld [vmem:[#allocation7 + $0x2418] sm:$0xff]
    %v1541 = vld [vmem:[#allocation7 + $0x2420] sm:$0xff]
    %v1542 = vld [vmem:[#allocation7 + $0x2428] sm:$0xff]
    %v1543 = vld [vmem:[#allocation7 + $0x2430] sm:$0xff]
    %v1544 = vld [vmem:[#allocation7 + $0x2438] sm:$0xff]
    %v1545 = vld [vmem:[#allocation7 + $0x2440] sm:$0xff]
    %v1546 = vld [vmem:[#allocation7 + $0x2448] sm:$0xff]
    %v1547 = vld [vmem:[#allocation7 + $0x2450] sm:$0xff]
    %v1548 = vld [vmem:[#allocation7 + $0x2458] sm:$0xff]
    %v1549 = vld [vmem:[#allocation7 + $0x2460] sm:$0xff]
    %v1550 = vld [vmem:[#allocation7 + $0x2468] sm:$0xff]
    %v1551 = vld [vmem:[#allocation7 + $0x2470] sm:$0xff]
    %v1552 = vld [vmem:[#allocation7 + $0x2478] sm:$0xff]
    %v1553 = vld [vmem:[#allocation7 + $0x2480] sm:$0xff]
    %v1554 = vld [vmem:[#allocation7 + $0x2488] sm:$0xff]
    %v1555 = vld [vmem:[#allocation7 + $0x2490] sm:$0xff]
    %v1556 = vld [vmem:[#allocation7 + $0x2498] sm:$0xff]
    %v1557 = vld [vmem:[#allocation7 + $0x24a0] sm:$0xff]
    %v1558 = vld [vmem:[#allocation7 + $0x24a8] sm:$0xff]
    %v1559 = vld [vmem:[#allocation7 + $0x24b0] sm:$0xff]
    %v1560 = vld [vmem:[#allocation7 + $0x24b8] sm:$0xff]
    %v1561 = vld [vmem:[#allocation7 + $0x24c0] sm:$0xff]
    %v1562 = vld [vmem:[#allocation7 + $0x24c8] sm:$0xff]
    %v1563 = vld [vmem:[#allocation7 + $0x24d0] sm:$0xff]
    %v1564 = vld [vmem:[#allocation7 + $0x24d8] sm:$0xff]
    %v1565 = vld [vmem:[#allocation7 + $0x24e0] sm:$0xff]
    %v1566 = vld [vmem:[#allocation7 + $0x24e8] sm:$0xff]
    %v1567 = vld [vmem:[#allocation7 + $0x24f0] sm:$0xff]
    %v1568 = vld [vmem:[#allocation7 + $0x24f8] sm:$0xff]
    %v1569 = vld [vmem:[#allocation7 + $0x2500] sm:$0xff]
    %v1570 = vld [vmem:[#allocation7 + $0x2508] sm:$0xff]
    %v1571 = vld [vmem:[#allocation7 + $0x2510] sm:$0xff]
    %v1572 = vld [vmem:[#allocation7 + $0x2518] sm:$0xff]
    %v1573 = vld [vmem:[#allocation7 + $0x2520] sm:$0xff]
    %v1574 = vld [vmem:[#allocation7 + $0x2528] sm:$0xff]
    %v1575 = vld [vmem:[#allocation7 + $0x2530] sm:$0xff]
    %v1576 = vld [vmem:[#allocation7 + $0x2538] sm:$0xff]
    %v1577 = vld [vmem:[#allocation7 + $0x2540] sm:$0xff]
    %v1578 = vld [vmem:[#allocation7 + $0x2548] sm:$0xff]
    %v1579 = vld [vmem:[#allocation7 + $0x2550] sm:$0xff]
    %v1580 = vld [vmem:[#allocation7 + $0x2558] sm:$0xff]
    %v1581 = vld [vmem:[#allocation7 + $0x2560] sm:$0xff]
    %v1582 = vld [vmem:[#allocation7 + $0x2568] sm:$0xff]
    %v1583 = vld [vmem:[#allocation7 + $0x2570] sm:$0xff]
    %v1584 = vld [vmem:[#allocation7 + $0x2578] sm:$0xff]
    %v1585 = vld [vmem:[#allocation7 + $0x2580] sm:$0xff]
    %v1586 = vld [vmem:[#allocation7 + $0x2588] sm:$0xff]
    %v1587 = vld [vmem:[#allocation7 + $0x2590] sm:$0xff]
    %v1588 = vld [vmem:[#allocation7 + $0x2598] sm:$0xff]
    %v1589 = vld [vmem:[#allocation7 + $0x25a0] sm:$0xff]
    %v1590 = vld [vmem:[#allocation7 + $0x25a8] sm:$0xff]
    %v1591 = vld [vmem:[#allocation7 + $0x25b0] sm:$0xff]
    %v1592 = vld [vmem:[#allocation7 + $0x25b8] sm:$0xff]
    %v1593 = vld [vmem:[#allocation7 + $0x25c0] sm:$0xff]
    %v1594 = vld [vmem:[#allocation7 + $0x25c8] sm:$0xff]
    %v1595 = vld [vmem:[#allocation7 + $0x25d0] sm:$0xff]
    %v1596 = vld [vmem:[#allocation7 + $0x25d8] sm:$0xff]
    %v1597 = vld [vmem:[#allocation7 + $0x25e0] sm:$0xff]
    %v1598 = vld [vmem:[#allocation7 + $0x25e8] sm:$0xff]
    %v1599 = vld [vmem:[#allocation7 + $0x25f0] sm:$0xff]
    %v1600 = vld [vmem:[#allocation7 + $0x25f8] sm:$0xff]
    %v1601 = vld [vmem:[#allocation8] sm:$0xf]
    %v1603 = vperm.slane %v1601, 0
    %v1604 = vperm.slane %v1601, 1
    %v1605 = vperm.slane %v1601, 2
    %v1606 = vperm.slane %v1601, 3
    %v2827 = vunpack.c.l.b16 %v385
    %v2828 = vunpack.c.h.b16 %v385
    %v2829 = vunpack.c.l.b16 %v386
    %v2830 = vunpack.c.h.b16 %v386
    %v2831 = vunpack.c.l.b16 %v387
    %v2832 = vunpack.c.h.b16 %v387
    %v2833 = vunpack.c.l.b16 %v388
    %v2834 = vunpack.c.h.b16 %v388
    %v2835 = vunpack.c.l.b16 %v389
    %v2836 = vunpack.c.h.b16 %v389
    %v2837 = vunpack.c.l.b16 %v390
    %v2838 = vunpack.c.h.b16 %v390
    %v2839 = vunpack.c.l.b16 %v391
    %v2840 = vunpack.c.h.b16 %v391
    %v2841 = vunpack.c.l.b16 %v392
    %v2842 = vunpack.c.h.b16 %v392
    %v2843 = vunpack.c.l.b16 %v393
    %v2844 = vunpack.c.h.b16 %v393
    %v2845 = vunpack.c.l.b16 %v394
    %v2846 = vunpack.c.h.b16 %v394
    %v2847 = vunpack.c.l.b16 %v395
    %v2848 = vunpack.c.h.b16 %v395
    %v2849 = vunpack.c.l.b16 %v396
    %v2850 = vunpack.c.h.b16 %v396
    %v2851 = vunpack.c.l.b16 %v397
    %v2852 = vunpack.c.h.b16 %v397
    %v2853 = vunpack.c.l.b16 %v398
    %v2854 = vunpack.c.h.b16 %v398
    %v2855 = vunpack.c.l.b16 %v399
    %v2856 = vunpack.c.h.b16 %v399
    %v2857 = vunpack.c.l.b16 %v400
    %v2858 = vunpack.c.h.b16 %v400
    %v2859 = vunpack.c.l.b16 %v401
    %v2860 = vunpack.c.h.b16 %v401
    %v2861 = vunpack.c.l.b16 %v402
    %v2862 = vunpack.c.h.b16 %v402
    %v2863 = vunpack.c.l.b16 %v403
    %v2864 = vunpack.c.h.b16 %v403
    %v2865 = vunpack.c.l.b16 %v404
    %v2866 = vunpack.c.h.b16 %v404
    %v2867 = vunpack.c.l.b16 %v405
    %v2868 = vunpack.c.h.b16 %v405
    %v2869 = vunpack.c.l.b16 %v406
    %v2870 = vunpack.c.h.b16 %v406
    %v2871 = vunpack.c.l.b16 %v407
    %v2872 = vunpack.c.h.b16 %v407
    %v2873 = vunpack.c.l.b16 %v408
    %v2874 = vunpack.c.h.b16 %v408
    %v2875 = vunpack.c.l.b16 %v409
    %v2876 = vunpack.c.h.b16 %v409
    %v2877 = vunpack.c.l.b16 %v410
    %v2878 = vunpack.c.h.b16 %v410
    %v2879 = vunpack.c.l.b16 %v411
    %v2880 = vunpack.c.h.b16 %v411
    %v2881 = vunpack.c.l.b16 %v412
    %v2882 = vunpack.c.h.b16 %v412
    %v2883 = vunpack.c.l.b16 %v413
    %v2884 = vunpack.c.h.b16 %v413
    %v2885 = vunpack.c.l.b16 %v414
    %v2886 = vunpack.c.h.b16 %v414
    %v2887 = vunpack.c.l.b16 %v415
    %v2888 = vunpack.c.h.b16 %v415
    %v2889 = vunpack.c.l.b16 %v416
    %v2890 = vunpack.c.h.b16 %v416
    %v2891 = vunpack.c.l.b16 %v417
    %v2892 = vunpack.c.h.b16 %v417
    %v2893 = vunpack.c.l.b16 %v418
    %v2894 = vunpack.c.h.b16 %v418
    %v2895 = vunpack.c.l.b16 %v419
    %v2896 = vunpack.c.h.b16 %v419
    %v2897 = vunpack.c.l.b16 %v420
    %v2898 = vunpack.c.h.b16 %v420
    %v2899 = vunpack.c.l.b16 %v421
    %v2900 = vunpack.c.h.b16 %v421
    %v2901 = vunpack.c.l.b16 %v422
    %v2902 = vunpack.c.h.b16 %v422
    %v2903 = vunpack.c.l.b16 %v423
    %v2904 = vunpack.c.h.b16 %v423
    %v2905 = vunpack.c.l.b16 %v424
    %v2906 = vunpack.c.h.b16 %v424
    %v2907 = vunpack.c.l.b16 %v425
    %v2908 = vunpack.c.h.b16 %v425
    %v2909 = vunpack.c.l.b16 %v426
    %v2910 = vunpack.c.h.b16 %v426
    %v2911 = vunpack.c.l.b16 %v427
    %v2912 = vunpack.c.h.b16 %v427
    %v2913 = vunpack.c.l.b16 %v428
    %v2914 = vunpack.c.h.b16 %v428
    %v2915 = vunpack.c.l.b16 %v429
    %v2916 = vunpack.c.h.b16 %v429
    %v2917 = vunpack.c.l.b16 %v430
    %v2918 = vunpack.c.h.b16 %v430
    %v2919 = vunpack.c.l.b16 %v431
    %v2920 = vunpack.c.h.b16 %v431
    %v2921 = vunpack.c.l.b16 %v432
    %v2922 = vunpack.c.h.b16 %v432
    %v2923 = vunpack.c.l.b16 %v433
    %v2924 = vunpack.c.h.b16 %v433
    %v2925 = vunpack.c.l.b16 %v434
    %v2926 = vunpack.c.h.b16 %v434
    %v2927 = vunpack.c.l.b16 %v435
    %v2928 = vunpack.c.h.b16 %v435
    %v2929 = vunpack.c.l.b16 %v436
    %v2930 = vunpack.c.h.b16 %v436
    %v2931 = vunpack.c.l.b16 %v437
    %v2932 = vunpack.c.h.b16 %v437
    %v2933 = vunpack.c.l.b16 %v438
    %v2934 = vunpack.c.h.b16 %v438
    %v2935 = vunpack.c.l.b16 %v439
    %v2936 = vunpack.c.h.b16 %v439
    %v2937 = vunpack.c.l.b16 %v440
    %v2938 = vunpack.c.h.b16 %v440
    %v2939 = vunpack.c.l.b16 %v441
    %v2940 = vunpack.c.h.b16 %v441
    %v2941 = vunpack.c.l.b16 %v442
    %v2942 = vunpack.c.h.b16 %v442
    %v2943 = vunpack.c.l.b16 %v443
    %v2944 = vunpack.c.h.b16 %v443
    %v2945 = vunpack.c.l.b16 %v444
    %v2946 = vunpack.c.h.b16 %v444
    %v2947 = vunpack.c.l.b16 %v445
    %v2948 = vunpack.c.h.b16 %v445
    %v2949 = vunpack.c.l.b16 %v446
    %v2950 = vunpack.c.h.b16 %v446
    %v2951 = vunpack.c.l.b16 %v447
    %v2952 = vunpack.c.h.b16 %v447
    %v2953 = vunpack.c.l.b16 %v448
    %v2954 = vunpack.c.h.b16 %v448
    %v2955 = vunpack.c.l.b16 %v449
    %v2956 = vunpack.c.h.b16 %v449
    %v2957 = vunpack.c.l.b16 %v450
    %v2958 = vunpack.c.h.b16 %v450
    %v2959 = vunpack.c.l.b16 %v451
    %v2960 = vunpack.c.h.b16 %v451
    %v2961 = vunpack.c.l.b16 %v452
    %v2962 = vunpack.c.h.b16 %v452
    %v2963 = vunpack.c.l.b16 %v453
    %v2964 = vunpack.c.h.b16 %v453
    %v2965 = vunpack.c.l.b16 %v454
    %v2966 = vunpack.c.h.b16 %v454
    %v2967 = vunpack.c.l.b16 %v455
    %v2968 = vunpack.c.h.b16 %v455
    %v2969 = vunpack.c.l.b16 %v456
    %v2970 = vunpack.c.h.b16 %v456
    %v2971 = vunpack.c.l.b16 %v457
    %v2972 = vunpack.c.h.b16 %v457
    %v2973 = vunpack.c.l.b16 %v458
    %v2974 = vunpack.c.h.b16 %v458
    %v2975 = vunpack.c.l.b16 %v459
    %v2976 = vunpack.c.h.b16 %v459
    %v2977 = vunpack.c.l.b16 %v460
    %v2978 = vunpack.c.h.b16 %v460
    %v2979 = vunpack.c.l.b16 %v461
    %v2980 = vunpack.c.h.b16 %v461
    %v2981 = vunpack.c.l.b16 %v462
    %v2982 = vunpack.c.h.b16 %v462
    %v2983 = vunpack.c.l.b16 %v463
    %v2984 = vunpack.c.h.b16 %v463
    %v2985 = vunpack.c.l.b16 %v464
    %v2986 = vunpack.c.h.b16 %v464
    %v2987 = vunpack.c.l.b16 %v465
    %v2988 = vunpack.c.h.b16 %v465
    %v2989 = vunpack.c.l.b16 %v466
    %v2990 = vunpack.c.h.b16 %v466
    %v2991 = vunpack.c.l.b16 %v467
    %v2992 = vunpack.c.h.b16 %v467
    %v2993 = vunpack.c.l.b16 %v468
    %v2994 = vunpack.c.h.b16 %v468
    %v2995 = vunpack.c.l.b16 %v469
    %v2996 = vunpack.c.h.b16 %v469
    %v2997 = vunpack.c.l.b16 %v470
    %v2998 = vunpack.c.h.b16 %v470
    %v2999 = vunpack.c.l.b16 %v471
    %v3000 = vunpack.c.h.b16 %v471
    %v3001 = vunpack.c.l.b16 %v472
    %v3002 = vunpack.c.h.b16 %v472
    %v3003 = vunpack.c.l.b16 %v473
    %v3004 = vunpack.c.h.b16 %v473
    %v3005 = vunpack.c.l.b16 %v474
    %v3006 = vunpack.c.h.b16 %v474
    %v3007 = vunpack.c.l.b16 %v475
    %v3008 = vunpack.c.h.b16 %v475
    %v3009 = vunpack.c.l.b16 %v476
    %v3010 = vunpack.c.h.b16 %v476
    %v3011 = vunpack.c.l.b16 %v477
    %v3012 = vunpack.c.h.b16 %v477
    %v3013 = vunpack.c.l.b16 %v478
    %v3014 = vunpack.c.h.b16 %v478
    %v3015 = vunpack.c.l.b16 %v479
    %v3016 = vunpack.c.h.b16 %v479
    %v3017 = vunpack.c.l.b16 %v480
    %v3018 = vunpack.c.h.b16 %v480
    %v3019 = vunpack.c.l.b16 %v481
    %v3020 = vunpack.c.h.b16 %v481
    %v3021 = vunpack.c.l.b16 %v482
    %v3022 = vunpack.c.h.b16 %v482
    %v3023 = vunpack.c.l.b16 %v483
    %v3024 = vunpack.c.h.b16 %v483
    %v3025 = vunpack.c.l.b16 %v484
    %v3026 = vunpack.c.h.b16 %v484
    %v3027 = vunpack.c.l.b16 %v485
    %v3028 = vunpack.c.h.b16 %v485
    %v3029 = vunpack.c.l.b16 %v486
    %v3030 = vunpack.c.h.b16 %v486
    %v3031 = vunpack.c.l.b16 %v487
    %v3032 = vunpack.c.h.b16 %v487
    %v3033 = vunpack.c.l.b16 %v488
    %v3034 = vunpack.c.h.b16 %v488
    %v3035 = vunpack.c.l.b16 %v489
    %v3036 = vunpack.c.h.b16 %v489
    %v3037 = vunpack.c.l.b16 %v490
    %v3038 = vunpack.c.h.b16 %v490
    %v3039 = vunpack.c.l.b16 %v491
    %v3040 = vunpack.c.h.b16 %v491
    %v3041 = vunpack.c.l.b16 %v492
    %v3042 = vunpack.c.h.b16 %v492
    %v3043 = vunpack.c.l.b16 %v493
    %v3044 = vunpack.c.h.b16 %v493
    %v3045 = vunpack.c.l.b16 %v494
    %v3046 = vunpack.c.h.b16 %v494
    %v3047 = vunpack.c.l.b16 %v495
    %v3048 = vunpack.c.h.b16 %v495
    %v3049 = vunpack.c.l.b16 %v496
    %v3050 = vunpack.c.h.b16 %v496
    %v3051 = vunpack.c.l.b16 %v497
    %v3052 = vunpack.c.h.b16 %v497
    %v3053 = vunpack.c.l.b16 %v498
    %v3054 = vunpack.c.h.b16 %v498
    %v3055 = vunpack.c.l.b16 %v499
    %v3056 = vunpack.c.h.b16 %v499
    %v3057 = vunpack.c.l.b16 %v500
    %v3058 = vunpack.c.h.b16 %v500
    %v3059 = vunpack.c.l.b16 %v501
    %v3060 = vunpack.c.h.b16 %v501
    %v3061 = vunpack.c.l.b16 %v502
    %v3062 = vunpack.c.h.b16 %v502
    %v3063 = vunpack.c.l.b16 %v503
    %v3064 = vunpack.c.h.b16 %v503
    %v3065 = vunpack.c.l.b16 %v504
    %v3066 = vunpack.c.h.b16 %v504
    %v3067 = vunpack.c.l.b16 %v505
    %v3068 = vunpack.c.h.b16 %v505
    %v3069 = vunpack.c.l.b16 %v506
    %v3070 = vunpack.c.h.b16 %v506
    %v3071 = vunpack.c.l.b16 %v507
    %v3072 = vunpack.c.h.b16 %v507
    %v3073 = vunpack.c.l.b16 %v508
    %v3074 = vunpack.c.h.b16 %v508
    %v3075 = vunpack.c.l.b16 %v509
    %v3076 = vunpack.c.h.b16 %v509
    %v3077 = vunpack.c.l.b16 %v510
    %v3078 = vunpack.c.h.b16 %v510
    %v3079 = vunpack.c.l.b16 %v511
    %v3080 = vunpack.c.h.b16 %v511
    %v3081 = vunpack.c.l.b16 %v512
    %v3082 = vunpack.c.h.b16 %v512
    %v3083 = vunpack.c.l.b16 %v513
    %v3084 = vunpack.c.h.b16 %v513
    %v3085 = vunpack.c.l.b16 %v514
    %v3086 = vunpack.c.h.b16 %v514
    %v3087 = vunpack.c.l.b16 %v515
    %v3088 = vunpack.c.h.b16 %v515
    %v3089 = vunpack.c.l.b16 %v516
    %v3090 = vunpack.c.h.b16 %v516
    %v3091 = vunpack.c.l.b16 %v517
    %v3092 = vunpack.c.h.b16 %v517
    %v3093 = vunpack.c.l.b16 %v518
    %v3094 = vunpack.c.h.b16 %v518
    %v3095 = vunpack.c.l.b16 %v519
    %v3096 = vunpack.c.h.b16 %v519
    %v3097 = vunpack.c.l.b16 %v520
    %v3098 = vunpack.c.h.b16 %v520
    %v3099 = vunpack.c.l.b16 %v521
    %v3100 = vunpack.c.h.b16 %v521
    %v3101 = vunpack.c.l.b16 %v522
    %v3102 = vunpack.c.h.b16 %v522
    %v3103 = vunpack.c.l.b16 %v523
    %v3104 = vunpack.c.h.b16 %v523
    %v3105 = vunpack.c.l.b16 %v524
    %v3106 = vunpack.c.h.b16 %v524
    %v3107 = vunpack.c.l.b16 %v525
    %v3108 = vunpack.c.h.b16 %v525
    %v3109 = vunpack.c.l.b16 %v526
    %v3110 = vunpack.c.h.b16 %v526
    %v3111 = vunpack.c.l.b16 %v527
    %v3112 = vunpack.c.h.b16 %v527
    %v3113 = vunpack.c.l.b16 %v528
    %v3114 = vunpack.c.h.b16 %v528
    %v3115 = vunpack.c.l.b16 %v529
    %v3116 = vunpack.c.h.b16 %v529
    %v3117 = vunpack.c.l.b16 %v530
    %v3118 = vunpack.c.h.b16 %v530
    %v3119 = vunpack.c.l.b16 %v531
    %v3120 = vunpack.c.h.b16 %v531
    %v3121 = vunpack.c.l.b16 %v532
    %v3122 = vunpack.c.h.b16 %v532
    %v3123 = vunpack.c.l.b16 %v533
    %v3124 = vunpack.c.h.b16 %v533
    %v3125 = vunpack.c.l.b16 %v534
    %v3126 = vunpack.c.h.b16 %v534
    %v3127 = vunpack.c.l.b16 %v535
    %v3128 = vunpack.c.h.b16 %v535
    %v3129 = vunpack.c.l.b16 %v536
    %v3130 = vunpack.c.h.b16 %v536
    %v3131 = vunpack.c.l.b16 %v537
    %v3132 = vunpack.c.h.b16 %v537
    %v3133 = vunpack.c.l.b16 %v538
    %v3134 = vunpack.c.h.b16 %v538
    %v3135 = vunpack.c.l.b16 %v539
    %v3136 = vunpack.c.h.b16 %v539
    %v3137 = vunpack.c.l.b16 %v540
    %v3138 = vunpack.c.h.b16 %v540
    %v3139 = vunpack.c.l.b16 %v541
    %v3140 = vunpack.c.h.b16 %v541
    %v3141 = vunpack.c.l.b16 %v542
    %v3142 = vunpack.c.h.b16 %v542
    %v3143 = vunpack.c.l.b16 %v543
    %v3144 = vunpack.c.h.b16 %v543
    %v3145 = vunpack.c.l.b16 %v544
    %v3146 = vunpack.c.h.b16 %v544
    %v3147 = vunpack.c.l.b16 %v545
    %v3148 = vunpack.c.h.b16 %v545
    %v3149 = vunpack.c.l.b16 %v546
    %v3150 = vunpack.c.h.b16 %v546
    %v3151 = vunpack.c.l.b16 %v547
    %v3152 = vunpack.c.h.b16 %v547
    %v3153 = vunpack.c.l.b16 %v548
    %v3154 = vunpack.c.h.b16 %v548
    %v3155 = vunpack.c.l.b16 %v549
    %v3156 = vunpack.c.h.b16 %v549
    %v3157 = vunpack.c.l.b16 %v550
    %v3158 = vunpack.c.h.b16 %v550
    %v3159 = vunpack.c.l.b16 %v551
    %v3160 = vunpack.c.h.b16 %v551
    %v3161 = vunpack.c.l.b16 %v552
    %v3162 = vunpack.c.h.b16 %v552
    %v3163 = vunpack.c.l.b16 %v553
    %v3164 = vunpack.c.h.b16 %v553
    %v3165 = vunpack.c.l.b16 %v554
    %v3166 = vunpack.c.h.b16 %v554
    %v3167 = vunpack.c.l.b16 %v555
    %v3168 = vunpack.c.h.b16 %v555
    %v3169 = vunpack.c.l.b16 %v556
    %v3170 = vunpack.c.h.b16 %v556
    %v3171 = vunpack.c.l.b16 %v557
    %v3172 = vunpack.c.h.b16 %v557
    %v3173 = vunpack.c.l.b16 %v558
    %v3174 = vunpack.c.h.b16 %v558
    %v3175 = vunpack.c.l.b16 %v559
    %v3176 = vunpack.c.h.b16 %v559
    %v3177 = vunpack.c.l.b16 %v560
    %v3178 = vunpack.c.h.b16 %v560
    %v3179 = vunpack.c.l.b16 %v561
    %v3180 = vunpack.c.h.b16 %v561
    %v3181 = vunpack.c.l.b16 %v562
    %v3182 = vunpack.c.h.b16 %v562
    %v3183 = vunpack.c.l.b16 %v563
    %v3184 = vunpack.c.h.b16 %v563
    %v3185 = vunpack.c.l.b16 %v564
    %v3186 = vunpack.c.h.b16 %v564
    %v3187 = vunpack.c.l.b16 %v565
    %v3188 = vunpack.c.h.b16 %v565
    %v3189 = vunpack.c.l.b16 %v566
    %v3190 = vunpack.c.h.b16 %v566
    %v3191 = vunpack.c.l.b16 %v567
    %v3192 = vunpack.c.h.b16 %v567
    %v3193 = vunpack.c.l.b16 %v568
    %v3194 = vunpack.c.h.b16 %v568
    %v3195 = vunpack.c.l.b16 %v569
    %v3196 = vunpack.c.h.b16 %v569
    %v3197 = vunpack.c.l.b16 %v570
    %v3198 = vunpack.c.h.b16 %v570
    %v3199 = vunpack.c.l.b16 %v571
    %v3200 = vunpack.c.h.b16 %v571
    %v3201 = vunpack.c.l.b16 %v572
    %v3202 = vunpack.c.h.b16 %v572
    %v3203 = vunpack.c.l.b16 %v573
    %v3204 = vunpack.c.h.b16 %v573
    %v3205 = vunpack.c.l.b16 %v574
    %v3206 = vunpack.c.h.b16 %v574
    %v3207 = vunpack.c.l.b16 %v575
    %v3208 = vunpack.c.h.b16 %v575
    %v3209 = vunpack.c.l.b16 %v576
    %v3210 = vunpack.c.h.b16 %v576
    %v3211 = vunpack.c.l.b16 %v577
    %v3212 = vunpack.c.h.b16 %v577
    %v3213 = vunpack.c.l.b16 %v578
    %v3214 = vunpack.c.h.b16 %v578
    %v3215 = vunpack.c.l.b16 %v579
    %v3216 = vunpack.c.h.b16 %v579
    %v3217 = vunpack.c.l.b16 %v580
    %v3218 = vunpack.c.h.b16 %v580
    %v3219 = vunpack.c.l.b16 %v581
    %v3220 = vunpack.c.h.b16 %v581
    %v3221 = vunpack.c.l.b16 %v582
    %v3222 = vunpack.c.h.b16 %v582
    %v3223 = vunpack.c.l.b16 %v583
    %v3224 = vunpack.c.h.b16 %v583
    %v3225 = vunpack.c.l.b16 %v584
    %v3226 = vunpack.c.h.b16 %v584
    %v3227 = vunpack.c.l.b16 %v585
    %v3228 = vunpack.c.h.b16 %v585
    %v3229 = vunpack.c.l.b16 %v586
    %v3230 = vunpack.c.h.b16 %v586
    %v3231 = vunpack.c.l.b16 %v587
    %v3232 = vunpack.c.h.b16 %v587
    %v3233 = vunpack.c.l.b16 %v588
    %v3234 = vunpack.c.h.b16 %v588
    %v3235 = vunpack.c.l.b16 %v589
    %v3236 = vunpack.c.h.b16 %v589
    %v3237 = vunpack.c.l.b16 %v590
    %v3238 = vunpack.c.h.b16 %v590
    %v3239 = vunpack.c.l.b16 %v591
    %v3240 = vunpack.c.h.b16 %v591
    %v3241 = vunpack.c.l.b16 %v592
    %v3242 = vunpack.c.h.b16 %v592
    %v3243 = vunpack.c.l.b16 %v593
    %v3244 = vunpack.c.h.b16 %v593
    %v3245 = vunpack.c.l.b16 %v594
    %v3246 = vunpack.c.h.b16 %v594
    %v3247 = vunpack.c.l.b16 %v595
    %v3248 = vunpack.c.h.b16 %v595
    %v3249 = vunpack.c.l.b16 %v596
    %v3250 = vunpack.c.h.b16 %v596
    %v3251 = vunpack.c.l.b16 %v597
    %v3252 = vunpack.c.h.b16 %v597
    %v3253 = vunpack.c.l.b16 %v598
    %v3254 = vunpack.c.h.b16 %v598
    %v3255 = vunpack.c.l.b16 %v599
    %v3256 = vunpack.c.h.b16 %v599
    %v3257 = vunpack.c.l.b16 %v600
    %v3258 = vunpack.c.h.b16 %v600
    %v3259 = vunpack.c.l.b16 %v601
    %v3260 = vunpack.c.h.b16 %v601
    %v3261 = vunpack.c.l.b16 %v602
    %v3262 = vunpack.c.h.b16 %v602
    %v3263 = vunpack.c.l.b16 %v603
    %v3264 = vunpack.c.h.b16 %v603
    %v3265 = vunpack.c.l.b16 %v604
    %v3266 = vunpack.c.h.b16 %v604
    %v3267 = vunpack.c.l.b16 %v605
    %v3268 = vunpack.c.h.b16 %v605
    %v3269 = vunpack.c.l.b16 %v606
    %v3270 = vunpack.c.h.b16 %v606
    %v3271 = vunpack.c.l.b16 %v607
    %v3272 = vunpack.c.h.b16 %v607
    %v3273 = vunpack.c.l.b16 %v608
    %v3274 = vunpack.c.h.b16 %v608
    %v3275 = vunpack.c.l.b16 %v609
    %v3276 = vunpack.c.h.b16 %v609
    %v3277 = vunpack.c.l.b16 %v610
    %v3278 = vunpack.c.h.b16 %v610
    %v3279 = vunpack.c.l.b16 %v611
    %v3280 = vunpack.c.h.b16 %v611
    %v3281 = vunpack.c.l.b16 %v612
    %v3282 = vunpack.c.h.b16 %v612
    %v3283 = vunpack.c.l.b16 %v613
    %v3284 = vunpack.c.h.b16 %v613
    %v3285 = vunpack.c.l.b16 %v614
    %v3286 = vunpack.c.h.b16 %v614
    %v3287 = vunpack.c.l.b16 %v615
    %v3288 = vunpack.c.h.b16 %v615
    %v3289 = vunpack.c.l.b16 %v616
    %v3290 = vunpack.c.h.b16 %v616
    %v3291 = vunpack.c.l.b16 %v617
    %v3292 = vunpack.c.h.b16 %v617
    %v3293 = vunpack.c.l.b16 %v618
    %v3294 = vunpack.c.h.b16 %v618
    %v3295 = vunpack.c.l.b16 %v619
    %v3296 = vunpack.c.h.b16 %v619
    %v3297 = vunpack.c.l.b16 %v620
    %v3298 = vunpack.c.h.b16 %v620
    %v3299 = vunpack.c.l.b16 %v621
    %v3300 = vunpack.c.h.b16 %v621
    %v3301 = vunpack.c.l.b16 %v622
    %v3302 = vunpack.c.h.b16 %v622
    %v3303 = vunpack.c.l.b16 %v623
    %v3304 = vunpack.c.h.b16 %v623
    %v3305 = vunpack.c.l.b16 %v624
    %v3306 = vunpack.c.h.b16 %v624
    %v3307 = vunpack.c.l.b16 %v625
    %v3308 = vunpack.c.h.b16 %v625
    %v3309 = vunpack.c.l.b16 %v626
    %v3310 = vunpack.c.h.b16 %v626
    %v3311 = vunpack.c.l.b16 %v627
    %v3312 = vunpack.c.h.b16 %v627
    %v3313 = vunpack.c.l.b16 %v628
    %v3314 = vunpack.c.h.b16 %v628
    %v3315 = vunpack.c.l.b16 %v629
    %v3316 = vunpack.c.h.b16 %v629
    %v3317 = vunpack.c.l.b16 %v630
    %v3318 = vunpack.c.h.b16 %v630
    %v3319 = vunpack.c.l.b16 %v631
    %v3320 = vunpack.c.h.b16 %v631
    %v3321 = vunpack.c.l.b16 %v632
    %v3322 = vunpack.c.h.b16 %v632
    %v3323 = vunpack.c.l.b16 %v633
    %v3324 = vunpack.c.h.b16 %v633
    %v3325 = vunpack.c.l.b16 %v634
    %v3326 = vunpack.c.h.b16 %v634
    %v3327 = vunpack.c.l.b16 %v635
    %v3328 = vunpack.c.h.b16 %v635
    %v3329 = vunpack.c.l.b16 %v636
    %v3330 = vunpack.c.h.b16 %v636
    %v3331 = vunpack.c.l.b16 %v637
    %v3332 = vunpack.c.h.b16 %v637
    %v3333 = vunpack.c.l.b16 %v638
    %v3334 = vunpack.c.h.b16 %v638
    %v3335 = vunpack.c.l.b16 %v639
    %v3336 = vunpack.c.h.b16 %v639
    %v3337 = vunpack.c.l.b16 %v640
    %v3338 = vunpack.c.h.b16 %v640
    %v3339 = vunpack.c.l.b16 %v641
    %v3340 = vunpack.c.h.b16 %v641
    %v3341 = vunpack.c.l.b16 %v642
    %v3342 = vunpack.c.h.b16 %v642
    %v3343 = vunpack.c.l.b16 %v643
    %v3344 = vunpack.c.h.b16 %v643
    %v3345 = vunpack.c.l.b16 %v644
    %v3346 = vunpack.c.h.b16 %v644
    %v3347 = vunpack.c.l.b16 %v645
    %v3348 = vunpack.c.h.b16 %v645
    %v3349 = vunpack.c.l.b16 %v646
    %v3350 = vunpack.c.h.b16 %v646
    %v3351 = vunpack.c.l.b16 %v647
    %v3352 = vunpack.c.h.b16 %v647
    %v3353 = vunpack.c.l.b16 %v648
    %v3354 = vunpack.c.h.b16 %v648
    %v3355 = vunpack.c.l.b16 %v649
    %v3356 = vunpack.c.h.b16 %v649
    %v3357 = vunpack.c.l.b16 %v650
    %v3358 = vunpack.c.h.b16 %v650
    %v3359 = vunpack.c.l.b16 %v651
    %v3360 = vunpack.c.h.b16 %v651
    %v3361 = vunpack.c.l.b16 %v652
    %v3362 = vunpack.c.h.b16 %v652
    %v3363 = vunpack.c.l.b16 %v653
    %v3364 = vunpack.c.h.b16 %v653
    %v3365 = vunpack.c.l.b16 %v654
    %v3366 = vunpack.c.h.b16 %v654
    %v3367 = vunpack.c.l.b16 %v655
    %v3368 = vunpack.c.h.b16 %v655
    %v3369 = vunpack.c.l.b16 %v656
    %v3370 = vunpack.c.h.b16 %v656
    %v3371 = vunpack.c.l.b16 %v657
    %v3372 = vunpack.c.h.b16 %v657
    %v3373 = vunpack.c.l.b16 %v658
    %v3374 = vunpack.c.h.b16 %v658
    %v3375 = vunpack.c.l.b16 %v659
    %v3376 = vunpack.c.h.b16 %v659
    %v3377 = vunpack.c.l.b16 %v660
    %v3378 = vunpack.c.h.b16 %v660
    %v3379 = vunpack.c.l.b16 %v661
    %v3380 = vunpack.c.h.b16 %v661
    %v3381 = vunpack.c.l.b16 %v662
    %v3382 = vunpack.c.h.b16 %v662
    %v3383 = vunpack.c.l.b16 %v663
    %v3384 = vunpack.c.h.b16 %v663
    %v3385 = vunpack.c.l.b16 %v664
    %v3386 = vunpack.c.h.b16 %v664
    %v3387 = vunpack.c.l.b16 %v665
    %v3388 = vunpack.c.h.b16 %v665
    %v3389 = vunpack.c.l.b16 %v666
    %v3390 = vunpack.c.h.b16 %v666
    %v3391 = vunpack.c.l.b16 %v667
    %v3392 = vunpack.c.h.b16 %v667
    %v3393 = vunpack.c.l.b16 %v668
    %v3394 = vunpack.c.h.b16 %v668
    %v3395 = vunpack.c.l.b16 %v669
    %v3396 = vunpack.c.h.b16 %v669
    %v3397 = vunpack.c.l.b16 %v670
    %v3398 = vunpack.c.h.b16 %v670
    %v3399 = vunpack.c.l.b16 %v671
    %v3400 = vunpack.c.h.b16 %v671
    %v3401 = vunpack.c.l.b16 %v672
    %v3402 = vunpack.c.h.b16 %v672
    %v3403 = vunpack.c.l.b16 %v673
    %v3404 = vunpack.c.h.b16 %v673
    %v3405 = vunpack.c.l.b16 %v674
    %v3406 = vunpack.c.h.b16 %v674
    %v3407 = vunpack.c.l.b16 %v675
    %v3408 = vunpack.c.h.b16 %v675
    %v3409 = vunpack.c.l.b16 %v676
    %v3410 = vunpack.c.h.b16 %v676
    %v3411 = vunpack.c.l.b16 %v677
    %v3412 = vunpack.c.h.b16 %v677
    %v3413 = vunpack.c.l.b16 %v678
    %v3414 = vunpack.c.h.b16 %v678
    %v3415 = vunpack.c.l.b16 %v679
    %v3416 = vunpack.c.h.b16 %v679
    %v3417 = vunpack.c.l.b16 %v680
    %v3418 = vunpack.c.h.b16 %v680
    %v3419 = vunpack.c.l.b16 %v681
    %v3420 = vunpack.c.h.b16 %v681
    %v3421 = vunpack.c.l.b16 %v682
    %v3422 = vunpack.c.h.b16 %v682
    %v3423 = vunpack.c.l.b16 %v683
    %v3424 = vunpack.c.h.b16 %v683
    %v3425 = vunpack.c.l.b16 %v684
    %v3426 = vunpack.c.h.b16 %v684
    %v3427 = vunpack.c.l.b16 %v685
    %v3428 = vunpack.c.h.b16 %v685
    %v3429 = vunpack.c.l.b16 %v686
    %v3430 = vunpack.c.h.b16 %v686
    %v3431 = vunpack.c.l.b16 %v687
    %v3432 = vunpack.c.h.b16 %v687
    %v3433 = vunpack.c.l.b16 %v688
    %v3434 = vunpack.c.h.b16 %v688
    %v3435 = vunpack.c.l.b16 %v689
    %v3436 = vunpack.c.h.b16 %v689
    %v3437 = vunpack.c.l.b16 %v690
    %v3438 = vunpack.c.h.b16 %v690
    %v3439 = vunpack.c.l.b16 %v691
    %v3440 = vunpack.c.h.b16 %v691
    %v3441 = vunpack.c.l.b16 %v692
    %v3442 = vunpack.c.h.b16 %v692
    %v3443 = vunpack.c.l.b16 %v693
    %v3444 = vunpack.c.h.b16 %v693
    %v3445 = vunpack.c.l.b16 %v694
    %v3446 = vunpack.c.h.b16 %v694
    %v3447 = vunpack.c.l.b16 %v695
    %v3448 = vunpack.c.h.b16 %v695
    %v3449 = vunpack.c.l.b16 %v696
    %v3450 = vunpack.c.h.b16 %v696
    %v3451 = vunpack.c.l.b16 %v697
    %v3452 = vunpack.c.h.b16 %v697
    %v3453 = vunpack.c.l.b16 %v698
    %v3454 = vunpack.c.h.b16 %v698
    %v3455 = vunpack.c.l.b16 %v699
    %v3456 = vunpack.c.h.b16 %v699
    %v3457 = vunpack.c.l.b16 %v700
    %v3458 = vunpack.c.h.b16 %v700
    %v3459 = vunpack.c.l.b16 %v701
    %v3460 = vunpack.c.h.b16 %v701
    %v3461 = vunpack.c.l.b16 %v702
    %v3462 = vunpack.c.h.b16 %v702
    %v3463 = vunpack.c.l.b16 %v703
    %v3464 = vunpack.c.h.b16 %v703
    %v3465 = vunpack.c.l.b16 %v704
    %v3466 = vunpack.c.h.b16 %v704
    %v3467 = vunpack.c.l.b16 %v705
    %v3468 = vunpack.c.h.b16 %v705
    %v3469 = vunpack.c.l.b16 %v706
    %v3470 = vunpack.c.h.b16 %v706
    %v3471 = vunpack.c.l.b16 %v707
    %v3472 = vunpack.c.h.b16 %v707
    %v3473 = vunpack.c.l.b16 %v708
    %v3474 = vunpack.c.h.b16 %v708
    %v3475 = vunpack.c.l.b16 %v709
    %v3476 = vunpack.c.h.b16 %v709
    %v3477 = vunpack.c.l.b16 %v710
    %v3478 = vunpack.c.h.b16 %v710
    %v3479 = vunpack.c.l.b16 %v711
    %v3480 = vunpack.c.h.b16 %v711
    %v3481 = vunpack.c.l.b16 %v712
    %v3482 = vunpack.c.h.b16 %v712
    %v3483 = vunpack.c.l.b16 %v713
    %v3484 = vunpack.c.h.b16 %v713
    %v3485 = vunpack.c.l.b16 %v714
    %v3486 = vunpack.c.h.b16 %v714
    %v3487 = vunpack.c.l.b16 %v715
    %v3488 = vunpack.c.h.b16 %v715
    %v3489 = vunpack.c.l.b16 %v716
    %v3490 = vunpack.c.h.b16 %v716
    %v3491 = vunpack.c.l.b16 %v717
    %v3492 = vunpack.c.h.b16 %v717
    %v3493 = vunpack.c.l.b16 %v718
    %v3494 = vunpack.c.h.b16 %v718
    %v3495 = vunpack.c.l.b16 %v719
    %v3496 = vunpack.c.h.b16 %v719
    %v3497 = vunpack.c.l.b16 %v720
    %v3498 = vunpack.c.h.b16 %v720
    %v3499 = vunpack.c.l.b16 %v721
    %v3500 = vunpack.c.h.b16 %v721
    %v3501 = vunpack.c.l.b16 %v722
    %v3502 = vunpack.c.h.b16 %v722
    %v3503 = vunpack.c.l.b16 %v723
    %v3504 = vunpack.c.h.b16 %v723
    %v3505 = vunpack.c.l.b16 %v724
    %v3506 = vunpack.c.h.b16 %v724
    %v3507 = vunpack.c.l.b16 %v725
    %v3508 = vunpack.c.h.b16 %v725
    %v3509 = vunpack.c.l.b16 %v726
    %v3510 = vunpack.c.h.b16 %v726
    %v3511 = vunpack.c.l.b16 %v727
    %v3512 = vunpack.c.h.b16 %v727
    %v3513 = vunpack.c.l.b16 %v728
    %v3514 = vunpack.c.h.b16 %v728
    %v3515 = vunpack.c.l.b16 %v729
    %v3516 = vunpack.c.h.b16 %v729
    %v3517 = vunpack.c.l.b16 %v730
    %v3518 = vunpack.c.h.b16 %v730
    %v3519 = vunpack.c.l.b16 %v731
    %v3520 = vunpack.c.h.b16 %v731
    %v3521 = vunpack.c.l.b16 %v732
    %v3522 = vunpack.c.h.b16 %v732
    %v3523 = vunpack.c.l.b16 %v733
    %v3524 = vunpack.c.h.b16 %v733
    %v3525 = vunpack.c.l.b16 %v734
    %v3526 = vunpack.c.h.b16 %v734
    %v3527 = vunpack.c.l.b16 %v735
    %v3528 = vunpack.c.h.b16 %v735
    %v3529 = vunpack.c.l.b16 %v736
    %v3530 = vunpack.c.h.b16 %v736
    %v3531 = vunpack.c.l.b16 %v737
    %v3532 = vunpack.c.h.b16 %v737
    %v3533 = vunpack.c.l.b16 %v738
    %v3534 = vunpack.c.h.b16 %v738
    %v3535 = vunpack.c.l.b16 %v739
    %v3536 = vunpack.c.h.b16 %v739
    %v3537 = vunpack.c.l.b16 %v740
    %v3538 = vunpack.c.h.b16 %v740
    %v3539 = vunpack.c.l.b16 %v741
    %v3540 = vunpack.c.h.b16 %v741
    %v3541 = vunpack.c.l.b16 %v742
    %v3542 = vunpack.c.h.b16 %v742
    %v3543 = vunpack.c.l.b16 %v743
    %v3544 = vunpack.c.h.b16 %v743
    %v3545 = vunpack.c.l.b16 %v744
    %v3546 = vunpack.c.h.b16 %v744
    %v3547 = vunpack.c.l.b16 %v745
    %v3548 = vunpack.c.h.b16 %v745
    %v3549 = vunpack.c.l.b16 %v746
    %v3550 = vunpack.c.h.b16 %v746
    %v3551 = vunpack.c.l.b16 %v747
    %v3552 = vunpack.c.h.b16 %v747
    %v3553 = vunpack.c.l.b16 %v748
    %v3554 = vunpack.c.h.b16 %v748
    %v3555 = vunpack.c.l.b16 %v749
    %v3556 = vunpack.c.h.b16 %v749
    %v3557 = vunpack.c.l.b16 %v750
    %v3558 = vunpack.c.h.b16 %v750
    %v3559 = vunpack.c.l.b16 %v751
    %v3560 = vunpack.c.h.b16 %v751
    %v3561 = vunpack.c.l.b16 %v752
    %v3562 = vunpack.c.h.b16 %v752
    %v3563 = vunpack.c.l.b16 %v753
    %v3564 = vunpack.c.h.b16 %v753
    %v3565 = vunpack.c.l.b16 %v754
    %v3566 = vunpack.c.h.b16 %v754
    %v3567 = vunpack.c.l.b16 %v755
    %v3568 = vunpack.c.h.b16 %v755
    %v3569 = vunpack.c.l.b16 %v756
    %v3570 = vunpack.c.h.b16 %v756
    %v3571 = vunpack.c.l.b16 %v757
    %v3572 = vunpack.c.h.b16 %v757
    %v3573 = vunpack.c.l.b16 %v758
    %v3574 = vunpack.c.h.b16 %v758
    %v3575 = vunpack.c.l.b16 %v759
    %v3576 = vunpack.c.h.b16 %v759
    %v3577 = vunpack.c.l.b16 %v760
    %v3578 = vunpack.c.h.b16 %v760
    %v3579 = vunpack.c.l.b16 %v761
    %v3580 = vunpack.c.h.b16 %v761
    %v3581 = vunpack.c.l.b16 %v762
    %v3582 = vunpack.c.h.b16 %v762
    %v3583 = vunpack.c.l.b16 %v763
    %v3584 = vunpack.c.h.b16 %v763
    %v3585 = vunpack.c.l.b16 %v764
    %v3586 = vunpack.c.h.b16 %v764
    %v3587 = vunpack.c.l.b16 %v765
    %v3588 = vunpack.c.h.b16 %v765
    %v3589 = vunpack.c.l.b16 %v766
    %v3590 = vunpack.c.h.b16 %v766
    %v3591 = vunpack.c.l.b16 %v767
    %v3592 = vunpack.c.h.b16 %v767
    %v3593 = vunpack.c.l.b16 %v768
    %v3594 = vunpack.c.h.b16 %v768
    %v3595 = vunpack.c.l.b16 %v769
    %v3596 = vunpack.c.h.b16 %v769
    %v3597 = vunpack.c.l.b16 %v770
    %v3598 = vunpack.c.h.b16 %v770
    %v3599 = vunpack.c.l.b16 %v771
    %v3600 = vunpack.c.h.b16 %v771
    %v3601 = vunpack.c.l.b16 %v772
    %v3602 = vunpack.c.h.b16 %v772
    %v3603 = vunpack.c.l.b16 %v773
    %v3604 = vunpack.c.h.b16 %v773
    %v3605 = vunpack.c.l.b16 %v774
    %v3606 = vunpack.c.h.b16 %v774
    %v3607 = vunpack.c.l.b16 %v775
    %v3608 = vunpack.c.h.b16 %v775
    %v3609 = vunpack.c.l.b16 %v776
    %v3610 = vunpack.c.h.b16 %v776
    %v3611 = vunpack.c.l.b16 %v777
    %v3612 = vunpack.c.h.b16 %v777
    %v3613 = vunpack.c.l.b16 %v778
    %v3614 = vunpack.c.h.b16 %v778
    %v3615 = vunpack.c.l.b16 %v779
    %v3616 = vunpack.c.h.b16 %v779
    %v3617 = vunpack.c.l.b16 %v780
    %v3618 = vunpack.c.h.b16 %v780
    %v3619 = vunpack.c.l.b16 %v781
    %v3620 = vunpack.c.h.b16 %v781
    %v3621 = vunpack.c.l.b16 %v782
    %v3622 = vunpack.c.h.b16 %v782
    %v3623 = vunpack.c.l.b16 %v783
    %v3624 = vunpack.c.h.b16 %v783
    %v3625 = vunpack.c.l.b16 %v784
    %v3626 = vunpack.c.h.b16 %v784
    %v3627 = vunpack.c.l.b16 %v785
    %v3628 = vunpack.c.h.b16 %v785
    %v3629 = vunpack.c.l.b16 %v786
    %v3630 = vunpack.c.h.b16 %v786
    %v3631 = vunpack.c.l.b16 %v787
    %v3632 = vunpack.c.h.b16 %v787
    %v3633 = vunpack.c.l.b16 %v788
    %v3634 = vunpack.c.h.b16 %v788
    %v3635 = vunpack.c.l.b16 %v789
    %v3636 = vunpack.c.h.b16 %v789
    %v3637 = vunpack.c.l.b16 %v790
    %v3638 = vunpack.c.h.b16 %v790
    %v3639 = vunpack.c.l.b16 %v791
    %v3640 = vunpack.c.h.b16 %v791
    %v3641 = vunpack.c.l.b16 %v792
    %v3642 = vunpack.c.h.b16 %v792
    %v3643 = vunpack.c.l.b16 %v793
    %v3644 = vunpack.c.h.b16 %v793
    %v3645 = vunpack.c.l.b16 %v794
    %v3646 = vunpack.c.h.b16 %v794
    %v3647 = vunpack.c.l.b16 %v795
    %v3648 = vunpack.c.h.b16 %v795
    %v3649 = vunpack.c.l.b16 %v796
    %v3650 = vunpack.c.h.b16 %v796
    %v3651 = vunpack.c.l.b16 %v797
    %v3652 = vunpack.c.h.b16 %v797
    %v3653 = vunpack.c.l.b16 %v798
    %v3654 = vunpack.c.h.b16 %v798
    %v3655 = vunpack.c.l.b16 %v799
    %v3656 = vunpack.c.h.b16 %v799
    %v3657 = vunpack.c.l.b16 %v800
    %v3658 = vunpack.c.h.b16 %v800
    %v3659 = vunpack.c.l.b16 %v801
    %v3660 = vunpack.c.h.b16 %v801
    %v3661 = vunpack.c.l.b16 %v802
    %v3662 = vunpack.c.h.b16 %v802
    %v3663 = vunpack.c.l.b16 %v803
    %v3664 = vunpack.c.h.b16 %v803
    %v3665 = vunpack.c.l.b16 %v804
    %v3666 = vunpack.c.h.b16 %v804
    %v3667 = vunpack.c.l.b16 %v805
    %v3668 = vunpack.c.h.b16 %v805
    %v3669 = vunpack.c.l.b16 %v806
    %v3670 = vunpack.c.h.b16 %v806
    %v3671 = vunpack.c.l.b16 %v807
    %v3672 = vunpack.c.h.b16 %v807
    %v3673 = vunpack.c.l.b16 %v808
    %v3674 = vunpack.c.h.b16 %v808
    %v3675 = vunpack.c.l.b16 %v809
    %v3676 = vunpack.c.h.b16 %v809
    %v3677 = vunpack.c.l.b16 %v810
    %v3678 = vunpack.c.h.b16 %v810
    %v3679 = vunpack.c.l.b16 %v811
    %v3680 = vunpack.c.h.b16 %v811
    %v3681 = vunpack.c.l.b16 %v812
    %v3682 = vunpack.c.h.b16 %v812
    %v3683 = vunpack.c.l.b16 %v813
    %v3684 = vunpack.c.h.b16 %v813
    %v3685 = vunpack.c.l.b16 %v814
    %v3686 = vunpack.c.h.b16 %v814
    %v3687 = vunpack.c.l.b16 %v815
    %v3688 = vunpack.c.h.b16 %v815
    %v3689 = vunpack.c.l.b16 %v816
    %v3690 = vunpack.c.h.b16 %v816
    %v3691 = vunpack.c.l.b16 %v817
    %v3692 = vunpack.c.h.b16 %v817
    %v3693 = vunpack.c.l.b16 %v818
    %v3694 = vunpack.c.h.b16 %v818
    %v3695 = vunpack.c.l.b16 %v819
    %v3696 = vunpack.c.h.b16 %v819
    %v3697 = vunpack.c.l.b16 %v820
    %v3698 = vunpack.c.h.b16 %v820
    %v3699 = vunpack.c.l.b16 %v821
    %v3700 = vunpack.c.h.b16 %v821
    %v3701 = vunpack.c.l.b16 %v822
    %v3702 = vunpack.c.h.b16 %v822
    %v3703 = vunpack.c.l.b16 %v823
    %v3704 = vunpack.c.h.b16 %v823
    %v3705 = vunpack.c.l.b16 %v824
    %v3706 = vunpack.c.h.b16 %v824
    %v3707 = vunpack.c.l.b16 %v825
    %v3708 = vunpack.c.h.b16 %v825
    %v3709 = vunpack.c.l.b16 %v826
    %v3710 = vunpack.c.h.b16 %v826
    %v3711 = vunpack.c.l.b16 %v827
    %v3712 = vunpack.c.h.b16 %v827
    %v3713 = vunpack.c.l.b16 %v828
    %v3714 = vunpack.c.h.b16 %v828
    %v3715 = vunpack.c.l.b16 %v829
    %v3716 = vunpack.c.h.b16 %v829
    %v3717 = vunpack.c.l.b16 %v830
    %v3718 = vunpack.c.h.b16 %v830
    %v3719 = vunpack.c.l.b16 %v831
    %v3720 = vunpack.c.h.b16 %v831
    %v3721 = vunpack.c.l.b16 %v832
    %v3722 = vunpack.c.h.b16 %v832
    %v3723 = vunpack.c.l.b16 %v833
    %v3724 = vunpack.c.h.b16 %v833
    %v3725 = vunpack.c.l.b16 %v834
    %v3726 = vunpack.c.h.b16 %v834
    %v3727 = vunpack.c.l.b16 %v835
    %v3728 = vunpack.c.h.b16 %v835
    %v3729 = vunpack.c.l.b16 %v836
    %v3730 = vunpack.c.h.b16 %v836
    %v3731 = vunpack.c.l.b16 %v837
    %v3732 = vunpack.c.h.b16 %v837
    %v3733 = vunpack.c.l.b16 %v838
    %v3734 = vunpack.c.h.b16 %v838
    %v3735 = vunpack.c.l.b16 %v839
    %v3736 = vunpack.c.h.b16 %v839
    %v3737 = vunpack.c.l.b16 %v840
    %v3738 = vunpack.c.h.b16 %v840
    %v3739 = vunpack.c.l.b16 %v841
    %v3740 = vunpack.c.h.b16 %v841
    %v3741 = vunpack.c.l.b16 %v842
    %v3742 = vunpack.c.h.b16 %v842
    %v3743 = vunpack.c.l.b16 %v843
    %v3744 = vunpack.c.h.b16 %v843
    %v3745 = vunpack.c.l.b16 %v844
    %v3746 = vunpack.c.h.b16 %v844
    %v3747 = vunpack.c.l.b16 %v845
    %v3748 = vunpack.c.h.b16 %v845
    %v3749 = vunpack.c.l.b16 %v846
    %v3750 = vunpack.c.h.b16 %v846
    %v3751 = vunpack.c.l.b16 %v847
    %v3752 = vunpack.c.h.b16 %v847
    %v3753 = vunpack.c.l.b16 %v848
    %v3754 = vunpack.c.h.b16 %v848
    %v3755 = vunpack.c.l.b16 %v849
    %v3756 = vunpack.c.h.b16 %v849
    %v3757 = vunpack.c.l.b16 %v850
    %v3758 = vunpack.c.h.b16 %v850
    %v3759 = vunpack.c.l.b16 %v851
    %v3760 = vunpack.c.h.b16 %v851
    %v3761 = vunpack.c.l.b16 %v852
    %v3762 = vunpack.c.h.b16 %v852
    %v3763 = vunpack.c.l.b16 %v853
    %v3764 = vunpack.c.h.b16 %v853
    %v3765 = vunpack.c.l.b16 %v854
    %v3766 = vunpack.c.h.b16 %v854
    %v3767 = vunpack.c.l.b16 %v855
    %v3768 = vunpack.c.h.b16 %v855
    %v3769 = vunpack.c.l.b16 %v856
    %v3770 = vunpack.c.h.b16 %v856
    %v3771 = vunpack.c.l.b16 %v857
    %v3772 = vunpack.c.h.b16 %v857
    %v3773 = vunpack.c.l.b16 %v858
    %v3774 = vunpack.c.h.b16 %v858
    %v3775 = vunpack.c.l.b16 %v859
    %v3776 = vunpack.c.h.b16 %v859
    %v3777 = vunpack.c.l.b16 %v860
    %v3778 = vunpack.c.h.b16 %v860
    %v3779 = vunpack.c.l.b16 %v861
    %v3780 = vunpack.c.h.b16 %v861
    %v3781 = vunpack.c.l.b16 %v862
    %v3782 = vunpack.c.h.b16 %v862
    %v3783 = vunpack.c.l.b16 %v863
    %v3784 = vunpack.c.h.b16 %v863
    %v3785 = vunpack.c.l.b16 %v864
    %v3786 = vunpack.c.h.b16 %v864
    %v3787 = vunpack.c.l.b16 %v865
    %v3788 = vunpack.c.h.b16 %v865
    %v3789 = vunpack.c.l.b16 %v866
    %v3790 = vunpack.c.h.b16 %v866
    %v3791 = vunpack.c.l.b16 %v867
    %v3792 = vunpack.c.h.b16 %v867
    %v3793 = vunpack.c.l.b16 %v868
    %v3794 = vunpack.c.h.b16 %v868
    %v3795 = vunpack.c.l.b16 %v869
    %v3796 = vunpack.c.h.b16 %v869
    %v3797 = vunpack.c.l.b16 %v870
    %v3798 = vunpack.c.h.b16 %v870
    %v3799 = vunpack.c.l.b16 %v871
    %v3800 = vunpack.c.h.b16 %v871
    %v3801 = vunpack.c.l.b16 %v872
    %v3802 = vunpack.c.h.b16 %v872
    %v3803 = vunpack.c.l.b16 %v873
    %v3804 = vunpack.c.h.b16 %v873
    %v3805 = vunpack.c.l.b16 %v874
    %v3806 = vunpack.c.h.b16 %v874
    %v3807 = vunpack.c.l.b16 %v875
    %v3808 = vunpack.c.h.b16 %v875
    %v3809 = vunpack.c.l.b16 %v876
    %v3810 = vunpack.c.h.b16 %v876
    %v3811 = vunpack.c.l.b16 %v877
    %v3812 = vunpack.c.h.b16 %v877
    %v3813 = vunpack.c.l.b16 %v878
    %v3814 = vunpack.c.h.b16 %v878
    %v3815 = vunpack.c.l.b16 %v879
    %v3816 = vunpack.c.h.b16 %v879
    %v3817 = vunpack.c.l.b16 %v880
    %v3818 = vunpack.c.h.b16 %v880
    %v3819 = vunpack.c.l.b16 %v881
    %v3820 = vunpack.c.h.b16 %v881
    %v3821 = vunpack.c.l.b16 %v882
    %v3822 = vunpack.c.h.b16 %v882
    %v3823 = vunpack.c.l.b16 %v883
    %v3824 = vunpack.c.h.b16 %v883
    %v3825 = vunpack.c.l.b16 %v884
    %v3826 = vunpack.c.h.b16 %v884
    %v3827 = vunpack.c.l.b16 %v885
    %v3828 = vunpack.c.h.b16 %v885
    %v3829 = vunpack.c.l.b16 %v886
    %v3830 = vunpack.c.h.b16 %v886
    %v3831 = vunpack.c.l.b16 %v887
    %v3832 = vunpack.c.h.b16 %v887
    %v3833 = vunpack.c.l.b16 %v888
    %v3834 = vunpack.c.h.b16 %v888
    %v3835 = vunpack.c.l.b16 %v889
    %v3836 = vunpack.c.h.b16 %v889
    %v3837 = vunpack.c.l.b16 %v890
    %v3838 = vunpack.c.h.b16 %v890
    %v3839 = vunpack.c.l.b16 %v891
    %v3840 = vunpack.c.h.b16 %v891
    %v3841 = vunpack.c.l.b16 %v892
    %v3842 = vunpack.c.h.b16 %v892
    %v3843 = vunpack.c.l.b16 %v893
    %v3844 = vunpack.c.h.b16 %v893
    %v3845 = vunpack.c.l.b16 %v894
    %v3846 = vunpack.c.h.b16 %v894
    %v3847 = vunpack.c.l.b16 %v895
    %v3848 = vunpack.c.h.b16 %v895
    %v3849 = vunpack.c.l.b16 %v896
    %v3850 = vunpack.c.h.b16 %v896
    %v3851 = vunpack.c.l.b16 %v897
    %v3852 = vunpack.c.h.b16 %v897
    %v3853 = vunpack.c.l.b16 %v898
    %v3854 = vunpack.c.h.b16 %v898
    %v3855 = vunpack.c.l.b16 %v899
    %v3856 = vunpack.c.h.b16 %v899
    %v3857 = vunpack.c.l.b16 %v900
    %v3858 = vunpack.c.h.b16 %v900
    %v3859 = vunpack.c.l.b16 %v901
    %v3860 = vunpack.c.h.b16 %v901
    %v3861 = vunpack.c.l.b16 %v902
    %v3862 = vunpack.c.h.b16 %v902
    %v3863 = vunpack.c.l.b16 %v903
    %v3864 = vunpack.c.h.b16 %v903
    %v3865 = vunpack.c.l.b16 %v904
    %v3866 = vunpack.c.h.b16 %v904
    %v3867 = vunpack.c.l.b16 %v905
    %v3868 = vunpack.c.h.b16 %v905
    %v3869 = vunpack.c.l.b16 %v906
    %v3870 = vunpack.c.h.b16 %v906
    %v3871 = vunpack.c.l.b16 %v907
    %v3872 = vunpack.c.h.b16 %v907
    %v3873 = vunpack.c.l.b16 %v908
    %v3874 = vunpack.c.h.b16 %v908
    %v3875 = vunpack.c.l.b16 %v909
    %v3876 = vunpack.c.h.b16 %v909
    %v3877 = vunpack.c.l.b16 %v910
    %v3878 = vunpack.c.h.b16 %v910
    %v3879 = vunpack.c.l.b16 %v911
    %v3880 = vunpack.c.h.b16 %v911
    %v3881 = vunpack.c.l.b16 %v912
    %v3882 = vunpack.c.h.b16 %v912
    %v3883 = vunpack.c.l.b16 %v913
    %v3884 = vunpack.c.h.b16 %v913
    %v3885 = vunpack.c.l.b16 %v914
    %v3886 = vunpack.c.h.b16 %v914
    %v3887 = vunpack.c.l.b16 %v915
    %v3888 = vunpack.c.h.b16 %v915
    %v3889 = vunpack.c.l.b16 %v916
    %v3890 = vunpack.c.h.b16 %v916
    %v3891 = vunpack.c.l.b16 %v917
    %v3892 = vunpack.c.h.b16 %v917
    %v3893 = vunpack.c.l.b16 %v918
    %v3894 = vunpack.c.h.b16 %v918
    %v3895 = vunpack.c.l.b16 %v919
    %v3896 = vunpack.c.h.b16 %v919
    %v3897 = vunpack.c.l.b16 %v920
    %v3898 = vunpack.c.h.b16 %v920
    %v3899 = vunpack.c.l.b16 %v921
    %v3900 = vunpack.c.h.b16 %v921
    %v3901 = vunpack.c.l.b16 %v922
    %v3902 = vunpack.c.h.b16 %v922
    %v3903 = vunpack.c.l.b16 %v923
    %v3904 = vunpack.c.h.b16 %v923
    %v3905 = vunpack.c.l.b16 %v924
    %v3906 = vunpack.c.h.b16 %v924
    %v3907 = vunpack.c.l.b16 %v925
    %v3908 = vunpack.c.h.b16 %v925
    %v3909 = vunpack.c.l.b16 %v926
    %v3910 = vunpack.c.h.b16 %v926
    %v3911 = vunpack.c.l.b16 %v927
    %v3912 = vunpack.c.h.b16 %v927
    %v3913 = vunpack.c.l.b16 %v928
    %v3914 = vunpack.c.h.b16 %v928
    %v3915 = vunpack.c.l.b16 %v929
    %v3916 = vunpack.c.h.b16 %v929
    %v3917 = vunpack.c.l.b16 %v930
    %v3918 = vunpack.c.h.b16 %v930
    %v3919 = vunpack.c.l.b16 %v931
    %v3920 = vunpack.c.h.b16 %v931
    %v3921 = vunpack.c.l.b16 %v932
    %v3922 = vunpack.c.h.b16 %v932
    %v3923 = vunpack.c.l.b16 %v933
    %v3924 = vunpack.c.h.b16 %v933
    %v3925 = vunpack.c.l.b16 %v934
    %v3926 = vunpack.c.h.b16 %v934
    %v3927 = vunpack.c.l.b16 %v935
    %v3928 = vunpack.c.h.b16 %v935
    %v3929 = vunpack.c.l.b16 %v936
    %v3930 = vunpack.c.h.b16 %v936
    %v3931 = vunpack.c.l.b16 %v937
    %v3932 = vunpack.c.h.b16 %v937
    %v3933 = vunpack.c.l.b16 %v938
    %v3934 = vunpack.c.h.b16 %v938
    %v3935 = vunpack.c.l.b16 %v939
    %v3936 = vunpack.c.h.b16 %v939
    %v3937 = vunpack.c.l.b16 %v940
    %v3938 = vunpack.c.h.b16 %v940
    %v3939 = vunpack.c.l.b16 %v941
    %v3940 = vunpack.c.h.b16 %v941
    %v3941 = vunpack.c.l.b16 %v942
    %v3942 = vunpack.c.h.b16 %v942
    %v3943 = vunpack.c.l.b16 %v943
    %v3944 = vunpack.c.h.b16 %v943
    %v3945 = vunpack.c.l.b16 %v944
    %v3946 = vunpack.c.h.b16 %v944
    %v3947 = vunpack.c.l.b16 %v945
    %v3948 = vunpack.c.h.b16 %v945
    %v3949 = vunpack.c.l.b16 %v946
    %v3950 = vunpack.c.h.b16 %v946
    %v3951 = vunpack.c.l.b16 %v947
    %v3952 = vunpack.c.h.b16 %v947
    %v3953 = vunpack.c.l.b16 %v948
    %v3954 = vunpack.c.h.b16 %v948
    %v3955 = vunpack.c.l.b16 %v949
    %v3956 = vunpack.c.h.b16 %v949
    %v3957 = vunpack.c.l.b16 %v950
    %v3958 = vunpack.c.h.b16 %v950
    %v3959 = vunpack.c.l.b16 %v951
    %v3960 = vunpack.c.h.b16 %v951
    %v3961 = vunpack.c.l.b16 %v952
    %v3962 = vunpack.c.h.b16 %v952
    %v3963 = vunpack.c.l.b16 %v953
    %v3964 = vunpack.c.h.b16 %v953
    %v3965 = vunpack.c.l.b16 %v954
    %v3966 = vunpack.c.h.b16 %v954
    %v3967 = vunpack.c.l.b16 %v955
    %v3968 = vunpack.c.h.b16 %v955
    %v3969 = vunpack.c.l.b16 %v956
    %v3970 = vunpack.c.h.b16 %v956
    %v3971 = vunpack.c.l.b16 %v957
    %v3972 = vunpack.c.h.b16 %v957
    %v3973 = vunpack.c.l.b16 %v958
    %v3974 = vunpack.c.h.b16 %v958
    %v3975 = vunpack.c.l.b16 %v959
    %v3976 = vunpack.c.h.b16 %v959
    %v3977 = vunpack.c.l.b16 %v960
    %v3978 = vunpack.c.h.b16 %v960
    %v3979 = vunpack.c.l.b16 %v961
    %v3980 = vunpack.c.h.b16 %v961
    %v3981 = vunpack.c.l.b16 %v962
    %v3982 = vunpack.c.h.b16 %v962
    %v3983 = vunpack.c.l.b16 %v963
    %v3984 = vunpack.c.h.b16 %v963
    %v3985 = vunpack.c.l.b16 %v964
    %v3986 = vunpack.c.h.b16 %v964
    %v3987 = vunpack.c.l.b16 %v965
    %v3988 = vunpack.c.h.b16 %v965
    %v3989 = vunpack.c.l.b16 %v966
    %v3990 = vunpack.c.h.b16 %v966
    %v3991 = vunpack.c.l.b16 %v967
    %v3992 = vunpack.c.h.b16 %v967
    %v3993 = vunpack.c.l.b16 %v968
    %v3994 = vunpack.c.h.b16 %v968
    %v3995 = vunpack.c.l.b16 %v969
    %v3996 = vunpack.c.h.b16 %v969
    %v3997 = vunpack.c.l.b16 %v970
    %v3998 = vunpack.c.h.b16 %v970
    %v3999 = vunpack.c.l.b16 %v971
    %v4000 = vunpack.c.h.b16 %v971
    %v4001 = vunpack.c.l.b16 %v972
    %v4002 = vunpack.c.h.b16 %v972
    %v4003 = vunpack.c.l.b16 %v973
    %v4004 = vunpack.c.h.b16 %v973
    %v4005 = vunpack.c.l.b16 %v974
    %v4006 = vunpack.c.h.b16 %v974
    %v4007 = vunpack.c.l.b16 %v975
    %v4008 = vunpack.c.h.b16 %v975
    %v4009 = vunpack.c.l.b16 %v976
    %v4010 = vunpack.c.h.b16 %v976
    %v4011 = vunpack.c.l.b16 %v977
    %v4012 = vunpack.c.h.b16 %v977
    %v4013 = vunpack.c.l.b16 %v978
    %v4014 = vunpack.c.h.b16 %v978
    %v4015 = vunpack.c.l.b16 %v979
    %v4016 = vunpack.c.h.b16 %v979
    %v4017 = vunpack.c.l.b16 %v980
    %v4018 = vunpack.c.h.b16 %v980
    %v4019 = vunpack.c.l.b16 %v981
    %v4020 = vunpack.c.h.b16 %v981
    %v4021 = vunpack.c.l.b16 %v982
    %v4022 = vunpack.c.h.b16 %v982
    %v4023 = vunpack.c.l.b16 %v983
    %v4024 = vunpack.c.h.b16 %v983
    %v4025 = vunpack.c.l.b16 %v984
    %v4026 = vunpack.c.h.b16 %v984
    %v4027 = vunpack.c.l.b16 %v985
    %v4028 = vunpack.c.h.b16 %v985
    %v4029 = vunpack.c.l.b16 %v986
    %v4030 = vunpack.c.h.b16 %v986
    %v4031 = vunpack.c.l.b16 %v987
    %v4032 = vunpack.c.h.b16 %v987
    %v4033 = vunpack.c.l.b16 %v988
    %v4034 = vunpack.c.h.b16 %v988
    %v4035 = vunpack.c.l.b16 %v989
    %v4036 = vunpack.c.h.b16 %v989
    %v4037 = vunpack.c.l.b16 %v990
    %v4038 = vunpack.c.h.b16 %v990
    %v4039 = vunpack.c.l.b16 %v991
    %v4040 = vunpack.c.h.b16 %v991
    %v4041 = vunpack.c.l.b16 %v992
    %v4042 = vunpack.c.h.b16 %v992
    %v4043 = vunpack.c.l.b16 %v993
    %v4044 = vunpack.c.h.b16 %v993
    %v4045 = vunpack.c.l.b16 %v994
    %v4046 = vunpack.c.h.b16 %v994
    %v4047 = vunpack.c.l.b16 %v995
    %v4048 = vunpack.c.h.b16 %v995
    %v4049 = vunpack.c.l.b16 %v996
    %v4050 = vunpack.c.h.b16 %v996
    %v4051 = vunpack.c.l.b16 %v997
    %v4052 = vunpack.c.h.b16 %v997
    %v4053 = vunpack.c.l.b16 %v998
    %v4054 = vunpack.c.h.b16 %v998
    %v4055 = vunpack.c.l.b16 %v999
    %v4056 = vunpack.c.h.b16 %v999
    %v4057 = vunpack.c.l.b16 %v1000
    %v4058 = vunpack.c.h.b16 %v1000
    %v4059 = vunpack.c.l.b16 %v1001
    %v4060 = vunpack.c.h.b16 %v1001
    %v4061 = vunpack.c.l.b16 %v1002
    %v4062 = vunpack.c.h.b16 %v1002
    %v4063 = vunpack.c.l.b16 %v1003
    %v4064 = vunpack.c.h.b16 %v1003
    %v4065 = vunpack.c.l.b16 %v1004
    %v4066 = vunpack.c.h.b16 %v1004
    %v4067 = vunpack.c.l.b16 %v1005
    %v4068 = vunpack.c.h.b16 %v1005
    %v4069 = vunpack.c.l.b16 %v1006
    %v4070 = vunpack.c.h.b16 %v1006
    %v4071 = vunpack.c.l.b16 %v1007
    %v4072 = vunpack.c.h.b16 %v1007
    %v4073 = vunpack.c.l.b16 %v1008
    %v4074 = vunpack.c.h.b16 %v1008
    %v4075 = vunpack.c.l.b16 %v1009
    %v4076 = vunpack.c.h.b16 %v1009
    %v4077 = vunpack.c.l.b16 %v1010
    %v4078 = vunpack.c.h.b16 %v1010
    %v4079 = vunpack.c.l.b16 %v1011
    %v4080 = vunpack.c.h.b16 %v1011
    %v4081 = vunpack.c.l.b16 %v1012
    %v4082 = vunpack.c.h.b16 %v1012
    %v4083 = vunpack.c.l.b16 %v1013
    %v4084 = vunpack.c.h.b16 %v1013
    %v4085 = vunpack.c.l.b16 %v1014
    %v4086 = vunpack.c.h.b16 %v1014
    %v4087 = vunpack.c.l.b16 %v1015
    %v4088 = vunpack.c.h.b16 %v1015
    %v4089 = vunpack.c.l.b16 %v1016
    %v4090 = vunpack.c.h.b16 %v1016
    %v4091 = vunpack.c.l.b16 %v1017
    %v4092 = vunpack.c.h.b16 %v1017
    %v4093 = vunpack.c.l.b16 %v1018
    %v4094 = vunpack.c.h.b16 %v1018
    %v4095 = vunpack.c.l.b16 %v1019
    %v4096 = vunpack.c.h.b16 %v1019
    %v4097 = vunpack.c.l.b16 %v1020
    %v4098 = vunpack.c.h.b16 %v1020
    %v4099 = vunpack.c.l.b16 %v1021
    %v4100 = vunpack.c.h.b16 %v1021
    %v4101 = vunpack.c.l.b16 %v1022
    %v4102 = vunpack.c.h.b16 %v1022
    %v4103 = vunpack.c.l.b16 %v1023
    %v4104 = vunpack.c.h.b16 %v1023
    %v4105 = vunpack.c.l.b16 %v1024
    %v4106 = vunpack.c.h.b16 %v1024
    %v4107 = vunpack.c.l.b16 %v1025
    %v4108 = vunpack.c.h.b16 %v1025
    %v4109 = vunpack.c.l.b16 %v1026
    %v4110 = vunpack.c.h.b16 %v1026
    %v4111 = vunpack.c.l.b16 %v1027
    %v4112 = vunpack.c.h.b16 %v1027
    %v4113 = vunpack.c.l.b16 %v1028
    %v4114 = vunpack.c.h.b16 %v1028
    %v4115 = vunpack.c.l.b16 %v1029
    %v4116 = vunpack.c.h.b16 %v1029
    %v4117 = vunpack.c.l.b16 %v1030
    %v4118 = vunpack.c.h.b16 %v1030
    %v4119 = vunpack.c.l.b16 %v1031
    %v4120 = vunpack.c.h.b16 %v1031
    %v4121 = vunpack.c.l.b16 %v1032
    %v4122 = vunpack.c.h.b16 %v1032
    %v4123 = vunpack.c.l.b16 %v1033
    %v4124 = vunpack.c.h.b16 %v1033
    %v4125 = vunpack.c.l.b16 %v1034
    %v4126 = vunpack.c.h.b16 %v1034
    %v4127 = vunpack.c.l.b16 %v1035
    %v4128 = vunpack.c.h.b16 %v1035
    %v4129 = vunpack.c.l.b16 %v1036
    %v4130 = vunpack.c.h.b16 %v1036
    %v4131 = vunpack.c.l.b16 %v1037
    %v4132 = vunpack.c.h.b16 %v1037
    %v4133 = vunpack.c.l.b16 %v1038
    %v4134 = vunpack.c.h.b16 %v1038
    %v4135 = vunpack.c.l.b16 %v1039
    %v4136 = vunpack.c.h.b16 %v1039
    %v4137 = vunpack.c.l.b16 %v1040
    %v4138 = vunpack.c.h.b16 %v1040
    %v4139 = vunpack.c.l.b16 %v1041
    %v4140 = vunpack.c.h.b16 %v1041
    %v4141 = vunpack.c.l.b16 %v1042
    %v4142 = vunpack.c.h.b16 %v1042
    %v4143 = vunpack.c.l.b16 %v1043
    %v4144 = vunpack.c.h.b16 %v1043
    %v4145 = vunpack.c.l.b16 %v1044
    %v4146 = vunpack.c.h.b16 %v1044
    %v4147 = vunpack.c.l.b16 %v1045
    %v4148 = vunpack.c.h.b16 %v1045
    %v4149 = vunpack.c.l.b16 %v1046
    %v4150 = vunpack.c.h.b16 %v1046
    %v4151 = vunpack.c.l.b16 %v1047
    %v4152 = vunpack.c.h.b16 %v1047
    %v4153 = vunpack.c.l.b16 %v1048
    %v4154 = vunpack.c.h.b16 %v1048
    %v4155 = vunpack.c.l.b16 %v1049
    %v4156 = vunpack.c.h.b16 %v1049
    %v4157 = vunpack.c.l.b16 %v1050
    %v4158 = vunpack.c.h.b16 %v1050
    %v4159 = vunpack.c.l.b16 %v1051
    %v4160 = vunpack.c.h.b16 %v1051
    %v4161 = vunpack.c.l.b16 %v1052
    %v4162 = vunpack.c.h.b16 %v1052
    %v4163 = vunpack.c.l.b16 %v1053
    %v4164 = vunpack.c.h.b16 %v1053
    %v4165 = vunpack.c.l.b16 %v1054
    %v4166 = vunpack.c.h.b16 %v1054
    %v4167 = vunpack.c.l.b16 %v1055
    %v4168 = vunpack.c.h.b16 %v1055
    %v4169 = vunpack.c.l.b16 %v1056
    %v4170 = vunpack.c.h.b16 %v1056
    %v4171 = vunpack.c.l.b16 %v1057
    %v4172 = vunpack.c.h.b16 %v1057
    %v4173 = vunpack.c.l.b16 %v1058
    %v4174 = vunpack.c.h.b16 %v1058
    %v4175 = vunpack.c.l.b16 %v1059
    %v4176 = vunpack.c.h.b16 %v1059
    %v4177 = vunpack.c.l.b16 %v1060
    %v4178 = vunpack.c.h.b16 %v1060
    %v4179 = vunpack.c.l.b16 %v1061
    %v4180 = vunpack.c.h.b16 %v1061
    %v4181 = vunpack.c.l.b16 %v1062
    %v4182 = vunpack.c.h.b16 %v1062
    %v4183 = vunpack.c.l.b16 %v1063
    %v4184 = vunpack.c.h.b16 %v1063
    %v4185 = vunpack.c.l.b16 %v1064
    %v4186 = vunpack.c.h.b16 %v1064
    %v4187 = vunpack.c.l.b16 %v1065
    %v4188 = vunpack.c.h.b16 %v1065
    %v4189 = vunpack.c.l.b16 %v1066
    %v4190 = vunpack.c.h.b16 %v1066
    %v4191 = vunpack.c.l.b16 %v1067
    %v4192 = vunpack.c.h.b16 %v1067
    %v4193 = vunpack.c.l.b16 %v1068
    %v4194 = vunpack.c.h.b16 %v1068
    %v4195 = vunpack.c.l.b16 %v1069
    %v4196 = vunpack.c.h.b16 %v1069
    %v4197 = vunpack.c.l.b16 %v1070
    %v4198 = vunpack.c.h.b16 %v1070
    %v4199 = vunpack.c.l.b16 %v1071
    %v4200 = vunpack.c.h.b16 %v1071
    %v4201 = vunpack.c.l.b16 %v1072
    %v4202 = vunpack.c.h.b16 %v1072
    %v4203 = vunpack.c.l.b16 %v1073
    %v4204 = vunpack.c.h.b16 %v1073
    %v4205 = vunpack.c.l.b16 %v1074
    %v4206 = vunpack.c.h.b16 %v1074
    %v4207 = vunpack.c.l.b16 %v1075
    %v4208 = vunpack.c.h.b16 %v1075
    %v4209 = vunpack.c.l.b16 %v1076
    %v4210 = vunpack.c.h.b16 %v1076
    %v4211 = vunpack.c.l.b16 %v1077
    %v4212 = vunpack.c.h.b16 %v1077
    %v4213 = vunpack.c.l.b16 %v1078
    %v4214 = vunpack.c.h.b16 %v1078
    %v4215 = vunpack.c.l.b16 %v1079
    %v4216 = vunpack.c.h.b16 %v1079
    %v4217 = vunpack.c.l.b16 %v1080
    %v4218 = vunpack.c.h.b16 %v1080
    %v4219 = vunpack.c.l.b16 %v1081
    %v4220 = vunpack.c.h.b16 %v1081
    %v4221 = vunpack.c.l.b16 %v1082
    %v4222 = vunpack.c.h.b16 %v1082
    %v4223 = vunpack.c.l.b16 %v1083
    %v4224 = vunpack.c.h.b16 %v1083
    %v4225 = vunpack.c.l.b16 %v1084
    %v4226 = vunpack.c.h.b16 %v1084
    %v4227 = vunpack.c.l.b16 %v1085
    %v4228 = vunpack.c.h.b16 %v1085
    %v4229 = vunpack.c.l.b16 %v1086
    %v4230 = vunpack.c.h.b16 %v1086
    %v4231 = vunpack.c.l.b16 %v1087
    %v4232 = vunpack.c.h.b16 %v1087
    %v4233 = vunpack.c.l.b16 %v1088
    %v4234 = vunpack.c.h.b16 %v1088
    %v4235 = vunpack.c.l.b16 %v1089
    %v4236 = vunpack.c.h.b16 %v1089
    %v4237 = vunpack.c.l.b16 %v1090
    %v4238 = vunpack.c.h.b16 %v1090
    %v4239 = vunpack.c.l.b16 %v1091
    %v4240 = vunpack.c.h.b16 %v1091
    %v4241 = vunpack.c.l.b16 %v1092
    %v4242 = vunpack.c.h.b16 %v1092
    %v4243 = vunpack.c.l.b16 %v1093
    %v4244 = vunpack.c.h.b16 %v1093
    %v4245 = vunpack.c.l.b16 %v1094
    %v4246 = vunpack.c.h.b16 %v1094
    %v4247 = vunpack.c.l.b16 %v1095
    %v4248 = vunpack.c.h.b16 %v1095
    %v4249 = vunpack.c.l.b16 %v1096
    %v4250 = vunpack.c.h.b16 %v1096
    %v4251 = vunpack.c.l.b16 %v1097
    %v4252 = vunpack.c.h.b16 %v1097
    %v4253 = vunpack.c.l.b16 %v1098
    %v4254 = vunpack.c.h.b16 %v1098
    %v4255 = vunpack.c.l.b16 %v1099
    %v4256 = vunpack.c.h.b16 %v1099
    %v4257 = vunpack.c.l.b16 %v1100
    %v4258 = vunpack.c.h.b16 %v1100
    %v4259 = vunpack.c.l.b16 %v1101
    %v4260 = vunpack.c.h.b16 %v1101
    %v4261 = vunpack.c.l.b16 %v1102
    %v4262 = vunpack.c.h.b16 %v1102
    %v4263 = vunpack.c.l.b16 %v1103
    %v4264 = vunpack.c.h.b16 %v1103
    %v4265 = vunpack.c.l.b16 %v1104
    %v4266 = vunpack.c.h.b16 %v1104
    %v4267 = vunpack.c.l.b16 %v1105
    %v4268 = vunpack.c.h.b16 %v1105
    %v4269 = vunpack.c.l.b16 %v1106
    %v4270 = vunpack.c.h.b16 %v1106
    %v4271 = vunpack.c.l.b16 %v1107
    %v4272 = vunpack.c.h.b16 %v1107
    %v4273 = vunpack.c.l.b16 %v1108
    %v4274 = vunpack.c.h.b16 %v1108
    %v4275 = vunpack.c.l.b16 %v1109
    %v4276 = vunpack.c.h.b16 %v1109
    %v4277 = vunpack.c.l.b16 %v1110
    %v4278 = vunpack.c.h.b16 %v1110
    %v4279 = vunpack.c.l.b16 %v1111
    %v4280 = vunpack.c.h.b16 %v1111
    %v4281 = vunpack.c.l.b16 %v1112
    %v4282 = vunpack.c.h.b16 %v1112
    %v4283 = vunpack.c.l.b16 %v1113
    %v4284 = vunpack.c.h.b16 %v1113
    %v4285 = vunpack.c.l.b16 %v1114
    %v4286 = vunpack.c.h.b16 %v1114
    %v4287 = vunpack.c.l.b16 %v1115
    %v4288 = vunpack.c.h.b16 %v1115
    %v4289 = vunpack.c.l.b16 %v1116
    %v4290 = vunpack.c.h.b16 %v1116
    %v4291 = vunpack.c.l.b16 %v1117
    %v4292 = vunpack.c.h.b16 %v1117
    %v4293 = vunpack.c.l.b16 %v1118
    %v4294 = vunpack.c.h.b16 %v1118
    %v4295 = vunpack.c.l.b16 %v1119
    %v4296 = vunpack.c.h.b16 %v1119
    %v4297 = vunpack.c.l.b16 %v1120
    %v4298 = vunpack.c.h.b16 %v1120
    %v4299 = vunpack.c.l.b16 %v1121
    %v4300 = vunpack.c.h.b16 %v1121
    %v4301 = vunpack.c.l.b16 %v1122
    %v4302 = vunpack.c.h.b16 %v1122
    %v4303 = vunpack.c.l.b16 %v1123
    %v4304 = vunpack.c.h.b16 %v1123
    %v4305 = vunpack.c.l.b16 %v1124
    %v4306 = vunpack.c.h.b16 %v1124
    %v4307 = vunpack.c.l.b16 %v1125
    %v4308 = vunpack.c.h.b16 %v1125
    %v4309 = vunpack.c.l.b16 %v1126
    %v4310 = vunpack.c.h.b16 %v1126
    %v4311 = vunpack.c.l.b16 %v1127
    %v4312 = vunpack.c.h.b16 %v1127
    %v4313 = vunpack.c.l.b16 %v1128
    %v4314 = vunpack.c.h.b16 %v1128
    %v4315 = vunpack.c.l.b16 %v1129
    %v4316 = vunpack.c.h.b16 %v1129
    %v4317 = vunpack.c.l.b16 %v1130
    %v4318 = vunpack.c.h.b16 %v1130
    %v4319 = vunpack.c.l.b16 %v1131
    %v4320 = vunpack.c.h.b16 %v1131
    %v4321 = vunpack.c.l.b16 %v1132
    %v4322 = vunpack.c.h.b16 %v1132
    %v4323 = vunpack.c.l.b16 %v1133
    %v4324 = vunpack.c.h.b16 %v1133
    %v4325 = vunpack.c.l.b16 %v1134
    %v4326 = vunpack.c.h.b16 %v1134
    %v4327 = vunpack.c.l.b16 %v1135
    %v4328 = vunpack.c.h.b16 %v1135
    %v4329 = vunpack.c.l.b16 %v1136
    %v4330 = vunpack.c.h.b16 %v1136
    %v4331 = vunpack.c.l.b16 %v1137
    %v4332 = vunpack.c.h.b16 %v1137
    %v4333 = vunpack.c.l.b16 %v1138
    %v4334 = vunpack.c.h.b16 %v1138
    %v4335 = vunpack.c.l.b16 %v1139
    %v4336 = vunpack.c.h.b16 %v1139
    %v4337 = vunpack.c.l.b16 %v1140
    %v4338 = vunpack.c.h.b16 %v1140
    %v4339 = vunpack.c.l.b16 %v1141
    %v4340 = vunpack.c.h.b16 %v1141
    %v4341 = vunpack.c.l.b16 %v1142
    %v4342 = vunpack.c.h.b16 %v1142
    %v4343 = vunpack.c.l.b16 %v1143
    %v4344 = vunpack.c.h.b16 %v1143
    %v4345 = vunpack.c.l.b16 %v1144
    %v4346 = vunpack.c.h.b16 %v1144
    %v4347 = vunpack.c.l.b16 %v1145
    %v4348 = vunpack.c.h.b16 %v1145
    %v4349 = vunpack.c.l.b16 %v1146
    %v4350 = vunpack.c.h.b16 %v1146
    %v4351 = vunpack.c.l.b16 %v1147
    %v4352 = vunpack.c.h.b16 %v1147
    %v4353 = vunpack.c.l.b16 %v1148
    %v4354 = vunpack.c.h.b16 %v1148
    %v4355 = vunpack.c.l.b16 %v1149
    %v4356 = vunpack.c.h.b16 %v1149
    %v4357 = vunpack.c.l.b16 %v1150
    %v4358 = vunpack.c.h.b16 %v1150
    %v4359 = vunpack.c.l.b16 %v1151
    %v4360 = vunpack.c.h.b16 %v1151
    %v4361 = vunpack.c.l.b16 %v1152
    %v4362 = vunpack.c.h.b16 %v1152
    %v4363 = vunpack.c.l.b16 %v1153
    %v4364 = vunpack.c.h.b16 %v1153
    %v4365 = vunpack.c.l.b16 %v1154
    %v4366 = vunpack.c.h.b16 %v1154
    %v4367 = vunpack.c.l.b16 %v1155
    %v4368 = vunpack.c.h.b16 %v1155
    %v4369 = vunpack.c.l.b16 %v1156
    %v4370 = vunpack.c.h.b16 %v1156
    %v4371 = vunpack.c.l.b16 %v1157
    %v4372 = vunpack.c.h.b16 %v1157
    %v4373 = vunpack.c.l.b16 %v1158
    %v4374 = vunpack.c.h.b16 %v1158
    %v4375 = vunpack.c.l.b16 %v1159
    %v4376 = vunpack.c.h.b16 %v1159
    %v4377 = vunpack.c.l.b16 %v1160
    %v4378 = vunpack.c.h.b16 %v1160
    %v4379 = vunpack.c.l.b16 %v1161
    %v4380 = vunpack.c.h.b16 %v1161
    %v4381 = vunpack.c.l.b16 %v1162
    %v4382 = vunpack.c.h.b16 %v1162
    %v4383 = vunpack.c.l.b16 %v1163
    %v4384 = vunpack.c.h.b16 %v1163
    %v4385 = vunpack.c.l.b16 %v1164
    %v4386 = vunpack.c.h.b16 %v1164
    %v4387 = vunpack.c.l.b16 %v1165
    %v4388 = vunpack.c.h.b16 %v1165
    %v4389 = vunpack.c.l.b16 %v1166
    %v4390 = vunpack.c.h.b16 %v1166
    %v4391 = vunpack.c.l.b16 %v1167
    %v4392 = vunpack.c.h.b16 %v1167
    %v4393 = vunpack.c.l.b16 %v1168
    %v4394 = vunpack.c.h.b16 %v1168
    %v4395 = vunpack.c.l.b16 %v1169
    %v4396 = vunpack.c.h.b16 %v1169
    %v4397 = vunpack.c.l.b16 %v1170
    %v4398 = vunpack.c.h.b16 %v1170
    %v4399 = vunpack.c.l.b16 %v1171
    %v4400 = vunpack.c.h.b16 %v1171
    %v4401 = vunpack.c.l.b16 %v1172
    %v4402 = vunpack.c.h.b16 %v1172
    %v4403 = vunpack.c.l.b16 %v1173
    %v4404 = vunpack.c.h.b16 %v1173
    %v4405 = vunpack.c.l.b16 %v1174
    %v4406 = vunpack.c.h.b16 %v1174
    %v4407 = vunpack.c.l.b16 %v1175
    %v4408 = vunpack.c.h.b16 %v1175
    %v4409 = vunpack.c.l.b16 %v1176
    %v4410 = vunpack.c.h.b16 %v1176
    %v4411 = vunpack.c.l.b16 %v1177
    %v4412 = vunpack.c.h.b16 %v1177
    %v4413 = vunpack.c.l.b16 %v1178
    %v4414 = vunpack.c.h.b16 %v1178
    %v4415 = vunpack.c.l.b16 %v1179
    %v4416 = vunpack.c.h.b16 %v1179
    %v4417 = vunpack.c.l.b16 %v1180
    %v4418 = vunpack.c.h.b16 %v1180
    %v4419 = vunpack.c.l.b16 %v1181
    %v4420 = vunpack.c.h.b16 %v1181
    %v4421 = vunpack.c.l.b16 %v1182
    %v4422 = vunpack.c.h.b16 %v1182
    %v4423 = vunpack.c.l.b16 %v1183
    %v4424 = vunpack.c.h.b16 %v1183
    %v4425 = vunpack.c.l.b16 %v1184
    %v4426 = vunpack.c.h.b16 %v1184
    %v4427 = vunpack.c.l.b16 %v1185
    %v4428 = vunpack.c.h.b16 %v1185
    %v4429 = vunpack.c.l.b16 %v1186
    %v4430 = vunpack.c.h.b16 %v1186
    %v4431 = vunpack.c.l.b16 %v1187
    %v4432 = vunpack.c.h.b16 %v1187
    %v4433 = vunpack.c.l.b16 %v1188
    %v4434 = vunpack.c.h.b16 %v1188
    %v4435 = vunpack.c.l.b16 %v1189
    %v4436 = vunpack.c.h.b16 %v1189
    %v4437 = vunpack.c.l.b16 %v1190
    %v4438 = vunpack.c.h.b16 %v1190
    %v4439 = vunpack.c.l.b16 %v1191
    %v4440 = vunpack.c.h.b16 %v1191
    %v4441 = vunpack.c.l.b16 %v1192
    %v4442 = vunpack.c.h.b16 %v1192
    %v4443 = vunpack.c.l.b16 %v1193
    %v4444 = vunpack.c.h.b16 %v1193
    %v4445 = vunpack.c.l.b16 %v1194
    %v4446 = vunpack.c.h.b16 %v1194
    %v4447 = vunpack.c.l.b16 %v1195
    %v4448 = vunpack.c.h.b16 %v1195
    %v4449 = vunpack.c.l.b16 %v1196
    %v4450 = vunpack.c.h.b16 %v1196
    %v4451 = vunpack.c.l.b16 %v1197
    %v4452 = vunpack.c.h.b16 %v1197
    %v4453 = vunpack.c.l.b16 %v1198
    %v4454 = vunpack.c.h.b16 %v1198
    %v4455 = vunpack.c.l.b16 %v1199
    %v4456 = vunpack.c.h.b16 %v1199
    %v4457 = vunpack.c.l.b16 %v1200
    %v4458 = vunpack.c.h.b16 %v1200
    %v4459 = vunpack.c.l.b16 %v1201
    %v4460 = vunpack.c.h.b16 %v1201
    %v4461 = vunpack.c.l.b16 %v1202
    %v4462 = vunpack.c.h.b16 %v1202
    %v4463 = vunpack.c.l.b16 %v1203
    %v4464 = vunpack.c.h.b16 %v1203
    %v4465 = vunpack.c.l.b16 %v1204
    %v4466 = vunpack.c.h.b16 %v1204
    %v4467 = vunpack.c.l.b16 %v1205
    %v4468 = vunpack.c.h.b16 %v1205
    %v4469 = vunpack.c.l.b16 %v1206
    %v4470 = vunpack.c.h.b16 %v1206
    %v4471 = vunpack.c.l.b16 %v1207
    %v4472 = vunpack.c.h.b16 %v1207
    %v4473 = vunpack.c.l.b16 %v1208
    %v4474 = vunpack.c.h.b16 %v1208
    %v4475 = vunpack.c.l.b16 %v1209
    %v4476 = vunpack.c.h.b16 %v1209
    %v4477 = vunpack.c.l.b16 %v1210
    %v4478 = vunpack.c.h.b16 %v1210
    %v4479 = vunpack.c.l.b16 %v1211
    %v4480 = vunpack.c.h.b16 %v1211
    %v4481 = vunpack.c.l.b16 %v1212
    %v4482 = vunpack.c.h.b16 %v1212
    %v4483 = vunpack.c.l.b16 %v1213
    %v4484 = vunpack.c.h.b16 %v1213
    %v4485 = vunpack.c.l.b16 %v1214
    %v4486 = vunpack.c.h.b16 %v1214
    %v4487 = vunpack.c.l.b16 %v1215
    %v4488 = vunpack.c.h.b16 %v1215
    %v4489 = vunpack.c.l.b16 %v1216
    %v4490 = vunpack.c.h.b16 %v1216
    %v4491 = vunpack.c.l.b16 %v1217
    %v4492 = vunpack.c.h.b16 %v1217
    %v4493 = vunpack.c.l.b16 %v1218
    %v4494 = vunpack.c.h.b16 %v1218
    %v4495 = vunpack.c.l.b16 %v1219
    %v4496 = vunpack.c.h.b16 %v1219
    %v4497 = vunpack.c.l.b16 %v1220
    %v4498 = vunpack.c.h.b16 %v1220
    %v4499 = vunpack.c.l.b16 %v1221
    %v4500 = vunpack.c.h.b16 %v1221
    %v4501 = vunpack.c.l.b16 %v1222
    %v4502 = vunpack.c.h.b16 %v1222
    %v4503 = vunpack.c.l.b16 %v1223
    %v4504 = vunpack.c.h.b16 %v1223
    %v4505 = vunpack.c.l.b16 %v1224
    %v4506 = vunpack.c.h.b16 %v1224
    %v4507 = vunpack.c.l.b16 %v1225
    %v4508 = vunpack.c.h.b16 %v1225
    %v4509 = vunpack.c.l.b16 %v1226
    %v4510 = vunpack.c.h.b16 %v1226
    %v4511 = vunpack.c.l.b16 %v1227
    %v4512 = vunpack.c.h.b16 %v1227
    %v4513 = vunpack.c.l.b16 %v1228
    %v4514 = vunpack.c.h.b16 %v1228
    %v4515 = vunpack.c.l.b16 %v1229
    %v4516 = vunpack.c.h.b16 %v1229
    %v4517 = vunpack.c.l.b16 %v1230
    %v4518 = vunpack.c.h.b16 %v1230
    %v4519 = vunpack.c.l.b16 %v1231
    %v4520 = vunpack.c.h.b16 %v1231
    %v4521 = vunpack.c.l.b16 %v1232
    %v4522 = vunpack.c.h.b16 %v1232
    %v4523 = vunpack.c.l.b16 %v1233
    %v4524 = vunpack.c.h.b16 %v1233
    %v4525 = vunpack.c.l.b16 %v1234
    %v4526 = vunpack.c.h.b16 %v1234
    %v4527 = vunpack.c.l.b16 %v1235
    %v4528 = vunpack.c.h.b16 %v1235
    %v4529 = vunpack.c.l.b16 %v1236
    %v4530 = vunpack.c.h.b16 %v1236
    %v4531 = vunpack.c.l.b16 %v1237
    %v4532 = vunpack.c.h.b16 %v1237
    %v4533 = vunpack.c.l.b16 %v1238
    %v4534 = vunpack.c.h.b16 %v1238
    %v4535 = vunpack.c.l.b16 %v1239
    %v4536 = vunpack.c.h.b16 %v1239
    %v4537 = vunpack.c.l.b16 %v1240
    %v4538 = vunpack.c.h.b16 %v1240
    %v4539 = vunpack.c.l.b16 %v1241
    %v4540 = vunpack.c.h.b16 %v1241
    %v4541 = vunpack.c.l.b16 %v1242
    %v4542 = vunpack.c.h.b16 %v1242
    %v4543 = vunpack.c.l.b16 %v1243
    %v4544 = vunpack.c.h.b16 %v1243
    %v4545 = vunpack.c.l.b16 %v1244
    %v4546 = vunpack.c.h.b16 %v1244
    %v4547 = vunpack.c.l.b16 %v1245
    %v4548 = vunpack.c.h.b16 %v1245
    %v4549 = vunpack.c.l.b16 %v1246
    %v4550 = vunpack.c.h.b16 %v1246
    %v4551 = vunpack.c.l.b16 %v1247
    %v4552 = vunpack.c.h.b16 %v1247
    %v4553 = vunpack.c.l.b16 %v1248
    %v4554 = vunpack.c.h.b16 %v1248
    %v4555 = vunpack.c.l.b16 %v1249
    %v4556 = vunpack.c.h.b16 %v1249
    %v4557 = vunpack.c.l.b16 %v1250
    %v4558 = vunpack.c.h.b16 %v1250
    %v4559 = vunpack.c.l.b16 %v1251
    %v4560 = vunpack.c.h.b16 %v1251
    %v4561 = vunpack.c.l.b16 %v1252
    %v4562 = vunpack.c.h.b16 %v1252
    %v4563 = vunpack.c.l.b16 %v1253
    %v4564 = vunpack.c.h.b16 %v1253
    %v4565 = vunpack.c.l.b16 %v1254
    %v4566 = vunpack.c.h.b16 %v1254
    %v4567 = vunpack.c.l.b16 %v1255
    %v4568 = vunpack.c.h.b16 %v1255
    %v4569 = vunpack.c.l.b16 %v1256
    %v4570 = vunpack.c.h.b16 %v1256
    %v4571 = vunpack.c.l.b16 %v1257
    %v4572 = vunpack.c.h.b16 %v1257
    %v4573 = vunpack.c.l.b16 %v1258
    %v4574 = vunpack.c.h.b16 %v1258
    %v4575 = vunpack.c.l.b16 %v1259
    %v4576 = vunpack.c.h.b16 %v1259
    %v4577 = vunpack.c.l.b16 %v1260
    %v4578 = vunpack.c.h.b16 %v1260
    %v4579 = vunpack.c.l.b16 %v1261
    %v4580 = vunpack.c.h.b16 %v1261
    %v4581 = vunpack.c.l.b16 %v1262
    %v4582 = vunpack.c.h.b16 %v1262
    %v4583 = vunpack.c.l.b16 %v1263
    %v4584 = vunpack.c.h.b16 %v1263
    %v4585 = vunpack.c.l.b16 %v1264
    %v4586 = vunpack.c.h.b16 %v1264
    %v4587 = vunpack.c.l.b16 %v1265
    %v4588 = vunpack.c.h.b16 %v1265
    %v4589 = vunpack.c.l.b16 %v1266
    %v4590 = vunpack.c.h.b16 %v1266
    %v4591 = vunpack.c.l.b16 %v1267
    %v4592 = vunpack.c.h.b16 %v1267
    %v4593 = vunpack.c.l.b16 %v1268
    %v4594 = vunpack.c.h.b16 %v1268
    %v4595 = vunpack.c.l.b16 %v1269
    %v4596 = vunpack.c.h.b16 %v1269
    %v4597 = vunpack.c.l.b16 %v1270
    %v4598 = vunpack.c.h.b16 %v1270
    %v4599 = vunpack.c.l.b16 %v1271
    %v4600 = vunpack.c.h.b16 %v1271
    %v4601 = vunpack.c.l.b16 %v1272
    %v4602 = vunpack.c.h.b16 %v1272
    %v4603 = vunpack.c.l.b16 %v1273
    %v4604 = vunpack.c.h.b16 %v1273
    %v4605 = vunpack.c.l.b16 %v1274
    %v4606 = vunpack.c.h.b16 %v1274
    %v4607 = vunpack.c.l.b16 %v1275
    %v4608 = vunpack.c.h.b16 %v1275
    %v4609 = vunpack.c.l.b16 %v1276
    %v4610 = vunpack.c.h.b16 %v1276
    %v4611 = vunpack.c.l.b16 %v1277
    %v4612 = vunpack.c.h.b16 %v1277
    %v4613 = vunpack.c.l.b16 %v1278
    %v4614 = vunpack.c.h.b16 %v1278
    %v4615 = vunpack.c.l.b16 %v1279
    %v4616 = vunpack.c.h.b16 %v1279
    %v4617 = vunpack.c.l.b16 %v1280
    %v4618 = vunpack.c.h.b16 %v1280
    %v4619 = vunpack.c.l.b16 %v1281
    %v4620 = vunpack.c.h.b16 %v1281
    %v4621 = vunpack.c.l.b16 %v1282
    %v4622 = vunpack.c.h.b16 %v1282
    %v4623 = vunpack.c.l.b16 %v1283
    %v4624 = vunpack.c.h.b16 %v1283
    %v4625 = vunpack.c.l.b16 %v1284
    %v4626 = vunpack.c.h.b16 %v1284
    %v4627 = vunpack.c.l.b16 %v1285
    %v4628 = vunpack.c.h.b16 %v1285
    %v4629 = vunpack.c.l.b16 %v1286
    %v4630 = vunpack.c.h.b16 %v1286
    %v4631 = vunpack.c.l.b16 %v1287
    %v4632 = vunpack.c.h.b16 %v1287
    %v4633 = vunpack.c.l.b16 %v1288
    %v4634 = vunpack.c.h.b16 %v1288
    %v4635 = vunpack.c.l.b16 %v1289
    %v4636 = vunpack.c.h.b16 %v1289
    %v4637 = vunpack.c.l.b16 %v1290
    %v4638 = vunpack.c.h.b16 %v1290
    %v4639 = vunpack.c.l.b16 %v1291
    %v4640 = vunpack.c.h.b16 %v1291
    %v4641 = vunpack.c.l.b16 %v1292
    %v4642 = vunpack.c.h.b16 %v1292
    %v4643 = vunpack.c.l.b16 %v1293
    %v4644 = vunpack.c.h.b16 %v1293
    %v4645 = vunpack.c.l.b16 %v1294
    %v4646 = vunpack.c.h.b16 %v1294
    %v4647 = vunpack.c.l.b16 %v1295
    %v4648 = vunpack.c.h.b16 %v1295
    %v4649 = vunpack.c.l.b16 %v1296
    %v4650 = vunpack.c.h.b16 %v1296
    %v4651 = vunpack.c.l.b16 %v1297
    %v4652 = vunpack.c.h.b16 %v1297
    %v4653 = vunpack.c.l.b16 %v1298
    %v4654 = vunpack.c.h.b16 %v1298
    %v4655 = vunpack.c.l.b16 %v1299
    %v4656 = vunpack.c.h.b16 %v1299
    %v4657 = vunpack.c.l.b16 %v1300
    %v4658 = vunpack.c.h.b16 %v1300
    %v4659 = vunpack.c.l.b16 %v1301
    %v4660 = vunpack.c.h.b16 %v1301
    %v4661 = vunpack.c.l.b16 %v1302
    %v4662 = vunpack.c.h.b16 %v1302
    %v4663 = vunpack.c.l.b16 %v1303
    %v4664 = vunpack.c.h.b16 %v1303
    %v4665 = vunpack.c.l.b16 %v1304
    %v4666 = vunpack.c.h.b16 %v1304
    %v4667 = vunpack.c.l.b16 %v1305
    %v4668 = vunpack.c.h.b16 %v1305
    %v4669 = vunpack.c.l.b16 %v1306
    %v4670 = vunpack.c.h.b16 %v1306
    %v4671 = vunpack.c.l.b16 %v1307
    %v4672 = vunpack.c.h.b16 %v1307
    %v4673 = vunpack.c.l.b16 %v1308
    %v4674 = vunpack.c.h.b16 %v1308
    %v4675 = vunpack.c.l.b16 %v1309
    %v4676 = vunpack.c.h.b16 %v1309
    %v4677 = vunpack.c.l.b16 %v1310
    %v4678 = vunpack.c.h.b16 %v1310
    %v4679 = vunpack.c.l.b16 %v1311
    %v4680 = vunpack.c.h.b16 %v1311
    %v4681 = vunpack.c.l.b16 %v1312
    %v4682 = vunpack.c.h.b16 %v1312
    %v4683 = vunpack.c.l.b16 %v1313
    %v4684 = vunpack.c.h.b16 %v1313
    %v4685 = vunpack.c.l.b16 %v1314
    %v4686 = vunpack.c.h.b16 %v1314
    %v4687 = vunpack.c.l.b16 %v1315
    %v4688 = vunpack.c.h.b16 %v1315
    %v4689 = vunpack.c.l.b16 %v1316
    %v4690 = vunpack.c.h.b16 %v1316
    %v4691 = vunpack.c.l.b16 %v1317
    %v4692 = vunpack.c.h.b16 %v1317
    %v4693 = vunpack.c.l.b16 %v1318
    %v4694 = vunpack.c.h.b16 %v1318
    %v4695 = vunpack.c.l.b16 %v1319
    %v4696 = vunpack.c.h.b16 %v1319
    %v4697 = vunpack.c.l.b16 %v1320
    %v4698 = vunpack.c.h.b16 %v1320
    %v4699 = vunpack.c.l.b16 %v1321
    %v4700 = vunpack.c.h.b16 %v1321
    %v4701 = vunpack.c.l.b16 %v1322
    %v4702 = vunpack.c.h.b16 %v1322
    %v4703 = vunpack.c.l.b16 %v1323
    %v4704 = vunpack.c.h.b16 %v1323
    %v4705 = vunpack.c.l.b16 %v1324
    %v4706 = vunpack.c.h.b16 %v1324
    %v4707 = vunpack.c.l.b16 %v1325
    %v4708 = vunpack.c.h.b16 %v1325
    %v4709 = vunpack.c.l.b16 %v1326
    %v4710 = vunpack.c.h.b16 %v1326
    %v4711 = vunpack.c.l.b16 %v1327
    %v4712 = vunpack.c.h.b16 %v1327
    %v4713 = vunpack.c.l.b16 %v1328
    %v4714 = vunpack.c.h.b16 %v1328
    %v4715 = vunpack.c.l.b16 %v1329
    %v4716 = vunpack.c.h.b16 %v1329
    %v4717 = vunpack.c.l.b16 %v1330
    %v4718 = vunpack.c.h.b16 %v1330
    %v4719 = vunpack.c.l.b16 %v1331
    %v4720 = vunpack.c.h.b16 %v1331
    %v4721 = vunpack.c.l.b16 %v1332
    %v4722 = vunpack.c.h.b16 %v1332
    %v4723 = vunpack.c.l.b16 %v1333
    %v4724 = vunpack.c.h.b16 %v1333
    %v4725 = vunpack.c.l.b16 %v1334
    %v4726 = vunpack.c.h.b16 %v1334
    %v4727 = vunpack.c.l.b16 %v1335
    %v4728 = vunpack.c.h.b16 %v1335
    %v4729 = vunpack.c.l.b16 %v1336
    %v4730 = vunpack.c.h.b16 %v1336
    %v4731 = vunpack.c.l.b16 %v1337
    %v4732 = vunpack.c.h.b16 %v1337
    %v4733 = vunpack.c.l.b16 %v1338
    %v4734 = vunpack.c.h.b16 %v1338
    %v4735 = vunpack.c.l.b16 %v1339
    %v4736 = vunpack.c.h.b16 %v1339
    %v4737 = vunpack.c.l.b16 %v1340
    %v4738 = vunpack.c.h.b16 %v1340
    %v4739 = vunpack.c.l.b16 %v1341
    %v4740 = vunpack.c.h.b16 %v1341
    %v4741 = vunpack.c.l.b16 %v1342
    %v4742 = vunpack.c.h.b16 %v1342
    %v4743 = vunpack.c.l.b16 %v1343
    %v4744 = vunpack.c.h.b16 %v1343
    %v4745 = vunpack.c.l.b16 %v1344
    %v4746 = vunpack.c.h.b16 %v1344
    %v4747 = vunpack.c.l.b16 %v1345
    %v4748 = vunpack.c.h.b16 %v1345
    %v4749 = vunpack.c.l.b16 %v1346
    %v4750 = vunpack.c.h.b16 %v1346
    %v4751 = vunpack.c.l.b16 %v1347
    %v4752 = vunpack.c.h.b16 %v1347
    %v4753 = vunpack.c.l.b16 %v1348
    %v4754 = vunpack.c.h.b16 %v1348
    %v4755 = vunpack.c.l.b16 %v1349
    %v4756 = vunpack.c.h.b16 %v1349
    %v4757 = vunpack.c.l.b16 %v1350
    %v4758 = vunpack.c.h.b16 %v1350
    %v4759 = vunpack.c.l.b16 %v1351
    %v4760 = vunpack.c.h.b16 %v1351
    %v4761 = vunpack.c.l.b16 %v1352
    %v4762 = vunpack.c.h.b16 %v1352
    %v4763 = vunpack.c.l.b16 %v1353
    %v4764 = vunpack.c.h.b16 %v1353
    %v4765 = vunpack.c.l.b16 %v1354
    %v4766 = vunpack.c.h.b16 %v1354
    %v4767 = vunpack.c.l.b16 %v1355
    %v4768 = vunpack.c.h.b16 %v1355
    %v4769 = vunpack.c.l.b16 %v1356
    %v4770 = vunpack.c.h.b16 %v1356
    %v4771 = vunpack.c.l.b16 %v1357
    %v4772 = vunpack.c.h.b16 %v1357
    %v4773 = vunpack.c.l.b16 %v1358
    %v4774 = vunpack.c.h.b16 %v1358
    %v4775 = vunpack.c.l.b16 %v1359
    %v4776 = vunpack.c.h.b16 %v1359
    %v4777 = vunpack.c.l.b16 %v1360
    %v4778 = vunpack.c.h.b16 %v1360
    %v4779 = vunpack.c.l.b16 %v1361
    %v4780 = vunpack.c.h.b16 %v1361
    %v4781 = vunpack.c.l.b16 %v1362
    %v4782 = vunpack.c.h.b16 %v1362
    %v4783 = vunpack.c.l.b16 %v1363
    %v4784 = vunpack.c.h.b16 %v1363
    %v4785 = vunpack.c.l.b16 %v1364
    %v4786 = vunpack.c.h.b16 %v1364
    %v4787 = vunpack.c.l.b16 %v1365
    %v4788 = vunpack.c.h.b16 %v1365
    %v4789 = vunpack.c.l.b16 %v1366
    %v4790 = vunpack.c.h.b16 %v1366
    %v4791 = vunpack.c.l.b16 %v1367
    %v4792 = vunpack.c.h.b16 %v1367
    %v4793 = vunpack.c.l.b16 %v1368
    %v4794 = vunpack.c.h.b16 %v1368
    %v4795 = vunpack.c.l.b16 %v1369
    %v4796 = vunpack.c.h.b16 %v1369
    %v4797 = vunpack.c.l.b16 %v1370
    %v4798 = vunpack.c.h.b16 %v1370
    %v4799 = vunpack.c.l.b16 %v1371
    %v4800 = vunpack.c.h.b16 %v1371
    %v4801 = vunpack.c.l.b16 %v1372
    %v4802 = vunpack.c.h.b16 %v1372
    %v4803 = vunpack.c.l.b16 %v1373
    %v4804 = vunpack.c.h.b16 %v1373
    %v4805 = vunpack.c.l.b16 %v1374
    %v4806 = vunpack.c.h.b16 %v1374
    %v4807 = vunpack.c.l.b16 %v1375
    %v4808 = vunpack.c.h.b16 %v1375
    %v4809 = vunpack.c.l.b16 %v1376
    %v4810 = vunpack.c.h.b16 %v1376
    %v4811 = vunpack.c.l.b16 %v1377
    %v4812 = vunpack.c.h.b16 %v1377
    %v4813 = vunpack.c.l.b16 %v1378
    %v4814 = vunpack.c.h.b16 %v1378
    %v4815 = vunpack.c.l.b16 %v1379
    %v4816 = vunpack.c.h.b16 %v1379
    %v4817 = vunpack.c.l.b16 %v1380
    %v4818 = vunpack.c.h.b16 %v1380
    %v4819 = vunpack.c.l.b16 %v1381
    %v4820 = vunpack.c.h.b16 %v1381
    %v4821 = vunpack.c.l.b16 %v1382
    %v4822 = vunpack.c.h.b16 %v1382
    %v4823 = vunpack.c.l.b16 %v1383
    %v4824 = vunpack.c.h.b16 %v1383
    %v4825 = vunpack.c.l.b16 %v1384
    %v4826 = vunpack.c.h.b16 %v1384
    %v4827 = vunpack.c.l.b16 %v1385
    %v4828 = vunpack.c.h.b16 %v1385
    %v4829 = vunpack.c.l.b16 %v1386
    %v4830 = vunpack.c.h.b16 %v1386
    %v4831 = vunpack.c.l.b16 %v1387
    %v4832 = vunpack.c.h.b16 %v1387
    %v4833 = vunpack.c.l.b16 %v1388
    %v4834 = vunpack.c.h.b16 %v1388
    %v4835 = vunpack.c.l.b16 %v1389
    %v4836 = vunpack.c.h.b16 %v1389
    %v4837 = vunpack.c.l.b16 %v1390
    %v4838 = vunpack.c.h.b16 %v1390
    %v4839 = vunpack.c.l.b16 %v1391
    %v4840 = vunpack.c.h.b16 %v1391
    %v4841 = vunpack.c.l.b16 %v1392
    %v4842 = vunpack.c.h.b16 %v1392
    %v4843 = vunpack.c.l.b16 %v1393
    %v4844 = vunpack.c.h.b16 %v1393
    %v4845 = vunpack.c.l.b16 %v1394
    %v4846 = vunpack.c.h.b16 %v1394
    %v4847 = vunpack.c.l.b16 %v1395
    %v4848 = vunpack.c.h.b16 %v1395
    %v4849 = vunpack.c.l.b16 %v1396
    %v4850 = vunpack.c.h.b16 %v1396
    %v4851 = vunpack.c.l.b16 %v1397
    %v4852 = vunpack.c.h.b16 %v1397
    %v4853 = vunpack.c.l.b16 %v1398
    %v4854 = vunpack.c.h.b16 %v1398
    %v4855 = vunpack.c.l.b16 %v1399
    %v4856 = vunpack.c.h.b16 %v1399
    %v4857 = vunpack.c.l.b16 %v1400
    %v4858 = vunpack.c.h.b16 %v1400
    %v4859 = vunpack.c.l.b16 %v1401
    %v4860 = vunpack.c.h.b16 %v1401
    %v4861 = vunpack.c.l.b16 %v1402
    %v4862 = vunpack.c.h.b16 %v1402
    %v4863 = vunpack.c.l.b16 %v1403
    %v4864 = vunpack.c.h.b16 %v1403
    %v4865 = vunpack.c.l.b16 %v1404
    %v4866 = vunpack.c.h.b16 %v1404
    %v4867 = vunpack.c.l.b16 %v1405
    %v4868 = vunpack.c.h.b16 %v1405
    %v4869 = vunpack.c.l.b16 %v1406
    %v4870 = vunpack.c.h.b16 %v1406
    %v4871 = vunpack.c.l.b16 %v1407
    %v4872 = vunpack.c.h.b16 %v1407
    %v4873 = vunpack.c.l.b16 %v1408
    %v4874 = vunpack.c.h.b16 %v1408
    %v4875 = vunpack.c.l.b16 %v1409
    %v4876 = vunpack.c.h.b16 %v1409
    %v4877 = vunpack.c.l.b16 %v1410
    %v4878 = vunpack.c.h.b16 %v1410
    %v4879 = vunpack.c.l.b16 %v1411
    %v4880 = vunpack.c.h.b16 %v1411
    %v4881 = vunpack.c.l.b16 %v1412
    %v4882 = vunpack.c.h.b16 %v1412
    %v4883 = vunpack.c.l.b16 %v1413
    %v4884 = vunpack.c.h.b16 %v1413
    %v4885 = vunpack.c.l.b16 %v1414
    %v4886 = vunpack.c.h.b16 %v1414
    %v4887 = vunpack.c.l.b16 %v1415
    %v4888 = vunpack.c.h.b16 %v1415
    %v4889 = vunpack.c.l.b16 %v1416
    %v4890 = vunpack.c.h.b16 %v1416
    %v4891 = vunpack.c.l.b16 %v1417
    %v4892 = vunpack.c.h.b16 %v1417
    %v4893 = vunpack.c.l.b16 %v1418
    %v4894 = vunpack.c.h.b16 %v1418
    %v4895 = vunpack.c.l.b16 %v1419
    %v4896 = vunpack.c.h.b16 %v1419
    %v4897 = vunpack.c.l.b16 %v1420
    %v4898 = vunpack.c.h.b16 %v1420
    %v4899 = vunpack.c.l.b16 %v1421
    %v4900 = vunpack.c.h.b16 %v1421
    %v4901 = vunpack.c.l.b16 %v1422
    %v4902 = vunpack.c.h.b16 %v1422
    %v4903 = vunpack.c.l.b16 %v1423
    %v4904 = vunpack.c.h.b16 %v1423
    %v4905 = vunpack.c.l.b16 %v1424
    %v4906 = vunpack.c.h.b16 %v1424
    %v4907 = vunpack.c.l.b16 %v1425
    %v4908 = vunpack.c.h.b16 %v1425
    %v4909 = vunpack.c.l.b16 %v1426
    %v4910 = vunpack.c.h.b16 %v1426
    %v4911 = vunpack.c.l.b16 %v1427
    %v4912 = vunpack.c.h.b16 %v1427
    %v4913 = vunpack.c.l.b16 %v1428
    %v4914 = vunpack.c.h.b16 %v1428
    %v4915 = vunpack.c.l.b16 %v1429
    %v4916 = vunpack.c.h.b16 %v1429
    %v4917 = vunpack.c.l.b16 %v1430
    %v4918 = vunpack.c.h.b16 %v1430
    %v4919 = vunpack.c.l.b16 %v1431
    %v4920 = vunpack.c.h.b16 %v1431
    %v4921 = vunpack.c.l.b16 %v1432
    %v4922 = vunpack.c.h.b16 %v1432
    %v4923 = vunpack.c.l.b16 %v1433
    %v4924 = vunpack.c.h.b16 %v1433
    %v4925 = vunpack.c.l.b16 %v1434
    %v4926 = vunpack.c.h.b16 %v1434
    %v4927 = vunpack.c.l.b16 %v1435
    %v4928 = vunpack.c.h.b16 %v1435
    %v4929 = vunpack.c.l.b16 %v1436
    %v4930 = vunpack.c.h.b16 %v1436
    %v4931 = vunpack.c.l.b16 %v1437
    %v4932 = vunpack.c.h.b16 %v1437
    %v4933 = vunpack.c.l.b16 %v1438
    %v4934 = vunpack.c.h.b16 %v1438
    %v4935 = vunpack.c.l.b16 %v1439
    %v4936 = vunpack.c.h.b16 %v1439
    %v4937 = vunpack.c.l.b16 %v1440
    %v4938 = vunpack.c.h.b16 %v1440
    %v4939 = vunpack.c.l.b16 %v1441
    %v4940 = vunpack.c.h.b16 %v1441
    %v4941 = vunpack.c.l.b16 %v1442
    %v4942 = vunpack.c.h.b16 %v1442
    %v4943 = vunpack.c.l.b16 %v1443
    %v4944 = vunpack.c.h.b16 %v1443
    %v4945 = vunpack.c.l.b16 %v1444
    %v4946 = vunpack.c.h.b16 %v1444
    %v4947 = vunpack.c.l.b16 %v1445
    %v4948 = vunpack.c.h.b16 %v1445
    %v4949 = vunpack.c.l.b16 %v1446
    %v4950 = vunpack.c.h.b16 %v1446
    %v4951 = vunpack.c.l.b16 %v1447
    %v4952 = vunpack.c.h.b16 %v1447
    %v4953 = vunpack.c.l.b16 %v1448
    %v4954 = vunpack.c.h.b16 %v1448
    %v4955 = vunpack.c.l.b16 %v1449
    %v4956 = vunpack.c.h.b16 %v1449
    %v4957 = vunpack.c.l.b16 %v1450
    %v4958 = vunpack.c.h.b16 %v1450
    %v4959 = vunpack.c.l.b16 %v1451
    %v4960 = vunpack.c.h.b16 %v1451
    %v4961 = vunpack.c.l.b16 %v1452
    %v4962 = vunpack.c.h.b16 %v1452
    %v4963 = vunpack.c.l.b16 %v1453
    %v4964 = vunpack.c.h.b16 %v1453
    %v4965 = vunpack.c.l.b16 %v1454
    %v4966 = vunpack.c.h.b16 %v1454
    %v4967 = vunpack.c.l.b16 %v1455
    %v4968 = vunpack.c.h.b16 %v1455
    %v4969 = vunpack.c.l.b16 %v1456
    %v4970 = vunpack.c.h.b16 %v1456
    %v4971 = vunpack.c.l.b16 %v1457
    %v4972 = vunpack.c.h.b16 %v1457
    %v4973 = vunpack.c.l.b16 %v1458
    %v4974 = vunpack.c.h.b16 %v1458
    %v4975 = vunpack.c.l.b16 %v1459
    %v4976 = vunpack.c.h.b16 %v1459
    %v4977 = vunpack.c.l.b16 %v1460
    %v4978 = vunpack.c.h.b16 %v1460
    %v4979 = vunpack.c.l.b16 %v1461
    %v4980 = vunpack.c.h.b16 %v1461
    %v4981 = vunpack.c.l.b16 %v1462
    %v4982 = vunpack.c.h.b16 %v1462
    %v4983 = vunpack.c.l.b16 %v1463
    %v4984 = vunpack.c.h.b16 %v1463
    %v4985 = vunpack.c.l.b16 %v1464
    %v4986 = vunpack.c.h.b16 %v1464
    %v4987 = vunpack.c.l.b16 %v1465
    %v4988 = vunpack.c.h.b16 %v1465
    %v4989 = vunpack.c.l.b16 %v1466
    %v4990 = vunpack.c.h.b16 %v1466
    %v4991 = vunpack.c.l.b16 %v1467
    %v4992 = vunpack.c.h.b16 %v1467
    %v4993 = vunpack.c.l.b16 %v1468
    %v4994 = vunpack.c.h.b16 %v1468
    %v4995 = vunpack.c.l.b16 %v1469
    %v4996 = vunpack.c.h.b16 %v1469
    %v4997 = vunpack.c.l.b16 %v1470
    %v4998 = vunpack.c.h.b16 %v1470
    %v4999 = vunpack.c.l.b16 %v1471
    %v5000 = vunpack.c.h.b16 %v1471
    %v5001 = vunpack.c.l.b16 %v1472
    %v5002 = vunpack.c.h.b16 %v1472
    %v5003 = vunpack.c.l.b16 %v1473
    %v5004 = vunpack.c.h.b16 %v1473
    %v5005 = vunpack.c.l.b16 %v1474
    %v5006 = vunpack.c.h.b16 %v1474
    %v5007 = vunpack.c.l.b16 %v1475
    %v5008 = vunpack.c.h.b16 %v1475
    %v5009 = vunpack.c.l.b16 %v1476
    %v5010 = vunpack.c.h.b16 %v1476
    %v5011 = vunpack.c.l.b16 %v1477
    %v5012 = vunpack.c.h.b16 %v1477
    %v5013 = vunpack.c.l.b16 %v1478
    %v5014 = vunpack.c.h.b16 %v1478
    %v5015 = vunpack.c.l.b16 %v1479
    %v5016 = vunpack.c.h.b16 %v1479
    %v5017 = vunpack.c.l.b16 %v1480
    %v5018 = vunpack.c.h.b16 %v1480
    %v5019 = vunpack.c.l.b16 %v1481
    %v5020 = vunpack.c.h.b16 %v1481
    %v5021 = vunpack.c.l.b16 %v1482
    %v5022 = vunpack.c.h.b16 %v1482
    %v5023 = vunpack.c.l.b16 %v1483
    %v5024 = vunpack.c.h.b16 %v1483
    %v5025 = vunpack.c.l.b16 %v1484
    %v5026 = vunpack.c.h.b16 %v1484
    %v5027 = vunpack.c.l.b16 %v1485
    %v5028 = vunpack.c.h.b16 %v1485
    %v5029 = vunpack.c.l.b16 %v1486
    %v5030 = vunpack.c.h.b16 %v1486
    %v5031 = vunpack.c.l.b16 %v1487
    %v5032 = vunpack.c.h.b16 %v1487
    %v5033 = vunpack.c.l.b16 %v1488
    %v5034 = vunpack.c.h.b16 %v1488
    %v5035 = vunpack.c.l.b16 %v1489
    %v5036 = vunpack.c.h.b16 %v1489
    %v5037 = vunpack.c.l.b16 %v1490
    %v5038 = vunpack.c.h.b16 %v1490
    %v5039 = vunpack.c.l.b16 %v1491
    %v5040 = vunpack.c.h.b16 %v1491
    %v5041 = vunpack.c.l.b16 %v1492
    %v5042 = vunpack.c.h.b16 %v1492
    %v5043 = vunpack.c.l.b16 %v1493
    %v5044 = vunpack.c.h.b16 %v1493
    %v5045 = vunpack.c.l.b16 %v1494
    %v5046 = vunpack.c.h.b16 %v1494
    %v5047 = vunpack.c.l.b16 %v1495
    %v5048 = vunpack.c.h.b16 %v1495
    %v5049 = vunpack.c.l.b16 %v1496
    %v5050 = vunpack.c.h.b16 %v1496
    %v5051 = vunpack.c.l.b16 %v1497
    %v5052 = vunpack.c.h.b16 %v1497
    %v5053 = vunpack.c.l.b16 %v1498
    %v5054 = vunpack.c.h.b16 %v1498
    %v5055 = vunpack.c.l.b16 %v1499
    %v5056 = vunpack.c.h.b16 %v1499
    %v5057 = vunpack.c.l.b16 %v1500
    %v5058 = vunpack.c.h.b16 %v1500
    %v5059 = vunpack.c.l.b16 %v1501
    %v5060 = vunpack.c.h.b16 %v1501
    %v5061 = vunpack.c.l.b16 %v1502
    %v5062 = vunpack.c.h.b16 %v1502
    %v5063 = vunpack.c.l.b16 %v1503
    %v5064 = vunpack.c.h.b16 %v1503
    %v5065 = vunpack.c.l.b16 %v1504
    %v5066 = vunpack.c.h.b16 %v1504
    %v5067 = vunpack.c.l.b16 %v1505
    %v5068 = vunpack.c.h.b16 %v1505
    %v5069 = vunpack.c.l.b16 %v1506
    %v5070 = vunpack.c.h.b16 %v1506
    %v5071 = vunpack.c.l.b16 %v1507
    %v5072 = vunpack.c.h.b16 %v1507
    %v5073 = vunpack.c.l.b16 %v1508
    %v5074 = vunpack.c.h.b16 %v1508
    %v5075 = vunpack.c.l.b16 %v1509
    %v5076 = vunpack.c.h.b16 %v1509
    %v5077 = vunpack.c.l.b16 %v1510
    %v5078 = vunpack.c.h.b16 %v1510
    %v5079 = vunpack.c.l.b16 %v1511
    %v5080 = vunpack.c.h.b16 %v1511
    %v5081 = vunpack.c.l.b16 %v1512
    %v5082 = vunpack.c.h.b16 %v1512
    %v5083 = vunpack.c.l.b16 %v1513
    %v5084 = vunpack.c.h.b16 %v1513
    %v5085 = vunpack.c.l.b16 %v1514
    %v5086 = vunpack.c.h.b16 %v1514
    %v5087 = vunpack.c.l.b16 %v1515
    %v5088 = vunpack.c.h.b16 %v1515
    %v5089 = vunpack.c.l.b16 %v1516
    %v5090 = vunpack.c.h.b16 %v1516
    %v5091 = vunpack.c.l.b16 %v1517
    %v5092 = vunpack.c.h.b16 %v1517
    %v5093 = vunpack.c.l.b16 %v1518
    %v5094 = vunpack.c.h.b16 %v1518
    %v5095 = vunpack.c.l.b16 %v1519
    %v5096 = vunpack.c.h.b16 %v1519
    %v5097 = vunpack.c.l.b16 %v1520
    %v5098 = vunpack.c.h.b16 %v1520
    %v5099 = vunpack.c.l.b16 %v1521
    %v5100 = vunpack.c.h.b16 %v1521
    %v5101 = vunpack.c.l.b16 %v1522
    %v5102 = vunpack.c.h.b16 %v1522
    %v5103 = vunpack.c.l.b16 %v1523
    %v5104 = vunpack.c.h.b16 %v1523
    %v5105 = vunpack.c.l.b16 %v1524
    %v5106 = vunpack.c.h.b16 %v1524
    %v5107 = vunpack.c.l.b16 %v1525
    %v5108 = vunpack.c.h.b16 %v1525
    %v5109 = vunpack.c.l.b16 %v1526
    %v5110 = vunpack.c.h.b16 %v1526
    %v5111 = vunpack.c.l.b16 %v1527
    %v5112 = vunpack.c.h.b16 %v1527
    %v5113 = vunpack.c.l.b16 %v1528
    %v5114 = vunpack.c.h.b16 %v1528
    %v5115 = vunpack.c.l.b16 %v1529
    %v5116 = vunpack.c.h.b16 %v1529
    %v5117 = vunpack.c.l.b16 %v1530
    %v5118 = vunpack.c.h.b16 %v1530
    %v5119 = vunpack.c.l.b16 %v1531
    %v5120 = vunpack.c.h.b16 %v1531
    %v5121 = vunpack.c.l.b16 %v1532
    %v5122 = vunpack.c.h.b16 %v1532
    %v5123 = vunpack.c.l.b16 %v1533
    %v5124 = vunpack.c.h.b16 %v1533
    %v5125 = vunpack.c.l.b16 %v1534
    %v5126 = vunpack.c.h.b16 %v1534
    %v5127 = vunpack.c.l.b16 %v1535
    %v5128 = vunpack.c.h.b16 %v1535
    %v5129 = vunpack.c.l.b16 %v1536
    %v5130 = vunpack.c.h.b16 %v1536
    %v5131 = vunpack.c.l.b16 %v1537
    %v5132 = vunpack.c.h.b16 %v1537
    %v5133 = vunpack.c.l.b16 %v1538
    %v5134 = vunpack.c.h.b16 %v1538
    %v5135 = vunpack.c.l.b16 %v1539
    %v5136 = vunpack.c.h.b16 %v1539
    %v5137 = vunpack.c.l.b16 %v1540
    %v5138 = vunpack.c.h.b16 %v1540
    %v5139 = vunpack.c.l.b16 %v1541
    %v5140 = vunpack.c.h.b16 %v1541
    %v5141 = vunpack.c.l.b16 %v1542
    %v5142 = vunpack.c.h.b16 %v1542
    %v5143 = vunpack.c.l.b16 %v1543
    %v5144 = vunpack.c.h.b16 %v1543
    %v5145 = vunpack.c.l.b16 %v1544
    %v5146 = vunpack.c.h.b16 %v1544
    %v5147 = vunpack.c.l.b16 %v1545
    %v5148 = vunpack.c.h.b16 %v1545
    %v5149 = vunpack.c.l.b16 %v1546
    %v5150 = vunpack.c.h.b16 %v1546
    %v5151 = vunpack.c.l.b16 %v1547
    %v5152 = vunpack.c.h.b16 %v1547
    %v5153 = vunpack.c.l.b16 %v1548
    %v5154 = vunpack.c.h.b16 %v1548
    %v5155 = vunpack.c.l.b16 %v1549
    %v5156 = vunpack.c.h.b16 %v1549
    %v5157 = vunpack.c.l.b16 %v1550
    %v5158 = vunpack.c.h.b16 %v1550
    %v5159 = vunpack.c.l.b16 %v1551
    %v5160 = vunpack.c.h.b16 %v1551
    %v5161 = vunpack.c.l.b16 %v1552
    %v5162 = vunpack.c.h.b16 %v1552
    %v5163 = vunpack.c.l.b16 %v1553
    %v5164 = vunpack.c.h.b16 %v1553
    %v5165 = vunpack.c.l.b16 %v1554
    %v5166 = vunpack.c.h.b16 %v1554
    %v5167 = vunpack.c.l.b16 %v1555
    %v5168 = vunpack.c.h.b16 %v1555
    %v5169 = vunpack.c.l.b16 %v1556
    %v5170 = vunpack.c.h.b16 %v1556
    %v5171 = vunpack.c.l.b16 %v1557
    %v5172 = vunpack.c.h.b16 %v1557
    %v5173 = vunpack.c.l.b16 %v1558
    %v5174 = vunpack.c.h.b16 %v1558
    %v5175 = vunpack.c.l.b16 %v1559
    %v5176 = vunpack.c.h.b16 %v1559
    %v5177 = vunpack.c.l.b16 %v1560
    %v5178 = vunpack.c.h.b16 %v1560
    %v5179 = vunpack.c.l.b16 %v1561
    %v5180 = vunpack.c.h.b16 %v1561
    %v5181 = vunpack.c.l.b16 %v1562
    %v5182 = vunpack.c.h.b16 %v1562
    %v5183 = vunpack.c.l.b16 %v1563
    %v5184 = vunpack.c.h.b16 %v1563
    %v5185 = vunpack.c.l.b16 %v1564
    %v5186 = vunpack.c.h.b16 %v1564
    %v5187 = vunpack.c.l.b16 %v1565
    %v5188 = vunpack.c.h.b16 %v1565
    %v5189 = vunpack.c.l.b16 %v1566
    %v5190 = vunpack.c.h.b16 %v1566
    %v5191 = vunpack.c.l.b16 %v1567
    %v5192 = vunpack.c.h.b16 %v1567
    %v5193 = vunpack.c.l.b16 %v1568
    %v5194 = vunpack.c.h.b16 %v1568
    %v5195 = vunpack.c.l.b16 %v1569
    %v5196 = vunpack.c.h.b16 %v1569
    %v5197 = vunpack.c.l.b16 %v1570
    %v5198 = vunpack.c.h.b16 %v1570
    %v5199 = vunpack.c.l.b16 %v1571
    %v5200 = vunpack.c.h.b16 %v1571
    %v5201 = vunpack.c.l.b16 %v1572
    %v5202 = vunpack.c.h.b16 %v1572
    %v5203 = vunpack.c.l.b16 %v1573
    %v5204 = vunpack.c.h.b16 %v1573
    %v5205 = vunpack.c.l.b16 %v1574
    %v5206 = vunpack.c.h.b16 %v1574
    %v5207 = vunpack.c.l.b16 %v1575
    %v5208 = vunpack.c.h.b16 %v1575
    %v5209 = vunpack.c.l.b16 %v1576
    %v5210 = vunpack.c.h.b16 %v1576
    %v5211 = vunpack.c.l.b16 %v1577
    %v5212 = vunpack.c.h.b16 %v1577
    %v5213 = vunpack.c.l.b16 %v1578
    %v5214 = vunpack.c.h.b16 %v1578
    %v5215 = vunpack.c.l.b16 %v1579
    %v5216 = vunpack.c.h.b16 %v1579
    %v5217 = vunpack.c.l.b16 %v1580
    %v5218 = vunpack.c.h.b16 %v1580
    %v5219 = vunpack.c.l.b16 %v1581
    %v5220 = vunpack.c.h.b16 %v1581
    %v5221 = vunpack.c.l.b16 %v1582
    %v5222 = vunpack.c.h.b16 %v1582
    %v5223 = vunpack.c.l.b16 %v1583
    %v5224 = vunpack.c.h.b16 %v1583
    %v5225 = vunpack.c.l.b16 %v1584
    %v5226 = vunpack.c.h.b16 %v1584
    %v5227 = vunpack.c.l.b16 %v1585
    %v5228 = vunpack.c.h.b16 %v1585
    %v5229 = vunpack.c.l.b16 %v1586
    %v5230 = vunpack.c.h.b16 %v1586
    %v5231 = vunpack.c.l.b16 %v1587
    %v5232 = vunpack.c.h.b16 %v1587
    %v5233 = vunpack.c.l.b16 %v1588
    %v5234 = vunpack.c.h.b16 %v1588
    %v5235 = vunpack.c.l.b16 %v1589
    %v5236 = vunpack.c.h.b16 %v1589
    %v5237 = vunpack.c.l.b16 %v1590
    %v5238 = vunpack.c.h.b16 %v1590
    %v5239 = vunpack.c.l.b16 %v1591
    %v5240 = vunpack.c.h.b16 %v1591
    %v5241 = vunpack.c.l.b16 %v1592
    %v5242 = vunpack.c.h.b16 %v1592
    %v5243 = vunpack.c.l.b16 %v1593
    %v5244 = vunpack.c.h.b16 %v1593
    %v5245 = vunpack.c.l.b16 %v1594
    %v5246 = vunpack.c.h.b16 %v1594
    %v5247 = vunpack.c.l.b16 %v1595
    %v5248 = vunpack.c.h.b16 %v1595
    %v5249 = vunpack.c.l.b16 %v1596
    %v5250 = vunpack.c.h.b16 %v1596
    %v5251 = vunpack.c.l.b16 %v1597
    %v5252 = vunpack.c.h.b16 %v1597
    %v5253 = vunpack.c.l.b16 %v1598
    %v5254 = vunpack.c.h.b16 %v1598
    %v5255 = vunpack.c.l.b16 %v1599
    %v5256 = vunpack.c.h.b16 %v1599
    %v5257 = vunpack.c.l.b16 %v1600
    %v5258 = vunpack.c.h.b16 %v1600
    %v5259 = vpack.c.b16 %v2831, %v2827
    %v5260 = vpack.c.b16 %v2832, %v2828
    %v5261 = vpack.c.b16 %v2833, %v2829
    %v5262 = vpack.c.b16 %v2834, %v2830
    %v5263 = vpack.c.b16 %v2839, %v2835
    %v5264 = vpack.c.b16 %v2840, %v2836
    %v5265 = vpack.c.b16 %v2841, %v2837
    %v5266 = vpack.c.b16 %v2842, %v2838
    %v5267 = vpack.c.b16 %v2847, %v2843
    %v5268 = vpack.c.b16 %v2848, %v2844
    %v5269 = vpack.c.b16 %v2849, %v2845
    %v5270 = vpack.c.b16 %v2850, %v2846
    %v5271 = vpack.c.b16 %v2855, %v2851
    %v5272 = vpack.c.b16 %v2856, %v2852
    %v5273 = vpack.c.b16 %v2857, %v2853
    %v5274 = vpack.c.b16 %v2858, %v2854
    %v5275 = vpack.c.b16 %v2863, %v2859
    %v5276 = vpack.c.b16 %v2864, %v2860
    %v5277 = vpack.c.b16 %v2865, %v2861
    %v5278 = vpack.c.b16 %v2866, %v2862
    %v5279 = vpack.c.b16 %v2871, %v2867
    %v5280 = vpack.c.b16 %v2872, %v2868
    %v5281 = vpack.c.b16 %v2873, %v2869
    %v5282 = vpack.c.b16 %v2874, %v2870
    %v5283 = vpack.c.b16 %v2879, %v2875
    %v5284 = vpack.c.b16 %v2880, %v2876
    %v5285 = vpack.c.b16 %v2881, %v2877
    %v5286 = vpack.c.b16 %v2882, %v2878
    %v5287 = vpack.c.b16 %v2887, %v2883
    %v5288 = vpack.c.b16 %v2888, %v2884
    %v5289 = vpack.c.b16 %v2889, %v2885
    %v5290 = vpack.c.b16 %v2890, %v2886
    %v5291 = vpack.c.b16 %v2895, %v2891
    %v5292 = vpack.c.b16 %v2896, %v2892
    %v5293 = vpack.c.b16 %v2897, %v2893
    %v5294 = vpack.c.b16 %v2898, %v2894
    %v5295 = vpack.c.b16 %v2903, %v2899
    %v5296 = vpack.c.b16 %v2904, %v2900
    %v5297 = vpack.c.b16 %v2905, %v2901
    %v5298 = vpack.c.b16 %v2906, %v2902
    %v5299 = vpack.c.b16 %v2911, %v2907
    %v5300 = vpack.c.b16 %v2912, %v2908
    %v5301 = vpack.c.b16 %v2913, %v2909
    %v5302 = vpack.c.b16 %v2914, %v2910
    %v5303 = vpack.c.b16 %v2919, %v2915
    %v5304 = vpack.c.b16 %v2920, %v2916
    %v5305 = vpack.c.b16 %v2921, %v2917
    %v5306 = vpack.c.b16 %v2922, %v2918
    %v5307 = vpack.c.b16 %v2927, %v2923
    %v5308 = vpack.c.b16 %v2928, %v2924
    %v5309 = vpack.c.b16 %v2929, %v2925
    %v5310 = vpack.c.b16 %v2930, %v2926
    %v5311 = vpack.c.b16 %v2935, %v2931
    %v5312 = vpack.c.b16 %v2936, %v2932
    %v5313 = vpack.c.b16 %v2937, %v2933
    %v5314 = vpack.c.b16 %v2938, %v2934
    %v5315 = vpack.c.b16 %v2943, %v2939
    %v5316 = vpack.c.b16 %v2944, %v2940
    %v5317 = vpack.c.b16 %v2945, %v2941
    %v5318 = vpack.c.b16 %v2946, %v2942
    %v5319 = vpack.c.b16 %v2951, %v2947
    %v5320 = vpack.c.b16 %v2952, %v2948
    %v5321 = vpack.c.b16 %v2953, %v2949
    %v5322 = vpack.c.b16 %v2954, %v2950
    %v5323 = vpack.c.b16 %v2959, %v2955
    %v5324 = vpack.c.b16 %v2960, %v2956
    %v5325 = vpack.c.b16 %v2961, %v2957
    %v5326 = vpack.c.b16 %v2962, %v2958
    %v5327 = vpack.c.b16 %v2967, %v2963
    %v5328 = vpack.c.b16 %v2968, %v2964
    %v5329 = vpack.c.b16 %v2969, %v2965
    %v5330 = vpack.c.b16 %v2970, %v2966
    %v5331 = vpack.c.b16 %v2975, %v2971
    %v5332 = vpack.c.b16 %v2976, %v2972
    %v5333 = vpack.c.b16 %v2977, %v2973
    %v5334 = vpack.c.b16 %v2978, %v2974
    %v5335 = vpack.c.b16 %v2983, %v2979
    %v5336 = vpack.c.b16 %v2984, %v2980
    %v5337 = vpack.c.b16 %v2985, %v2981
    %v5338 = vpack.c.b16 %v2986, %v2982
    %v5339 = vpack.c.b16 %v2991, %v2987
    %v5340 = vpack.c.b16 %v2992, %v2988
    %v5341 = vpack.c.b16 %v2993, %v2989
    %v5342 = vpack.c.b16 %v2994, %v2990
    %v5343 = vpack.c.b16 %v2999, %v2995
    %v5344 = vpack.c.b16 %v3000, %v2996
    %v5345 = vpack.c.b16 %v3001, %v2997
    %v5346 = vpack.c.b16 %v3002, %v2998
    %v5347 = vpack.c.b16 %v3007, %v3003
    %v5348 = vpack.c.b16 %v3008, %v3004
    %v5349 = vpack.c.b16 %v3009, %v3005
    %v5350 = vpack.c.b16 %v3010, %v3006
    %v5351 = vpack.c.b16 %v3015, %v3011
    %v5352 = vpack.c.b16 %v3016, %v3012
    %v5353 = vpack.c.b16 %v3017, %v3013
    %v5354 = vpack.c.b16 %v3018, %v3014
    %v5355 = vpack.c.b16 %v3023, %v3019
    %v5356 = vpack.c.b16 %v3024, %v3020
    %v5357 = vpack.c.b16 %v3025, %v3021
    %v5358 = vpack.c.b16 %v3026, %v3022
    %v5359 = vpack.c.b16 %v3031, %v3027
    %v5360 = vpack.c.b16 %v3032, %v3028
    %v5361 = vpack.c.b16 %v3033, %v3029
    %v5362 = vpack.c.b16 %v3034, %v3030
    %v5363 = vpack.c.b16 %v3039, %v3035
    %v5364 = vpack.c.b16 %v3040, %v3036
    %v5365 = vpack.c.b16 %v3041, %v3037
    %v5366 = vpack.c.b16 %v3042, %v3038
    %v5367 = vpack.c.b16 %v3047, %v3043
    %v5368 = vpack.c.b16 %v3048, %v3044
    %v5369 = vpack.c.b16 %v3049, %v3045
    %v5370 = vpack.c.b16 %v3050, %v3046
    %v5371 = vpack.c.b16 %v3055, %v3051
    %v5372 = vpack.c.b16 %v3056, %v3052
    %v5373 = vpack.c.b16 %v3057, %v3053
    %v5374 = vpack.c.b16 %v3058, %v3054
    %v5375 = vpack.c.b16 %v3063, %v3059
    %v5376 = vpack.c.b16 %v3064, %v3060
    %v5377 = vpack.c.b16 %v3065, %v3061
    %v5378 = vpack.c.b16 %v3066, %v3062
    %v5379 = vpack.c.b16 %v3071, %v3067
    %v5380 = vpack.c.b16 %v3072, %v3068
    %v5381 = vpack.c.b16 %v3073, %v3069
    %v5382 = vpack.c.b16 %v3074, %v3070
    %v5383 = vpack.c.b16 %v3079, %v3075
    %v5384 = vpack.c.b16 %v3080, %v3076
    %v5385 = vpack.c.b16 %v3081, %v3077
    %v5386 = vpack.c.b16 %v3082, %v3078
    %v5387 = vpack.c.b16 %v3087, %v3083
    %v5388 = vpack.c.b16 %v3088, %v3084
    %v5389 = vpack.c.b16 %v3089, %v3085
    %v5390 = vpack.c.b16 %v3090, %v3086
    %v5391 = vpack.c.b16 %v3095, %v3091
    %v5392 = vpack.c.b16 %v3096, %v3092
    %v5393 = vpack.c.b16 %v3097, %v3093
    %v5394 = vpack.c.b16 %v3098, %v3094
    %v5395 = vpack.c.b16 %v3103, %v3099
    %v5396 = vpack.c.b16 %v3104, %v3100
    %v5397 = vpack.c.b16 %v3105, %v3101
    %v5398 = vpack.c.b16 %v3106, %v3102
    %v5399 = vpack.c.b16 %v3111, %v3107
    %v5400 = vpack.c.b16 %v3112, %v3108
    %v5401 = vpack.c.b16 %v3113, %v3109
    %v5402 = vpack.c.b16 %v3114, %v3110
    %v5403 = vpack.c.b16 %v3119, %v3115
    %v5404 = vpack.c.b16 %v3120, %v3116
    %v5405 = vpack.c.b16 %v3121, %v3117
    %v5406 = vpack.c.b16 %v3122, %v3118
    %v5407 = vpack.c.b16 %v3127, %v3123
    %v5408 = vpack.c.b16 %v3128, %v3124
    %v5409 = vpack.c.b16 %v3129, %v3125
    %v5410 = vpack.c.b16 %v3130, %v3126
    %v5411 = vpack.c.b16 %v3135, %v3131
    %v5412 = vpack.c.b16 %v3136, %v3132
    %v5413 = vpack.c.b16 %v3137, %v3133
    %v5414 = vpack.c.b16 %v3138, %v3134
    %v5415 = vpack.c.b16 %v3143, %v3139
    %v5416 = vpack.c.b16 %v3144, %v3140
    %v5417 = vpack.c.b16 %v3145, %v3141
    %v5418 = vpack.c.b16 %v3146, %v3142
    %v5419 = vpack.c.b16 %v3151, %v3147
    %v5420 = vpack.c.b16 %v3152, %v3148
    %v5421 = vpack.c.b16 %v3153, %v3149
    %v5422 = vpack.c.b16 %v3154, %v3150
    %v5423 = vpack.c.b16 %v3159, %v3155
    %v5424 = vpack.c.b16 %v3160, %v3156
    %v5425 = vpack.c.b16 %v3161, %v3157
    %v5426 = vpack.c.b16 %v3162, %v3158
    %v5427 = vpack.c.b16 %v3167, %v3163
    %v5428 = vpack.c.b16 %v3168, %v3164
    %v5429 = vpack.c.b16 %v3169, %v3165
    %v5430 = vpack.c.b16 %v3170, %v3166
    %v5431 = vpack.c.b16 %v3175, %v3171
    %v5432 = vpack.c.b16 %v3176, %v3172
    %v5433 = vpack.c.b16 %v3177, %v3173
    %v5434 = vpack.c.b16 %v3178, %v3174
    %v5435 = vpack.c.b16 %v3183, %v3179
    %v5436 = vpack.c.b16 %v3184, %v3180
    %v5437 = vpack.c.b16 %v3185, %v3181
    %v5438 = vpack.c.b16 %v3186, %v3182
    %v5439 = vpack.c.b16 %v3191, %v3187
    %v5440 = vpack.c.b16 %v3192, %v3188
    %v5441 = vpack.c.b16 %v3193, %v3189
    %v5442 = vpack.c.b16 %v3194, %v3190
    %v5443 = vpack.c.b16 %v3199, %v3195
    %v5444 = vpack.c.b16 %v3200, %v3196
    %v5445 = vpack.c.b16 %v3201, %v3197
    %v5446 = vpack.c.b16 %v3202, %v3198
    %v5447 = vpack.c.b16 %v3207, %v3203
    %v5448 = vpack.c.b16 %v3208, %v3204
    %v5449 = vpack.c.b16 %v3209, %v3205
    %v5450 = vpack.c.b16 %v3210, %v3206
    %v5451 = vpack.c.b16 %v3215, %v3211
    %v5452 = vpack.c.b16 %v3216, %v3212
    %v5453 = vpack.c.b16 %v3217, %v3213
    %v5454 = vpack.c.b16 %v3218, %v3214
    %v5455 = vpack.c.b16 %v3223, %v3219
    %v5456 = vpack.c.b16 %v3224, %v3220
    %v5457 = vpack.c.b16 %v3225, %v3221
    %v5458 = vpack.c.b16 %v3226, %v3222
    %v5459 = vpack.c.b16 %v3231, %v3227
    %v5460 = vpack.c.b16 %v3232, %v3228
    %v5461 = vpack.c.b16 %v3233, %v3229
    %v5462 = vpack.c.b16 %v3234, %v3230
    %v5463 = vpack.c.b16 %v3239, %v3235
    %v5464 = vpack.c.b16 %v3240, %v3236
    %v5465 = vpack.c.b16 %v3241, %v3237
    %v5466 = vpack.c.b16 %v3242, %v3238
    %v5467 = vpack.c.b16 %v3247, %v3243
    %v5468 = vpack.c.b16 %v3248, %v3244
    %v5469 = vpack.c.b16 %v3249, %v3245
    %v5470 = vpack.c.b16 %v3250, %v3246
    %v5471 = vpack.c.b16 %v3255, %v3251
    %v5472 = vpack.c.b16 %v3256, %v3252
    %v5473 = vpack.c.b16 %v3257, %v3253
    %v5474 = vpack.c.b16 %v3258, %v3254
    %v5475 = vpack.c.b16 %v3263, %v3259
    %v5476 = vpack.c.b16 %v3264, %v3260
    %v5477 = vpack.c.b16 %v3265, %v3261
    %v5478 = vpack.c.b16 %v3266, %v3262
    %v5479 = vpack.c.b16 %v3271, %v3267
    %v5480 = vpack.c.b16 %v3272, %v3268
    %v5481 = vpack.c.b16 %v3273, %v3269
    %v5482 = vpack.c.b16 %v3274, %v3270
    %v5483 = vpack.c.b16 %v3279, %v3275
    %v5484 = vpack.c.b16 %v3280, %v3276
    %v5485 = vpack.c.b16 %v3281, %v3277
    %v5486 = vpack.c.b16 %v3282, %v3278
    %v5487 = vpack.c.b16 %v3287, %v3283
    %v5488 = vpack.c.b16 %v3288, %v3284
    %v5489 = vpack.c.b16 %v3289, %v3285
    %v5490 = vpack.c.b16 %v3290, %v3286
    %v5491 = vpack.c.b16 %v3295, %v3291
    %v5492 = vpack.c.b16 %v3296, %v3292
    %v5493 = vpack.c.b16 %v3297, %v3293
    %v5494 = vpack.c.b16 %v3298, %v3294
    %v5495 = vpack.c.b16 %v3303, %v3299
    %v5496 = vpack.c.b16 %v3304, %v3300
    %v5497 = vpack.c.b16 %v3305, %v3301
    %v5498 = vpack.c.b16 %v3306, %v3302
    %v5499 = vpack.c.b16 %v3311, %v3307
    %v5500 = vpack.c.b16 %v3312, %v3308
    %v5501 = vpack.c.b16 %v3313, %v3309
    %v5502 = vpack.c.b16 %v3314, %v3310
    %v5503 = vpack.c.b16 %v3319, %v3315
    %v5504 = vpack.c.b16 %v3320, %v3316
    %v5505 = vpack.c.b16 %v3321, %v3317
    %v5506 = vpack.c.b16 %v3322, %v3318
    %v5507 = vpack.c.b16 %v3327, %v3323
    %v5508 = vpack.c.b16 %v3328, %v3324
    %v5509 = vpack.c.b16 %v3329, %v3325
    %v5510 = vpack.c.b16 %v3330, %v3326
    %v5511 = vpack.c.b16 %v3335, %v3331
    %v5512 = vpack.c.b16 %v3336, %v3332
    %v5513 = vpack.c.b16 %v3337, %v3333
    %v5514 = vpack.c.b16 %v3338, %v3334
    %v5515 = vpack.c.b16 %v3343, %v3339
    %v5516 = vpack.c.b16 %v3344, %v3340
    %v5517 = vpack.c.b16 %v3345, %v3341
    %v5518 = vpack.c.b16 %v3346, %v3342
    %v5519 = vpack.c.b16 %v3351, %v3347
    %v5520 = vpack.c.b16 %v3352, %v3348
    %v5521 = vpack.c.b16 %v3353, %v3349
    %v5522 = vpack.c.b16 %v3354, %v3350
    %v5523 = vpack.c.b16 %v3359, %v3355
    %v5524 = vpack.c.b16 %v3360, %v3356
    %v5525 = vpack.c.b16 %v3361, %v3357
    %v5526 = vpack.c.b16 %v3362, %v3358
    %v5527 = vpack.c.b16 %v3367, %v3363
    %v5528 = vpack.c.b16 %v3368, %v3364
    %v5529 = vpack.c.b16 %v3369, %v3365
    %v5530 = vpack.c.b16 %v3370, %v3366
    %v5531 = vpack.c.b16 %v3375, %v3371
    %v5532 = vpack.c.b16 %v3376, %v3372
    %v5533 = vpack.c.b16 %v3377, %v3373
    %v5534 = vpack.c.b16 %v3378, %v3374
    %v5535 = vpack.c.b16 %v3383, %v3379
    %v5536 = vpack.c.b16 %v3384, %v3380
    %v5537 = vpack.c.b16 %v3385, %v3381
    %v5538 = vpack.c.b16 %v3386, %v3382
    %v5539 = vpack.c.b16 %v3391, %v3387
    %v5540 = vpack.c.b16 %v3392, %v3388
    %v5541 = vpack.c.b16 %v3393, %v3389
    %v5542 = vpack.c.b16 %v3394, %v3390
    %v5543 = vpack.c.b16 %v3399, %v3395
    %v5544 = vpack.c.b16 %v3400, %v3396
    %v5545 = vpack.c.b16 %v3401, %v3397
    %v5546 = vpack.c.b16 %v3402, %v3398
    %v5547 = vpack.c.b16 %v3407, %v3403
    %v5548 = vpack.c.b16 %v3408, %v3404
    %v5549 = vpack.c.b16 %v3409, %v3405
    %v5550 = vpack.c.b16 %v3410, %v3406
    %v5551 = vpack.c.b16 %v3415, %v3411
    %v5552 = vpack.c.b16 %v3416, %v3412
    %v5553 = vpack.c.b16 %v3417, %v3413
    %v5554 = vpack.c.b16 %v3418, %v3414
    %v5555 = vpack.c.b16 %v3423, %v3419
    %v5556 = vpack.c.b16 %v3424, %v3420
    %v5557 = vpack.c.b16 %v3425, %v3421
    %v5558 = vpack.c.b16 %v3426, %v3422
    %v5559 = vpack.c.b16 %v3431, %v3427
    %v5560 = vpack.c.b16 %v3432, %v3428
    %v5561 = vpack.c.b16 %v3433, %v3429
    %v5562 = vpack.c.b16 %v3434, %v3430
    %v5563 = vpack.c.b16 %v3439, %v3435
    %v5564 = vpack.c.b16 %v3440, %v3436
    %v5565 = vpack.c.b16 %v3441, %v3437
    %v5566 = vpack.c.b16 %v3442, %v3438
    %v5567 = vpack.c.b16 %v3447, %v3443
    %v5568 = vpack.c.b16 %v3448, %v3444
    %v5569 = vpack.c.b16 %v3449, %v3445
    %v5570 = vpack.c.b16 %v3450, %v3446
    %v5571 = vpack.c.b16 %v3455, %v3451
    %v5572 = vpack.c.b16 %v3456, %v3452
    %v5573 = vpack.c.b16 %v3457, %v3453
    %v5574 = vpack.c.b16 %v3458, %v3454
    %v5575 = vpack.c.b16 %v3463, %v3459
    %v5576 = vpack.c.b16 %v3464, %v3460
    %v5577 = vpack.c.b16 %v3465, %v3461
    %v5578 = vpack.c.b16 %v3466, %v3462
    %v5579 = vpack.c.b16 %v3471, %v3467
    %v5580 = vpack.c.b16 %v3472, %v3468
    %v5581 = vpack.c.b16 %v3473, %v3469
    %v5582 = vpack.c.b16 %v3474, %v3470
    %v5583 = vpack.c.b16 %v3479, %v3475
    %v5584 = vpack.c.b16 %v3480, %v3476
    %v5585 = vpack.c.b16 %v3481, %v3477
    %v5586 = vpack.c.b16 %v3482, %v3478
    %v5587 = vpack.c.b16 %v3487, %v3483
    %v5588 = vpack.c.b16 %v3488, %v3484
    %v5589 = vpack.c.b16 %v3489, %v3485
    %v5590 = vpack.c.b16 %v3490, %v3486
    %v5591 = vpack.c.b16 %v3495, %v3491
    %v5592 = vpack.c.b16 %v3496, %v3492
    %v5593 = vpack.c.b16 %v3497, %v3493
    %v5594 = vpack.c.b16 %v3498, %v3494
    %v5595 = vpack.c.b16 %v3503, %v3499
    %v5596 = vpack.c.b16 %v3504, %v3500
    %v5597 = vpack.c.b16 %v3505, %v3501
    %v5598 = vpack.c.b16 %v3506, %v3502
    %v5599 = vpack.c.b16 %v3511, %v3507
    %v5600 = vpack.c.b16 %v3512, %v3508
    %v5601 = vpack.c.b16 %v3513, %v3509
    %v5602 = vpack.c.b16 %v3514, %v3510
    %v5603 = vpack.c.b16 %v3519, %v3515
    %v5604 = vpack.c.b16 %v3520, %v3516
    %v5605 = vpack.c.b16 %v3521, %v3517
    %v5606 = vpack.c.b16 %v3522, %v3518
    %v5607 = vpack.c.b16 %v3527, %v3523
    %v5608 = vpack.c.b16 %v3528, %v3524
    %v5609 = vpack.c.b16 %v3529, %v3525
    %v5610 = vpack.c.b16 %v3530, %v3526
    %v5611 = vpack.c.b16 %v3535, %v3531
    %v5612 = vpack.c.b16 %v3536, %v3532
    %v5613 = vpack.c.b16 %v3537, %v3533
    %v5614 = vpack.c.b16 %v3538, %v3534
    %v5615 = vpack.c.b16 %v3543, %v3539
    %v5616 = vpack.c.b16 %v3544, %v3540
    %v5617 = vpack.c.b16 %v3545, %v3541
    %v5618 = vpack.c.b16 %v3546, %v3542
    %v5619 = vpack.c.b16 %v3551, %v3547
    %v5620 = vpack.c.b16 %v3552, %v3548
    %v5621 = vpack.c.b16 %v3553, %v3549
    %v5622 = vpack.c.b16 %v3554, %v3550
    %v5623 = vpack.c.b16 %v3559, %v3555
    %v5624 = vpack.c.b16 %v3560, %v3556
    %v5625 = vpack.c.b16 %v3561, %v3557
    %v5626 = vpack.c.b16 %v3562, %v3558
    %v5627 = vpack.c.b16 %v3567, %v3563
    %v5628 = vpack.c.b16 %v3568, %v3564
    %v5629 = vpack.c.b16 %v3569, %v3565
    %v5630 = vpack.c.b16 %v3570, %v3566
    %v5631 = vpack.c.b16 %v3575, %v3571
    %v5632 = vpack.c.b16 %v3576, %v3572
    %v5633 = vpack.c.b16 %v3577, %v3573
    %v5634 = vpack.c.b16 %v3578, %v3574
    %v5635 = vpack.c.b16 %v3583, %v3579
    %v5636 = vpack.c.b16 %v3584, %v3580
    %v5637 = vpack.c.b16 %v3585, %v3581
    %v5638 = vpack.c.b16 %v3586, %v3582
    %v5639 = vpack.c.b16 %v3591, %v3587
    %v5640 = vpack.c.b16 %v3592, %v3588
    %v5641 = vpack.c.b16 %v3593, %v3589
    %v5642 = vpack.c.b16 %v3594, %v3590
    %v5643 = vpack.c.b16 %v3599, %v3595
    %v5644 = vpack.c.b16 %v3600, %v3596
    %v5645 = vpack.c.b16 %v3601, %v3597
    %v5646 = vpack.c.b16 %v3602, %v3598
    %v5647 = vpack.c.b16 %v3607, %v3603
    %v5648 = vpack.c.b16 %v3608, %v3604
    %v5649 = vpack.c.b16 %v3609, %v3605
    %v5650 = vpack.c.b16 %v3610, %v3606
    %v5651 = vpack.c.b16 %v3615, %v3611
    %v5652 = vpack.c.b16 %v3616, %v3612
    %v5653 = vpack.c.b16 %v3617, %v3613
    %v5654 = vpack.c.b16 %v3618, %v3614
    %v5655 = vpack.c.b16 %v3623, %v3619
    %v5656 = vpack.c.b16 %v3624, %v3620
    %v5657 = vpack.c.b16 %v3625, %v3621
    %v5658 = vpack.c.b16 %v3626, %v3622
    %v5659 = vpack.c.b16 %v3631, %v3627
    %v5660 = vpack.c.b16 %v3632, %v3628
    %v5661 = vpack.c.b16 %v3633, %v3629
    %v5662 = vpack.c.b16 %v3634, %v3630
    %v5663 = vpack.c.b16 %v3639, %v3635
    %v5664 = vpack.c.b16 %v3640, %v3636
    %v5665 = vpack.c.b16 %v3641, %v3637
    %v5666 = vpack.c.b16 %v3642, %v3638
    %v5667 = vpack.c.b16 %v3647, %v3643
    %v5668 = vpack.c.b16 %v3648, %v3644
    %v5669 = vpack.c.b16 %v3649, %v3645
    %v5670 = vpack.c.b16 %v3650, %v3646
    %v5671 = vpack.c.b16 %v3655, %v3651
    %v5672 = vpack.c.b16 %v3656, %v3652
    %v5673 = vpack.c.b16 %v3657, %v3653
    %v5674 = vpack.c.b16 %v3658, %v3654
    %v5675 = vpack.c.b16 %v3663, %v3659
    %v5676 = vpack.c.b16 %v3664, %v3660
    %v5677 = vpack.c.b16 %v3665, %v3661
    %v5678 = vpack.c.b16 %v3666, %v3662
    %v5679 = vpack.c.b16 %v3671, %v3667
    %v5680 = vpack.c.b16 %v3672, %v3668
    %v5681 = vpack.c.b16 %v3673, %v3669
    %v5682 = vpack.c.b16 %v3674, %v3670
    %v5683 = vpack.c.b16 %v3679, %v3675
    %v5684 = vpack.c.b16 %v3680, %v3676
    %v5685 = vpack.c.b16 %v3681, %v3677
    %v5686 = vpack.c.b16 %v3682, %v3678
    %v5687 = vpack.c.b16 %v3687, %v3683
    %v5688 = vpack.c.b16 %v3688, %v3684
    %v5689 = vpack.c.b16 %v3689, %v3685
    %v5690 = vpack.c.b16 %v3690, %v3686
    %v5691 = vpack.c.b16 %v3695, %v3691
    %v5692 = vpack.c.b16 %v3696, %v3692
    %v5693 = vpack.c.b16 %v3697, %v3693
    %v5694 = vpack.c.b16 %v3698, %v3694
    %v5695 = vpack.c.b16 %v3703, %v3699
    %v5696 = vpack.c.b16 %v3704, %v3700
    %v5697 = vpack.c.b16 %v3705, %v3701
    %v5698 = vpack.c.b16 %v3706, %v3702
    %v5699 = vpack.c.b16 %v3711, %v3707
    %v5700 = vpack.c.b16 %v3712, %v3708
    %v5701 = vpack.c.b16 %v3713, %v3709
    %v5702 = vpack.c.b16 %v3714, %v3710
    %v5703 = vpack.c.b16 %v3719, %v3715
    %v5704 = vpack.c.b16 %v3720, %v3716
    %v5705 = vpack.c.b16 %v3721, %v3717
    %v5706 = vpack.c.b16 %v3722, %v3718
    %v5707 = vpack.c.b16 %v3727, %v3723
    %v5708 = vpack.c.b16 %v3728, %v3724
    %v5709 = vpack.c.b16 %v3729, %v3725
    %v5710 = vpack.c.b16 %v3730, %v3726
    %v5711 = vpack.c.b16 %v3735, %v3731
    %v5712 = vpack.c.b16 %v3736, %v3732
    %v5713 = vpack.c.b16 %v3737, %v3733
    %v5714 = vpack.c.b16 %v3738, %v3734
    %v5715 = vpack.c.b16 %v3743, %v3739
    %v5716 = vpack.c.b16 %v3744, %v3740
    %v5717 = vpack.c.b16 %v3745, %v3741
    %v5718 = vpack.c.b16 %v3746, %v3742
    %v5719 = vpack.c.b16 %v3751, %v3747
    %v5720 = vpack.c.b16 %v3752, %v3748
    %v5721 = vpack.c.b16 %v3753, %v3749
    %v5722 = vpack.c.b16 %v3754, %v3750
    %v5723 = vpack.c.b16 %v3759, %v3755
    %v5724 = vpack.c.b16 %v3760, %v3756
    %v5725 = vpack.c.b16 %v3761, %v3757
    %v5726 = vpack.c.b16 %v3762, %v3758
    %v5727 = vpack.c.b16 %v3767, %v3763
    %v5728 = vpack.c.b16 %v3768, %v3764
    %v5729 = vpack.c.b16 %v3769, %v3765
    %v5730 = vpack.c.b16 %v3770, %v3766
    %v5731 = vpack.c.b16 %v3775, %v3771
    %v5732 = vpack.c.b16 %v3776, %v3772
    %v5733 = vpack.c.b16 %v3777, %v3773
    %v5734 = vpack.c.b16 %v3778, %v3774
    %v5735 = vpack.c.b16 %v3783, %v3779
    %v5736 = vpack.c.b16 %v3784, %v3780
    %v5737 = vpack.c.b16 %v3785, %v3781
    %v5738 = vpack.c.b16 %v3786, %v3782
    %v5739 = vpack.c.b16 %v3791, %v3787
    %v5740 = vpack.c.b16 %v3792, %v3788
    %v5741 = vpack.c.b16 %v3793, %v3789
    %v5742 = vpack.c.b16 %v3794, %v3790
    %v5743 = vpack.c.b16 %v3799, %v3795
    %v5744 = vpack.c.b16 %v3800, %v3796
    %v5745 = vpack.c.b16 %v3801, %v3797
    %v5746 = vpack.c.b16 %v3802, %v3798
    %v5747 = vpack.c.b16 %v3807, %v3803
    %v5748 = vpack.c.b16 %v3808, %v3804
    %v5749 = vpack.c.b16 %v3809, %v3805
    %v5750 = vpack.c.b16 %v3810, %v3806
    %v5751 = vpack.c.b16 %v3815, %v3811
    %v5752 = vpack.c.b16 %v3816, %v3812
    %v5753 = vpack.c.b16 %v3817, %v3813
    %v5754 = vpack.c.b16 %v3818, %v3814
    %v5755 = vpack.c.b16 %v3823, %v3819
    %v5756 = vpack.c.b16 %v3824, %v3820
    %v5757 = vpack.c.b16 %v3825, %v3821
    %v5758 = vpack.c.b16 %v3826, %v3822
    %v5759 = vpack.c.b16 %v3831, %v3827
    %v5760 = vpack.c.b16 %v3832, %v3828
    %v5761 = vpack.c.b16 %v3833, %v3829
    %v5762 = vpack.c.b16 %v3834, %v3830
    %v5763 = vpack.c.b16 %v3839, %v3835
    %v5764 = vpack.c.b16 %v3840, %v3836
    %v5765 = vpack.c.b16 %v3841, %v3837
    %v5766 = vpack.c.b16 %v3842, %v3838
    %v5767 = vpack.c.b16 %v3847, %v3843
    %v5768 = vpack.c.b16 %v3848, %v3844
    %v5769 = vpack.c.b16 %v3849, %v3845
    %v5770 = vpack.c.b16 %v3850, %v3846
    %v5771 = vpack.c.b16 %v3855, %v3851
    %v5772 = vpack.c.b16 %v3856, %v3852
    %v5773 = vpack.c.b16 %v3857, %v3853
    %v5774 = vpack.c.b16 %v3858, %v3854
    %v5775 = vpack.c.b16 %v3863, %v3859
    %v5776 = vpack.c.b16 %v3864, %v3860
    %v5777 = vpack.c.b16 %v3865, %v3861
    %v5778 = vpack.c.b16 %v3866, %v3862
    %v5779 = vpack.c.b16 %v3871, %v3867
    %v5780 = vpack.c.b16 %v3872, %v3868
    %v5781 = vpack.c.b16 %v3873, %v3869
    %v5782 = vpack.c.b16 %v3874, %v3870
    %v5783 = vpack.c.b16 %v3879, %v3875
    %v5784 = vpack.c.b16 %v3880, %v3876
    %v5785 = vpack.c.b16 %v3881, %v3877
    %v5786 = vpack.c.b16 %v3882, %v3878
    %v5787 = vpack.c.b16 %v3887, %v3883
    %v5788 = vpack.c.b16 %v3888, %v3884
    %v5789 = vpack.c.b16 %v3889, %v3885
    %v5790 = vpack.c.b16 %v3890, %v3886
    %v5791 = vpack.c.b16 %v3895, %v3891
    %v5792 = vpack.c.b16 %v3896, %v3892
    %v5793 = vpack.c.b16 %v3897, %v3893
    %v5794 = vpack.c.b16 %v3898, %v3894
    %v5795 = vpack.c.b16 %v3903, %v3899
    %v5796 = vpack.c.b16 %v3904, %v3900
    %v5797 = vpack.c.b16 %v3905, %v3901
    %v5798 = vpack.c.b16 %v3906, %v3902
    %v5799 = vpack.c.b16 %v3911, %v3907
    %v5800 = vpack.c.b16 %v3912, %v3908
    %v5801 = vpack.c.b16 %v3913, %v3909
    %v5802 = vpack.c.b16 %v3914, %v3910
    %v5803 = vpack.c.b16 %v3919, %v3915
    %v5804 = vpack.c.b16 %v3920, %v3916
    %v5805 = vpack.c.b16 %v3921, %v3917
    %v5806 = vpack.c.b16 %v3922, %v3918
    %v5807 = vpack.c.b16 %v3927, %v3923
    %v5808 = vpack.c.b16 %v3928, %v3924
    %v5809 = vpack.c.b16 %v3929, %v3925
    %v5810 = vpack.c.b16 %v3930, %v3926
    %v5811 = vpack.c.b16 %v3935, %v3931
    %v5812 = vpack.c.b16 %v3936, %v3932
    %v5813 = vpack.c.b16 %v3937, %v3933
    %v5814 = vpack.c.b16 %v3938, %v3934
    %v5815 = vpack.c.b16 %v3943, %v3939
    %v5816 = vpack.c.b16 %v3944, %v3940
    %v5817 = vpack.c.b16 %v3945, %v3941
    %v5818 = vpack.c.b16 %v3946, %v3942
    %v5819 = vpack.c.b16 %v3951, %v3947
    %v5820 = vpack.c.b16 %v3952, %v3948
    %v5821 = vpack.c.b16 %v3953, %v3949
    %v5822 = vpack.c.b16 %v3954, %v3950
    %v5823 = vpack.c.b16 %v3959, %v3955
    %v5824 = vpack.c.b16 %v3960, %v3956
    %v5825 = vpack.c.b16 %v3961, %v3957
    %v5826 = vpack.c.b16 %v3962, %v3958
    %v5827 = vpack.c.b16 %v3967, %v3963
    %v5828 = vpack.c.b16 %v3968, %v3964
    %v5829 = vpack.c.b16 %v3969, %v3965
    %v5830 = vpack.c.b16 %v3970, %v3966
    %v5831 = vpack.c.b16 %v3975, %v3971
    %v5832 = vpack.c.b16 %v3976, %v3972
    %v5833 = vpack.c.b16 %v3977, %v3973
    %v5834 = vpack.c.b16 %v3978, %v3974
    %v5835 = vpack.c.b16 %v3983, %v3979
    %v5836 = vpack.c.b16 %v3984, %v3980
    %v5837 = vpack.c.b16 %v3985, %v3981
    %v5838 = vpack.c.b16 %v3986, %v3982
    %v5839 = vpack.c.b16 %v3991, %v3987
    %v5840 = vpack.c.b16 %v3992, %v3988
    %v5841 = vpack.c.b16 %v3993, %v3989
    %v5842 = vpack.c.b16 %v3994, %v3990
    %v5843 = vpack.c.b16 %v3999, %v3995
    %v5844 = vpack.c.b16 %v4000, %v3996
    %v5845 = vpack.c.b16 %v4001, %v3997
    %v5846 = vpack.c.b16 %v4002, %v3998
    %v5847 = vpack.c.b16 %v4007, %v4003
    %v5848 = vpack.c.b16 %v4008, %v4004
    %v5849 = vpack.c.b16 %v4009, %v4005
    %v5850 = vpack.c.b16 %v4010, %v4006
    %v5851 = vpack.c.b16 %v4015, %v4011
    %v5852 = vpack.c.b16 %v4016, %v4012
    %v5853 = vpack.c.b16 %v4017, %v4013
    %v5854 = vpack.c.b16 %v4018, %v4014
    %v5855 = vpack.c.b16 %v4023, %v4019
    %v5856 = vpack.c.b16 %v4024, %v4020
    %v5857 = vpack.c.b16 %v4025, %v4021
    %v5858 = vpack.c.b16 %v4026, %v4022
    %v5859 = vpack.c.b16 %v4031, %v4027
    %v5860 = vpack.c.b16 %v4032, %v4028
    %v5861 = vpack.c.b16 %v4033, %v4029
    %v5862 = vpack.c.b16 %v4034, %v4030
    %v5863 = vpack.c.b16 %v4039, %v4035
    %v5864 = vpack.c.b16 %v4040, %v4036
    %v5865 = vpack.c.b16 %v4041, %v4037
    %v5866 = vpack.c.b16 %v4042, %v4038
    %v5867 = vpack.c.b16 %v4047, %v4043
    %v5868 = vpack.c.b16 %v4048, %v4044
    %v5869 = vpack.c.b16 %v4049, %v4045
    %v5870 = vpack.c.b16 %v4050, %v4046
    %v5871 = vpack.c.b16 %v4055, %v4051
    %v5872 = vpack.c.b16 %v4056, %v4052
    %v5873 = vpack.c.b16 %v4057, %v4053
    %v5874 = vpack.c.b16 %v4058, %v4054
    %v5875 = vpack.c.b16 %v4063, %v4059
    %v5876 = vpack.c.b16 %v4064, %v4060
    %v5877 = vpack.c.b16 %v4065, %v4061
    %v5878 = vpack.c.b16 %v4066, %v4062
    %v5879 = vpack.c.b16 %v4071, %v4067
    %v5880 = vpack.c.b16 %v4072, %v4068
    %v5881 = vpack.c.b16 %v4073, %v4069
    %v5882 = vpack.c.b16 %v4074, %v4070
    %v5883 = vpack.c.b16 %v4079, %v4075
    %v5884 = vpack.c.b16 %v4080, %v4076
    %v5885 = vpack.c.b16 %v4081, %v4077
    %v5886 = vpack.c.b16 %v4082, %v4078
    %v5887 = vpack.c.b16 %v4087, %v4083
    %v5888 = vpack.c.b16 %v4088, %v4084
    %v5889 = vpack.c.b16 %v4089, %v4085
    %v5890 = vpack.c.b16 %v4090, %v4086
    %v5891 = vpack.c.b16 %v4095, %v4091
    %v5892 = vpack.c.b16 %v4096, %v4092
    %v5893 = vpack.c.b16 %v4097, %v4093
    %v5894 = vpack.c.b16 %v4098, %v4094
    %v5895 = vpack.c.b16 %v4103, %v4099
    %v5896 = vpack.c.b16 %v4104, %v4100
    %v5897 = vpack.c.b16 %v4105, %v4101
    %v5898 = vpack.c.b16 %v4106, %v4102
    %v5899 = vpack.c.b16 %v4111, %v4107
    %v5900 = vpack.c.b16 %v4112, %v4108
    %v5901 = vpack.c.b16 %v4113, %v4109
    %v5902 = vpack.c.b16 %v4114, %v4110
    %v5903 = vpack.c.b16 %v4119, %v4115
    %v5904 = vpack.c.b16 %v4120, %v4116
    %v5905 = vpack.c.b16 %v4121, %v4117
    %v5906 = vpack.c.b16 %v4122, %v4118
    %v5907 = vpack.c.b16 %v4127, %v4123
    %v5908 = vpack.c.b16 %v4128, %v4124
    %v5909 = vpack.c.b16 %v4129, %v4125
    %v5910 = vpack.c.b16 %v4130, %v4126
    %v5911 = vpack.c.b16 %v4135, %v4131
    %v5912 = vpack.c.b16 %v4136, %v4132
    %v5913 = vpack.c.b16 %v4137, %v4133
    %v5914 = vpack.c.b16 %v4138, %v4134
    %v5915 = vpack.c.b16 %v4143, %v4139
    %v5916 = vpack.c.b16 %v4144, %v4140
    %v5917 = vpack.c.b16 %v4145, %v4141
    %v5918 = vpack.c.b16 %v4146, %v4142
    %v5919 = vpack.c.b16 %v4151, %v4147
    %v5920 = vpack.c.b16 %v4152, %v4148
    %v5921 = vpack.c.b16 %v4153, %v4149
    %v5922 = vpack.c.b16 %v4154, %v4150
    %v5923 = vpack.c.b16 %v4159, %v4155
    %v5924 = vpack.c.b16 %v4160, %v4156
    %v5925 = vpack.c.b16 %v4161, %v4157
    %v5926 = vpack.c.b16 %v4162, %v4158
    %v5927 = vpack.c.b16 %v4167, %v4163
    %v5928 = vpack.c.b16 %v4168, %v4164
    %v5929 = vpack.c.b16 %v4169, %v4165
    %v5930 = vpack.c.b16 %v4170, %v4166
    %v5931 = vpack.c.b16 %v4175, %v4171
    %v5932 = vpack.c.b16 %v4176, %v4172
    %v5933 = vpack.c.b16 %v4177, %v4173
    %v5934 = vpack.c.b16 %v4178, %v4174
    %v5935 = vpack.c.b16 %v4183, %v4179
    %v5936 = vpack.c.b16 %v4184, %v4180
    %v5937 = vpack.c.b16 %v4185, %v4181
    %v5938 = vpack.c.b16 %v4186, %v4182
    %v5939 = vpack.c.b16 %v4191, %v4187
    %v5940 = vpack.c.b16 %v4192, %v4188
    %v5941 = vpack.c.b16 %v4193, %v4189
    %v5942 = vpack.c.b16 %v4194, %v4190
    %v5943 = vpack.c.b16 %v4199, %v4195
    %v5944 = vpack.c.b16 %v4200, %v4196
    %v5945 = vpack.c.b16 %v4201, %v4197
    %v5946 = vpack.c.b16 %v4202, %v4198
    %v5947 = vpack.c.b16 %v4207, %v4203
    %v5948 = vpack.c.b16 %v4208, %v4204
    %v5949 = vpack.c.b16 %v4209, %v4205
    %v5950 = vpack.c.b16 %v4210, %v4206
    %v5951 = vpack.c.b16 %v4215, %v4211
    %v5952 = vpack.c.b16 %v4216, %v4212
    %v5953 = vpack.c.b16 %v4217, %v4213
    %v5954 = vpack.c.b16 %v4218, %v4214
    %v5955 = vpack.c.b16 %v4223, %v4219
    %v5956 = vpack.c.b16 %v4224, %v4220
    %v5957 = vpack.c.b16 %v4225, %v4221
    %v5958 = vpack.c.b16 %v4226, %v4222
    %v5959 = vpack.c.b16 %v4231, %v4227
    %v5960 = vpack.c.b16 %v4232, %v4228
    %v5961 = vpack.c.b16 %v4233, %v4229
    %v5962 = vpack.c.b16 %v4234, %v4230
    %v5963 = vpack.c.b16 %v4239, %v4235
    %v5964 = vpack.c.b16 %v4240, %v4236
    %v5965 = vpack.c.b16 %v4241, %v4237
    %v5966 = vpack.c.b16 %v4242, %v4238
    %v5967 = vpack.c.b16 %v4247, %v4243
    %v5968 = vpack.c.b16 %v4248, %v4244
    %v5969 = vpack.c.b16 %v4249, %v4245
    %v5970 = vpack.c.b16 %v4250, %v4246
    %v5971 = vpack.c.b16 %v4255, %v4251
    %v5972 = vpack.c.b16 %v4256, %v4252
    %v5973 = vpack.c.b16 %v4257, %v4253
    %v5974 = vpack.c.b16 %v4258, %v4254
    %v5975 = vpack.c.b16 %v4263, %v4259
    %v5976 = vpack.c.b16 %v4264, %v4260
    %v5977 = vpack.c.b16 %v4265, %v4261
    %v5978 = vpack.c.b16 %v4266, %v4262
    %v5979 = vpack.c.b16 %v4271, %v4267
    %v5980 = vpack.c.b16 %v4272, %v4268
    %v5981 = vpack.c.b16 %v4273, %v4269
    %v5982 = vpack.c.b16 %v4274, %v4270
    %v5983 = vpack.c.b16 %v4279, %v4275
    %v5984 = vpack.c.b16 %v4280, %v4276
    %v5985 = vpack.c.b16 %v4281, %v4277
    %v5986 = vpack.c.b16 %v4282, %v4278
    %v5987 = vpack.c.b16 %v4287, %v4283
    %v5988 = vpack.c.b16 %v4288, %v4284
    %v5989 = vpack.c.b16 %v4289, %v4285
    %v5990 = vpack.c.b16 %v4290, %v4286
    %v5991 = vpack.c.b16 %v4295, %v4291
    %v5992 = vpack.c.b16 %v4296, %v4292
    %v5993 = vpack.c.b16 %v4297, %v4293
    %v5994 = vpack.c.b16 %v4298, %v4294
    %v5995 = vpack.c.b16 %v4303, %v4299
    %v5996 = vpack.c.b16 %v4304, %v4300
    %v5997 = vpack.c.b16 %v4305, %v4301
    %v5998 = vpack.c.b16 %v4306, %v4302
    %v5999 = vpack.c.b16 %v4311, %v4307
    %v6000 = vpack.c.b16 %v4312, %v4308
    %v6001 = vpack.c.b16 %v4313, %v4309
    %v6002 = vpack.c.b16 %v4314, %v4310
    %v6003 = vpack.c.b16 %v4319, %v4315
    %v6004 = vpack.c.b16 %v4320, %v4316
    %v6005 = vpack.c.b16 %v4321, %v4317
    %v6006 = vpack.c.b16 %v4322, %v4318
    %v6007 = vpack.c.b16 %v4327, %v4323
    %v6008 = vpack.c.b16 %v4328, %v4324
    %v6009 = vpack.c.b16 %v4329, %v4325
    %v6010 = vpack.c.b16 %v4330, %v4326
    %v6011 = vpack.c.b16 %v4335, %v4331
    %v6012 = vpack.c.b16 %v4336, %v4332
    %v6013 = vpack.c.b16 %v4337, %v4333
    %v6014 = vpack.c.b16 %v4338, %v4334
    %v6015 = vpack.c.b16 %v4343, %v4339
    %v6016 = vpack.c.b16 %v4344, %v4340
    %v6017 = vpack.c.b16 %v4345, %v4341
    %v6018 = vpack.c.b16 %v4346, %v4342
    %v6019 = vpack.c.b16 %v4351, %v4347
    %v6020 = vpack.c.b16 %v4352, %v4348
    %v6021 = vpack.c.b16 %v4353, %v4349
    %v6022 = vpack.c.b16 %v4354, %v4350
    %v6023 = vpack.c.b16 %v4359, %v4355
    %v6024 = vpack.c.b16 %v4360, %v4356
    %v6025 = vpack.c.b16 %v4361, %v4357
    %v6026 = vpack.c.b16 %v4362, %v4358
    %v6027 = vpack.c.b16 %v4367, %v4363
    %v6028 = vpack.c.b16 %v4368, %v4364
    %v6029 = vpack.c.b16 %v4369, %v4365
    %v6030 = vpack.c.b16 %v4370, %v4366
    %v6031 = vpack.c.b16 %v4375, %v4371
    %v6032 = vpack.c.b16 %v4376, %v4372
    %v6033 = vpack.c.b16 %v4377, %v4373
    %v6034 = vpack.c.b16 %v4378, %v4374
    %v6035 = vpack.c.b16 %v4383, %v4379
    %v6036 = vpack.c.b16 %v4384, %v4380
    %v6037 = vpack.c.b16 %v4385, %v4381
    %v6038 = vpack.c.b16 %v4386, %v4382
    %v6039 = vpack.c.b16 %v4391, %v4387
    %v6040 = vpack.c.b16 %v4392, %v4388
    %v6041 = vpack.c.b16 %v4393, %v4389
    %v6042 = vpack.c.b16 %v4394, %v4390
    %v6043 = vpack.c.b16 %v4399, %v4395
    %v6044 = vpack.c.b16 %v4400, %v4396
    %v6045 = vpack.c.b16 %v4401, %v4397
    %v6046 = vpack.c.b16 %v4402, %v4398
    %v6047 = vpack.c.b16 %v4407, %v4403
    %v6048 = vpack.c.b16 %v4408, %v4404
    %v6049 = vpack.c.b16 %v4409, %v4405
    %v6050 = vpack.c.b16 %v4410, %v4406
    %v6051 = vpack.c.b16 %v4415, %v4411
    %v6052 = vpack.c.b16 %v4416, %v4412
    %v6053 = vpack.c.b16 %v4417, %v4413
    %v6054 = vpack.c.b16 %v4418, %v4414
    %v6055 = vpack.c.b16 %v4423, %v4419
    %v6056 = vpack.c.b16 %v4424, %v4420
    %v6057 = vpack.c.b16 %v4425, %v4421
    %v6058 = vpack.c.b16 %v4426, %v4422
    %v6059 = vpack.c.b16 %v4431, %v4427
    %v6060 = vpack.c.b16 %v4432, %v4428
    %v6061 = vpack.c.b16 %v4433, %v4429
    %v6062 = vpack.c.b16 %v4434, %v4430
    %v6063 = vpack.c.b16 %v4439, %v4435
    %v6064 = vpack.c.b16 %v4440, %v4436
    %v6065 = vpack.c.b16 %v4441, %v4437
    %v6066 = vpack.c.b16 %v4442, %v4438
    %v6067 = vpack.c.b16 %v4447, %v4443
    %v6068 = vpack.c.b16 %v4448, %v4444
    %v6069 = vpack.c.b16 %v4449, %v4445
    %v6070 = vpack.c.b16 %v4450, %v4446
    %v6071 = vpack.c.b16 %v4455, %v4451
    %v6072 = vpack.c.b16 %v4456, %v4452
    %v6073 = vpack.c.b16 %v4457, %v4453
    %v6074 = vpack.c.b16 %v4458, %v4454
    %v6075 = vpack.c.b16 %v4463, %v4459
    %v6076 = vpack.c.b16 %v4464, %v4460
    %v6077 = vpack.c.b16 %v4465, %v4461
    %v6078 = vpack.c.b16 %v4466, %v4462
    %v6079 = vpack.c.b16 %v4471, %v4467
    %v6080 = vpack.c.b16 %v4472, %v4468
    %v6081 = vpack.c.b16 %v4473, %v4469
    %v6082 = vpack.c.b16 %v4474, %v4470
    %v6083 = vpack.c.b16 %v4479, %v4475
    %v6084 = vpack.c.b16 %v4480, %v4476
    %v6085 = vpack.c.b16 %v4481, %v4477
    %v6086 = vpack.c.b16 %v4482, %v4478
    %v6087 = vpack.c.b16 %v4487, %v4483
    %v6088 = vpack.c.b16 %v4488, %v4484
    %v6089 = vpack.c.b16 %v4489, %v4485
    %v6090 = vpack.c.b16 %v4490, %v4486
    %v6091 = vpack.c.b16 %v4495, %v4491
    %v6092 = vpack.c.b16 %v4496, %v4492
    %v6093 = vpack.c.b16 %v4497, %v4493
    %v6094 = vpack.c.b16 %v4498, %v4494
    %v6095 = vpack.c.b16 %v4503, %v4499
    %v6096 = vpack.c.b16 %v4504, %v4500
    %v6097 = vpack.c.b16 %v4505, %v4501
    %v6098 = vpack.c.b16 %v4506, %v4502
    %v6099 = vpack.c.b16 %v4511, %v4507
    %v6100 = vpack.c.b16 %v4512, %v4508
    %v6101 = vpack.c.b16 %v4513, %v4509
    %v6102 = vpack.c.b16 %v4514, %v4510
    %v6103 = vpack.c.b16 %v4519, %v4515
    %v6104 = vpack.c.b16 %v4520, %v4516
    %v6105 = vpack.c.b16 %v4521, %v4517
    %v6106 = vpack.c.b16 %v4522, %v4518
    %v6107 = vpack.c.b16 %v4527, %v4523
    %v6108 = vpack.c.b16 %v4528, %v4524
    %v6109 = vpack.c.b16 %v4529, %v4525
    %v6110 = vpack.c.b16 %v4530, %v4526
    %v6111 = vpack.c.b16 %v4535, %v4531
    %v6112 = vpack.c.b16 %v4536, %v4532
    %v6113 = vpack.c.b16 %v4537, %v4533
    %v6114 = vpack.c.b16 %v4538, %v4534
    %v6115 = vpack.c.b16 %v4543, %v4539
    %v6116 = vpack.c.b16 %v4544, %v4540
    %v6117 = vpack.c.b16 %v4545, %v4541
    %v6118 = vpack.c.b16 %v4546, %v4542
    %v6119 = vpack.c.b16 %v4551, %v4547
    %v6120 = vpack.c.b16 %v4552, %v4548
    %v6121 = vpack.c.b16 %v4553, %v4549
    %v6122 = vpack.c.b16 %v4554, %v4550
    %v6123 = vpack.c.b16 %v4559, %v4555
    %v6124 = vpack.c.b16 %v4560, %v4556
    %v6125 = vpack.c.b16 %v4561, %v4557
    %v6126 = vpack.c.b16 %v4562, %v4558
    %v6127 = vpack.c.b16 %v4567, %v4563
    %v6128 = vpack.c.b16 %v4568, %v4564
    %v6129 = vpack.c.b16 %v4569, %v4565
    %v6130 = vpack.c.b16 %v4570, %v4566
    %v6131 = vpack.c.b16 %v4575, %v4571
    %v6132 = vpack.c.b16 %v4576, %v4572
    %v6133 = vpack.c.b16 %v4577, %v4573
    %v6134 = vpack.c.b16 %v4578, %v4574
    %v6135 = vpack.c.b16 %v4583, %v4579
    %v6136 = vpack.c.b16 %v4584, %v4580
    %v6137 = vpack.c.b16 %v4585, %v4581
    %v6138 = vpack.c.b16 %v4586, %v4582
    %v6139 = vpack.c.b16 %v4591, %v4587
    %v6140 = vpack.c.b16 %v4592, %v4588
    %v6141 = vpack.c.b16 %v4593, %v4589
    %v6142 = vpack.c.b16 %v4594, %v4590
    %v6143 = vpack.c.b16 %v4599, %v4595
    %v6144 = vpack.c.b16 %v4600, %v4596
    %v6145 = vpack.c.b16 %v4601, %v4597
    %v6146 = vpack.c.b16 %v4602, %v4598
    %v6147 = vpack.c.b16 %v4607, %v4603
    %v6148 = vpack.c.b16 %v4608, %v4604
    %v6149 = vpack.c.b16 %v4609, %v4605
    %v6150 = vpack.c.b16 %v4610, %v4606
    %v6151 = vpack.c.b16 %v4615, %v4611
    %v6152 = vpack.c.b16 %v4616, %v4612
    %v6153 = vpack.c.b16 %v4617, %v4613
    %v6154 = vpack.c.b16 %v4618, %v4614
    %v6155 = vpack.c.b16 %v4623, %v4619
    %v6156 = vpack.c.b16 %v4624, %v4620
    %v6157 = vpack.c.b16 %v4625, %v4621
    %v6158 = vpack.c.b16 %v4626, %v4622
    %v6159 = vpack.c.b16 %v4631, %v4627
    %v6160 = vpack.c.b16 %v4632, %v4628
    %v6161 = vpack.c.b16 %v4633, %v4629
    %v6162 = vpack.c.b16 %v4634, %v4630
    %v6163 = vpack.c.b16 %v4639, %v4635
    %v6164 = vpack.c.b16 %v4640, %v4636
    %v6165 = vpack.c.b16 %v4641, %v4637
    %v6166 = vpack.c.b16 %v4642, %v4638
    %v6167 = vpack.c.b16 %v4647, %v4643
    %v6168 = vpack.c.b16 %v4648, %v4644
    %v6169 = vpack.c.b16 %v4649, %v4645
    %v6170 = vpack.c.b16 %v4650, %v4646
    %v6171 = vpack.c.b16 %v4655, %v4651
    %v6172 = vpack.c.b16 %v4656, %v4652
    %v6173 = vpack.c.b16 %v4657, %v4653
    %v6174 = vpack.c.b16 %v4658, %v4654
    %v6175 = vpack.c.b16 %v4663, %v4659
    %v6176 = vpack.c.b16 %v4664, %v4660
    %v6177 = vpack.c.b16 %v4665, %v4661
    %v6178 = vpack.c.b16 %v4666, %v4662
    %v6179 = vpack.c.b16 %v4671, %v4667
    %v6180 = vpack.c.b16 %v4672, %v4668
    %v6181 = vpack.c.b16 %v4673, %v4669
    %v6182 = vpack.c.b16 %v4674, %v4670
    %v6183 = vpack.c.b16 %v4679, %v4675
    %v6184 = vpack.c.b16 %v4680, %v4676
    %v6185 = vpack.c.b16 %v4681, %v4677
    %v6186 = vpack.c.b16 %v4682, %v4678
    %v6187 = vpack.c.b16 %v4687, %v4683
    %v6188 = vpack.c.b16 %v4688, %v4684
    %v6189 = vpack.c.b16 %v4689, %v4685
    %v6190 = vpack.c.b16 %v4690, %v4686
    %v6191 = vpack.c.b16 %v4695, %v4691
    %v6192 = vpack.c.b16 %v4696, %v4692
    %v6193 = vpack.c.b16 %v4697, %v4693
    %v6194 = vpack.c.b16 %v4698, %v4694
    %v6195 = vpack.c.b16 %v4703, %v4699
    %v6196 = vpack.c.b16 %v4704, %v4700
    %v6197 = vpack.c.b16 %v4705, %v4701
    %v6198 = vpack.c.b16 %v4706, %v4702
    %v6199 = vpack.c.b16 %v4711, %v4707
    %v6200 = vpack.c.b16 %v4712, %v4708
    %v6201 = vpack.c.b16 %v4713, %v4709
    %v6202 = vpack.c.b16 %v4714, %v4710
    %v6203 = vpack.c.b16 %v4719, %v4715
    %v6204 = vpack.c.b16 %v4720, %v4716
    %v6205 = vpack.c.b16 %v4721, %v4717
    %v6206 = vpack.c.b16 %v4722, %v4718
    %v6207 = vpack.c.b16 %v4727, %v4723
    %v6208 = vpack.c.b16 %v4728, %v4724
    %v6209 = vpack.c.b16 %v4729, %v4725
    %v6210 = vpack.c.b16 %v4730, %v4726
    %v6211 = vpack.c.b16 %v4735, %v4731
    %v6212 = vpack.c.b16 %v4736, %v4732
    %v6213 = vpack.c.b16 %v4737, %v4733
    %v6214 = vpack.c.b16 %v4738, %v4734
    %v6215 = vpack.c.b16 %v4743, %v4739
    %v6216 = vpack.c.b16 %v4744, %v4740
    %v6217 = vpack.c.b16 %v4745, %v4741
    %v6218 = vpack.c.b16 %v4746, %v4742
    %v6219 = vpack.c.b16 %v4751, %v4747
    %v6220 = vpack.c.b16 %v4752, %v4748
    %v6221 = vpack.c.b16 %v4753, %v4749
    %v6222 = vpack.c.b16 %v4754, %v4750
    %v6223 = vpack.c.b16 %v4759, %v4755
    %v6224 = vpack.c.b16 %v4760, %v4756
    %v6225 = vpack.c.b16 %v4761, %v4757
    %v6226 = vpack.c.b16 %v4762, %v4758
    %v6227 = vpack.c.b16 %v4767, %v4763
    %v6228 = vpack.c.b16 %v4768, %v4764
    %v6229 = vpack.c.b16 %v4769, %v4765
    %v6230 = vpack.c.b16 %v4770, %v4766
    %v6231 = vpack.c.b16 %v4775, %v4771
    %v6232 = vpack.c.b16 %v4776, %v4772
    %v6233 = vpack.c.b16 %v4777, %v4773
    %v6234 = vpack.c.b16 %v4778, %v4774
    %v6235 = vpack.c.b16 %v4783, %v4779
    %v6236 = vpack.c.b16 %v4784, %v4780
    %v6237 = vpack.c.b16 %v4785, %v4781
    %v6238 = vpack.c.b16 %v4786, %v4782
    %v6239 = vpack.c.b16 %v4791, %v4787
    %v6240 = vpack.c.b16 %v4792, %v4788
    %v6241 = vpack.c.b16 %v4793, %v4789
    %v6242 = vpack.c.b16 %v4794, %v4790
    %v6243 = vpack.c.b16 %v4799, %v4795
    %v6244 = vpack.c.b16 %v4800, %v4796
    %v6245 = vpack.c.b16 %v4801, %v4797
    %v6246 = vpack.c.b16 %v4802, %v4798
    %v6247 = vpack.c.b16 %v4807, %v4803
    %v6248 = vpack.c.b16 %v4808, %v4804
    %v6249 = vpack.c.b16 %v4809, %v4805
    %v6250 = vpack.c.b16 %v4810, %v4806
    %v6251 = vpack.c.b16 %v4815, %v4811
    %v6252 = vpack.c.b16 %v4816, %v4812
    %v6253 = vpack.c.b16 %v4817, %v4813
    %v6254 = vpack.c.b16 %v4818, %v4814
    %v6255 = vpack.c.b16 %v4823, %v4819
    %v6256 = vpack.c.b16 %v4824, %v4820
    %v6257 = vpack.c.b16 %v4825, %v4821
    %v6258 = vpack.c.b16 %v4826, %v4822
    %v6259 = vpack.c.b16 %v4831, %v4827
    %v6260 = vpack.c.b16 %v4832, %v4828
    %v6261 = vpack.c.b16 %v4833, %v4829
    %v6262 = vpack.c.b16 %v4834, %v4830
    %v6263 = vpack.c.b16 %v4839, %v4835
    %v6264 = vpack.c.b16 %v4840, %v4836
    %v6265 = vpack.c.b16 %v4841, %v4837
    %v6266 = vpack.c.b16 %v4842, %v4838
    %v6267 = vpack.c.b16 %v4847, %v4843
    %v6268 = vpack.c.b16 %v4848, %v4844
    %v6269 = vpack.c.b16 %v4849, %v4845
    %v6270 = vpack.c.b16 %v4850, %v4846
    %v6271 = vpack.c.b16 %v4855, %v4851
    %v6272 = vpack.c.b16 %v4856, %v4852
    %v6273 = vpack.c.b16 %v4857, %v4853
    %v6274 = vpack.c.b16 %v4858, %v4854
    %v6275 = vpack.c.b16 %v4863, %v4859
    %v6276 = vpack.c.b16 %v4864, %v4860
    %v6277 = vpack.c.b16 %v4865, %v4861
    %v6278 = vpack.c.b16 %v4866, %v4862
    %v6279 = vpack.c.b16 %v4871, %v4867
    %v6280 = vpack.c.b16 %v4872, %v4868
    %v6281 = vpack.c.b16 %v4873, %v4869
    %v6282 = vpack.c.b16 %v4874, %v4870
    %v6283 = vpack.c.b16 %v4879, %v4875
    %v6284 = vpack.c.b16 %v4880, %v4876
    %v6285 = vpack.c.b16 %v4881, %v4877
    %v6286 = vpack.c.b16 %v4882, %v4878
    %v6287 = vpack.c.b16 %v4887, %v4883
    %v6288 = vpack.c.b16 %v4888, %v4884
    %v6289 = vpack.c.b16 %v4889, %v4885
    %v6290 = vpack.c.b16 %v4890, %v4886
    %v6291 = vpack.c.b16 %v4895, %v4891
    %v6292 = vpack.c.b16 %v4896, %v4892
    %v6293 = vpack.c.b16 %v4897, %v4893
    %v6294 = vpack.c.b16 %v4898, %v4894
    %v6295 = vpack.c.b16 %v4903, %v4899
    %v6296 = vpack.c.b16 %v4904, %v4900
    %v6297 = vpack.c.b16 %v4905, %v4901
    %v6298 = vpack.c.b16 %v4906, %v4902
    %v6299 = vpack.c.b16 %v4911, %v4907
    %v6300 = vpack.c.b16 %v4912, %v4908
    %v6301 = vpack.c.b16 %v4913, %v4909
    %v6302 = vpack.c.b16 %v4914, %v4910
    %v6303 = vpack.c.b16 %v4919, %v4915
    %v6304 = vpack.c.b16 %v4920, %v4916
    %v6305 = vpack.c.b16 %v4921, %v4917
    %v6306 = vpack.c.b16 %v4922, %v4918
    %v6307 = vpack.c.b16 %v4927, %v4923
    %v6308 = vpack.c.b16 %v4928, %v4924
    %v6309 = vpack.c.b16 %v4929, %v4925
    %v6310 = vpack.c.b16 %v4930, %v4926
    %v6311 = vpack.c.b16 %v4935, %v4931
    %v6312 = vpack.c.b16 %v4936, %v4932
    %v6313 = vpack.c.b16 %v4937, %v4933
    %v6314 = vpack.c.b16 %v4938, %v4934
    %v6315 = vpack.c.b16 %v4943, %v4939
    %v6316 = vpack.c.b16 %v4944, %v4940
    %v6317 = vpack.c.b16 %v4945, %v4941
    %v6318 = vpack.c.b16 %v4946, %v4942
    %v6319 = vpack.c.b16 %v4951, %v4947
    %v6320 = vpack.c.b16 %v4952, %v4948
    %v6321 = vpack.c.b16 %v4953, %v4949
    %v6322 = vpack.c.b16 %v4954, %v4950
    %v6323 = vpack.c.b16 %v4959, %v4955
    %v6324 = vpack.c.b16 %v4960, %v4956
    %v6325 = vpack.c.b16 %v4961, %v4957
    %v6326 = vpack.c.b16 %v4962, %v4958
    %v6327 = vpack.c.b16 %v4967, %v4963
    %v6328 = vpack.c.b16 %v4968, %v4964
    %v6329 = vpack.c.b16 %v4969, %v4965
    %v6330 = vpack.c.b16 %v4970, %v4966
    %v6331 = vpack.c.b16 %v4975, %v4971
    %v6332 = vpack.c.b16 %v4976, %v4972
    %v6333 = vpack.c.b16 %v4977, %v4973
    %v6334 = vpack.c.b16 %v4978, %v4974
    %v6335 = vpack.c.b16 %v4983, %v4979
    %v6336 = vpack.c.b16 %v4984, %v4980
    %v6337 = vpack.c.b16 %v4985, %v4981
    %v6338 = vpack.c.b16 %v4986, %v4982
    %v6339 = vpack.c.b16 %v4991, %v4987
    %v6340 = vpack.c.b16 %v4992, %v4988
    %v6341 = vpack.c.b16 %v4993, %v4989
    %v6342 = vpack.c.b16 %v4994, %v4990
    %v6343 = vpack.c.b16 %v4999, %v4995
    %v6344 = vpack.c.b16 %v5000, %v4996
    %v6345 = vpack.c.b16 %v5001, %v4997
    %v6346 = vpack.c.b16 %v5002, %v4998
    %v6347 = vpack.c.b16 %v5007, %v5003
    %v6348 = vpack.c.b16 %v5008, %v5004
    %v6349 = vpack.c.b16 %v5009, %v5005
    %v6350 = vpack.c.b16 %v5010, %v5006
    %v6351 = vpack.c.b16 %v5015, %v5011
    %v6352 = vpack.c.b16 %v5016, %v5012
    %v6353 = vpack.c.b16 %v5017, %v5013
    %v6354 = vpack.c.b16 %v5018, %v5014
    %v6355 = vpack.c.b16 %v5023, %v5019
    %v6356 = vpack.c.b16 %v5024, %v5020
    %v6357 = vpack.c.b16 %v5025, %v5021
    %v6358 = vpack.c.b16 %v5026, %v5022
    %v6359 = vpack.c.b16 %v5031, %v5027
    %v6360 = vpack.c.b16 %v5032, %v5028
    %v6361 = vpack.c.b16 %v5033, %v5029
    %v6362 = vpack.c.b16 %v5034, %v5030
    %v6363 = vpack.c.b16 %v5039, %v5035
    %v6364 = vpack.c.b16 %v5040, %v5036
    %v6365 = vpack.c.b16 %v5041, %v5037
    %v6366 = vpack.c.b16 %v5042, %v5038
    %v6367 = vpack.c.b16 %v5047, %v5043
    %v6368 = vpack.c.b16 %v5048, %v5044
    %v6369 = vpack.c.b16 %v5049, %v5045
    %v6370 = vpack.c.b16 %v5050, %v5046
    %v6371 = vpack.c.b16 %v5055, %v5051
    %v6372 = vpack.c.b16 %v5056, %v5052
    %v6373 = vpack.c.b16 %v5057, %v5053
    %v6374 = vpack.c.b16 %v5058, %v5054
    %v6375 = vpack.c.b16 %v5063, %v5059
    %v6376 = vpack.c.b16 %v5064, %v5060
    %v6377 = vpack.c.b16 %v5065, %v5061
    %v6378 = vpack.c.b16 %v5066, %v5062
    %v6379 = vpack.c.b16 %v5071, %v5067
    %v6380 = vpack.c.b16 %v5072, %v5068
    %v6381 = vpack.c.b16 %v5073, %v5069
    %v6382 = vpack.c.b16 %v5074, %v5070
    %v6383 = vpack.c.b16 %v5079, %v5075
    %v6384 = vpack.c.b16 %v5080, %v5076
    %v6385 = vpack.c.b16 %v5081, %v5077
    %v6386 = vpack.c.b16 %v5082, %v5078
    %v6387 = vpack.c.b16 %v5087, %v5083
    %v6388 = vpack.c.b16 %v5088, %v5084
    %v6389 = vpack.c.b16 %v5089, %v5085
    %v6390 = vpack.c.b16 %v5090, %v5086
    %v6391 = vpack.c.b16 %v5095, %v5091
    %v6392 = vpack.c.b16 %v5096, %v5092
    %v6393 = vpack.c.b16 %v5097, %v5093
    %v6394 = vpack.c.b16 %v5098, %v5094
    %v6395 = vpack.c.b16 %v5103, %v5099
    %v6396 = vpack.c.b16 %v5104, %v5100
    %v6397 = vpack.c.b16 %v5105, %v5101
    %v6398 = vpack.c.b16 %v5106, %v5102
    %v6399 = vpack.c.b16 %v5111, %v5107
    %v6400 = vpack.c.b16 %v5112, %v5108
    %v6401 = vpack.c.b16 %v5113, %v5109
    %v6402 = vpack.c.b16 %v5114, %v5110
    %v6403 = vpack.c.b16 %v5119, %v5115
    %v6404 = vpack.c.b16 %v5120, %v5116
    %v6405 = vpack.c.b16 %v5121, %v5117
    %v6406 = vpack.c.b16 %v5122, %v5118
    %v6407 = vpack.c.b16 %v5127, %v5123
    %v6408 = vpack.c.b16 %v5128, %v5124
    %v6409 = vpack.c.b16 %v5129, %v5125
    %v6410 = vpack.c.b16 %v5130, %v5126
    %v6411 = vpack.c.b16 %v5135, %v5131
    %v6412 = vpack.c.b16 %v5136, %v5132
    %v6413 = vpack.c.b16 %v5137, %v5133
    %v6414 = vpack.c.b16 %v5138, %v5134
    %v6415 = vpack.c.b16 %v5143, %v5139
    %v6416 = vpack.c.b16 %v5144, %v5140
    %v6417 = vpack.c.b16 %v5145, %v5141
    %v6418 = vpack.c.b16 %v5146, %v5142
    %v6419 = vpack.c.b16 %v5151, %v5147
    %v6420 = vpack.c.b16 %v5152, %v5148
    %v6421 = vpack.c.b16 %v5153, %v5149
    %v6422 = vpack.c.b16 %v5154, %v5150
    %v6423 = vpack.c.b16 %v5159, %v5155
    %v6424 = vpack.c.b16 %v5160, %v5156
    %v6425 = vpack.c.b16 %v5161, %v5157
    %v6426 = vpack.c.b16 %v5162, %v5158
    %v6427 = vpack.c.b16 %v5167, %v5163
    %v6428 = vpack.c.b16 %v5168, %v5164
    %v6429 = vpack.c.b16 %v5169, %v5165
    %v6430 = vpack.c.b16 %v5170, %v5166
    %v6431 = vpack.c.b16 %v5175, %v5171
    %v6432 = vpack.c.b16 %v5176, %v5172
    %v6433 = vpack.c.b16 %v5177, %v5173
    %v6434 = vpack.c.b16 %v5178, %v5174
    %v6435 = vpack.c.b16 %v5183, %v5179
    %v6436 = vpack.c.b16 %v5184, %v5180
    %v6437 = vpack.c.b16 %v5185, %v5181
    %v6438 = vpack.c.b16 %v5186, %v5182
    %v6439 = vpack.c.b16 %v5191, %v5187
    %v6440 = vpack.c.b16 %v5192, %v5188
    %v6441 = vpack.c.b16 %v5193, %v5189
    %v6442 = vpack.c.b16 %v5194, %v5190
    %v6443 = vpack.c.b16 %v5199, %v5195
    %v6444 = vpack.c.b16 %v5200, %v5196
    %v6445 = vpack.c.b16 %v5201, %v5197
    %v6446 = vpack.c.b16 %v5202, %v5198
    %v6447 = vpack.c.b16 %v5207, %v5203
    %v6448 = vpack.c.b16 %v5208, %v5204
    %v6449 = vpack.c.b16 %v5209, %v5205
    %v6450 = vpack.c.b16 %v5210, %v5206
    %v6451 = vpack.c.b16 %v5215, %v5211
    %v6452 = vpack.c.b16 %v5216, %v5212
    %v6453 = vpack.c.b16 %v5217, %v5213
    %v6454 = vpack.c.b16 %v5218, %v5214
    %v6455 = vpack.c.b16 %v5223, %v5219
    %v6456 = vpack.c.b16 %v5224, %v5220
    %v6457 = vpack.c.b16 %v5225, %v5221
    %v6458 = vpack.c.b16 %v5226, %v5222
    %v6459 = vpack.c.b16 %v5231, %v5227
    %v6460 = vpack.c.b16 %v5232, %v5228
    %v6461 = vpack.c.b16 %v5233, %v5229
    %v6462 = vpack.c.b16 %v5234, %v5230
    %v6463 = vpack.c.b16 %v5239, %v5235
    %v6464 = vpack.c.b16 %v5240, %v5236
    %v6465 = vpack.c.b16 %v5241, %v5237
    %v6466 = vpack.c.b16 %v5242, %v5238
    %v6467 = vpack.c.b16 %v5247, %v5243
    %v6468 = vpack.c.b16 %v5248, %v5244
    %v6469 = vpack.c.b16 %v5249, %v5245
    %v6470 = vpack.c.b16 %v5250, %v5246
    %v6471 = vpack.c.b16 %v5255, %v5251
    %v6472 = vpack.c.b16 %v5256, %v5252
    %v6473 = vpack.c.b16 %v5257, %v5253
    %v6474 = vpack.c.b16 %v5258, %v5254
    %7691 = vmatpush.bf16.msra.mxu0 %v5287
    %7692 = vmatpush.bf16.msra.mxu0 %v5283
    %7693 = vmatpush.bf16.msra.mxu0 %v5279
    %7694 = vmatpush.bf16.msra.mxu0 %v5275
    %7695 = vmatpush.bf16.msra.mxu0 %v5271
    %7696 = vmatpush.bf16.msra.mxu0 %v5267
    %7697 = vmatpush.bf16.msra.mxu0 %v5263
    %7698 = vmatpush.bf16.msra.mxu0 %v5259
    %7699 = vmatmul.bf16.gmra.mxu0 %v345
    %v7700 = vpop.f32.mrf.mxu0
    %v7701 = vadd.f32 %v1603, %v7700
    %v7702 = vpop.f32.mrf.mxu0
    %7703 = vdwg.mxu0
    %7704 = vmatpush.bf16.msra.mxu0 %v5319
    %7705 = vmatpush.bf16.msra.mxu0 %v5315
    %7706 = vmatpush.bf16.msra.mxu0 %v5311
    %7707 = vmatpush.bf16.msra.mxu0 %v5307
    %7708 = vmatpush.bf16.msra.mxu0 %v5303
    %7709 = vmatpush.bf16.msra.mxu0 %v5299
    %7710 = vmatpush.bf16.msra.mxu0 %v5295
    %7711 = vmatpush.bf16.msra.mxu0 %v5291
    %7712 = vmatmul.bf16.gmra.mxu0 %v346
    %v7713 = vpop.f32.mrf.mxu0
    %v7714 = vadd.f32 %v7701, %v7713
    %v7715 = vpop.f32.mrf.mxu0
    %7716 = vdwg.mxu0
    %7717 = vmatpush.bf16.msra.mxu0 %v5351
    %7718 = vmatpush.bf16.msra.mxu0 %v5347
    %7719 = vmatpush.bf16.msra.mxu0 %v5343
    %7720 = vmatpush.bf16.msra.mxu0 %v5339
    %7721 = vmatpush.bf16.msra.mxu0 %v5335
    %7722 = vmatpush.bf16.msra.mxu0 %v5331
    %7723 = vmatpush.bf16.msra.mxu0 %v5327
    %7724 = vmatpush.bf16.msra.mxu0 %v5323
    %7725 = vmatmul.bf16.gmra.mxu0 %v347
    %v7726 = vpop.f32.mrf.mxu0
    %v7727 = vadd.f32 %v7714, %v7726
    %v7728 = vpop.f32.mrf.mxu0
    %7729 = vdwg.mxu0
    %7730 = vmatpush.bf16.msra.mxu0 %v5383
    %7731 = vmatpush.bf16.msra.mxu0 %v5379
    %7732 = vmatpush.bf16.msra.mxu0 %v5375
    %7733 = vmatpush.bf16.msra.mxu0 %v5371
    %7734 = vmatpush.bf16.msra.mxu0 %v5367
    %7735 = vmatpush.bf16.msra.mxu0 %v5363
    %7736 = vmatpush.bf16.msra.mxu0 %v5359
    %7737 = vmatpush.bf16.msra.mxu0 %v5355
    %7738 = vmatmul.bf16.gmra.mxu0 %v348
    %v7739 = vpop.f32.mrf.mxu0
    %v7740 = vadd.f32 %v7727, %v7739
    %v7741 = vpop.f32.mrf.mxu0
    %7742 = vdwg.mxu0
    %7743 = vmatpush.bf16.msra.mxu0 %v5415
    %7744 = vmatpush.bf16.msra.mxu0 %v5411
    %7745 = vmatpush.bf16.msra.mxu0 %v5407
    %7746 = vmatpush.bf16.msra.mxu0 %v5403
    %7747 = vmatpush.bf16.msra.mxu0 %v5399
    %7748 = vmatpush.bf16.msra.mxu0 %v5395
    %7749 = vmatpush.bf16.msra.mxu0 %v5391
    %7750 = vmatpush.bf16.msra.mxu0 %v5387
    %7751 = vmatmul.bf16.gmra.mxu0 %v349
    %v7752 = vpop.f32.mrf.mxu0
    %v7753 = vadd.f32 %v7740, %v7752
    %v7754 = vpop.f32.mrf.mxu0
    %7755 = vdwg.mxu0
    %7756 = vmatpush.bf16.msra.mxu0 %v5447
    %7757 = vmatpush.bf16.msra.mxu0 %v5443
    %7758 = vmatpush.bf16.msra.mxu0 %v5439
    %7759 = vmatpush.bf16.msra.mxu0 %v5435
    %7760 = vmatpush.bf16.msra.mxu0 %v5431
    %7761 = vmatpush.bf16.msra.mxu0 %v5427
    %7762 = vmatpush.bf16.msra.mxu0 %v5423
    %7763 = vmatpush.bf16.msra.mxu0 %v5419
    %7764 = vmatmul.bf16.gmra.mxu0 %v350
    %v7765 = vpop.f32.mrf.mxu0
    %v7766 = vadd.f32 %v7753, %v7765
    %v7767 = vpop.f32.mrf.mxu0
    %7768 = vdwg.mxu0
    %7769 = vmatpush.bf16.msra.mxu0 %v5479
    %7770 = vmatpush.bf16.msra.mxu0 %v5475
    %7771 = vmatpush.bf16.msra.mxu0 %v5471
    %7772 = vmatpush.bf16.msra.mxu0 %v5467
    %7773 = vmatpush.bf16.msra.mxu0 %v5463
    %7774 = vmatpush.bf16.msra.mxu0 %v5459
    %7775 = vmatpush.bf16.msra.mxu0 %v5455
    %7776 = vmatpush.bf16.msra.mxu0 %v5451
    %7777 = vmatmul.bf16.gmra.mxu0 %v351
    %v7778 = vpop.f32.mrf.mxu0
    %v7779 = vadd.f32 %v7766, %v7778
    %v7780 = vpop.f32.mrf.mxu0
    %7781 = vdwg.mxu0
    %7782 = vmatpush.bf16.msra.mxu0 %v5511
    %7783 = vmatpush.bf16.msra.mxu0 %v5507
    %7784 = vmatpush.bf16.msra.mxu0 %v5503
    %7785 = vmatpush.bf16.msra.mxu0 %v5499
    %7786 = vmatpush.bf16.msra.mxu0 %v5495
    %7787 = vmatpush.bf16.msra.mxu0 %v5491
    %7788 = vmatpush.bf16.msra.mxu0 %v5487
    %7789 = vmatpush.bf16.msra.mxu0 %v5483
    %7790 = vmatmul.bf16.gmra.mxu0 %v352
    %v7791 = vpop.f32.mrf.mxu0
    %v7792 = vadd.f32 %v7779, %v7791
    %v7793 = vpop.f32.mrf.mxu0
    %7794 = vdwg.mxu0
    %7795 = vmatpush.bf16.msra.mxu0 %v5543
    %7796 = vmatpush.bf16.msra.mxu0 %v5539
    %7797 = vmatpush.bf16.msra.mxu0 %v5535
    %7798 = vmatpush.bf16.msra.mxu0 %v5531
    %7799 = vmatpush.bf16.msra.mxu0 %v5527
    %7800 = vmatpush.bf16.msra.mxu0 %v5523
    %7801 = vmatpush.bf16.msra.mxu0 %v5519
    %7802 = vmatpush.bf16.msra.mxu0 %v5515
    %7803 = vmatmul.bf16.gmra.mxu0 %v353
    %v7804 = vpop.f32.mrf.mxu0
    %v7805 = vadd.f32 %v7792, %v7804
    %v7806 = vpop.f32.mrf.mxu0
    %7807 = vdwg.mxu0
    %7808 = vmatpush.bf16.msra.mxu0 %v5575
    %7809 = vmatpush.bf16.msra.mxu0 %v5571
    %7810 = vmatpush.bf16.msra.mxu0 %v5567
    %7811 = vmatpush.bf16.msra.mxu0 %v5563
    %7812 = vmatpush.bf16.msra.mxu0 %v5559
    %7813 = vmatpush.bf16.msra.mxu0 %v5555
    %7814 = vmatpush.bf16.msra.mxu0 %v5551
    %7815 = vmatpush.bf16.msra.mxu0 %v5547
    %7816 = vmatmul.bf16.gmra.mxu0 %v354
    %v7817 = vpop.f32.mrf.mxu0
    %v7818 = vadd.f32 %v7805, %v7817
    %v7819 = vpop.f32.mrf.mxu0
    %7820 = vdwg.mxu0
    %7821 = vmatpush.bf16.msra.mxu0 %v5607
    %7822 = vmatpush.bf16.msra.mxu0 %v5603
    %7823 = vmatpush.bf16.msra.mxu0 %v5599
    %7824 = vmatpush.bf16.msra.mxu0 %v5595
    %7825 = vmatpush.bf16.msra.mxu0 %v5591
    %7826 = vmatpush.bf16.msra.mxu0 %v5587
    %7827 = vmatpush.bf16.msra.mxu0 %v5583
    %7828 = vmatpush.bf16.msra.mxu0 %v5579
    %7829 = vmatmul.bf16.gmra.mxu0 %v355
    %v7830 = vpop.f32.mrf.mxu0
    %v7831 = vadd.f32 %v7818, %v7830
    %v7832 = vpop.f32.mrf.mxu0
    %7833 = vdwg.mxu0
    %7834 = vmatpush.bf16.msra.mxu0 %v5639
    %7835 = vmatpush.bf16.msra.mxu0 %v5635
    %7836 = vmatpush.bf16.msra.mxu0 %v5631
    %7837 = vmatpush.bf16.msra.mxu0 %v5627
    %7838 = vmatpush.bf16.msra.mxu0 %v5623
    %7839 = vmatpush.bf16.msra.mxu0 %v5619
    %7840 = vmatpush.bf16.msra.mxu0 %v5615
    %7841 = vmatpush.bf16.msra.mxu0 %v5611
    %7842 = vmatmul.bf16.gmra.mxu0 %v356
    %v7843 = vpop.f32.mrf.mxu0
    %v7844 = vadd.f32 %v7831, %v7843
    %v7845 = vpop.f32.mrf.mxu0
    %7846 = vdwg.mxu0
    %7847 = vmatpush.bf16.msra.mxu0 %v5671
    %7848 = vmatpush.bf16.msra.mxu0 %v5667
    %7849 = vmatpush.bf16.msra.mxu0 %v5663
    %7850 = vmatpush.bf16.msra.mxu0 %v5659
    %7851 = vmatpush.bf16.msra.mxu0 %v5655
    %7852 = vmatpush.bf16.msra.mxu0 %v5651
    %7853 = vmatpush.bf16.msra.mxu0 %v5647
    %7854 = vmatpush.bf16.msra.mxu0 %v5643
    %7855 = vmatmul.bf16.gmra.mxu0 %v357
    %v7856 = vpop.f32.mrf.mxu0
    %v7857 = vadd.f32 %v7844, %v7856
    %v7858 = vpop.f32.mrf.mxu0
    %7859 = vdwg.mxu0
    %7860 = vmatpush.bf16.msra.mxu0 %v5703
    %7861 = vmatpush.bf16.msra.mxu0 %v5699
    %7862 = vmatpush.bf16.msra.mxu0 %v5695
    %7863 = vmatpush.bf16.msra.mxu0 %v5691
    %7864 = vmatpush.bf16.msra.mxu0 %v5687
    %7865 = vmatpush.bf16.msra.mxu0 %v5683
    %7866 = vmatpush.bf16.msra.mxu0 %v5679
    %7867 = vmatpush.bf16.msra.mxu0 %v5675
    %7868 = vmatmul.bf16.gmra.mxu0 %v358
    %v7869 = vpop.f32.mrf.mxu0
    %v7870 = vadd.f32 %v7857, %v7869
    %v7871 = vpop.f32.mrf.mxu0
    %7872 = vdwg.mxu0
    %7873 = vmatpush.bf16.msra.mxu0 %v5735
    %7874 = vmatpush.bf16.msra.mxu0 %v5731
    %7875 = vmatpush.bf16.msra.mxu0 %v5727
    %7876 = vmatpush.bf16.msra.mxu0 %v5723
    %7877 = vmatpush.bf16.msra.mxu0 %v5719
    %7878 = vmatpush.bf16.msra.mxu0 %v5715
    %7879 = vmatpush.bf16.msra.mxu0 %v5711
    %7880 = vmatpush.bf16.msra.mxu0 %v5707
    %7881 = vmatmul.bf16.gmra.mxu0 %v359
    %v7882 = vpop.f32.mrf.mxu0
    %v7883 = vadd.f32 %v7870, %v7882
    %v7884 = vpop.f32.mrf.mxu0
    %7885 = vdwg.mxu0
    %7886 = vmatpush.bf16.msra.mxu0 %v5767
    %7887 = vmatpush.bf16.msra.mxu0 %v5763
    %7888 = vmatpush.bf16.msra.mxu0 %v5759
    %7889 = vmatpush.bf16.msra.mxu0 %v5755
    %7890 = vmatpush.bf16.msra.mxu0 %v5751
    %7891 = vmatpush.bf16.msra.mxu0 %v5747
    %7892 = vmatpush.bf16.msra.mxu0 %v5743
    %7893 = vmatpush.bf16.msra.mxu0 %v5739
    %7894 = vmatmul.bf16.gmra.mxu0 %v360
    %v7895 = vpop.f32.mrf.mxu0
    %v7896 = vadd.f32 %v7883, %v7895
    %v7897 = vpop.f32.mrf.mxu0
    %7898 = vdwg.mxu0
    %7899 = vmatpush.bf16.msra.mxu0 %v5799
    %7900 = vmatpush.bf16.msra.mxu0 %v5795
    %7901 = vmatpush.bf16.msra.mxu0 %v5791
    %7902 = vmatpush.bf16.msra.mxu0 %v5787
    %7903 = vmatpush.bf16.msra.mxu0 %v5783
    %7904 = vmatpush.bf16.msra.mxu0 %v5779
    %7905 = vmatpush.bf16.msra.mxu0 %v5775
    %7906 = vmatpush.bf16.msra.mxu0 %v5771
    %7907 = vmatmul.bf16.gmra.mxu0 %v361
    %v7908 = vpop.f32.mrf.mxu0
    %v7909 = vadd.f32 %v7896, %v7908
    %v7910 = vpop.f32.mrf.mxu0
    %7911 = vdwg.mxu0
    %7912 = vmatpush.bf16.msra.mxu0 %v5831
    %7913 = vmatpush.bf16.msra.mxu0 %v5827
    %7914 = vmatpush.bf16.msra.mxu0 %v5823
    %7915 = vmatpush.bf16.msra.mxu0 %v5819
    %7916 = vmatpush.bf16.msra.mxu0 %v5815
    %7917 = vmatpush.bf16.msra.mxu0 %v5811
    %7918 = vmatpush.bf16.msra.mxu0 %v5807
    %7919 = vmatpush.bf16.msra.mxu0 %v5803
    %7920 = vmatmul.bf16.gmra.mxu0 %v362
    %v7921 = vpop.f32.mrf.mxu0
    %v7922 = vadd.f32 %v7909, %v7921
    %v7923 = vpop.f32.mrf.mxu0
    %7924 = vdwg.mxu0
    %7925 = vmatpush.bf16.msra.mxu0 %v5863
    %7926 = vmatpush.bf16.msra.mxu0 %v5859
    %7927 = vmatpush.bf16.msra.mxu0 %v5855
    %7928 = vmatpush.bf16.msra.mxu0 %v5851
    %7929 = vmatpush.bf16.msra.mxu0 %v5847
    %7930 = vmatpush.bf16.msra.mxu0 %v5843
    %7931 = vmatpush.bf16.msra.mxu0 %v5839
    %7932 = vmatpush.bf16.msra.mxu0 %v5835
    %7933 = vmatmul.bf16.gmra.mxu0 %v363
    %v7934 = vpop.f32.mrf.mxu0
    %v7935 = vadd.f32 %v7922, %v7934
    %v7936 = vpop.f32.mrf.mxu0
    %7937 = vdwg.mxu0
    %7938 = vmatpush.bf16.msra.mxu0 %v5895
    %7939 = vmatpush.bf16.msra.mxu0 %v5891
    %7940 = vmatpush.bf16.msra.mxu0 %v5887
    %7941 = vmatpush.bf16.msra.mxu0 %v5883
    %7942 = vmatpush.bf16.msra.mxu0 %v5879
    %7943 = vmatpush.bf16.msra.mxu0 %v5875
    %7944 = vmatpush.bf16.msra.mxu0 %v5871
    %7945 = vmatpush.bf16.msra.mxu0 %v5867
    %7946 = vmatmul.bf16.gmra.mxu0 %v364
    %v7947 = vpop.f32.mrf.mxu0
    %v7948 = vadd.f32 %v7935, %v7947
    %v7949 = vpop.f32.mrf.mxu0
    %7950 = vdwg.mxu0
    %7951 = vmatpush.bf16.msra.mxu0 %v5927
    %7952 = vmatpush.bf16.msra.mxu0 %v5923
    %7953 = vmatpush.bf16.msra.mxu0 %v5919
    %7954 = vmatpush.bf16.msra.mxu0 %v5915
    %7955 = vmatpush.bf16.msra.mxu0 %v5911
    %7956 = vmatpush.bf16.msra.mxu0 %v5907
    %7957 = vmatpush.bf16.msra.mxu0 %v5903
    %7958 = vmatpush.bf16.msra.mxu0 %v5899
    %7959 = vmatmul.bf16.gmra.mxu0 %v365
    %v7960 = vpop.f32.mrf.mxu0
    %v7961 = vadd.f32 %v7948, %v7960
    %v7962 = vpop.f32.mrf.mxu0
    %7963 = vdwg.mxu0
    %7964 = vmatpush.bf16.msra.mxu0 %v5959
    %7965 = vmatpush.bf16.msra.mxu0 %v5955
    %7966 = vmatpush.bf16.msra.mxu0 %v5951
    %7967 = vmatpush.bf16.msra.mxu0 %v5947
    %7968 = vmatpush.bf16.msra.mxu0 %v5943
    %7969 = vmatpush.bf16.msra.mxu0 %v5939
    %7970 = vmatpush.bf16.msra.mxu0 %v5935
    %7971 = vmatpush.bf16.msra.mxu0 %v5931
    %7972 = vmatmul.bf16.gmra.mxu0 %v366
    %v7973 = vpop.f32.mrf.mxu0
    %v7974 = vadd.f32 %v7961, %v7973
    %v7975 = vpop.f32.mrf.mxu0
    %7976 = vdwg.mxu0
    %7977 = vmatpush.bf16.msra.mxu0 %v5991
    %7978 = vmatpush.bf16.msra.mxu0 %v5987
    %7979 = vmatpush.bf16.msra.mxu0 %v5983
    %7980 = vmatpush.bf16.msra.mxu0 %v5979
    %7981 = vmatpush.bf16.msra.mxu0 %v5975
    %7982 = vmatpush.bf16.msra.mxu0 %v5971
    %7983 = vmatpush.bf16.msra.mxu0 %v5967
    %7984 = vmatpush.bf16.msra.mxu0 %v5963
    %7985 = vmatmul.bf16.gmra.mxu0 %v367
    %v7986 = vpop.f32.mrf.mxu0
    %v7987 = vadd.f32 %v7974, %v7986
    %v7988 = vpop.f32.mrf.mxu0
    %7989 = vdwg.mxu0
    %7990 = vmatpush.bf16.msra.mxu0 %v6023
    %7991 = vmatpush.bf16.msra.mxu0 %v6019
    %7992 = vmatpush.bf16.msra.mxu0 %v6015
    %7993 = vmatpush.bf16.msra.mxu0 %v6011
    %7994 = vmatpush.bf16.msra.mxu0 %v6007
    %7995 = vmatpush.bf16.msra.mxu0 %v6003
    %7996 = vmatpush.bf16.msra.mxu0 %v5999
    %7997 = vmatpush.bf16.msra.mxu0 %v5995
    %7998 = vmatmul.bf16.gmra.mxu0 %v368
    %v7999 = vpop.f32.mrf.mxu0
    %v8000 = vadd.f32 %v7987, %v7999
    %v8001 = vpop.f32.mrf.mxu0
    %8002 = vdwg.mxu0
    %8003 = vmatpush.bf16.msra.mxu0 %v6055
    %8004 = vmatpush.bf16.msra.mxu0 %v6051
    %8005 = vmatpush.bf16.msra.mxu0 %v6047
    %8006 = vmatpush.bf16.msra.mxu0 %v6043
    %8007 = vmatpush.bf16.msra.mxu0 %v6039
    %8008 = vmatpush.bf16.msra.mxu0 %v6035
    %8009 = vmatpush.bf16.msra.mxu0 %v6031
    %8010 = vmatpush.bf16.msra.mxu0 %v6027
    %8011 = vmatmul.bf16.gmra.mxu0 %v369
    %v8012 = vpop.f32.mrf.mxu0
    %v8013 = vadd.f32 %v8000, %v8012
    %v8014 = vpop.f32.mrf.mxu0
    %8015 = vdwg.mxu0
    %8016 = vmatpush.bf16.msra.mxu0 %v6087
    %8017 = vmatpush.bf16.msra.mxu0 %v6083
    %8018 = vmatpush.bf16.msra.mxu0 %v6079
    %8019 = vmatpush.bf16.msra.mxu0 %v6075
    %8020 = vmatpush.bf16.msra.mxu0 %v6071
    %8021 = vmatpush.bf16.msra.mxu0 %v6067
    %8022 = vmatpush.bf16.msra.mxu0 %v6063
    %8023 = vmatpush.bf16.msra.mxu0 %v6059
    %8024 = vmatmul.bf16.gmra.mxu0 %v370
    %v8025 = vpop.f32.mrf.mxu0
    %v8026 = vadd.f32 %v8013, %v8025
    %v8027 = vpop.f32.mrf.mxu0
    %8028 = vdwg.mxu0
    %8029 = vmatpush.bf16.msra.mxu0 %v6119
    %8030 = vmatpush.bf16.msra.mxu0 %v6115
    %8031 = vmatpush.bf16.msra.mxu0 %v6111
    %8032 = vmatpush.bf16.msra.mxu0 %v6107
    %8033 = vmatpush.bf16.msra.mxu0 %v6103
    %8034 = vmatpush.bf16.msra.mxu0 %v6099
    %8035 = vmatpush.bf16.msra.mxu0 %v6095
    %8036 = vmatpush.bf16.msra.mxu0 %v6091
    %8037 = vmatmul.bf16.gmra.mxu0 %v371
    %v8038 = vpop.f32.mrf.mxu0
    %v8039 = vadd.f32 %v8026, %v8038
    %v8040 = vpop.f32.mrf.mxu0
    %8041 = vdwg.mxu0
    %8042 = vmatpush.bf16.msra.mxu0 %v6151
    %8043 = vmatpush.bf16.msra.mxu0 %v6147
    %8044 = vmatpush.bf16.msra.mxu0 %v6143
    %8045 = vmatpush.bf16.msra.mxu0 %v6139
    %8046 = vmatpush.bf16.msra.mxu0 %v6135
    %8047 = vmatpush.bf16.msra.mxu0 %v6131
    %8048 = vmatpush.bf16.msra.mxu0 %v6127
    %8049 = vmatpush.bf16.msra.mxu0 %v6123
    %8050 = vmatmul.bf16.gmra.mxu0 %v372
    %v8051 = vpop.f32.mrf.mxu0
    %v8052 = vadd.f32 %v8039, %v8051
    %v8053 = vpop.f32.mrf.mxu0
    %8054 = vdwg.mxu0
    %8055 = vmatpush.bf16.msra.mxu0 %v6183
    %8056 = vmatpush.bf16.msra.mxu0 %v6179
    %8057 = vmatpush.bf16.msra.mxu0 %v6175
    %8058 = vmatpush.bf16.msra.mxu0 %v6171
    %8059 = vmatpush.bf16.msra.mxu0 %v6167
    %8060 = vmatpush.bf16.msra.mxu0 %v6163
    %8061 = vmatpush.bf16.msra.mxu0 %v6159
    %8062 = vmatpush.bf16.msra.mxu0 %v6155
    %8063 = vmatmul.bf16.gmra.mxu0 %v373
    %v8064 = vpop.f32.mrf.mxu0
    %v8065 = vadd.f32 %v8052, %v8064
    %v8066 = vpop.f32.mrf.mxu0
    %8067 = vdwg.mxu0
    %8068 = vmatpush.bf16.msra.mxu0 %v6215
    %8069 = vmatpush.bf16.msra.mxu0 %v6211
    %8070 = vmatpush.bf16.msra.mxu0 %v6207
    %8071 = vmatpush.bf16.msra.mxu0 %v6203
    %8072 = vmatpush.bf16.msra.mxu0 %v6199
    %8073 = vmatpush.bf16.msra.mxu0 %v6195
    %8074 = vmatpush.bf16.msra.mxu0 %v6191
    %8075 = vmatpush.bf16.msra.mxu0 %v6187
    %8076 = vmatmul.bf16.gmra.mxu0 %v374
    %v8077 = vpop.f32.mrf.mxu0
    %v8078 = vadd.f32 %v8065, %v8077
    %v8079 = vpop.f32.mrf.mxu0
    %8080 = vdwg.mxu0
    %8081 = vmatpush.bf16.msra.mxu0 %v6247
    %8082 = vmatpush.bf16.msra.mxu0 %v6243
    %8083 = vmatpush.bf16.msra.mxu0 %v6239
    %8084 = vmatpush.bf16.msra.mxu0 %v6235
    %8085 = vmatpush.bf16.msra.mxu0 %v6231
    %8086 = vmatpush.bf16.msra.mxu0 %v6227
    %8087 = vmatpush.bf16.msra.mxu0 %v6223
    %8088 = vmatpush.bf16.msra.mxu0 %v6219
    %8089 = vmatmul.bf16.gmra.mxu0 %v375
    %v8090 = vpop.f32.mrf.mxu0
    %v8091 = vadd.f32 %v8078, %v8090
    %v8092 = vpop.f32.mrf.mxu0
    %8093 = vdwg.mxu0
    %8094 = vmatpush.bf16.msra.mxu0 %v6279
    %8095 = vmatpush.bf16.msra.mxu0 %v6275
    %8096 = vmatpush.bf16.msra.mxu0 %v6271
    %8097 = vmatpush.bf16.msra.mxu0 %v6267
    %8098 = vmatpush.bf16.msra.mxu0 %v6263
    %8099 = vmatpush.bf16.msra.mxu0 %v6259
    %8100 = vmatpush.bf16.msra.mxu0 %v6255
    %8101 = vmatpush.bf16.msra.mxu0 %v6251
    %8102 = vmatmul.bf16.gmra.mxu0 %v376
    %v8103 = vpop.f32.mrf.mxu0
    %v8104 = vadd.f32 %v8091, %v8103
    %v8105 = vpop.f32.mrf.mxu0
    %8106 = vdwg.mxu0
    %8107 = vmatpush.bf16.msra.mxu0 %v6311
    %8108 = vmatpush.bf16.msra.mxu0 %v6307
    %8109 = vmatpush.bf16.msra.mxu0 %v6303
    %8110 = vmatpush.bf16.msra.mxu0 %v6299
    %8111 = vmatpush.bf16.msra.mxu0 %v6295
    %8112 = vmatpush.bf16.msra.mxu0 %v6291
    %8113 = vmatpush.bf16.msra.mxu0 %v6287
    %8114 = vmatpush.bf16.msra.mxu0 %v6283
    %8115 = vmatmul.bf16.gmra.mxu0 %v377
    %v8116 = vpop.f32.mrf.mxu0
    %v8117 = vadd.f32 %v8104, %v8116
    %v8118 = vpop.f32.mrf.mxu0
    %8119 = vdwg.mxu0
    %8120 = vmatpush.bf16.msra.mxu0 %v6343
    %8121 = vmatpush.bf16.msra.mxu0 %v6339
    %8122 = vmatpush.bf16.msra.mxu0 %v6335
    %8123 = vmatpush.bf16.msra.mxu0 %v6331
    %8124 = vmatpush.bf16.msra.mxu0 %v6327
    %8125 = vmatpush.bf16.msra.mxu0 %v6323
    %8126 = vmatpush.bf16.msra.mxu0 %v6319
    %8127 = vmatpush.bf16.msra.mxu0 %v6315
    %8128 = vmatmul.bf16.gmra.mxu0 %v378
    %v8129 = vpop.f32.mrf.mxu0
    %v8130 = vadd.f32 %v8117, %v8129
    %v8131 = vpop.f32.mrf.mxu0
    %8132 = vdwg.mxu0
    %8133 = vmatpush.bf16.msra.mxu0 %v6375
    %8134 = vmatpush.bf16.msra.mxu0 %v6371
    %8135 = vmatpush.bf16.msra.mxu0 %v6367
    %8136 = vmatpush.bf16.msra.mxu0 %v6363
    %8137 = vmatpush.bf16.msra.mxu0 %v6359
    %8138 = vmatpush.bf16.msra.mxu0 %v6355
    %8139 = vmatpush.bf16.msra.mxu0 %v6351
    %8140 = vmatpush.bf16.msra.mxu0 %v6347
    %8141 = vmatmul.bf16.gmra.mxu0 %v379
    %v8142 = vpop.f32.mrf.mxu0
    %v8143 = vadd.f32 %v8130, %v8142
    %v8144 = vpop.f32.mrf.mxu0
    %8145 = vdwg.mxu0
    %8146 = vmatpush.bf16.msra.mxu0 %v6407
    %8147 = vmatpush.bf16.msra.mxu0 %v6403
    %8148 = vmatpush.bf16.msra.mxu0 %v6399
    %8149 = vmatpush.bf16.msra.mxu0 %v6395
    %8150 = vmatpush.bf16.msra.mxu0 %v6391
    %8151 = vmatpush.bf16.msra.mxu0 %v6387
    %8152 = vmatpush.bf16.msra.mxu0 %v6383
    %8153 = vmatpush.bf16.msra.mxu0 %v6379
    %8154 = vmatmul.bf16.gmra.mxu0 %v380
    %v8155 = vpop.f32.mrf.mxu0
    %v8156 = vadd.f32 %v8143, %v8155
    %v8157 = vpop.f32.mrf.mxu0
    %8158 = vdwg.mxu0
    %8159 = vmatpush.bf16.msra.mxu0 %v6439
    %8160 = vmatpush.bf16.msra.mxu0 %v6435
    %8161 = vmatpush.bf16.msra.mxu0 %v6431
    %8162 = vmatpush.bf16.msra.mxu0 %v6427
    %8163 = vmatpush.bf16.msra.mxu0 %v6423
    %8164 = vmatpush.bf16.msra.mxu0 %v6419
    %8165 = vmatpush.bf16.msra.mxu0 %v6415
    %8166 = vmatpush.bf16.msra.mxu0 %v6411
    %8167 = vmatmul.bf16.gmra.mxu0 %v381
    %v8168 = vpop.f32.mrf.mxu0
    %v8169 = vadd.f32 %v8156, %v8168
    %v8170 = vpop.f32.mrf.mxu0
    %8171 = vdwg.mxu0
    %8172 = vmatpush.bf16.msra.mxu0 %v6471
    %8173 = vmatpush.bf16.msra.mxu0 %v6467
    %8174 = vmatpush.bf16.msra.mxu0 %v6463
    %8175 = vmatpush.bf16.msra.mxu0 %v6459
    %8176 = vmatpush.bf16.msra.mxu0 %v6455
    %8177 = vmatpush.bf16.msra.mxu0 %v6451
    %8178 = vmatpush.bf16.msra.mxu0 %v6447
    %8179 = vmatpush.bf16.msra.mxu0 %v6443
    %8180 = vmatmul.bf16.gmra.mxu0 %v382
    %v8181 = vpop.f32.mrf.mxu0
    %v8182 = vadd.f32 %v8169, %v8181
    %v8183 = vpop.f32.mrf.mxu0
    %8184 = vdwg.mxu0
    %8185 = vmatpush.bf16.msra.mxu0 %v5288
    %8186 = vmatpush.bf16.msra.mxu0 %v5284
    %8187 = vmatpush.bf16.msra.mxu0 %v5280
    %8188 = vmatpush.bf16.msra.mxu0 %v5276
    %8189 = vmatpush.bf16.msra.mxu0 %v5272
    %8190 = vmatpush.bf16.msra.mxu0 %v5268
    %8191 = vmatpush.bf16.msra.mxu0 %v5264
    %8192 = vmatpush.bf16.msra.mxu0 %v5260
    %8193 = vmatmul.bf16.gmra.mxu0 %v345
    %v8194 = vpop.f32.mrf.mxu0
    %v8195 = vadd.f32 %v1604, %v8194
    %v8196 = vpop.f32.mrf.mxu0
    %8197 = vdwg.mxu0
    %8198 = vmatpush.bf16.msra.mxu0 %v5320
    %8199 = vmatpush.bf16.msra.mxu0 %v5316
    %8200 = vmatpush.bf16.msra.mxu0 %v5312
    %8201 = vmatpush.bf16.msra.mxu0 %v5308
    %8202 = vmatpush.bf16.msra.mxu0 %v5304
    %8203 = vmatpush.bf16.msra.mxu0 %v5300
    %8204 = vmatpush.bf16.msra.mxu0 %v5296
    %8205 = vmatpush.bf16.msra.mxu0 %v5292
    %8206 = vmatmul.bf16.gmra.mxu0 %v346
    %v8207 = vpop.f32.mrf.mxu0
    %v8208 = vadd.f32 %v8195, %v8207
    %v8209 = vpop.f32.mrf.mxu0
    %8210 = vdwg.mxu0
    %8211 = vmatpush.bf16.msra.mxu0 %v5352
    %8212 = vmatpush.bf16.msra.mxu0 %v5348
    %8213 = vmatpush.bf16.msra.mxu0 %v5344
    %8214 = vmatpush.bf16.msra.mxu0 %v5340
    %8215 = vmatpush.bf16.msra.mxu0 %v5336
    %8216 = vmatpush.bf16.msra.mxu0 %v5332
    %8217 = vmatpush.bf16.msra.mxu0 %v5328
    %8218 = vmatpush.bf16.msra.mxu0 %v5324
    %8219 = vmatmul.bf16.gmra.mxu0 %v347
    %v8220 = vpop.f32.mrf.mxu0
    %v8221 = vadd.f32 %v8208, %v8220
    %v8222 = vpop.f32.mrf.mxu0
    %8223 = vdwg.mxu0
    %8224 = vmatpush.bf16.msra.mxu0 %v5384
    %8225 = vmatpush.bf16.msra.mxu0 %v5380
    %8226 = vmatpush.bf16.msra.mxu0 %v5376
    %8227 = vmatpush.bf16.msra.mxu0 %v5372
    %8228 = vmatpush.bf16.msra.mxu0 %v5368
    %8229 = vmatpush.bf16.msra.mxu0 %v5364
    %8230 = vmatpush.bf16.msra.mxu0 %v5360
    %8231 = vmatpush.bf16.msra.mxu0 %v5356
    %8232 = vmatmul.bf16.gmra.mxu0 %v348
    %v8233 = vpop.f32.mrf.mxu0
    %v8234 = vadd.f32 %v8221, %v8233
    %v8235 = vpop.f32.mrf.mxu0
    %8236 = vdwg.mxu0
    %8237 = vmatpush.bf16.msra.mxu0 %v5416
    %8238 = vmatpush.bf16.msra.mxu0 %v5412
    %8239 = vmatpush.bf16.msra.mxu0 %v5408
    %8240 = vmatpush.bf16.msra.mxu0 %v5404
    %8241 = vmatpush.bf16.msra.mxu0 %v5400
    %8242 = vmatpush.bf16.msra.mxu0 %v5396
    %8243 = vmatpush.bf16.msra.mxu0 %v5392
    %8244 = vmatpush.bf16.msra.mxu0 %v5388
    %8245 = vmatmul.bf16.gmra.mxu0 %v349
    %v8246 = vpop.f32.mrf.mxu0
    %v8247 = vadd.f32 %v8234, %v8246
    %v8248 = vpop.f32.mrf.mxu0
    %8249 = vdwg.mxu0
    %8250 = vmatpush.bf16.msra.mxu0 %v5448
    %8251 = vmatpush.bf16.msra.mxu0 %v5444
    %8252 = vmatpush.bf16.msra.mxu0 %v5440
    %8253 = vmatpush.bf16.msra.mxu0 %v5436
    %8254 = vmatpush.bf16.msra.mxu0 %v5432
    %8255 = vmatpush.bf16.msra.mxu0 %v5428
    %8256 = vmatpush.bf16.msra.mxu0 %v5424
    %8257 = vmatpush.bf16.msra.mxu0 %v5420
    %8258 = vmatmul.bf16.gmra.mxu0 %v350
    %v8259 = vpop.f32.mrf.mxu0
    %v8260 = vadd.f32 %v8247, %v8259
    %v8261 = vpop.f32.mrf.mxu0
    %8262 = vdwg.mxu0
    %8263 = vmatpush.bf16.msra.mxu0 %v5480
    %8264 = vmatpush.bf16.msra.mxu0 %v5476
    %8265 = vmatpush.bf16.msra.mxu0 %v5472
    %8266 = vmatpush.bf16.msra.mxu0 %v5468
    %8267 = vmatpush.bf16.msra.mxu0 %v5464
    %8268 = vmatpush.bf16.msra.mxu0 %v5460
    %8269 = vmatpush.bf16.msra.mxu0 %v5456
    %8270 = vmatpush.bf16.msra.mxu0 %v5452
    %8271 = vmatmul.bf16.gmra.mxu0 %v351
    %v8272 = vpop.f32.mrf.mxu0
    %v8273 = vadd.f32 %v8260, %v8272
    %v8274 = vpop.f32.mrf.mxu0
    %8275 = vdwg.mxu0
    %8276 = vmatpush.bf16.msra.mxu0 %v5512
    %8277 = vmatpush.bf16.msra.mxu0 %v5508
    %8278 = vmatpush.bf16.msra.mxu0 %v5504
    %8279 = vmatpush.bf16.msra.mxu0 %v5500
    %8280 = vmatpush.bf16.msra.mxu0 %v5496
    %8281 = vmatpush.bf16.msra.mxu0 %v5492
    %8282 = vmatpush.bf16.msra.mxu0 %v5488
    %8283 = vmatpush.bf16.msra.mxu0 %v5484
    %8284 = vmatmul.bf16.gmra.mxu0 %v352
    %v8285 = vpop.f32.mrf.mxu0
    %v8286 = vadd.f32 %v8273, %v8285
    %v8287 = vpop.f32.mrf.mxu0
    %8288 = vdwg.mxu0
    %8289 = vmatpush.bf16.msra.mxu0 %v5544
    %8290 = vmatpush.bf16.msra.mxu0 %v5540
    %8291 = vmatpush.bf16.msra.mxu0 %v5536
    %8292 = vmatpush.bf16.msra.mxu0 %v5532
    %8293 = vmatpush.bf16.msra.mxu0 %v5528
    %8294 = vmatpush.bf16.msra.mxu0 %v5524
    %8295 = vmatpush.bf16.msra.mxu0 %v5520
    %8296 = vmatpush.bf16.msra.mxu0 %v5516
    %8297 = vmatmul.bf16.gmra.mxu0 %v353
    %v8298 = vpop.f32.mrf.mxu0
    %v8299 = vadd.f32 %v8286, %v8298
    %v8300 = vpop.f32.mrf.mxu0
    %8301 = vdwg.mxu0
    %8302 = vmatpush.bf16.msra.mxu0 %v5576
    %8303 = vmatpush.bf16.msra.mxu0 %v5572
    %8304 = vmatpush.bf16.msra.mxu0 %v5568
    %8305 = vmatpush.bf16.msra.mxu0 %v5564
    %8306 = vmatpush.bf16.msra.mxu0 %v5560
    %8307 = vmatpush.bf16.msra.mxu0 %v5556
    %8308 = vmatpush.bf16.msra.mxu0 %v5552
    %8309 = vmatpush.bf16.msra.mxu0 %v5548
    %8310 = vmatmul.bf16.gmra.mxu0 %v354
    %v8311 = vpop.f32.mrf.mxu0
    %v8312 = vadd.f32 %v8299, %v8311
    %v8313 = vpop.f32.mrf.mxu0
    %8314 = vdwg.mxu0
    %8315 = vmatpush.bf16.msra.mxu0 %v5608
    %8316 = vmatpush.bf16.msra.mxu0 %v5604
    %8317 = vmatpush.bf16.msra.mxu0 %v5600
    %8318 = vmatpush.bf16.msra.mxu0 %v5596
    %8319 = vmatpush.bf16.msra.mxu0 %v5592
    %8320 = vmatpush.bf16.msra.mxu0 %v5588
    %8321 = vmatpush.bf16.msra.mxu0 %v5584
    %8322 = vmatpush.bf16.msra.mxu0 %v5580
    %8323 = vmatmul.bf16.gmra.mxu0 %v355
    %v8324 = vpop.f32.mrf.mxu0
    %v8325 = vadd.f32 %v8312, %v8324
    %v8326 = vpop.f32.mrf.mxu0
    %8327 = vdwg.mxu0
    %8328 = vmatpush.bf16.msra.mxu0 %v5640
    %8329 = vmatpush.bf16.msra.mxu0 %v5636
    %8330 = vmatpush.bf16.msra.mxu0 %v5632
    %8331 = vmatpush.bf16.msra.mxu0 %v5628
    %8332 = vmatpush.bf16.msra.mxu0 %v5624
    %8333 = vmatpush.bf16.msra.mxu0 %v5620
    %8334 = vmatpush.bf16.msra.mxu0 %v5616
    %8335 = vmatpush.bf16.msra.mxu0 %v5612
    %8336 = vmatmul.bf16.gmra.mxu0 %v356
    %v8337 = vpop.f32.mrf.mxu0
    %v8338 = vadd.f32 %v8325, %v8337
    %v8339 = vpop.f32.mrf.mxu0
    %8340 = vdwg.mxu0
    %8341 = vmatpush.bf16.msra.mxu0 %v5672
    %8342 = vmatpush.bf16.msra.mxu0 %v5668
    %8343 = vmatpush.bf16.msra.mxu0 %v5664
    %8344 = vmatpush.bf16.msra.mxu0 %v5660
    %8345 = vmatpush.bf16.msra.mxu0 %v5656
    %8346 = vmatpush.bf16.msra.mxu0 %v5652
    %8347 = vmatpush.bf16.msra.mxu0 %v5648
    %8348 = vmatpush.bf16.msra.mxu0 %v5644
    %8349 = vmatmul.bf16.gmra.mxu0 %v357
    %v8350 = vpop.f32.mrf.mxu0
    %v8351 = vadd.f32 %v8338, %v8350
    %v8352 = vpop.f32.mrf.mxu0
    %8353 = vdwg.mxu0
    %8354 = vmatpush.bf16.msra.mxu0 %v5704
    %8355 = vmatpush.bf16.msra.mxu0 %v5700
    %8356 = vmatpush.bf16.msra.mxu0 %v5696
    %8357 = vmatpush.bf16.msra.mxu0 %v5692
    %8358 = vmatpush.bf16.msra.mxu0 %v5688
    %8359 = vmatpush.bf16.msra.mxu0 %v5684
    %8360 = vmatpush.bf16.msra.mxu0 %v5680
    %8361 = vmatpush.bf16.msra.mxu0 %v5676
    %8362 = vmatmul.bf16.gmra.mxu0 %v358
    %v8363 = vpop.f32.mrf.mxu0
    %v8364 = vadd.f32 %v8351, %v8363
    %v8365 = vpop.f32.mrf.mxu0
    %8366 = vdwg.mxu0
    %8367 = vmatpush.bf16.msra.mxu0 %v5736
    %8368 = vmatpush.bf16.msra.mxu0 %v5732
    %8369 = vmatpush.bf16.msra.mxu0 %v5728
    %8370 = vmatpush.bf16.msra.mxu0 %v5724
    %8371 = vmatpush.bf16.msra.mxu0 %v5720
    %8372 = vmatpush.bf16.msra.mxu0 %v5716
    %8373 = vmatpush.bf16.msra.mxu0 %v5712
    %8374 = vmatpush.bf16.msra.mxu0 %v5708
    %8375 = vmatmul.bf16.gmra.mxu0 %v359
    %v8376 = vpop.f32.mrf.mxu0
    %v8377 = vadd.f32 %v8364, %v8376
    %v8378 = vpop.f32.mrf.mxu0
    %8379 = vdwg.mxu0
    %8380 = vmatpush.bf16.msra.mxu0 %v5768
    %8381 = vmatpush.bf16.msra.mxu0 %v5764
    %8382 = vmatpush.bf16.msra.mxu0 %v5760
    %8383 = vmatpush.bf16.msra.mxu0 %v5756
    %8384 = vmatpush.bf16.msra.mxu0 %v5752
    %8385 = vmatpush.bf16.msra.mxu0 %v5748
    %8386 = vmatpush.bf16.msra.mxu0 %v5744
    %8387 = vmatpush.bf16.msra.mxu0 %v5740
    %8388 = vmatmul.bf16.gmra.mxu0 %v360
    %v8389 = vpop.f32.mrf.mxu0
    %v8390 = vadd.f32 %v8377, %v8389
    %v8391 = vpop.f32.mrf.mxu0
    %8392 = vdwg.mxu0
    %8393 = vmatpush.bf16.msra.mxu0 %v5800
    %8394 = vmatpush.bf16.msra.mxu0 %v5796
    %8395 = vmatpush.bf16.msra.mxu0 %v5792
    %8396 = vmatpush.bf16.msra.mxu0 %v5788
    %8397 = vmatpush.bf16.msra.mxu0 %v5784
    %8398 = vmatpush.bf16.msra.mxu0 %v5780
    %8399 = vmatpush.bf16.msra.mxu0 %v5776
    %8400 = vmatpush.bf16.msra.mxu0 %v5772
    %8401 = vmatmul.bf16.gmra.mxu0 %v361
    %v8402 = vpop.f32.mrf.mxu0
    %v8403 = vadd.f32 %v8390, %v8402
    %v8404 = vpop.f32.mrf.mxu0
    %8405 = vdwg.mxu0
    %8406 = vmatpush.bf16.msra.mxu0 %v5832
    %8407 = vmatpush.bf16.msra.mxu0 %v5828
    %8408 = vmatpush.bf16.msra.mxu0 %v5824
    %8409 = vmatpush.bf16.msra.mxu0 %v5820
    %8410 = vmatpush.bf16.msra.mxu0 %v5816
    %8411 = vmatpush.bf16.msra.mxu0 %v5812
    %8412 = vmatpush.bf16.msra.mxu0 %v5808
    %8413 = vmatpush.bf16.msra.mxu0 %v5804
    %8414 = vmatmul.bf16.gmra.mxu0 %v362
    %v8415 = vpop.f32.mrf.mxu0
    %v8416 = vadd.f32 %v8403, %v8415
    %v8417 = vpop.f32.mrf.mxu0
    %8418 = vdwg.mxu0
    %8419 = vmatpush.bf16.msra.mxu0 %v5864
    %8420 = vmatpush.bf16.msra.mxu0 %v5860
    %8421 = vmatpush.bf16.msra.mxu0 %v5856
    %8422 = vmatpush.bf16.msra.mxu0 %v5852
    %8423 = vmatpush.bf16.msra.mxu0 %v5848
    %8424 = vmatpush.bf16.msra.mxu0 %v5844
    %8425 = vmatpush.bf16.msra.mxu0 %v5840
    %8426 = vmatpush.bf16.msra.mxu0 %v5836
    %8427 = vmatmul.bf16.gmra.mxu0 %v363
    %v8428 = vpop.f32.mrf.mxu0
    %v8429 = vadd.f32 %v8416, %v8428
    %v8430 = vpop.f32.mrf.mxu0
    %8431 = vdwg.mxu0
    %8432 = vmatpush.bf16.msra.mxu0 %v5896
    %8433 = vmatpush.bf16.msra.mxu0 %v5892
    %8434 = vmatpush.bf16.msra.mxu0 %v5888
    %8435 = vmatpush.bf16.msra.mxu0 %v5884
    %8436 = vmatpush.bf16.msra.mxu0 %v5880
    %8437 = vmatpush.bf16.msra.mxu0 %v5876
    %8438 = vmatpush.bf16.msra.mxu0 %v5872
    %8439 = vmatpush.bf16.msra.mxu0 %v5868
    %8440 = vmatmul.bf16.gmra.mxu0 %v364
    %v8441 = vpop.f32.mrf.mxu0
    %v8442 = vadd.f32 %v8429, %v8441
    %v8443 = vpop.f32.mrf.mxu0
    %8444 = vdwg.mxu0
    %8445 = vmatpush.bf16.msra.mxu0 %v5928
    %8446 = vmatpush.bf16.msra.mxu0 %v5924
    %8447 = vmatpush.bf16.msra.mxu0 %v5920
    %8448 = vmatpush.bf16.msra.mxu0 %v5916
    %8449 = vmatpush.bf16.msra.mxu0 %v5912
    %8450 = vmatpush.bf16.msra.mxu0 %v5908
    %8451 = vmatpush.bf16.msra.mxu0 %v5904
    %8452 = vmatpush.bf16.msra.mxu0 %v5900
    %8453 = vmatmul.bf16.gmra.mxu0 %v365
    %v8454 = vpop.f32.mrf.mxu0
    %v8455 = vadd.f32 %v8442, %v8454
    %v8456 = vpop.f32.mrf.mxu0
    %8457 = vdwg.mxu0
    %8458 = vmatpush.bf16.msra.mxu0 %v5960
    %8459 = vmatpush.bf16.msra.mxu0 %v5956
    %8460 = vmatpush.bf16.msra.mxu0 %v5952
    %8461 = vmatpush.bf16.msra.mxu0 %v5948
    %8462 = vmatpush.bf16.msra.mxu0 %v5944
    %8463 = vmatpush.bf16.msra.mxu0 %v5940
    %8464 = vmatpush.bf16.msra.mxu0 %v5936
    %8465 = vmatpush.bf16.msra.mxu0 %v5932
    %8466 = vmatmul.bf16.gmra.mxu0 %v366
    %v8467 = vpop.f32.mrf.mxu0
    %v8468 = vadd.f32 %v8455, %v8467
    %v8469 = vpop.f32.mrf.mxu0
    %8470 = vdwg.mxu0
    %8471 = vmatpush.bf16.msra.mxu0 %v5992
    %8472 = vmatpush.bf16.msra.mxu0 %v5988
    %8473 = vmatpush.bf16.msra.mxu0 %v5984
    %8474 = vmatpush.bf16.msra.mxu0 %v5980
    %8475 = vmatpush.bf16.msra.mxu0 %v5976
    %8476 = vmatpush.bf16.msra.mxu0 %v5972
    %8477 = vmatpush.bf16.msra.mxu0 %v5968
    %8478 = vmatpush.bf16.msra.mxu0 %v5964
    %8479 = vmatmul.bf16.gmra.mxu0 %v367
    %v8480 = vpop.f32.mrf.mxu0
    %v8481 = vadd.f32 %v8468, %v8480
    %v8482 = vpop.f32.mrf.mxu0
    %8483 = vdwg.mxu0
    %8484 = vmatpush.bf16.msra.mxu0 %v6024
    %8485 = vmatpush.bf16.msra.mxu0 %v6020
    %8486 = vmatpush.bf16.msra.mxu0 %v6016
    %8487 = vmatpush.bf16.msra.mxu0 %v6012
    %8488 = vmatpush.bf16.msra.mxu0 %v6008
    %8489 = vmatpush.bf16.msra.mxu0 %v6004
    %8490 = vmatpush.bf16.msra.mxu0 %v6000
    %8491 = vmatpush.bf16.msra.mxu0 %v5996
    %8492 = vmatmul.bf16.gmra.mxu0 %v368
    %v8493 = vpop.f32.mrf.mxu0
    %v8494 = vadd.f32 %v8481, %v8493
    %v8495 = vpop.f32.mrf.mxu0
    %8496 = vdwg.mxu0
    %8497 = vmatpush.bf16.msra.mxu0 %v6056
    %8498 = vmatpush.bf16.msra.mxu0 %v6052
    %8499 = vmatpush.bf16.msra.mxu0 %v6048
    %8500 = vmatpush.bf16.msra.mxu0 %v6044
    %8501 = vmatpush.bf16.msra.mxu0 %v6040
    %8502 = vmatpush.bf16.msra.mxu0 %v6036
    %8503 = vmatpush.bf16.msra.mxu0 %v6032
    %8504 = vmatpush.bf16.msra.mxu0 %v6028
    %8505 = vmatmul.bf16.gmra.mxu0 %v369
    %v8506 = vpop.f32.mrf.mxu0
    %v8507 = vadd.f32 %v8494, %v8506
    %v8508 = vpop.f32.mrf.mxu0
    %8509 = vdwg.mxu0
    %8510 = vmatpush.bf16.msra.mxu0 %v6088
    %8511 = vmatpush.bf16.msra.mxu0 %v6084
    %8512 = vmatpush.bf16.msra.mxu0 %v6080
    %8513 = vmatpush.bf16.msra.mxu0 %v6076
    %8514 = vmatpush.bf16.msra.mxu0 %v6072
    %8515 = vmatpush.bf16.msra.mxu0 %v6068
    %8516 = vmatpush.bf16.msra.mxu0 %v6064
    %8517 = vmatpush.bf16.msra.mxu0 %v6060
    %8518 = vmatmul.bf16.gmra.mxu0 %v370
    %v8519 = vpop.f32.mrf.mxu0
    %v8520 = vadd.f32 %v8507, %v8519
    %v8521 = vpop.f32.mrf.mxu0
    %8522 = vdwg.mxu0
    %8523 = vmatpush.bf16.msra.mxu0 %v6120
    %8524 = vmatpush.bf16.msra.mxu0 %v6116
    %8525 = vmatpush.bf16.msra.mxu0 %v6112
    %8526 = vmatpush.bf16.msra.mxu0 %v6108
    %8527 = vmatpush.bf16.msra.mxu0 %v6104
    %8528 = vmatpush.bf16.msra.mxu0 %v6100
    %8529 = vmatpush.bf16.msra.mxu0 %v6096
    %8530 = vmatpush.bf16.msra.mxu0 %v6092
    %8531 = vmatmul.bf16.gmra.mxu0 %v371
    %v8532 = vpop.f32.mrf.mxu0
    %v8533 = vadd.f32 %v8520, %v8532
    %v8534 = vpop.f32.mrf.mxu0
    %8535 = vdwg.mxu0
    %8536 = vmatpush.bf16.msra.mxu0 %v6152
    %8537 = vmatpush.bf16.msra.mxu0 %v6148
    %8538 = vmatpush.bf16.msra.mxu0 %v6144
    %8539 = vmatpush.bf16.msra.mxu0 %v6140
    %8540 = vmatpush.bf16.msra.mxu0 %v6136
    %8541 = vmatpush.bf16.msra.mxu0 %v6132
    %8542 = vmatpush.bf16.msra.mxu0 %v6128
    %8543 = vmatpush.bf16.msra.mxu0 %v6124
    %8544 = vmatmul.bf16.gmra.mxu0 %v372
    %v8545 = vpop.f32.mrf.mxu0
    %v8546 = vadd.f32 %v8533, %v8545
    %v8547 = vpop.f32.mrf.mxu0
    %8548 = vdwg.mxu0
    %8549 = vmatpush.bf16.msra.mxu0 %v6184
    %8550 = vmatpush.bf16.msra.mxu0 %v6180
    %8551 = vmatpush.bf16.msra.mxu0 %v6176
    %8552 = vmatpush.bf16.msra.mxu0 %v6172
    %8553 = vmatpush.bf16.msra.mxu0 %v6168
    %8554 = vmatpush.bf16.msra.mxu0 %v6164
    %8555 = vmatpush.bf16.msra.mxu0 %v6160
    %8556 = vmatpush.bf16.msra.mxu0 %v6156
    %8557 = vmatmul.bf16.gmra.mxu0 %v373
    %v8558 = vpop.f32.mrf.mxu0
    %v8559 = vadd.f32 %v8546, %v8558
    %v8560 = vpop.f32.mrf.mxu0
    %8561 = vdwg.mxu0
    %8562 = vmatpush.bf16.msra.mxu0 %v6216
    %8563 = vmatpush.bf16.msra.mxu0 %v6212
    %8564 = vmatpush.bf16.msra.mxu0 %v6208
    %8565 = vmatpush.bf16.msra.mxu0 %v6204
    %8566 = vmatpush.bf16.msra.mxu0 %v6200
    %8567 = vmatpush.bf16.msra.mxu0 %v6196
    %8568 = vmatpush.bf16.msra.mxu0 %v6192
    %8569 = vmatpush.bf16.msra.mxu0 %v6188
    %8570 = vmatmul.bf16.gmra.mxu0 %v374
    %v8571 = vpop.f32.mrf.mxu0
    %v8572 = vadd.f32 %v8559, %v8571
    %v8573 = vpop.f32.mrf.mxu0
    %8574 = vdwg.mxu0
    %8575 = vmatpush.bf16.msra.mxu0 %v6248
    %8576 = vmatpush.bf16.msra.mxu0 %v6244
    %8577 = vmatpush.bf16.msra.mxu0 %v6240
    %8578 = vmatpush.bf16.msra.mxu0 %v6236
    %8579 = vmatpush.bf16.msra.mxu0 %v6232
    %8580 = vmatpush.bf16.msra.mxu0 %v6228
    %8581 = vmatpush.bf16.msra.mxu0 %v6224
    %8582 = vmatpush.bf16.msra.mxu0 %v6220
    %8583 = vmatmul.bf16.gmra.mxu0 %v375
    %v8584 = vpop.f32.mrf.mxu0
    %v8585 = vadd.f32 %v8572, %v8584
    %v8586 = vpop.f32.mrf.mxu0
    %8587 = vdwg.mxu0
    %8588 = vmatpush.bf16.msra.mxu0 %v6280
    %8589 = vmatpush.bf16.msra.mxu0 %v6276
    %8590 = vmatpush.bf16.msra.mxu0 %v6272
    %8591 = vmatpush.bf16.msra.mxu0 %v6268
    %8592 = vmatpush.bf16.msra.mxu0 %v6264
    %8593 = vmatpush.bf16.msra.mxu0 %v6260
    %8594 = vmatpush.bf16.msra.mxu0 %v6256
    %8595 = vmatpush.bf16.msra.mxu0 %v6252
    %8596 = vmatmul.bf16.gmra.mxu0 %v376
    %v8597 = vpop.f32.mrf.mxu0
    %v8598 = vadd.f32 %v8585, %v8597
    %v8599 = vpop.f32.mrf.mxu0
    %8600 = vdwg.mxu0
    %8601 = vmatpush.bf16.msra.mxu0 %v6312
    %8602 = vmatpush.bf16.msra.mxu0 %v6308
    %8603 = vmatpush.bf16.msra.mxu0 %v6304
    %8604 = vmatpush.bf16.msra.mxu0 %v6300
    %8605 = vmatpush.bf16.msra.mxu0 %v6296
    %8606 = vmatpush.bf16.msra.mxu0 %v6292
    %8607 = vmatpush.bf16.msra.mxu0 %v6288
    %8608 = vmatpush.bf16.msra.mxu0 %v6284
    %8609 = vmatmul.bf16.gmra.mxu0 %v377
    %v8610 = vpop.f32.mrf.mxu0
    %v8611 = vadd.f32 %v8598, %v8610
    %v8612 = vpop.f32.mrf.mxu0
    %8613 = vdwg.mxu0
    %8614 = vmatpush.bf16.msra.mxu0 %v6344
    %8615 = vmatpush.bf16.msra.mxu0 %v6340
    %8616 = vmatpush.bf16.msra.mxu0 %v6336
    %8617 = vmatpush.bf16.msra.mxu0 %v6332
    %8618 = vmatpush.bf16.msra.mxu0 %v6328
    %8619 = vmatpush.bf16.msra.mxu0 %v6324
    %8620 = vmatpush.bf16.msra.mxu0 %v6320
    %8621 = vmatpush.bf16.msra.mxu0 %v6316
    %8622 = vmatmul.bf16.gmra.mxu0 %v378
    %v8623 = vpop.f32.mrf.mxu0
    %v8624 = vadd.f32 %v8611, %v8623
    %v8625 = vpop.f32.mrf.mxu0
    %8626 = vdwg.mxu0
    %8627 = vmatpush.bf16.msra.mxu0 %v6376
    %8628 = vmatpush.bf16.msra.mxu0 %v6372
    %8629 = vmatpush.bf16.msra.mxu0 %v6368
    %8630 = vmatpush.bf16.msra.mxu0 %v6364
    %8631 = vmatpush.bf16.msra.mxu0 %v6360
    %8632 = vmatpush.bf16.msra.mxu0 %v6356
    %8633 = vmatpush.bf16.msra.mxu0 %v6352
    %8634 = vmatpush.bf16.msra.mxu0 %v6348
    %8635 = vmatmul.bf16.gmra.mxu0 %v379
    %v8636 = vpop.f32.mrf.mxu0
    %v8637 = vadd.f32 %v8624, %v8636
    %v8638 = vpop.f32.mrf.mxu0
    %8639 = vdwg.mxu0
    %8640 = vmatpush.bf16.msra.mxu0 %v6408
    %8641 = vmatpush.bf16.msra.mxu0 %v6404
    %8642 = vmatpush.bf16.msra.mxu0 %v6400
    %8643 = vmatpush.bf16.msra.mxu0 %v6396
    %8644 = vmatpush.bf16.msra.mxu0 %v6392
    %8645 = vmatpush.bf16.msra.mxu0 %v6388
    %8646 = vmatpush.bf16.msra.mxu0 %v6384
    %8647 = vmatpush.bf16.msra.mxu0 %v6380
    %8648 = vmatmul.bf16.gmra.mxu0 %v380
    %v8649 = vpop.f32.mrf.mxu0
    %v8650 = vadd.f32 %v8637, %v8649
    %v8651 = vpop.f32.mrf.mxu0
    %8652 = vdwg.mxu0
    %8653 = vmatpush.bf16.msra.mxu0 %v6440
    %8654 = vmatpush.bf16.msra.mxu0 %v6436
    %8655 = vmatpush.bf16.msra.mxu0 %v6432
    %8656 = vmatpush.bf16.msra.mxu0 %v6428
    %8657 = vmatpush.bf16.msra.mxu0 %v6424
    %8658 = vmatpush.bf16.msra.mxu0 %v6420
    %8659 = vmatpush.bf16.msra.mxu0 %v6416
    %8660 = vmatpush.bf16.msra.mxu0 %v6412
    %8661 = vmatmul.bf16.gmra.mxu0 %v381
    %v8662 = vpop.f32.mrf.mxu0
    %v8663 = vadd.f32 %v8650, %v8662
    %v8664 = vpop.f32.mrf.mxu0
    %8665 = vdwg.mxu0
    %8666 = vmatpush.bf16.msra.mxu0 %v6472
    %8667 = vmatpush.bf16.msra.mxu0 %v6468
    %8668 = vmatpush.bf16.msra.mxu0 %v6464
    %8669 = vmatpush.bf16.msra.mxu0 %v6460
    %8670 = vmatpush.bf16.msra.mxu0 %v6456
    %8671 = vmatpush.bf16.msra.mxu0 %v6452
    %8672 = vmatpush.bf16.msra.mxu0 %v6448
    %8673 = vmatpush.bf16.msra.mxu0 %v6444
    %8674 = vmatmul.bf16.gmra.mxu0 %v382
    %v8675 = vpop.f32.mrf.mxu0
    %v8676 = vadd.f32 %v8663, %v8675
    %v8677 = vpop.f32.mrf.mxu0
    %8678 = vdwg.mxu0
    %8679 = vmatpush.bf16.msra.mxu0 %v5289
    %8680 = vmatpush.bf16.msra.mxu0 %v5285
    %8681 = vmatpush.bf16.msra.mxu0 %v5281
    %8682 = vmatpush.bf16.msra.mxu0 %v5277
    %8683 = vmatpush.bf16.msra.mxu0 %v5273
    %8684 = vmatpush.bf16.msra.mxu0 %v5269
    %8685 = vmatpush.bf16.msra.mxu0 %v5265
    %8686 = vmatpush.bf16.msra.mxu0 %v5261
    %8687 = vmatmul.bf16.gmra.mxu0 %v345
    %v8688 = vpop.f32.mrf.mxu0
    %v8689 = vadd.f32 %v1605, %v8688
    %v8690 = vpop.f32.mrf.mxu0
    %8691 = vdwg.mxu0
    %8692 = vmatpush.bf16.msra.mxu0 %v5321
    %8693 = vmatpush.bf16.msra.mxu0 %v5317
    %8694 = vmatpush.bf16.msra.mxu0 %v5313
    %8695 = vmatpush.bf16.msra.mxu0 %v5309
    %8696 = vmatpush.bf16.msra.mxu0 %v5305
    %8697 = vmatpush.bf16.msra.mxu0 %v5301
    %8698 = vmatpush.bf16.msra.mxu0 %v5297
    %8699 = vmatpush.bf16.msra.mxu0 %v5293
    %8700 = vmatmul.bf16.gmra.mxu0 %v346
    %v8701 = vpop.f32.mrf.mxu0
    %v8702 = vadd.f32 %v8689, %v8701
    %v8703 = vpop.f32.mrf.mxu0
    %8704 = vdwg.mxu0
    %8705 = vmatpush.bf16.msra.mxu0 %v5353
    %8706 = vmatpush.bf16.msra.mxu0 %v5349
    %8707 = vmatpush.bf16.msra.mxu0 %v5345
    %8708 = vmatpush.bf16.msra.mxu0 %v5341
    %8709 = vmatpush.bf16.msra.mxu0 %v5337
    %8710 = vmatpush.bf16.msra.mxu0 %v5333
    %8711 = vmatpush.bf16.msra.mxu0 %v5329
    %8712 = vmatpush.bf16.msra.mxu0 %v5325
    %8713 = vmatmul.bf16.gmra.mxu0 %v347
    %v8714 = vpop.f32.mrf.mxu0
    %v8715 = vadd.f32 %v8702, %v8714
    %v8716 = vpop.f32.mrf.mxu0
    %8717 = vdwg.mxu0
    %8718 = vmatpush.bf16.msra.mxu0 %v5385
    %8719 = vmatpush.bf16.msra.mxu0 %v5381
    %8720 = vmatpush.bf16.msra.mxu0 %v5377
    %8721 = vmatpush.bf16.msra.mxu0 %v5373
    %8722 = vmatpush.bf16.msra.mxu0 %v5369
    %8723 = vmatpush.bf16.msra.mxu0 %v5365
    %8724 = vmatpush.bf16.msra.mxu0 %v5361
    %8725 = vmatpush.bf16.msra.mxu0 %v5357
    %8726 = vmatmul.bf16.gmra.mxu0 %v348
    %v8727 = vpop.f32.mrf.mxu0
    %v8728 = vadd.f32 %v8715, %v8727
    %v8729 = vpop.f32.mrf.mxu0
    %8730 = vdwg.mxu0
    %8731 = vmatpush.bf16.msra.mxu0 %v5417
    %8732 = vmatpush.bf16.msra.mxu0 %v5413
    %8733 = vmatpush.bf16.msra.mxu0 %v5409
    %8734 = vmatpush.bf16.msra.mxu0 %v5405
    %8735 = vmatpush.bf16.msra.mxu0 %v5401
    %8736 = vmatpush.bf16.msra.mxu0 %v5397
    %8737 = vmatpush.bf16.msra.mxu0 %v5393
    %8738 = vmatpush.bf16.msra.mxu0 %v5389
    %8739 = vmatmul.bf16.gmra.mxu0 %v349
    %v8740 = vpop.f32.mrf.mxu0
    %v8741 = vadd.f32 %v8728, %v8740
    %v8742 = vpop.f32.mrf.mxu0
    %8743 = vdwg.mxu0
    %8744 = vmatpush.bf16.msra.mxu0 %v5449
    %8745 = vmatpush.bf16.msra.mxu0 %v5445
    %8746 = vmatpush.bf16.msra.mxu0 %v5441
    %8747 = vmatpush.bf16.msra.mxu0 %v5437
    %8748 = vmatpush.bf16.msra.mxu0 %v5433
    %8749 = vmatpush.bf16.msra.mxu0 %v5429
    %8750 = vmatpush.bf16.msra.mxu0 %v5425
    %8751 = vmatpush.bf16.msra.mxu0 %v5421
    %8752 = vmatmul.bf16.gmra.mxu0 %v350
    %v8753 = vpop.f32.mrf.mxu0
    %v8754 = vadd.f32 %v8741, %v8753
    %v8755 = vpop.f32.mrf.mxu0
    %8756 = vdwg.mxu0
    %8757 = vmatpush.bf16.msra.mxu0 %v5481
    %8758 = vmatpush.bf16.msra.mxu0 %v5477
    %8759 = vmatpush.bf16.msra.mxu0 %v5473
    %8760 = vmatpush.bf16.msra.mxu0 %v5469
    %8761 = vmatpush.bf16.msra.mxu0 %v5465
    %8762 = vmatpush.bf16.msra.mxu0 %v5461
    %8763 = vmatpush.bf16.msra.mxu0 %v5457
    %8764 = vmatpush.bf16.msra.mxu0 %v5453
    %8765 = vmatmul.bf16.gmra.mxu0 %v351
    %v8766 = vpop.f32.mrf.mxu0
    %v8767 = vadd.f32 %v8754, %v8766
    %v8768 = vpop.f32.mrf.mxu0
    %8769 = vdwg.mxu0
    %8770 = vmatpush.bf16.msra.mxu0 %v5513
    %8771 = vmatpush.bf16.msra.mxu0 %v5509
    %8772 = vmatpush.bf16.msra.mxu0 %v5505
    %8773 = vmatpush.bf16.msra.mxu0 %v5501
    %8774 = vmatpush.bf16.msra.mxu0 %v5497
    %8775 = vmatpush.bf16.msra.mxu0 %v5493
    %8776 = vmatpush.bf16.msra.mxu0 %v5489
    %8777 = vmatpush.bf16.msra.mxu0 %v5485
    %8778 = vmatmul.bf16.gmra.mxu0 %v352
    %v8779 = vpop.f32.mrf.mxu0
    %v8780 = vadd.f32 %v8767, %v8779
    %v8781 = vpop.f32.mrf.mxu0
    %8782 = vdwg.mxu0
    %8783 = vmatpush.bf16.msra.mxu0 %v5545
    %8784 = vmatpush.bf16.msra.mxu0 %v5541
    %8785 = vmatpush.bf16.msra.mxu0 %v5537
    %8786 = vmatpush.bf16.msra.mxu0 %v5533
    %8787 = vmatpush.bf16.msra.mxu0 %v5529
    %8788 = vmatpush.bf16.msra.mxu0 %v5525
    %8789 = vmatpush.bf16.msra.mxu0 %v5521
    %8790 = vmatpush.bf16.msra.mxu0 %v5517
    %8791 = vmatmul.bf16.gmra.mxu0 %v353
    %v8792 = vpop.f32.mrf.mxu0
    %v8793 = vadd.f32 %v8780, %v8792
    %v8794 = vpop.f32.mrf.mxu0
    %8795 = vdwg.mxu0
    %8796 = vmatpush.bf16.msra.mxu0 %v5577
    %8797 = vmatpush.bf16.msra.mxu0 %v5573
    %8798 = vmatpush.bf16.msra.mxu0 %v5569
    %8799 = vmatpush.bf16.msra.mxu0 %v5565
    %8800 = vmatpush.bf16.msra.mxu0 %v5561
    %8801 = vmatpush.bf16.msra.mxu0 %v5557
    %8802 = vmatpush.bf16.msra.mxu0 %v5553
    %8803 = vmatpush.bf16.msra.mxu0 %v5549
    %8804 = vmatmul.bf16.gmra.mxu0 %v354
    %v8805 = vpop.f32.mrf.mxu0
    %v8806 = vadd.f32 %v8793, %v8805
    %v8807 = vpop.f32.mrf.mxu0
    %8808 = vdwg.mxu0
    %8809 = vmatpush.bf16.msra.mxu0 %v5609
    %8810 = vmatpush.bf16.msra.mxu0 %v5605
    %8811 = vmatpush.bf16.msra.mxu0 %v5601
    %8812 = vmatpush.bf16.msra.mxu0 %v5597
    %8813 = vmatpush.bf16.msra.mxu0 %v5593
    %8814 = vmatpush.bf16.msra.mxu0 %v5589
    %8815 = vmatpush.bf16.msra.mxu0 %v5585
    %8816 = vmatpush.bf16.msra.mxu0 %v5581
    %8817 = vmatmul.bf16.gmra.mxu0 %v355
    %v8818 = vpop.f32.mrf.mxu0
    %v8819 = vadd.f32 %v8806, %v8818
    %v8820 = vpop.f32.mrf.mxu0
    %8821 = vdwg.mxu0
    %8822 = vmatpush.bf16.msra.mxu0 %v5641
    %8823 = vmatpush.bf16.msra.mxu0 %v5637
    %8824 = vmatpush.bf16.msra.mxu0 %v5633
    %8825 = vmatpush.bf16.msra.mxu0 %v5629
    %8826 = vmatpush.bf16.msra.mxu0 %v5625
    %8827 = vmatpush.bf16.msra.mxu0 %v5621
    %8828 = vmatpush.bf16.msra.mxu0 %v5617
    %8829 = vmatpush.bf16.msra.mxu0 %v5613
    %8830 = vmatmul.bf16.gmra.mxu0 %v356
    %v8831 = vpop.f32.mrf.mxu0
    %v8832 = vadd.f32 %v8819, %v8831
    %v8833 = vpop.f32.mrf.mxu0
    %8834 = vdwg.mxu0
    %8835 = vmatpush.bf16.msra.mxu0 %v5673
    %8836 = vmatpush.bf16.msra.mxu0 %v5669
    %8837 = vmatpush.bf16.msra.mxu0 %v5665
    %8838 = vmatpush.bf16.msra.mxu0 %v5661
    %8839 = vmatpush.bf16.msra.mxu0 %v5657
    %8840 = vmatpush.bf16.msra.mxu0 %v5653
    %8841 = vmatpush.bf16.msra.mxu0 %v5649
    %8842 = vmatpush.bf16.msra.mxu0 %v5645
    %8843 = vmatmul.bf16.gmra.mxu0 %v357
    %v8844 = vpop.f32.mrf.mxu0
    %v8845 = vadd.f32 %v8832, %v8844
    %v8846 = vpop.f32.mrf.mxu0
    %8847 = vdwg.mxu0
    %8848 = vmatpush.bf16.msra.mxu0 %v5705
    %8849 = vmatpush.bf16.msra.mxu0 %v5701
    %8850 = vmatpush.bf16.msra.mxu0 %v5697
    %8851 = vmatpush.bf16.msra.mxu0 %v5693
    %8852 = vmatpush.bf16.msra.mxu0 %v5689
    %8853 = vmatpush.bf16.msra.mxu0 %v5685
    %8854 = vmatpush.bf16.msra.mxu0 %v5681
    %8855 = vmatpush.bf16.msra.mxu0 %v5677
    %8856 = vmatmul.bf16.gmra.mxu0 %v358
    %v8857 = vpop.f32.mrf.mxu0
    %v8858 = vadd.f32 %v8845, %v8857
    %v8859 = vpop.f32.mrf.mxu0
    %8860 = vdwg.mxu0
    %8861 = vmatpush.bf16.msra.mxu0 %v5737
    %8862 = vmatpush.bf16.msra.mxu0 %v5733
    %8863 = vmatpush.bf16.msra.mxu0 %v5729
    %8864 = vmatpush.bf16.msra.mxu0 %v5725
    %8865 = vmatpush.bf16.msra.mxu0 %v5721
    %8866 = vmatpush.bf16.msra.mxu0 %v5717
    %8867 = vmatpush.bf16.msra.mxu0 %v5713
    %8868 = vmatpush.bf16.msra.mxu0 %v5709
    %8869 = vmatmul.bf16.gmra.mxu0 %v359
    %v8870 = vpop.f32.mrf.mxu0
    %v8871 = vadd.f32 %v8858, %v8870
    %v8872 = vpop.f32.mrf.mxu0
    %8873 = vdwg.mxu0
    %8874 = vmatpush.bf16.msra.mxu0 %v5769
    %8875 = vmatpush.bf16.msra.mxu0 %v5765
    %8876 = vmatpush.bf16.msra.mxu0 %v5761
    %8877 = vmatpush.bf16.msra.mxu0 %v5757
    %8878 = vmatpush.bf16.msra.mxu0 %v5753
    %8879 = vmatpush.bf16.msra.mxu0 %v5749
    %8880 = vmatpush.bf16.msra.mxu0 %v5745
    %8881 = vmatpush.bf16.msra.mxu0 %v5741
    %8882 = vmatmul.bf16.gmra.mxu0 %v360
    %v8883 = vpop.f32.mrf.mxu0
    %v8884 = vadd.f32 %v8871, %v8883
    %v8885 = vpop.f32.mrf.mxu0
    %8886 = vdwg.mxu0
    %8887 = vmatpush.bf16.msra.mxu0 %v5801
    %8888 = vmatpush.bf16.msra.mxu0 %v5797
    %8889 = vmatpush.bf16.msra.mxu0 %v5793
    %8890 = vmatpush.bf16.msra.mxu0 %v5789
    %8891 = vmatpush.bf16.msra.mxu0 %v5785
    %8892 = vmatpush.bf16.msra.mxu0 %v5781
    %8893 = vmatpush.bf16.msra.mxu0 %v5777
    %8894 = vmatpush.bf16.msra.mxu0 %v5773
    %8895 = vmatmul.bf16.gmra.mxu0 %v361
    %v8896 = vpop.f32.mrf.mxu0
    %v8897 = vadd.f32 %v8884, %v8896
    %v8898 = vpop.f32.mrf.mxu0
    %8899 = vdwg.mxu0
    %8900 = vmatpush.bf16.msra.mxu0 %v5833
    %8901 = vmatpush.bf16.msra.mxu0 %v5829
    %8902 = vmatpush.bf16.msra.mxu0 %v5825
    %8903 = vmatpush.bf16.msra.mxu0 %v5821
    %8904 = vmatpush.bf16.msra.mxu0 %v5817
    %8905 = vmatpush.bf16.msra.mxu0 %v5813
    %8906 = vmatpush.bf16.msra.mxu0 %v5809
    %8907 = vmatpush.bf16.msra.mxu0 %v5805
    %8908 = vmatmul.bf16.gmra.mxu0 %v362
    %v8909 = vpop.f32.mrf.mxu0
    %v8910 = vadd.f32 %v8897, %v8909
    %v8911 = vpop.f32.mrf.mxu0
    %8912 = vdwg.mxu0
    %8913 = vmatpush.bf16.msra.mxu0 %v5865
    %8914 = vmatpush.bf16.msra.mxu0 %v5861
    %8915 = vmatpush.bf16.msra.mxu0 %v5857
    %8916 = vmatpush.bf16.msra.mxu0 %v5853
    %8917 = vmatpush.bf16.msra.mxu0 %v5849
    %8918 = vmatpush.bf16.msra.mxu0 %v5845
    %8919 = vmatpush.bf16.msra.mxu0 %v5841
    %8920 = vmatpush.bf16.msra.mxu0 %v5837
    %8921 = vmatmul.bf16.gmra.mxu0 %v363
    %v8922 = vpop.f32.mrf.mxu0
    %v8923 = vadd.f32 %v8910, %v8922
    %v8924 = vpop.f32.mrf.mxu0
    %8925 = vdwg.mxu0
    %8926 = vmatpush.bf16.msra.mxu0 %v5897
    %8927 = vmatpush.bf16.msra.mxu0 %v5893
    %8928 = vmatpush.bf16.msra.mxu0 %v5889
    %8929 = vmatpush.bf16.msra.mxu0 %v5885
    %8930 = vmatpush.bf16.msra.mxu0 %v5881
    %8931 = vmatpush.bf16.msra.mxu0 %v5877
    %8932 = vmatpush.bf16.msra.mxu0 %v5873
    %8933 = vmatpush.bf16.msra.mxu0 %v5869
    %8934 = vmatmul.bf16.gmra.mxu0 %v364
    %v8935 = vpop.f32.mrf.mxu0
    %v8936 = vadd.f32 %v8923, %v8935
    %v8937 = vpop.f32.mrf.mxu0
    %8938 = vdwg.mxu0
    %8939 = vmatpush.bf16.msra.mxu0 %v5929
    %8940 = vmatpush.bf16.msra.mxu0 %v5925
    %8941 = vmatpush.bf16.msra.mxu0 %v5921
    %8942 = vmatpush.bf16.msra.mxu0 %v5917
    %8943 = vmatpush.bf16.msra.mxu0 %v5913
    %8944 = vmatpush.bf16.msra.mxu0 %v5909
    %8945 = vmatpush.bf16.msra.mxu0 %v5905
    %8946 = vmatpush.bf16.msra.mxu0 %v5901
    %8947 = vmatmul.bf16.gmra.mxu0 %v365
    %v8948 = vpop.f32.mrf.mxu0
    %v8949 = vadd.f32 %v8936, %v8948
    %v8950 = vpop.f32.mrf.mxu0
    %8951 = vdwg.mxu0
    %8952 = vmatpush.bf16.msra.mxu0 %v5961
    %8953 = vmatpush.bf16.msra.mxu0 %v5957
    %8954 = vmatpush.bf16.msra.mxu0 %v5953
    %8955 = vmatpush.bf16.msra.mxu0 %v5949
    %8956 = vmatpush.bf16.msra.mxu0 %v5945
    %8957 = vmatpush.bf16.msra.mxu0 %v5941
    %8958 = vmatpush.bf16.msra.mxu0 %v5937
    %8959 = vmatpush.bf16.msra.mxu0 %v5933
    %8960 = vmatmul.bf16.gmra.mxu0 %v366
    %v8961 = vpop.f32.mrf.mxu0
    %v8962 = vadd.f32 %v8949, %v8961
    %v8963 = vpop.f32.mrf.mxu0
    %8964 = vdwg.mxu0
    %8965 = vmatpush.bf16.msra.mxu0 %v5993
    %8966 = vmatpush.bf16.msra.mxu0 %v5989
    %8967 = vmatpush.bf16.msra.mxu0 %v5985
    %8968 = vmatpush.bf16.msra.mxu0 %v5981
    %8969 = vmatpush.bf16.msra.mxu0 %v5977
    %8970 = vmatpush.bf16.msra.mxu0 %v5973
    %8971 = vmatpush.bf16.msra.mxu0 %v5969
    %8972 = vmatpush.bf16.msra.mxu0 %v5965
    %8973 = vmatmul.bf16.gmra.mxu0 %v367
    %v8974 = vpop.f32.mrf.mxu0
    %v8975 = vadd.f32 %v8962, %v8974
    %v8976 = vpop.f32.mrf.mxu0
    %8977 = vdwg.mxu0
    %8978 = vmatpush.bf16.msra.mxu0 %v6025
    %8979 = vmatpush.bf16.msra.mxu0 %v6021
    %8980 = vmatpush.bf16.msra.mxu0 %v6017
    %8981 = vmatpush.bf16.msra.mxu0 %v6013
    %8982 = vmatpush.bf16.msra.mxu0 %v6009
    %8983 = vmatpush.bf16.msra.mxu0 %v6005
    %8984 = vmatpush.bf16.msra.mxu0 %v6001
    %8985 = vmatpush.bf16.msra.mxu0 %v5997
    %8986 = vmatmul.bf16.gmra.mxu0 %v368
    %v8987 = vpop.f32.mrf.mxu0
    %v8988 = vadd.f32 %v8975, %v8987
    %v8989 = vpop.f32.mrf.mxu0
    %8990 = vdwg.mxu0
    %8991 = vmatpush.bf16.msra.mxu0 %v6057
    %8992 = vmatpush.bf16.msra.mxu0 %v6053
    %8993 = vmatpush.bf16.msra.mxu0 %v6049
    %8994 = vmatpush.bf16.msra.mxu0 %v6045
    %8995 = vmatpush.bf16.msra.mxu0 %v6041
    %8996 = vmatpush.bf16.msra.mxu0 %v6037
    %8997 = vmatpush.bf16.msra.mxu0 %v6033
    %8998 = vmatpush.bf16.msra.mxu0 %v6029
    %8999 = vmatmul.bf16.gmra.mxu0 %v369
    %v9000 = vpop.f32.mrf.mxu0
    %v9001 = vadd.f32 %v8988, %v9000
    %v9002 = vpop.f32.mrf.mxu0
    %9003 = vdwg.mxu0
    %9004 = vmatpush.bf16.msra.mxu0 %v6089
    %9005 = vmatpush.bf16.msra.mxu0 %v6085
    %9006 = vmatpush.bf16.msra.mxu0 %v6081
    %9007 = vmatpush.bf16.msra.mxu0 %v6077
    %9008 = vmatpush.bf16.msra.mxu0 %v6073
    %9009 = vmatpush.bf16.msra.mxu0 %v6069
    %9010 = vmatpush.bf16.msra.mxu0 %v6065
    %9011 = vmatpush.bf16.msra.mxu0 %v6061
    %9012 = vmatmul.bf16.gmra.mxu0 %v370
    %v9013 = vpop.f32.mrf.mxu0
    %v9014 = vadd.f32 %v9001, %v9013
    %v9015 = vpop.f32.mrf.mxu0
    %9016 = vdwg.mxu0
    %9017 = vmatpush.bf16.msra.mxu0 %v6121
    %9018 = vmatpush.bf16.msra.mxu0 %v6117
    %9019 = vmatpush.bf16.msra.mxu0 %v6113
    %9020 = vmatpush.bf16.msra.mxu0 %v6109
    %9021 = vmatpush.bf16.msra.mxu0 %v6105
    %9022 = vmatpush.bf16.msra.mxu0 %v6101
    %9023 = vmatpush.bf16.msra.mxu0 %v6097
    %9024 = vmatpush.bf16.msra.mxu0 %v6093
    %9025 = vmatmul.bf16.gmra.mxu0 %v371
    %v9026 = vpop.f32.mrf.mxu0
    %v9027 = vadd.f32 %v9014, %v9026
    %v9028 = vpop.f32.mrf.mxu0
    %9029 = vdwg.mxu0
    %9030 = vmatpush.bf16.msra.mxu0 %v6153
    %9031 = vmatpush.bf16.msra.mxu0 %v6149
    %9032 = vmatpush.bf16.msra.mxu0 %v6145
    %9033 = vmatpush.bf16.msra.mxu0 %v6141
    %9034 = vmatpush.bf16.msra.mxu0 %v6137
    %9035 = vmatpush.bf16.msra.mxu0 %v6133
    %9036 = vmatpush.bf16.msra.mxu0 %v6129
    %9037 = vmatpush.bf16.msra.mxu0 %v6125
    %9038 = vmatmul.bf16.gmra.mxu0 %v372
    %v9039 = vpop.f32.mrf.mxu0
    %v9040 = vadd.f32 %v9027, %v9039
    %v9041 = vpop.f32.mrf.mxu0
    %9042 = vdwg.mxu0
    %9043 = vmatpush.bf16.msra.mxu0 %v6185
    %9044 = vmatpush.bf16.msra.mxu0 %v6181
    %9045 = vmatpush.bf16.msra.mxu0 %v6177
    %9046 = vmatpush.bf16.msra.mxu0 %v6173
    %9047 = vmatpush.bf16.msra.mxu0 %v6169
    %9048 = vmatpush.bf16.msra.mxu0 %v6165
    %9049 = vmatpush.bf16.msra.mxu0 %v6161
    %9050 = vmatpush.bf16.msra.mxu0 %v6157
    %9051 = vmatmul.bf16.gmra.mxu0 %v373
    %v9052 = vpop.f32.mrf.mxu0
    %v9053 = vadd.f32 %v9040, %v9052
    %v9054 = vpop.f32.mrf.mxu0
    %9055 = vdwg.mxu0
    %9056 = vmatpush.bf16.msra.mxu0 %v6217
    %9057 = vmatpush.bf16.msra.mxu0 %v6213
    %9058 = vmatpush.bf16.msra.mxu0 %v6209
    %9059 = vmatpush.bf16.msra.mxu0 %v6205
    %9060 = vmatpush.bf16.msra.mxu0 %v6201
    %9061 = vmatpush.bf16.msra.mxu0 %v6197
    %9062 = vmatpush.bf16.msra.mxu0 %v6193
    %9063 = vmatpush.bf16.msra.mxu0 %v6189
    %9064 = vmatmul.bf16.gmra.mxu0 %v374
    %v9065 = vpop.f32.mrf.mxu0
    %v9066 = vadd.f32 %v9053, %v9065
    %v9067 = vpop.f32.mrf.mxu0
    %9068 = vdwg.mxu0
    %9069 = vmatpush.bf16.msra.mxu0 %v6249
    %9070 = vmatpush.bf16.msra.mxu0 %v6245
    %9071 = vmatpush.bf16.msra.mxu0 %v6241
    %9072 = vmatpush.bf16.msra.mxu0 %v6237
    %9073 = vmatpush.bf16.msra.mxu0 %v6233
    %9074 = vmatpush.bf16.msra.mxu0 %v6229
    %9075 = vmatpush.bf16.msra.mxu0 %v6225
    %9076 = vmatpush.bf16.msra.mxu0 %v6221
    %9077 = vmatmul.bf16.gmra.mxu0 %v375
    %v9078 = vpop.f32.mrf.mxu0
    %v9079 = vadd.f32 %v9066, %v9078
    %v9080 = vpop.f32.mrf.mxu0
    %9081 = vdwg.mxu0
    %9082 = vmatpush.bf16.msra.mxu0 %v6281
    %9083 = vmatpush.bf16.msra.mxu0 %v6277
    %9084 = vmatpush.bf16.msra.mxu0 %v6273
    %9085 = vmatpush.bf16.msra.mxu0 %v6269
    %9086 = vmatpush.bf16.msra.mxu0 %v6265
    %9087 = vmatpush.bf16.msra.mxu0 %v6261
    %9088 = vmatpush.bf16.msra.mxu0 %v6257
    %9089 = vmatpush.bf16.msra.mxu0 %v6253
    %9090 = vmatmul.bf16.gmra.mxu0 %v376
    %v9091 = vpop.f32.mrf.mxu0
    %v9092 = vadd.f32 %v9079, %v9091
    %v9093 = vpop.f32.mrf.mxu0
    %9094 = vdwg.mxu0
    %9095 = vmatpush.bf16.msra.mxu0 %v6313
    %9096 = vmatpush.bf16.msra.mxu0 %v6309
    %9097 = vmatpush.bf16.msra.mxu0 %v6305
    %9098 = vmatpush.bf16.msra.mxu0 %v6301
    %9099 = vmatpush.bf16.msra.mxu0 %v6297
    %9100 = vmatpush.bf16.msra.mxu0 %v6293
    %9101 = vmatpush.bf16.msra.mxu0 %v6289
    %9102 = vmatpush.bf16.msra.mxu0 %v6285
    %9103 = vmatmul.bf16.gmra.mxu0 %v377
    %v9104 = vpop.f32.mrf.mxu0
    %v9105 = vadd.f32 %v9092, %v9104
    %v9106 = vpop.f32.mrf.mxu0
    %9107 = vdwg.mxu0
    %9108 = vmatpush.bf16.msra.mxu0 %v6345
    %9109 = vmatpush.bf16.msra.mxu0 %v6341
    %9110 = vmatpush.bf16.msra.mxu0 %v6337
    %9111 = vmatpush.bf16.msra.mxu0 %v6333
    %9112 = vmatpush.bf16.msra.mxu0 %v6329
    %9113 = vmatpush.bf16.msra.mxu0 %v6325
    %9114 = vmatpush.bf16.msra.mxu0 %v6321
    %9115 = vmatpush.bf16.msra.mxu0 %v6317
    %9116 = vmatmul.bf16.gmra.mxu0 %v378
    %v9117 = vpop.f32.mrf.mxu0
    %v9118 = vadd.f32 %v9105, %v9117
    %v9119 = vpop.f32.mrf.mxu0
    %9120 = vdwg.mxu0
    %9121 = vmatpush.bf16.msra.mxu0 %v6377
    %9122 = vmatpush.bf16.msra.mxu0 %v6373
    %9123 = vmatpush.bf16.msra.mxu0 %v6369
    %9124 = vmatpush.bf16.msra.mxu0 %v6365
    %9125 = vmatpush.bf16.msra.mxu0 %v6361
    %9126 = vmatpush.bf16.msra.mxu0 %v6357
    %9127 = vmatpush.bf16.msra.mxu0 %v6353
    %9128 = vmatpush.bf16.msra.mxu0 %v6349
    %9129 = vmatmul.bf16.gmra.mxu0 %v379
    %v9130 = vpop.f32.mrf.mxu0
    %v9131 = vadd.f32 %v9118, %v9130
    %v9132 = vpop.f32.mrf.mxu0
    %9133 = vdwg.mxu0
    %9134 = vmatpush.bf16.msra.mxu0 %v6409
    %9135 = vmatpush.bf16.msra.mxu0 %v6405
    %9136 = vmatpush.bf16.msra.mxu0 %v6401
    %9137 = vmatpush.bf16.msra.mxu0 %v6397
    %9138 = vmatpush.bf16.msra.mxu0 %v6393
    %9139 = vmatpush.bf16.msra.mxu0 %v6389
    %9140 = vmatpush.bf16.msra.mxu0 %v6385
    %9141 = vmatpush.bf16.msra.mxu0 %v6381
    %9142 = vmatmul.bf16.gmra.mxu0 %v380
    %v9143 = vpop.f32.mrf.mxu0
    %v9144 = vadd.f32 %v9131, %v9143
    %v9145 = vpop.f32.mrf.mxu0
    %9146 = vdwg.mxu0
    %9147 = vmatpush.bf16.msra.mxu0 %v6441
    %9148 = vmatpush.bf16.msra.mxu0 %v6437
    %9149 = vmatpush.bf16.msra.mxu0 %v6433
    %9150 = vmatpush.bf16.msra.mxu0 %v6429
    %9151 = vmatpush.bf16.msra.mxu0 %v6425
    %9152 = vmatpush.bf16.msra.mxu0 %v6421
    %9153 = vmatpush.bf16.msra.mxu0 %v6417
    %9154 = vmatpush.bf16.msra.mxu0 %v6413
    %9155 = vmatmul.bf16.gmra.mxu0 %v381
    %v9156 = vpop.f32.mrf.mxu0
    %v9157 = vadd.f32 %v9144, %v9156
    %v9158 = vpop.f32.mrf.mxu0
    %9159 = vdwg.mxu0
    %9160 = vmatpush.bf16.msra.mxu0 %v6473
    %9161 = vmatpush.bf16.msra.mxu0 %v6469
    %9162 = vmatpush.bf16.msra.mxu0 %v6465
    %9163 = vmatpush.bf16.msra.mxu0 %v6461
    %9164 = vmatpush.bf16.msra.mxu0 %v6457
    %9165 = vmatpush.bf16.msra.mxu0 %v6453
    %9166 = vmatpush.bf16.msra.mxu0 %v6449
    %9167 = vmatpush.bf16.msra.mxu0 %v6445
    %9168 = vmatmul.bf16.gmra.mxu0 %v382
    %v9169 = vpop.f32.mrf.mxu0
    %v9170 = vadd.f32 %v9157, %v9169
    %v9171 = vpop.f32.mrf.mxu0
    %9172 = vdwg.mxu0
    %9173 = vmatpush.bf16.msra.mxu0 %v5290
    %9174 = vmatpush.bf16.msra.mxu0 %v5286
    %9175 = vmatpush.bf16.msra.mxu0 %v5282
    %9176 = vmatpush.bf16.msra.mxu0 %v5278
    %9177 = vmatpush.bf16.msra.mxu0 %v5274
    %9178 = vmatpush.bf16.msra.mxu0 %v5270
    %9179 = vmatpush.bf16.msra.mxu0 %v5266
    %9180 = vmatpush.bf16.msra.mxu0 %v5262
    %9181 = vmatmul.bf16.gmra.mxu0 %v345
    %v9182 = vpop.f32.mrf.mxu0
    %v9183 = vadd.f32 %v1606, %v9182
    %v9184 = vpop.f32.mrf.mxu0
    %9185 = vdwg.mxu0
    %9186 = vmatpush.bf16.msra.mxu0 %v5322
    %9187 = vmatpush.bf16.msra.mxu0 %v5318
    %9188 = vmatpush.bf16.msra.mxu0 %v5314
    %9189 = vmatpush.bf16.msra.mxu0 %v5310
    %9190 = vmatpush.bf16.msra.mxu0 %v5306
    %9191 = vmatpush.bf16.msra.mxu0 %v5302
    %9192 = vmatpush.bf16.msra.mxu0 %v5298
    %9193 = vmatpush.bf16.msra.mxu0 %v5294
    %9194 = vmatmul.bf16.gmra.mxu0 %v346
    %v9195 = vpop.f32.mrf.mxu0
    %v9196 = vadd.f32 %v9183, %v9195
    %v9197 = vpop.f32.mrf.mxu0
    %9198 = vdwg.mxu0
    %9199 = vmatpush.bf16.msra.mxu0 %v5354
    %9200 = vmatpush.bf16.msra.mxu0 %v5350
    %9201 = vmatpush.bf16.msra.mxu0 %v5346
    %9202 = vmatpush.bf16.msra.mxu0 %v5342
    %9203 = vmatpush.bf16.msra.mxu0 %v5338
    %9204 = vmatpush.bf16.msra.mxu0 %v5334
    %9205 = vmatpush.bf16.msra.mxu0 %v5330
    %9206 = vmatpush.bf16.msra.mxu0 %v5326
    %9207 = vmatmul.bf16.gmra.mxu0 %v347
    %v9208 = vpop.f32.mrf.mxu0
    %v9209 = vadd.f32 %v9196, %v9208
    %v9210 = vpop.f32.mrf.mxu0
    %9211 = vdwg.mxu0
    %9212 = vmatpush.bf16.msra.mxu0 %v5386
    %9213 = vmatpush.bf16.msra.mxu0 %v5382
    %9214 = vmatpush.bf16.msra.mxu0 %v5378
    %9215 = vmatpush.bf16.msra.mxu0 %v5374
    %9216 = vmatpush.bf16.msra.mxu0 %v5370
    %9217 = vmatpush.bf16.msra.mxu0 %v5366
    %9218 = vmatpush.bf16.msra.mxu0 %v5362
    %9219 = vmatpush.bf16.msra.mxu0 %v5358
    %9220 = vmatmul.bf16.gmra.mxu0 %v348
    %v9221 = vpop.f32.mrf.mxu0
    %v9222 = vadd.f32 %v9209, %v9221
    %v9223 = vpop.f32.mrf.mxu0
    %9224 = vdwg.mxu0
    %9225 = vmatpush.bf16.msra.mxu0 %v5418
    %9226 = vmatpush.bf16.msra.mxu0 %v5414
    %9227 = vmatpush.bf16.msra.mxu0 %v5410
    %9228 = vmatpush.bf16.msra.mxu0 %v5406
    %9229 = vmatpush.bf16.msra.mxu0 %v5402
    %9230 = vmatpush.bf16.msra.mxu0 %v5398
    %9231 = vmatpush.bf16.msra.mxu0 %v5394
    %9232 = vmatpush.bf16.msra.mxu0 %v5390
    %9233 = vmatmul.bf16.gmra.mxu0 %v349
    %v9234 = vpop.f32.mrf.mxu0
    %v9235 = vadd.f32 %v9222, %v9234
    %v9236 = vpop.f32.mrf.mxu0
    %9237 = vdwg.mxu0
    %9238 = vmatpush.bf16.msra.mxu0 %v5450
    %9239 = vmatpush.bf16.msra.mxu0 %v5446
    %9240 = vmatpush.bf16.msra.mxu0 %v5442
    %9241 = vmatpush.bf16.msra.mxu0 %v5438
    %9242 = vmatpush.bf16.msra.mxu0 %v5434
    %9243 = vmatpush.bf16.msra.mxu0 %v5430
    %9244 = vmatpush.bf16.msra.mxu0 %v5426
    %9245 = vmatpush.bf16.msra.mxu0 %v5422
    %9246 = vmatmul.bf16.gmra.mxu0 %v350
    %v9247 = vpop.f32.mrf.mxu0
    %v9248 = vadd.f32 %v9235, %v9247
    %v9249 = vpop.f32.mrf.mxu0
    %9250 = vdwg.mxu0
    %9251 = vmatpush.bf16.msra.mxu0 %v5482
    %9252 = vmatpush.bf16.msra.mxu0 %v5478
    %9253 = vmatpush.bf16.msra.mxu0 %v5474
    %9254 = vmatpush.bf16.msra.mxu0 %v5470
    %9255 = vmatpush.bf16.msra.mxu0 %v5466
    %9256 = vmatpush.bf16.msra.mxu0 %v5462
    %9257 = vmatpush.bf16.msra.mxu0 %v5458
    %9258 = vmatpush.bf16.msra.mxu0 %v5454
    %9259 = vmatmul.bf16.gmra.mxu0 %v351
    %v9260 = vpop.f32.mrf.mxu0
    %v9261 = vadd.f32 %v9248, %v9260
    %v9262 = vpop.f32.mrf.mxu0
    %9263 = vdwg.mxu0
    %9264 = vmatpush.bf16.msra.mxu0 %v5514
    %9265 = vmatpush.bf16.msra.mxu0 %v5510
    %9266 = vmatpush.bf16.msra.mxu0 %v5506
    %9267 = vmatpush.bf16.msra.mxu0 %v5502
    %9268 = vmatpush.bf16.msra.mxu0 %v5498
    %9269 = vmatpush.bf16.msra.mxu0 %v5494
    %9270 = vmatpush.bf16.msra.mxu0 %v5490
    %9271 = vmatpush.bf16.msra.mxu0 %v5486
    %9272 = vmatmul.bf16.gmra.mxu0 %v352
    %v9273 = vpop.f32.mrf.mxu0
    %v9274 = vadd.f32 %v9261, %v9273
    %v9275 = vpop.f32.mrf.mxu0
    %9276 = vdwg.mxu0
    %9277 = vmatpush.bf16.msra.mxu0 %v5546
    %9278 = vmatpush.bf16.msra.mxu0 %v5542
    %9279 = vmatpush.bf16.msra.mxu0 %v5538
    %9280 = vmatpush.bf16.msra.mxu0 %v5534
    %9281 = vmatpush.bf16.msra.mxu0 %v5530
    %9282 = vmatpush.bf16.msra.mxu0 %v5526
    %9283 = vmatpush.bf16.msra.mxu0 %v5522
    %9284 = vmatpush.bf16.msra.mxu0 %v5518
    %9285 = vmatmul.bf16.gmra.mxu0 %v353
    %v9286 = vpop.f32.mrf.mxu0
    %v9287 = vadd.f32 %v9274, %v9286
    %v9288 = vpop.f32.mrf.mxu0
    %9289 = vdwg.mxu0
    %9290 = vmatpush.bf16.msra.mxu0 %v5578
    %9291 = vmatpush.bf16.msra.mxu0 %v5574
    %9292 = vmatpush.bf16.msra.mxu0 %v5570
    %9293 = vmatpush.bf16.msra.mxu0 %v5566
    %9294 = vmatpush.bf16.msra.mxu0 %v5562
    %9295 = vmatpush.bf16.msra.mxu0 %v5558
    %9296 = vmatpush.bf16.msra.mxu0 %v5554
    %9297 = vmatpush.bf16.msra.mxu0 %v5550
    %9298 = vmatmul.bf16.gmra.mxu0 %v354
    %v9299 = vpop.f32.mrf.mxu0
    %v9300 = vadd.f32 %v9287, %v9299
    %v9301 = vpop.f32.mrf.mxu0
    %9302 = vdwg.mxu0
    %9303 = vmatpush.bf16.msra.mxu0 %v5610
    %9304 = vmatpush.bf16.msra.mxu0 %v5606
    %9305 = vmatpush.bf16.msra.mxu0 %v5602
    %9306 = vmatpush.bf16.msra.mxu0 %v5598
    %9307 = vmatpush.bf16.msra.mxu0 %v5594
    %9308 = vmatpush.bf16.msra.mxu0 %v5590
    %9309 = vmatpush.bf16.msra.mxu0 %v5586
    %9310 = vmatpush.bf16.msra.mxu0 %v5582
    %9311 = vmatmul.bf16.gmra.mxu0 %v355
    %v9312 = vpop.f32.mrf.mxu0
    %v9313 = vadd.f32 %v9300, %v9312
    %v9314 = vpop.f32.mrf.mxu0
    %9315 = vdwg.mxu0
    %9316 = vmatpush.bf16.msra.mxu0 %v5642
    %9317 = vmatpush.bf16.msra.mxu0 %v5638
    %9318 = vmatpush.bf16.msra.mxu0 %v5634
    %9319 = vmatpush.bf16.msra.mxu0 %v5630
    %9320 = vmatpush.bf16.msra.mxu0 %v5626
    %9321 = vmatpush.bf16.msra.mxu0 %v5622
    %9322 = vmatpush.bf16.msra.mxu0 %v5618
    %9323 = vmatpush.bf16.msra.mxu0 %v5614
    %9324 = vmatmul.bf16.gmra.mxu0 %v356
    %v9325 = vpop.f32.mrf.mxu0
    %v9326 = vadd.f32 %v9313, %v9325
    %v9327 = vpop.f32.mrf.mxu0
    %9328 = vdwg.mxu0
    %9329 = vmatpush.bf16.msra.mxu0 %v5674
    %9330 = vmatpush.bf16.msra.mxu0 %v5670
    %9331 = vmatpush.bf16.msra.mxu0 %v5666
    %9332 = vmatpush.bf16.msra.mxu0 %v5662
    %9333 = vmatpush.bf16.msra.mxu0 %v5658
    %9334 = vmatpush.bf16.msra.mxu0 %v5654
    %9335 = vmatpush.bf16.msra.mxu0 %v5650
    %9336 = vmatpush.bf16.msra.mxu0 %v5646
    %9337 = vmatmul.bf16.gmra.mxu0 %v357
    %v9338 = vpop.f32.mrf.mxu0
    %v9339 = vadd.f32 %v9326, %v9338
    %v9340 = vpop.f32.mrf.mxu0
    %9341 = vdwg.mxu0
    %9342 = vmatpush.bf16.msra.mxu0 %v5706
    %9343 = vmatpush.bf16.msra.mxu0 %v5702
    %9344 = vmatpush.bf16.msra.mxu0 %v5698
    %9345 = vmatpush.bf16.msra.mxu0 %v5694
    %9346 = vmatpush.bf16.msra.mxu0 %v5690
    %9347 = vmatpush.bf16.msra.mxu0 %v5686
    %9348 = vmatpush.bf16.msra.mxu0 %v5682
    %9349 = vmatpush.bf16.msra.mxu0 %v5678
    %9350 = vmatmul.bf16.gmra.mxu0 %v358
    %v9351 = vpop.f32.mrf.mxu0
    %v9352 = vadd.f32 %v9339, %v9351
    %v9353 = vpop.f32.mrf.mxu0
    %9354 = vdwg.mxu0
    %9355 = vmatpush.bf16.msra.mxu0 %v5738
    %9356 = vmatpush.bf16.msra.mxu0 %v5734
    %9357 = vmatpush.bf16.msra.mxu0 %v5730
    %9358 = vmatpush.bf16.msra.mxu0 %v5726
    %9359 = vmatpush.bf16.msra.mxu0 %v5722
    %9360 = vmatpush.bf16.msra.mxu0 %v5718
    %9361 = vmatpush.bf16.msra.mxu0 %v5714
    %9362 = vmatpush.bf16.msra.mxu0 %v5710
    %9363 = vmatmul.bf16.gmra.mxu0 %v359
    %v9364 = vpop.f32.mrf.mxu0
    %v9365 = vadd.f32 %v9352, %v9364
    %v9366 = vpop.f32.mrf.mxu0
    %9367 = vdwg.mxu0
    %9368 = vmatpush.bf16.msra.mxu0 %v5770
    %9369 = vmatpush.bf16.msra.mxu0 %v5766
    %9370 = vmatpush.bf16.msra.mxu0 %v5762
    %9371 = vmatpush.bf16.msra.mxu0 %v5758
    %9372 = vmatpush.bf16.msra.mxu0 %v5754
    %9373 = vmatpush.bf16.msra.mxu0 %v5750
    %9374 = vmatpush.bf16.msra.mxu0 %v5746
    %9375 = vmatpush.bf16.msra.mxu0 %v5742
    %9376 = vmatmul.bf16.gmra.mxu0 %v360
    %v9377 = vpop.f32.mrf.mxu0
    %v9378 = vadd.f32 %v9365, %v9377
    %v9379 = vpop.f32.mrf.mxu0
    %9380 = vdwg.mxu0
    %9381 = vmatpush.bf16.msra.mxu0 %v5802
    %9382 = vmatpush.bf16.msra.mxu0 %v5798
    %9383 = vmatpush.bf16.msra.mxu0 %v5794
    %9384 = vmatpush.bf16.msra.mxu0 %v5790
    %9385 = vmatpush.bf16.msra.mxu0 %v5786
    %9386 = vmatpush.bf16.msra.mxu0 %v5782
    %9387 = vmatpush.bf16.msra.mxu0 %v5778
    %9388 = vmatpush.bf16.msra.mxu0 %v5774
    %9389 = vmatmul.bf16.gmra.mxu0 %v361
    %v9390 = vpop.f32.mrf.mxu0
    %v9391 = vadd.f32 %v9378, %v9390
    %v9392 = vpop.f32.mrf.mxu0
    %9393 = vdwg.mxu0
    %9394 = vmatpush.bf16.msra.mxu0 %v5834
    %9395 = vmatpush.bf16.msra.mxu0 %v5830
    %9396 = vmatpush.bf16.msra.mxu0 %v5826
    %9397 = vmatpush.bf16.msra.mxu0 %v5822
    %9398 = vmatpush.bf16.msra.mxu0 %v5818
    %9399 = vmatpush.bf16.msra.mxu0 %v5814
    %9400 = vmatpush.bf16.msra.mxu0 %v5810
    %9401 = vmatpush.bf16.msra.mxu0 %v5806
    %9402 = vmatmul.bf16.gmra.mxu0 %v362
    %v9403 = vpop.f32.mrf.mxu0
    %v9404 = vadd.f32 %v9391, %v9403
    %v9405 = vpop.f32.mrf.mxu0
    %9406 = vdwg.mxu0
    %9407 = vmatpush.bf16.msra.mxu0 %v5866
    %9408 = vmatpush.bf16.msra.mxu0 %v5862
    %9409 = vmatpush.bf16.msra.mxu0 %v5858
    %9410 = vmatpush.bf16.msra.mxu0 %v5854
    %9411 = vmatpush.bf16.msra.mxu0 %v5850
    %9412 = vmatpush.bf16.msra.mxu0 %v5846
    %9413 = vmatpush.bf16.msra.mxu0 %v5842
    %9414 = vmatpush.bf16.msra.mxu0 %v5838
    %9415 = vmatmul.bf16.gmra.mxu0 %v363
    %v9416 = vpop.f32.mrf.mxu0
    %v9417 = vadd.f32 %v9404, %v9416
    %v9418 = vpop.f32.mrf.mxu0
    %9419 = vdwg.mxu0
    %9420 = vmatpush.bf16.msra.mxu0 %v5898
    %9421 = vmatpush.bf16.msra.mxu0 %v5894
    %9422 = vmatpush.bf16.msra.mxu0 %v5890
    %9423 = vmatpush.bf16.msra.mxu0 %v5886
    %9424 = vmatpush.bf16.msra.mxu0 %v5882
    %9425 = vmatpush.bf16.msra.mxu0 %v5878
    %9426 = vmatpush.bf16.msra.mxu0 %v5874
    %9427 = vmatpush.bf16.msra.mxu0 %v5870
    %9428 = vmatmul.bf16.gmra.mxu0 %v364
    %v9429 = vpop.f32.mrf.mxu0
    %v9430 = vadd.f32 %v9417, %v9429
    %v9431 = vpop.f32.mrf.mxu0
    %9432 = vdwg.mxu0
    %9433 = vmatpush.bf16.msra.mxu0 %v5930
    %9434 = vmatpush.bf16.msra.mxu0 %v5926
    %9435 = vmatpush.bf16.msra.mxu0 %v5922
    %9436 = vmatpush.bf16.msra.mxu0 %v5918
    %9437 = vmatpush.bf16.msra.mxu0 %v5914
    %9438 = vmatpush.bf16.msra.mxu0 %v5910
    %9439 = vmatpush.bf16.msra.mxu0 %v5906
    %9440 = vmatpush.bf16.msra.mxu0 %v5902
    %9441 = vmatmul.bf16.gmra.mxu0 %v365
    %v9442 = vpop.f32.mrf.mxu0
    %v9443 = vadd.f32 %v9430, %v9442
    %v9444 = vpop.f32.mrf.mxu0
    %9445 = vdwg.mxu0
    %9446 = vmatpush.bf16.msra.mxu0 %v5962
    %9447 = vmatpush.bf16.msra.mxu0 %v5958
    %9448 = vmatpush.bf16.msra.mxu0 %v5954
    %9449 = vmatpush.bf16.msra.mxu0 %v5950
    %9450 = vmatpush.bf16.msra.mxu0 %v5946
    %9451 = vmatpush.bf16.msra.mxu0 %v5942
    %9452 = vmatpush.bf16.msra.mxu0 %v5938
    %9453 = vmatpush.bf16.msra.mxu0 %v5934
    %9454 = vmatmul.bf16.gmra.mxu0 %v366
    %v9455 = vpop.f32.mrf.mxu0
    %v9456 = vadd.f32 %v9443, %v9455
    %v9457 = vpop.f32.mrf.mxu0
    %9458 = vdwg.mxu0
    %9459 = vmatpush.bf16.msra.mxu0 %v5994
    %9460 = vmatpush.bf16.msra.mxu0 %v5990
    %9461 = vmatpush.bf16.msra.mxu0 %v5986
    %9462 = vmatpush.bf16.msra.mxu0 %v5982
    %9463 = vmatpush.bf16.msra.mxu0 %v5978
    %9464 = vmatpush.bf16.msra.mxu0 %v5974
    %9465 = vmatpush.bf16.msra.mxu0 %v5970
    %9466 = vmatpush.bf16.msra.mxu0 %v5966
    %9467 = vmatmul.bf16.gmra.mxu0 %v367
    %v9468 = vpop.f32.mrf.mxu0
    %v9469 = vadd.f32 %v9456, %v9468
    %v9470 = vpop.f32.mrf.mxu0
    %9471 = vdwg.mxu0
    %9472 = vmatpush.bf16.msra.mxu0 %v6026
    %9473 = vmatpush.bf16.msra.mxu0 %v6022
    %9474 = vmatpush.bf16.msra.mxu0 %v6018
    %9475 = vmatpush.bf16.msra.mxu0 %v6014
    %9476 = vmatpush.bf16.msra.mxu0 %v6010
    %9477 = vmatpush.bf16.msra.mxu0 %v6006
    %9478 = vmatpush.bf16.msra.mxu0 %v6002
    %9479 = vmatpush.bf16.msra.mxu0 %v5998
    %9480 = vmatmul.bf16.gmra.mxu0 %v368
    %v9481 = vpop.f32.mrf.mxu0
    %v9482 = vadd.f32 %v9469, %v9481
    %v9483 = vpop.f32.mrf.mxu0
    %9484 = vdwg.mxu0
    %9485 = vmatpush.bf16.msra.mxu0 %v6058
    %9486 = vmatpush.bf16.msra.mxu0 %v6054
    %9487 = vmatpush.bf16.msra.mxu0 %v6050
    %9488 = vmatpush.bf16.msra.mxu0 %v6046
    %9489 = vmatpush.bf16.msra.mxu0 %v6042
    %9490 = vmatpush.bf16.msra.mxu0 %v6038
    %9491 = vmatpush.bf16.msra.mxu0 %v6034
    %9492 = vmatpush.bf16.msra.mxu0 %v6030
    %9493 = vmatmul.bf16.gmra.mxu0 %v369
    %v9494 = vpop.f32.mrf.mxu0
    %v9495 = vadd.f32 %v9482, %v9494
    %v9496 = vpop.f32.mrf.mxu0
    %9497 = vdwg.mxu0
    %9498 = vmatpush.bf16.msra.mxu0 %v6090
    %9499 = vmatpush.bf16.msra.mxu0 %v6086
    %9500 = vmatpush.bf16.msra.mxu0 %v6082
    %9501 = vmatpush.bf16.msra.mxu0 %v6078
    %9502 = vmatpush.bf16.msra.mxu0 %v6074
    %9503 = vmatpush.bf16.msra.mxu0 %v6070
    %9504 = vmatpush.bf16.msra.mxu0 %v6066
    %9505 = vmatpush.bf16.msra.mxu0 %v6062
    %9506 = vmatmul.bf16.gmra.mxu0 %v370
    %v9507 = vpop.f32.mrf.mxu0
    %v9508 = vadd.f32 %v9495, %v9507
    %v9509 = vpop.f32.mrf.mxu0
    %9510 = vdwg.mxu0
    %9511 = vmatpush.bf16.msra.mxu0 %v6122
    %9512 = vmatpush.bf16.msra.mxu0 %v6118
    %9513 = vmatpush.bf16.msra.mxu0 %v6114
    %9514 = vmatpush.bf16.msra.mxu0 %v6110
    %9515 = vmatpush.bf16.msra.mxu0 %v6106
    %9516 = vmatpush.bf16.msra.mxu0 %v6102
    %9517 = vmatpush.bf16.msra.mxu0 %v6098
    %9518 = vmatpush.bf16.msra.mxu0 %v6094
    %9519 = vmatmul.bf16.gmra.mxu0 %v371
    %v9520 = vpop.f32.mrf.mxu0
    %v9521 = vadd.f32 %v9508, %v9520
    %v9522 = vpop.f32.mrf.mxu0
    %9523 = vdwg.mxu0
    %9524 = vmatpush.bf16.msra.mxu0 %v6154
    %9525 = vmatpush.bf16.msra.mxu0 %v6150
    %9526 = vmatpush.bf16.msra.mxu0 %v6146
    %9527 = vmatpush.bf16.msra.mxu0 %v6142
    %9528 = vmatpush.bf16.msra.mxu0 %v6138
    %9529 = vmatpush.bf16.msra.mxu0 %v6134
    %9530 = vmatpush.bf16.msra.mxu0 %v6130
    %9531 = vmatpush.bf16.msra.mxu0 %v6126
    %9532 = vmatmul.bf16.gmra.mxu0 %v372
    %v9533 = vpop.f32.mrf.mxu0
    %v9534 = vadd.f32 %v9521, %v9533
    %v9535 = vpop.f32.mrf.mxu0
    %9536 = vdwg.mxu0
    %9537 = vmatpush.bf16.msra.mxu0 %v6186
    %9538 = vmatpush.bf16.msra.mxu0 %v6182
    %9539 = vmatpush.bf16.msra.mxu0 %v6178
    %9540 = vmatpush.bf16.msra.mxu0 %v6174
    %9541 = vmatpush.bf16.msra.mxu0 %v6170
    %9542 = vmatpush.bf16.msra.mxu0 %v6166
    %9543 = vmatpush.bf16.msra.mxu0 %v6162
    %9544 = vmatpush.bf16.msra.mxu0 %v6158
    %9545 = vmatmul.bf16.gmra.mxu0 %v373
    %v9546 = vpop.f32.mrf.mxu0
    %v9547 = vadd.f32 %v9534, %v9546
    %v9548 = vpop.f32.mrf.mxu0
    %9549 = vdwg.mxu0
    %9550 = vmatpush.bf16.msra.mxu0 %v6218
    %9551 = vmatpush.bf16.msra.mxu0 %v6214
    %9552 = vmatpush.bf16.msra.mxu0 %v6210
    %9553 = vmatpush.bf16.msra.mxu0 %v6206
    %9554 = vmatpush.bf16.msra.mxu0 %v6202
    %9555 = vmatpush.bf16.msra.mxu0 %v6198
    %9556 = vmatpush.bf16.msra.mxu0 %v6194
    %9557 = vmatpush.bf16.msra.mxu0 %v6190
    %9558 = vmatmul.bf16.gmra.mxu0 %v374
    %v9559 = vpop.f32.mrf.mxu0
    %v9560 = vadd.f32 %v9547, %v9559
    %v9561 = vpop.f32.mrf.mxu0
    %9562 = vdwg.mxu0
    %9563 = vmatpush.bf16.msra.mxu0 %v6250
    %9564 = vmatpush.bf16.msra.mxu0 %v6246
    %9565 = vmatpush.bf16.msra.mxu0 %v6242
    %9566 = vmatpush.bf16.msra.mxu0 %v6238
    %9567 = vmatpush.bf16.msra.mxu0 %v6234
    %9568 = vmatpush.bf16.msra.mxu0 %v6230
    %9569 = vmatpush.bf16.msra.mxu0 %v6226
    %9570 = vmatpush.bf16.msra.mxu0 %v6222
    %9571 = vmatmul.bf16.gmra.mxu0 %v375
    %v9572 = vpop.f32.mrf.mxu0
    %v9573 = vadd.f32 %v9560, %v9572
    %v9574 = vpop.f32.mrf.mxu0
    %9575 = vdwg.mxu0
    %9576 = vmatpush.bf16.msra.mxu0 %v6282
    %9577 = vmatpush.bf16.msra.mxu0 %v6278
    %9578 = vmatpush.bf16.msra.mxu0 %v6274
    %9579 = vmatpush.bf16.msra.mxu0 %v6270
    %9580 = vmatpush.bf16.msra.mxu0 %v6266
    %9581 = vmatpush.bf16.msra.mxu0 %v6262
    %9582 = vmatpush.bf16.msra.mxu0 %v6258
    %9583 = vmatpush.bf16.msra.mxu0 %v6254
    %9584 = vmatmul.bf16.gmra.mxu0 %v376
    %v9585 = vpop.f32.mrf.mxu0
    %v9586 = vadd.f32 %v9573, %v9585
    %v9587 = vpop.f32.mrf.mxu0
    %9588 = vdwg.mxu0
    %9589 = vmatpush.bf16.msra.mxu0 %v6314
    %9590 = vmatpush.bf16.msra.mxu0 %v6310
    %9591 = vmatpush.bf16.msra.mxu0 %v6306
    %9592 = vmatpush.bf16.msra.mxu0 %v6302
    %9593 = vmatpush.bf16.msra.mxu0 %v6298
    %9594 = vmatpush.bf16.msra.mxu0 %v6294
    %9595 = vmatpush.bf16.msra.mxu0 %v6290
    %9596 = vmatpush.bf16.msra.mxu0 %v6286
    %9597 = vmatmul.bf16.gmra.mxu0 %v377
    %v9598 = vpop.f32.mrf.mxu0
    %v9599 = vadd.f32 %v9586, %v9598
    %v9600 = vpop.f32.mrf.mxu0
    %9601 = vdwg.mxu0
    %9602 = vmatpush.bf16.msra.mxu0 %v6346
    %9603 = vmatpush.bf16.msra.mxu0 %v6342
    %9604 = vmatpush.bf16.msra.mxu0 %v6338
    %9605 = vmatpush.bf16.msra.mxu0 %v6334
    %9606 = vmatpush.bf16.msra.mxu0 %v6330
    %9607 = vmatpush.bf16.msra.mxu0 %v6326
    %9608 = vmatpush.bf16.msra.mxu0 %v6322
    %9609 = vmatpush.bf16.msra.mxu0 %v6318
    %9610 = vmatmul.bf16.gmra.mxu0 %v378
    %v9611 = vpop.f32.mrf.mxu0
    %v9612 = vadd.f32 %v9599, %v9611
    %v9613 = vpop.f32.mrf.mxu0
    %9614 = vdwg.mxu0
    %9615 = vmatpush.bf16.msra.mxu0 %v6378
    %9616 = vmatpush.bf16.msra.mxu0 %v6374
    %9617 = vmatpush.bf16.msra.mxu0 %v6370
    %9618 = vmatpush.bf16.msra.mxu0 %v6366
    %9619 = vmatpush.bf16.msra.mxu0 %v6362
    %9620 = vmatpush.bf16.msra.mxu0 %v6358
    %9621 = vmatpush.bf16.msra.mxu0 %v6354
    %9622 = vmatpush.bf16.msra.mxu0 %v6350
    %9623 = vmatmul.bf16.gmra.mxu0 %v379
    %v9624 = vpop.f32.mrf.mxu0
    %v9625 = vadd.f32 %v9612, %v9624
    %v9626 = vpop.f32.mrf.mxu0
    %9627 = vdwg.mxu0
    %9628 = vmatpush.bf16.msra.mxu0 %v6410
    %9629 = vmatpush.bf16.msra.mxu0 %v6406
    %9630 = vmatpush.bf16.msra.mxu0 %v6402
    %9631 = vmatpush.bf16.msra.mxu0 %v6398
    %9632 = vmatpush.bf16.msra.mxu0 %v6394
    %9633 = vmatpush.bf16.msra.mxu0 %v6390
    %9634 = vmatpush.bf16.msra.mxu0 %v6386
    %9635 = vmatpush.bf16.msra.mxu0 %v6382
    %9636 = vmatmul.bf16.gmra.mxu0 %v380
    %v9637 = vpop.f32.mrf.mxu0
    %v9638 = vadd.f32 %v9625, %v9637
    %v9639 = vpop.f32.mrf.mxu0
    %9640 = vdwg.mxu0
    %9641 = vmatpush.bf16.msra.mxu0 %v6442
    %9642 = vmatpush.bf16.msra.mxu0 %v6438
    %9643 = vmatpush.bf16.msra.mxu0 %v6434
    %9644 = vmatpush.bf16.msra.mxu0 %v6430
    %9645 = vmatpush.bf16.msra.mxu0 %v6426
    %9646 = vmatpush.bf16.msra.mxu0 %v6422
    %9647 = vmatpush.bf16.msra.mxu0 %v6418
    %9648 = vmatpush.bf16.msra.mxu0 %v6414
    %9649 = vmatmul.bf16.gmra.mxu0 %v381
    %v9650 = vpop.f32.mrf.mxu0
    %v9651 = vadd.f32 %v9638, %v9650
    %v9652 = vpop.f32.mrf.mxu0
    %9653 = vdwg.mxu0
    %9654 = vmatpush.bf16.msra.mxu0 %v6474
    %9655 = vmatpush.bf16.msra.mxu0 %v6470
    %9656 = vmatpush.bf16.msra.mxu0 %v6466
    %9657 = vmatpush.bf16.msra.mxu0 %v6462
    %9658 = vmatpush.bf16.msra.mxu0 %v6458
    %9659 = vmatpush.bf16.msra.mxu0 %v6454
    %9660 = vmatpush.bf16.msra.mxu0 %v6450
    %9661 = vmatpush.bf16.msra.mxu0 %v6446
    %9662 = vmatmul.bf16.gmra.mxu0 %v382
    %v9663 = vpop.f32.mrf.mxu0
    %v9664 = vadd.f32 %v9651, %v9663
    %v9665 = vpop.f32.mrf.mxu0
    %9666 = vdwg.mxu0
    %v9667 = vld [vmem:[#allocation10] sm:$0xff]
    %v9668 = vld [vmem:[#allocation10 + $0x8] sm:$0xff]
    %v9669 = vld [vmem:[#allocation10 + $0x10] sm:$0xff]
    %v9670 = vld [vmem:[#allocation10 + $0x18] sm:$0xff]
    %v9671 = vld [vmem:[#allocation10 + $0x20] sm:$0xff]
    %v9672 = vld [vmem:[#allocation10 + $0x28] sm:$0xff]
    %v9673 = vld [vmem:[#allocation10 + $0x30] sm:$0xff]
    %v9674 = vld [vmem:[#allocation10 + $0x38] sm:$0xff]
    %v9675 = vld [vmem:[#allocation10 + $0x40] sm:$0xff]
    %v9676 = vld [vmem:[#allocation10 + $0x48] sm:$0xff]
    %v9677 = vld [vmem:[#allocation10 + $0x50] sm:$0xff]
    %v9678 = vld [vmem:[#allocation10 + $0x58] sm:$0xff]
    %v9679 = vld [vmem:[#allocation10 + $0x60] sm:$0xff]
    %v9680 = vld [vmem:[#allocation10 + $0x68] sm:$0xff]
    %v9681 = vld [vmem:[#allocation10 + $0x70] sm:$0xff]
    %v9682 = vld [vmem:[#allocation10 + $0x78] sm:$0xff]
    %v9683 = vld [vmem:[#allocation10 + $0x80] sm:$0xff]
    %v9684 = vld [vmem:[#allocation10 + $0x88] sm:$0xff]
    %v9685 = vld [vmem:[#allocation10 + $0x90] sm:$0xff]
    %v9686 = vld [vmem:[#allocation10 + $0x98] sm:$0xff]
    %v9687 = vld [vmem:[#allocation10 + $0xa0] sm:$0xff]
    %v9688 = vld [vmem:[#allocation10 + $0xa8] sm:$0xff]
    %v9689 = vld [vmem:[#allocation10 + $0xb0] sm:$0xff]
    %v9690 = vld [vmem:[#allocation10 + $0xb8] sm:$0xff]
    %v9691 = vld [vmem:[#allocation10 + $0xc0] sm:$0xff]
    %v9692 = vld [vmem:[#allocation10 + $0xc8] sm:$0xff]
    %v9693 = vld [vmem:[#allocation10 + $0xd0] sm:$0xff]
    %v9694 = vld [vmem:[#allocation10 + $0xd8] sm:$0xff]
    %v9695 = vld [vmem:[#allocation10 + $0xe0] sm:$0xff]
    %v9696 = vld [vmem:[#allocation10 + $0xe8] sm:$0xff]
    %v9697 = vld [vmem:[#allocation10 + $0xf0] sm:$0xff]
    %v9698 = vld [vmem:[#allocation10 + $0xf8] sm:$0xff]
    %v9699 = vld [vmem:[#allocation11] sm:$0xf]
    %v9701 = vperm.slane %v9699, 0
    %v9702 = vperm.slane %v9699, 1
    %v9703 = vperm.slane %v9699, 2
    %v9704 = vperm.slane %v9699, 3
    %v9741 = vunpack.c.l.b16 %v9667
    %v9742 = vunpack.c.h.b16 %v9667
    %v9743 = vunpack.c.l.b16 %v9668
    %v9744 = vunpack.c.h.b16 %v9668
    %v9745 = vunpack.c.l.b16 %v9669
    %v9746 = vunpack.c.h.b16 %v9669
    %v9747 = vunpack.c.l.b16 %v9670
    %v9748 = vunpack.c.h.b16 %v9670
    %v9749 = vunpack.c.l.b16 %v9671
    %v9750 = vunpack.c.h.b16 %v9671
    %v9751 = vunpack.c.l.b16 %v9672
    %v9752 = vunpack.c.h.b16 %v9672
    %v9753 = vunpack.c.l.b16 %v9673
    %v9754 = vunpack.c.h.b16 %v9673
    %v9755 = vunpack.c.l.b16 %v9674
    %v9756 = vunpack.c.h.b16 %v9674
    %v9757 = vunpack.c.l.b16 %v9675
    %v9758 = vunpack.c.h.b16 %v9675
    %v9759 = vunpack.c.l.b16 %v9676
    %v9760 = vunpack.c.h.b16 %v9676
    %v9761 = vunpack.c.l.b16 %v9677
    %v9762 = vunpack.c.h.b16 %v9677
    %v9763 = vunpack.c.l.b16 %v9678
    %v9764 = vunpack.c.h.b16 %v9678
    %v9765 = vunpack.c.l.b16 %v9679
    %v9766 = vunpack.c.h.b16 %v9679
    %v9767 = vunpack.c.l.b16 %v9680
    %v9768 = vunpack.c.h.b16 %v9680
    %v9769 = vunpack.c.l.b16 %v9681
    %v9770 = vunpack.c.h.b16 %v9681
    %v9771 = vunpack.c.l.b16 %v9682
    %v9772 = vunpack.c.h.b16 %v9682
    %v9773 = vunpack.c.l.b16 %v9683
    %v9774 = vunpack.c.h.b16 %v9683
    %v9775 = vunpack.c.l.b16 %v9684
    %v9776 = vunpack.c.h.b16 %v9684
    %v9777 = vunpack.c.l.b16 %v9685
    %v9778 = vunpack.c.h.b16 %v9685
    %v9779 = vunpack.c.l.b16 %v9686
    %v9780 = vunpack.c.h.b16 %v9686
    %v9781 = vunpack.c.l.b16 %v9687
    %v9782 = vunpack.c.h.b16 %v9687
    %v9783 = vunpack.c.l.b16 %v9688
    %v9784 = vunpack.c.h.b16 %v9688
    %v9785 = vunpack.c.l.b16 %v9689
    %v9786 = vunpack.c.h.b16 %v9689
    %v9787 = vunpack.c.l.b16 %v9690
    %v9788 = vunpack.c.h.b16 %v9690
    %v9789 = vunpack.c.l.b16 %v9691
    %v9790 = vunpack.c.h.b16 %v9691
    %v9791 = vunpack.c.l.b16 %v9692
    %v9792 = vunpack.c.h.b16 %v9692
    %v9793 = vunpack.c.l.b16 %v9693
    %v9794 = vunpack.c.h.b16 %v9693
    %v9795 = vunpack.c.l.b16 %v9694
    %v9796 = vunpack.c.h.b16 %v9694
    %v9797 = vunpack.c.l.b16 %v9695
    %v9798 = vunpack.c.h.b16 %v9695
    %v9799 = vunpack.c.l.b16 %v9696
    %v9800 = vunpack.c.h.b16 %v9696
    %v9801 = vunpack.c.l.b16 %v9697
    %v9802 = vunpack.c.h.b16 %v9697
    %v9803 = vunpack.c.l.b16 %v9698
    %v9804 = vunpack.c.h.b16 %v9698
    %v9805 = vpack.c.b16 %v9745, %v9741
    %v9806 = vpack.c.b16 %v9746, %v9742
    %v9807 = vpack.c.b16 %v9747, %v9743
    %v9808 = vpack.c.b16 %v9748, %v9744
    %v9809 = vpack.c.b16 %v9753, %v9749
    %v9810 = vpack.c.b16 %v9754, %v9750
    %v9811 = vpack.c.b16 %v9755, %v9751
    %v9812 = vpack.c.b16 %v9756, %v9752
    %v9813 = vpack.c.b16 %v9761, %v9757
    %v9814 = vpack.c.b16 %v9762, %v9758
    %v9815 = vpack.c.b16 %v9763, %v9759
    %v9816 = vpack.c.b16 %v9764, %v9760
    %v9817 = vpack.c.b16 %v9769, %v9765
    %v9818 = vpack.c.b16 %v9770, %v9766
    %v9819 = vpack.c.b16 %v9771, %v9767
    %v9820 = vpack.c.b16 %v9772, %v9768
    %v9821 = vpack.c.b16 %v9777, %v9773
    %v9822 = vpack.c.b16 %v9778, %v9774
    %v9823 = vpack.c.b16 %v9779, %v9775
    %v9824 = vpack.c.b16 %v9780, %v9776
    %v9825 = vpack.c.b16 %v9785, %v9781
    %v9826 = vpack.c.b16 %v9786, %v9782
    %v9827 = vpack.c.b16 %v9787, %v9783
    %v9828 = vpack.c.b16 %v9788, %v9784
    %v9829 = vpack.c.b16 %v9793, %v9789
    %v9830 = vpack.c.b16 %v9794, %v9790
    %v9831 = vpack.c.b16 %v9795, %v9791
    %v9832 = vpack.c.b16 %v9796, %v9792
    %v9833 = vpack.c.b16 %v9801, %v9797
    %v9834 = vpack.c.b16 %v9802, %v9798
    %v9835 = vpack.c.b16 %v9803, %v9799
    %v9836 = vpack.c.b16 %v9804, %v9800
    %9869 = vmatpush.bf16.msra.mxu0 %v9833
    %9870 = vmatpush.bf16.msra.mxu0 %v9829
    %9871 = vmatpush.bf16.msra.mxu0 %v9825
    %9872 = vmatpush.bf16.msra.mxu0 %v9821
    %9873 = vmatpush.bf16.msra.mxu0 %v9817
    %9874 = vmatpush.bf16.msra.mxu0 %v9813
    %9875 = vmatpush.bf16.msra.mxu0 %v9809
    %9876 = vmatpush.bf16.msra.mxu0 %v9805
    %9877 = vmatmul.bf16.gmra.mxu0 %v384
    %v9878 = vpop.f32.mrf.mxu0
    %v9879 = vadd.f32 %v9701, %v9878
    %v9880 = vpop.f32.mrf.mxu0
    %9881 = vdwg.mxu0
    %9882 = vmatpush.bf16.msra.mxu0 %v9834
    %9883 = vmatpush.bf16.msra.mxu0 %v9830
    %9884 = vmatpush.bf16.msra.mxu0 %v9826
    %9885 = vmatpush.bf16.msra.mxu0 %v9822
    %9886 = vmatpush.bf16.msra.mxu0 %v9818
    %9887 = vmatpush.bf16.msra.mxu0 %v9814
    %9888 = vmatpush.bf16.msra.mxu0 %v9810
    %9889 = vmatpush.bf16.msra.mxu0 %v9806
    %9890 = vmatmul.bf16.gmra.mxu0 %v384
    %v9891 = vpop.f32.mrf.mxu0
    %v9892 = vadd.f32 %v9702, %v9891
    %v9893 = vpop.f32.mrf.mxu0
    %9894 = vdwg.mxu0
    %9895 = vmatpush.bf16.msra.mxu0 %v9835
    %9896 = vmatpush.bf16.msra.mxu0 %v9831
    %9897 = vmatpush.bf16.msra.mxu0 %v9827
    %9898 = vmatpush.bf16.msra.mxu0 %v9823
    %9899 = vmatpush.bf16.msra.mxu0 %v9819
    %9900 = vmatpush.bf16.msra.mxu0 %v9815
    %9901 = vmatpush.bf16.msra.mxu0 %v9811
    %9902 = vmatpush.bf16.msra.mxu0 %v9807
    %9903 = vmatmul.bf16.gmra.mxu0 %v384
    %v9904 = vpop.f32.mrf.mxu0
    %v9905 = vadd.f32 %v9703, %v9904
    %v9906 = vpop.f32.mrf.mxu0
    %9907 = vdwg.mxu0
    %9908 = vmatpush.bf16.msra.mxu0 %v9836
    %9909 = vmatpush.bf16.msra.mxu0 %v9832
    %9910 = vmatpush.bf16.msra.mxu0 %v9828
    %9911 = vmatpush.bf16.msra.mxu0 %v9824
    %9912 = vmatpush.bf16.msra.mxu0 %v9820
    %9913 = vmatpush.bf16.msra.mxu0 %v9816
    %9914 = vmatpush.bf16.msra.mxu0 %v9812
    %9915 = vmatpush.bf16.msra.mxu0 %v9808
    %9916 = vmatmul.bf16.gmra.mxu0 %v384
    %v9917 = vpop.f32.mrf.mxu0
    %v9918 = vadd.f32 %v9704, %v9917
    %v9919 = vpop.f32.mrf.mxu0
    %9920 = vdwg.mxu0
    %v9921 = vpack.c.bf16 %v8182, %v8182
    %v9922 = vpack.c.bf16 %v8676, %v8676
    %v9923 = vpack.c.bf16 %v9170, %v9170
    %v9924 = vpack.c.bf16 %v9664, %v9664
    %v9925 = vld [vmem:[#allocation13] sm:$0xff]
    %v9926 = vld [vmem:[#allocation13 + $0x8] sm:$0xff]
    %v9927 = vld [vmem:[#allocation13 + $0x10] sm:$0xff]
    %v9928 = vld [vmem:[#allocation13 + $0x18] sm:$0xff]
    %v9929 = vld [vmem:[#allocation13 + $0x20] sm:$0xff]
    %v9930 = vld [vmem:[#allocation13 + $0x28] sm:$0xff]
    %v9931 = vld [vmem:[#allocation13 + $0x30] sm:$0xff]
    %v9932 = vld [vmem:[#allocation13 + $0x38] sm:$0xff]
    %v9933 = vld [vmem:[#allocation13 + $0x40] sm:$0xff]
    %v9934 = vld [vmem:[#allocation13 + $0x48] sm:$0xff]
    %v9935 = vld [vmem:[#allocation13 + $0x50] sm:$0xff]
    %v9936 = vld [vmem:[#allocation13 + $0x58] sm:$0xff]
    %v9937 = vld [vmem:[#allocation13 + $0x60] sm:$0xff]
    %v9938 = vld [vmem:[#allocation13 + $0x68] sm:$0xff]
    %v9939 = vld [vmem:[#allocation13 + $0x70] sm:$0xff]
    %v9940 = vld [vmem:[#allocation13 + $0x78] sm:$0xff]
    %v9941 = vld [vmem:[#allocation13 + $0x80] sm:$0xff]
    %v9942 = vld [vmem:[#allocation13 + $0x88] sm:$0xff]
    %v9943 = vld [vmem:[#allocation13 + $0x90] sm:$0xff]
    %v9944 = vld [vmem:[#allocation13 + $0x98] sm:$0xff]
    %v9945 = vld [vmem:[#allocation13 + $0xa0] sm:$0xff]
    %v9946 = vld [vmem:[#allocation13 + $0xa8] sm:$0xff]
    %v9947 = vld [vmem:[#allocation13 + $0xb0] sm:$0xff]
    %v9948 = vld [vmem:[#allocation13 + $0xb8] sm:$0xff]
    %v9949 = vld [vmem:[#allocation13 + $0xc0] sm:$0xff]
    %v9950 = vld [vmem:[#allocation13 + $0xc8] sm:$0xff]
    %v9951 = vld [vmem:[#allocation13 + $0xd0] sm:$0xff]
    %v9952 = vld [vmem:[#allocation13 + $0xd8] sm:$0xff]
    %v9953 = vld [vmem:[#allocation13 + $0xe0] sm:$0xff]
    %v9954 = vld [vmem:[#allocation13 + $0xe8] sm:$0xff]
    %v9955 = vld [vmem:[#allocation13 + $0xf0] sm:$0xff]
    %v9956 = vld [vmem:[#allocation13 + $0xf8] sm:$0xff]
    %v9957 = vld [vmem:[#allocation13 + $0x100] sm:$0xff]
    %v9958 = vld [vmem:[#allocation13 + $0x108] sm:$0xff]
    %v9959 = vld [vmem:[#allocation13 + $0x110] sm:$0xff]
    %v9960 = vld [vmem:[#allocation13 + $0x118] sm:$0xff]
    %v9961 = vld [vmem:[#allocation13 + $0x120] sm:$0xff]
    %v9962 = vld [vmem:[#allocation13 + $0x128] sm:$0xff]
    %v9963 = vld [vmem:[#allocation13 + $0x130] sm:$0xff]
    %v9964 = vld [vmem:[#allocation13 + $0x138] sm:$0xff]
    %v9965 = vld [vmem:[#allocation13 + $0x140] sm:$0xff]
    %v9966 = vld [vmem:[#allocation13 + $0x148] sm:$0xff]
    %v9967 = vld [vmem:[#allocation13 + $0x150] sm:$0xff]
    %v9968 = vld [vmem:[#allocation13 + $0x158] sm:$0xff]
    %v9969 = vld [vmem:[#allocation13 + $0x160] sm:$0xff]
    %v9970 = vld [vmem:[#allocation13 + $0x168] sm:$0xff]
    %v9971 = vld [vmem:[#allocation13 + $0x170] sm:$0xff]
    %v9972 = vld [vmem:[#allocation13 + $0x178] sm:$0xff]
    %v9973 = vld [vmem:[#allocation13 + $0x180] sm:$0xff]
    %v9974 = vld [vmem:[#allocation13 + $0x188] sm:$0xff]
    %v9975 = vld [vmem:[#allocation13 + $0x190] sm:$0xff]
    %v9976 = vld [vmem:[#allocation13 + $0x198] sm:$0xff]
    %v9977 = vld [vmem:[#allocation13 + $0x1a0] sm:$0xff]
    %v9978 = vld [vmem:[#allocation13 + $0x1a8] sm:$0xff]
    %v9979 = vld [vmem:[#allocation13 + $0x1b0] sm:$0xff]
    %v9980 = vld [vmem:[#allocation13 + $0x1b8] sm:$0xff]
    %v9981 = vld [vmem:[#allocation13 + $0x1c0] sm:$0xff]
    %v9982 = vld [vmem:[#allocation13 + $0x1c8] sm:$0xff]
    %v9983 = vld [vmem:[#allocation13 + $0x1d0] sm:$0xff]
    %v9984 = vld [vmem:[#allocation13 + $0x1d8] sm:$0xff]
    %v9985 = vld [vmem:[#allocation13 + $0x1e0] sm:$0xff]
    %v9986 = vld [vmem:[#allocation13 + $0x1e8] sm:$0xff]
    %v9987 = vld [vmem:[#allocation13 + $0x1f0] sm:$0xff]
    %v9988 = vld [vmem:[#allocation13 + $0x1f8] sm:$0xff]
    %v9989 = vld [vmem:[#allocation13 + $0x200] sm:$0xff]
    %v9990 = vld [vmem:[#allocation13 + $0x208] sm:$0xff]
    %v9991 = vld [vmem:[#allocation13 + $0x210] sm:$0xff]
    %v9992 = vld [vmem:[#allocation13 + $0x218] sm:$0xff]
    %v9993 = vld [vmem:[#allocation13 + $0x220] sm:$0xff]
    %v9994 = vld [vmem:[#allocation13 + $0x228] sm:$0xff]
    %v9995 = vld [vmem:[#allocation13 + $0x230] sm:$0xff]
    %v9996 = vld [vmem:[#allocation13 + $0x238] sm:$0xff]
    %v9997 = vld [vmem:[#allocation13 + $0x240] sm:$0xff]
    %v9998 = vld [vmem:[#allocation13 + $0x248] sm:$0xff]
    %v9999 = vld [vmem:[#allocation13 + $0x250] sm:$0xff]
    %v10000 = vld [vmem:[#allocation13 + $0x258] sm:$0xff]
    %v10001 = vld [vmem:[#allocation13 + $0x260] sm:$0xff]
    %v10002 = vld [vmem:[#allocation13 + $0x268] sm:$0xff]
    %v10003 = vld [vmem:[#allocation13 + $0x270] sm:$0xff]
    %v10004 = vld [vmem:[#allocation13 + $0x278] sm:$0xff]
    %v10005 = vld [vmem:[#allocation13 + $0x280] sm:$0xff]
    %v10006 = vld [vmem:[#allocation13 + $0x288] sm:$0xff]
    %v10007 = vld [vmem:[#allocation13 + $0x290] sm:$0xff]
    %v10008 = vld [vmem:[#allocation13 + $0x298] sm:$0xff]
    %v10009 = vld [vmem:[#allocation13 + $0x2a0] sm:$0xff]
    %v10010 = vld [vmem:[#allocation13 + $0x2a8] sm:$0xff]
    %v10011 = vld [vmem:[#allocation13 + $0x2b0] sm:$0xff]
    %v10012 = vld [vmem:[#allocation13 + $0x2b8] sm:$0xff]
    %v10013 = vld [vmem:[#allocation13 + $0x2c0] sm:$0xff]
    %v10014 = vld [vmem:[#allocation13 + $0x2c8] sm:$0xff]
    %v10015 = vld [vmem:[#allocation13 + $0x2d0] sm:$0xff]
    %v10016 = vld [vmem:[#allocation13 + $0x2d8] sm:$0xff]
    %v10017 = vld [vmem:[#allocation13 + $0x2e0] sm:$0xff]
    %v10018 = vld [vmem:[#allocation13 + $0x2e8] sm:$0xff]
    %v10019 = vld [vmem:[#allocation13 + $0x2f0] sm:$0xff]
    %v10020 = vld [vmem:[#allocation13 + $0x2f8] sm:$0xff]
    %v10021 = vld [vmem:[#allocation13 + $0x300] sm:$0xff]
    %v10022 = vld [vmem:[#allocation13 + $0x308] sm:$0xff]
    %v10023 = vld [vmem:[#allocation13 + $0x310] sm:$0xff]
    %v10024 = vld [vmem:[#allocation13 + $0x318] sm:$0xff]
    %v10025 = vld [vmem:[#allocation13 + $0x320] sm:$0xff]
    %v10026 = vld [vmem:[#allocation13 + $0x328] sm:$0xff]
    %v10027 = vld [vmem:[#allocation13 + $0x330] sm:$0xff]
    %v10028 = vld [vmem:[#allocation13 + $0x338] sm:$0xff]
    %v10029 = vld [vmem:[#allocation13 + $0x340] sm:$0xff]
    %v10030 = vld [vmem:[#allocation13 + $0x348] sm:$0xff]
    %v10031 = vld [vmem:[#allocation13 + $0x350] sm:$0xff]
    %v10032 = vld [vmem:[#allocation13 + $0x358] sm:$0xff]
    %v10033 = vld [vmem:[#allocation13 + $0x360] sm:$0xff]
    %v10034 = vld [vmem:[#allocation13 + $0x368] sm:$0xff]
    %v10035 = vld [vmem:[#allocation13 + $0x370] sm:$0xff]
    %v10036 = vld [vmem:[#allocation13 + $0x378] sm:$0xff]
    %v10037 = vld [vmem:[#allocation13 + $0x380] sm:$0xff]
    %v10038 = vld [vmem:[#allocation13 + $0x388] sm:$0xff]
    %v10039 = vld [vmem:[#allocation13 + $0x390] sm:$0xff]
    %v10040 = vld [vmem:[#allocation13 + $0x398] sm:$0xff]
    %v10041 = vld [vmem:[#allocation13 + $0x3a0] sm:$0xff]
    %v10042 = vld [vmem:[#allocation13 + $0x3a8] sm:$0xff]
    %v10043 = vld [vmem:[#allocation13 + $0x3b0] sm:$0xff]
    %v10044 = vld [vmem:[#allocation13 + $0x3b8] sm:$0xff]
    %v10045 = vld [vmem:[#allocation13 + $0x3c0] sm:$0xff]
    %v10046 = vld [vmem:[#allocation13 + $0x3c8] sm:$0xff]
    %v10047 = vld [vmem:[#allocation13 + $0x3d0] sm:$0xff]
    %v10048 = vld [vmem:[#allocation13 + $0x3d8] sm:$0xff]
    %v10049 = vld [vmem:[#allocation13 + $0x3e0] sm:$0xff]
    %v10050 = vld [vmem:[#allocation13 + $0x3e8] sm:$0xff]
    %v10051 = vld [vmem:[#allocation13 + $0x3f0] sm:$0xff]
    %v10052 = vld [vmem:[#allocation13 + $0x3f8] sm:$0xff]
    %v10053 = vpack.c.bf16 %v9879, %v9879
    %v10054 = vpack.c.bf16 %v9892, %v9892
    %v10055 = vpack.c.bf16 %v9905, %v9905
    %v10056 = vpack.c.bf16 %v9918, %v9918
    %v10057 = vld [vmem:[#allocation14] sm:$0xff]
    %v10058 = vld [vmem:[#allocation14 + $0x8] sm:$0xff]
    %v10059 = vld [vmem:[#allocation14 + $0x10] sm:$0xff]
    %v10060 = vld [vmem:[#allocation14 + $0x18] sm:$0xff]
    %v10061 = vld [vmem:[#allocation14 + $0x20] sm:$0xff]
    %v10062 = vld [vmem:[#allocation14 + $0x28] sm:$0xff]
    %v10063 = vld [vmem:[#allocation14 + $0x30] sm:$0xff]
    %v10064 = vld [vmem:[#allocation14 + $0x38] sm:$0xff]
    %v10065 = vld [vmem:[#allocation14 + $0x40] sm:$0xff]
    %v10066 = vld [vmem:[#allocation14 + $0x48] sm:$0xff]
    %v10067 = vld [vmem:[#allocation14 + $0x50] sm:$0xff]
    %v10068 = vld [vmem:[#allocation14 + $0x58] sm:$0xff]
    %v10069 = vld [vmem:[#allocation14 + $0x60] sm:$0xff]
    %v10070 = vld [vmem:[#allocation14 + $0x68] sm:$0xff]
    %v10071 = vld [vmem:[#allocation14 + $0x70] sm:$0xff]
    %v10072 = vld [vmem:[#allocation14 + $0x78] sm:$0xff]
    %v10073 = vld [vmem:[#allocation14 + $0x80] sm:$0xff]
    %v10074 = vld [vmem:[#allocation14 + $0x88] sm:$0xff]
    %v10075 = vld [vmem:[#allocation14 + $0x90] sm:$0xff]
    %v10076 = vld [vmem:[#allocation14 + $0x98] sm:$0xff]
    %v10077 = vld [vmem:[#allocation14 + $0xa0] sm:$0xff]
    %v10078 = vld [vmem:[#allocation14 + $0xa8] sm:$0xff]
    %v10079 = vld [vmem:[#allocation14 + $0xb0] sm:$0xff]
    %v10080 = vld [vmem:[#allocation14 + $0xb8] sm:$0xff]
    %v10081 = vld [vmem:[#allocation14 + $0xc0] sm:$0xff]
    %v10082 = vld [vmem:[#allocation14 + $0xc8] sm:$0xff]
    %v10083 = vld [vmem:[#allocation14 + $0xd0] sm:$0xff]
    %v10084 = vld [vmem:[#allocation14 + $0xd8] sm:$0xff]
    %v10085 = vld [vmem:[#allocation14 + $0xe0] sm:$0xff]
    %v10086 = vld [vmem:[#allocation14 + $0xe8] sm:$0xff]
    %v10087 = vld [vmem:[#allocation14 + $0xf0] sm:$0xff]
    %v10088 = vld [vmem:[#allocation14 + $0xf8] sm:$0xff]
    %v10089 = vld [vmem:[#allocation14 + $0x100] sm:$0xff]
    %v10090 = vld [vmem:[#allocation14 + $0x108] sm:$0xff]
    %v10091 = vld [vmem:[#allocation14 + $0x110] sm:$0xff]
    %v10092 = vld [vmem:[#allocation14 + $0x118] sm:$0xff]
    %v10093 = vld [vmem:[#allocation14 + $0x120] sm:$0xff]
    %v10094 = vld [vmem:[#allocation14 + $0x128] sm:$0xff]
    %v10095 = vld [vmem:[#allocation14 + $0x130] sm:$0xff]
    %v10096 = vld [vmem:[#allocation14 + $0x138] sm:$0xff]
    %v10097 = vld [vmem:[#allocation14 + $0x140] sm:$0xff]
    %v10098 = vld [vmem:[#allocation14 + $0x148] sm:$0xff]
    %v10099 = vld [vmem:[#allocation14 + $0x150] sm:$0xff]
    %v10100 = vld [vmem:[#allocation14 + $0x158] sm:$0xff]
    %v10101 = vld [vmem:[#allocation14 + $0x160] sm:$0xff]
    %v10102 = vld [vmem:[#allocation14 + $0x168] sm:$0xff]
    %v10103 = vld [vmem:[#allocation14 + $0x170] sm:$0xff]
    %v10104 = vld [vmem:[#allocation14 + $0x178] sm:$0xff]
    %v10105 = vld [vmem:[#allocation14 + $0x180] sm:$0xff]
    %v10106 = vld [vmem:[#allocation14 + $0x188] sm:$0xff]
    %v10107 = vld [vmem:[#allocation14 + $0x190] sm:$0xff]
    %v10108 = vld [vmem:[#allocation14 + $0x198] sm:$0xff]
    %v10109 = vld [vmem:[#allocation14 + $0x1a0] sm:$0xff]
    %v10110 = vld [vmem:[#allocation14 + $0x1a8] sm:$0xff]
    %v10111 = vld [vmem:[#allocation14 + $0x1b0] sm:$0xff]
    %v10112 = vld [vmem:[#allocation14 + $0x1b8] sm:$0xff]
    %v10113 = vld [vmem:[#allocation14 + $0x1c0] sm:$0xff]
    %v10114 = vld [vmem:[#allocation14 + $0x1c8] sm:$0xff]
    %v10115 = vld [vmem:[#allocation14 + $0x1d0] sm:$0xff]
    %v10116 = vld [vmem:[#allocation14 + $0x1d8] sm:$0xff]
    %v10117 = vld [vmem:[#allocation14 + $0x1e0] sm:$0xff]
    %v10118 = vld [vmem:[#allocation14 + $0x1e8] sm:$0xff]
    %v10119 = vld [vmem:[#allocation14 + $0x1f0] sm:$0xff]
    %v10120 = vld [vmem:[#allocation14 + $0x1f8] sm:$0xff]
    %v10121 = vld [vmem:[#allocation14 + $0x200] sm:$0xff]
    %v10122 = vld [vmem:[#allocation14 + $0x208] sm:$0xff]
    %v10123 = vld [vmem:[#allocation14 + $0x210] sm:$0xff]
    %v10124 = vld [vmem:[#allocation14 + $0x218] sm:$0xff]
    %v10125 = vld [vmem:[#allocation14 + $0x220] sm:$0xff]
    %v10126 = vld [vmem:[#allocation14 + $0x228] sm:$0xff]
    %v10127 = vld [vmem:[#allocation14 + $0x230] sm:$0xff]
    %v10128 = vld [vmem:[#allocation14 + $0x238] sm:$0xff]
    %v10129 = vld [vmem:[#allocation14 + $0x240] sm:$0xff]
    %v10130 = vld [vmem:[#allocation14 + $0x248] sm:$0xff]
    %v10131 = vld [vmem:[#allocation14 + $0x250] sm:$0xff]
    %v10132 = vld [vmem:[#allocation14 + $0x258] sm:$0xff]
    %v10133 = vld [vmem:[#allocation14 + $0x260] sm:$0xff]
    %v10134 = vld [vmem:[#allocation14 + $0x268] sm:$0xff]
    %v10135 = vld [vmem:[#allocation14 + $0x270] sm:$0xff]
    %v10136 = vld [vmem:[#allocation14 + $0x278] sm:$0xff]
    %v10137 = vld [vmem:[#allocation14 + $0x280] sm:$0xff]
    %v10138 = vld [vmem:[#allocation14 + $0x288] sm:$0xff]
    %v10139 = vld [vmem:[#allocation14 + $0x290] sm:$0xff]
    %v10140 = vld [vmem:[#allocation14 + $0x298] sm:$0xff]
    %v10141 = vld [vmem:[#allocation14 + $0x2a0] sm:$0xff]
    %v10142 = vld [vmem:[#allocation14 + $0x2a8] sm:$0xff]
    %v10143 = vld [vmem:[#allocation14 + $0x2b0] sm:$0xff]
    %v10144 = vld [vmem:[#allocation14 + $0x2b8] sm:$0xff]
    %v10145 = vld [vmem:[#allocation14 + $0x2c0] sm:$0xff]
    %v10146 = vld [vmem:[#allocation14 + $0x2c8] sm:$0xff]
    %v10147 = vld [vmem:[#allocation14 + $0x2d0] sm:$0xff]
    %v10148 = vld [vmem:[#allocation14 + $0x2d8] sm:$0xff]
    %v10149 = vld [vmem:[#allocation14 + $0x2e0] sm:$0xff]
    %v10150 = vld [vmem:[#allocation14 + $0x2e8] sm:$0xff]
    %v10151 = vld [vmem:[#allocation14 + $0x2f0] sm:$0xff]
    %v10152 = vld [vmem:[#allocation14 + $0x2f8] sm:$0xff]
    %v10153 = vld [vmem:[#allocation14 + $0x300] sm:$0xff]
    %v10154 = vld [vmem:[#allocation14 + $0x308] sm:$0xff]
    %v10155 = vld [vmem:[#allocation14 + $0x310] sm:$0xff]
    %v10156 = vld [vmem:[#allocation14 + $0x318] sm:$0xff]
    %v10157 = vld [vmem:[#allocation14 + $0x320] sm:$0xff]
    %v10158 = vld [vmem:[#allocation14 + $0x328] sm:$0xff]
    %v10159 = vld [vmem:[#allocation14 + $0x330] sm:$0xff]
    %v10160 = vld [vmem:[#allocation14 + $0x338] sm:$0xff]
    %v10161 = vld [vmem:[#allocation14 + $0x340] sm:$0xff]
    %v10162 = vld [vmem:[#allocation14 + $0x348] sm:$0xff]
    %v10163 = vld [vmem:[#allocation14 + $0x350] sm:$0xff]
    %v10164 = vld [vmem:[#allocation14 + $0x358] sm:$0xff]
    %v10165 = vld [vmem:[#allocation14 + $0x360] sm:$0xff]
    %v10166 = vld [vmem:[#allocation14 + $0x368] sm:$0xff]
    %v10167 = vld [vmem:[#allocation14 + $0x370] sm:$0xff]
    %v10168 = vld [vmem:[#allocation14 + $0x378] sm:$0xff]
    %v10169 = vld [vmem:[#allocation14 + $0x380] sm:$0xff]
    %v10170 = vld [vmem:[#allocation14 + $0x388] sm:$0xff]
    %v10171 = vld [vmem:[#allocation14 + $0x390] sm:$0xff]
    %v10172 = vld [vmem:[#allocation14 + $0x398] sm:$0xff]
    %v10173 = vld [vmem:[#allocation14 + $0x3a0] sm:$0xff]
    %v10174 = vld [vmem:[#allocation14 + $0x3a8] sm:$0xff]
    %v10175 = vld [vmem:[#allocation14 + $0x3b0] sm:$0xff]
    %v10176 = vld [vmem:[#allocation14 + $0x3b8] sm:$0xff]
    %v10177 = vld [vmem:[#allocation14 + $0x3c0] sm:$0xff]
    %v10178 = vld [vmem:[#allocation14 + $0x3c8] sm:$0xff]
    %v10179 = vld [vmem:[#allocation14 + $0x3d0] sm:$0xff]
    %v10180 = vld [vmem:[#allocation14 + $0x3d8] sm:$0xff]
    %v10181 = vld [vmem:[#allocation14 + $0x3e0] sm:$0xff]
    %v10182 = vld [vmem:[#allocation14 + $0x3e8] sm:$0xff]
    %v10183 = vld [vmem:[#allocation14 + $0x3f0] sm:$0xff]
    %v10184 = vld [vmem:[#allocation14 + $0x3f8] sm:$0xff]
    %v10313 = vunpack.c.l.b16 %v10057
    %v10314 = vunpack.c.h.b16 %v10057
    %v10315 = vunpack.c.l.b16 %v10058
    %v10316 = vunpack.c.h.b16 %v10058
    %v10317 = vunpack.c.l.b16 %v10059
    %v10318 = vunpack.c.h.b16 %v10059
    %v10319 = vunpack.c.l.b16 %v10060
    %v10320 = vunpack.c.h.b16 %v10060
    %v10321 = vunpack.c.l.b16 %v10061
    %v10322 = vunpack.c.h.b16 %v10061
    %v10323 = vunpack.c.l.b16 %v10062
    %v10324 = vunpack.c.h.b16 %v10062
    %v10325 = vunpack.c.l.b16 %v10063
    %v10326 = vunpack.c.h.b16 %v10063
    %v10327 = vunpack.c.l.b16 %v10064
    %v10328 = vunpack.c.h.b16 %v10064
    %v10329 = vunpack.c.l.b16 %v10065
    %v10330 = vunpack.c.h.b16 %v10065
    %v10331 = vunpack.c.l.b16 %v10066
    %v10332 = vunpack.c.h.b16 %v10066
    %v10333 = vunpack.c.l.b16 %v10067
    %v10334 = vunpack.c.h.b16 %v10067
    %v10335 = vunpack.c.l.b16 %v10068
    %v10336 = vunpack.c.h.b16 %v10068
    %v10337 = vunpack.c.l.b16 %v10069
    %v10338 = vunpack.c.h.b16 %v10069
    %v10339 = vunpack.c.l.b16 %v10070
    %v10340 = vunpack.c.h.b16 %v10070
    %v10341 = vunpack.c.l.b16 %v10071
    %v10342 = vunpack.c.h.b16 %v10071
    %v10343 = vunpack.c.l.b16 %v10072
    %v10344 = vunpack.c.h.b16 %v10072
    %v10345 = vunpack.c.l.b16 %v10073
    %v10346 = vunpack.c.h.b16 %v10073
    %v10347 = vunpack.c.l.b16 %v10074
    %v10348 = vunpack.c.h.b16 %v10074
    %v10349 = vunpack.c.l.b16 %v10075
    %v10350 = vunpack.c.h.b16 %v10075
    %v10351 = vunpack.c.l.b16 %v10076
    %v10352 = vunpack.c.h.b16 %v10076
    %v10353 = vunpack.c.l.b16 %v10077
    %v10354 = vunpack.c.h.b16 %v10077
    %v10355 = vunpack.c.l.b16 %v10078
    %v10356 = vunpack.c.h.b16 %v10078
    %v10357 = vunpack.c.l.b16 %v10079
    %v10358 = vunpack.c.h.b16 %v10079
    %v10359 = vunpack.c.l.b16 %v10080
    %v10360 = vunpack.c.h.b16 %v10080
    %v10361 = vunpack.c.l.b16 %v10081
    %v10362 = vunpack.c.h.b16 %v10081
    %v10363 = vunpack.c.l.b16 %v10082
    %v10364 = vunpack.c.h.b16 %v10082
    %v10365 = vunpack.c.l.b16 %v10083
    %v10366 = vunpack.c.h.b16 %v10083
    %v10367 = vunpack.c.l.b16 %v10084
    %v10368 = vunpack.c.h.b16 %v10084
    %v10369 = vunpack.c.l.b16 %v10085
    %v10370 = vunpack.c.h.b16 %v10085
    %v10371 = vunpack.c.l.b16 %v10086
    %v10372 = vunpack.c.h.b16 %v10086
    %v10373 = vunpack.c.l.b16 %v10087
    %v10374 = vunpack.c.h.b16 %v10087
    %v10375 = vunpack.c.l.b16 %v10088
    %v10376 = vunpack.c.h.b16 %v10088
    %v10377 = vunpack.c.l.b16 %v10089
    %v10378 = vunpack.c.h.b16 %v10089
    %v10379 = vunpack.c.l.b16 %v10090
    %v10380 = vunpack.c.h.b16 %v10090
    %v10381 = vunpack.c.l.b16 %v10091
    %v10382 = vunpack.c.h.b16 %v10091
    %v10383 = vunpack.c.l.b16 %v10092
    %v10384 = vunpack.c.h.b16 %v10092
    %v10385 = vunpack.c.l.b16 %v10093
    %v10386 = vunpack.c.h.b16 %v10093
    %v10387 = vunpack.c.l.b16 %v10094
    %v10388 = vunpack.c.h.b16 %v10094
    %v10389 = vunpack.c.l.b16 %v10095
    %v10390 = vunpack.c.h.b16 %v10095
    %v10391 = vunpack.c.l.b16 %v10096
    %v10392 = vunpack.c.h.b16 %v10096
    %v10393 = vunpack.c.l.b16 %v10097
    %v10394 = vunpack.c.h.b16 %v10097
    %v10395 = vunpack.c.l.b16 %v10098
    %v10396 = vunpack.c.h.b16 %v10098
    %v10397 = vunpack.c.l.b16 %v10099
    %v10398 = vunpack.c.h.b16 %v10099
    %v10399 = vunpack.c.l.b16 %v10100
    %v10400 = vunpack.c.h.b16 %v10100
    %v10401 = vunpack.c.l.b16 %v10101
    %v10402 = vunpack.c.h.b16 %v10101
    %v10403 = vunpack.c.l.b16 %v10102
    %v10404 = vunpack.c.h.b16 %v10102
    %v10405 = vunpack.c.l.b16 %v10103
    %v10406 = vunpack.c.h.b16 %v10103
    %v10407 = vunpack.c.l.b16 %v10104
    %v10408 = vunpack.c.h.b16 %v10104
    %v10409 = vunpack.c.l.b16 %v10105
    %v10410 = vunpack.c.h.b16 %v10105
    %v10411 = vunpack.c.l.b16 %v10106
    %v10412 = vunpack.c.h.b16 %v10106
    %v10413 = vunpack.c.l.b16 %v10107
    %v10414 = vunpack.c.h.b16 %v10107
    %v10415 = vunpack.c.l.b16 %v10108
    %v10416 = vunpack.c.h.b16 %v10108
    %v10417 = vunpack.c.l.b16 %v10109
    %v10418 = vunpack.c.h.b16 %v10109
    %v10419 = vunpack.c.l.b16 %v10110
    %v10420 = vunpack.c.h.b16 %v10110
    %v10421 = vunpack.c.l.b16 %v10111
    %v10422 = vunpack.c.h.b16 %v10111
    %v10423 = vunpack.c.l.b16 %v10112
    %v10424 = vunpack.c.h.b16 %v10112
    %v10425 = vunpack.c.l.b16 %v10113
    %v10426 = vunpack.c.h.b16 %v10113
    %v10427 = vunpack.c.l.b16 %v10114
    %v10428 = vunpack.c.h.b16 %v10114
    %v10429 = vunpack.c.l.b16 %v10115
    %v10430 = vunpack.c.h.b16 %v10115
    %v10431 = vunpack.c.l.b16 %v10116
    %v10432 = vunpack.c.h.b16 %v10116
    %v10433 = vunpack.c.l.b16 %v10117
    %v10434 = vunpack.c.h.b16 %v10117
    %v10435 = vunpack.c.l.b16 %v10118
    %v10436 = vunpack.c.h.b16 %v10118
    %v10437 = vunpack.c.l.b16 %v10119
    %v10438 = vunpack.c.h.b16 %v10119
    %v10439 = vunpack.c.l.b16 %v10120
    %v10440 = vunpack.c.h.b16 %v10120
    %v10441 = vunpack.c.l.b16 %v10121
    %v10442 = vunpack.c.h.b16 %v10121
    %v10443 = vunpack.c.l.b16 %v10122
    %v10444 = vunpack.c.h.b16 %v10122
    %v10445 = vunpack.c.l.b16 %v10123
    %v10446 = vunpack.c.h.b16 %v10123
    %v10447 = vunpack.c.l.b16 %v10124
    %v10448 = vunpack.c.h.b16 %v10124
    %v10449 = vunpack.c.l.b16 %v10125
    %v10450 = vunpack.c.h.b16 %v10125
    %v10451 = vunpack.c.l.b16 %v10126
    %v10452 = vunpack.c.h.b16 %v10126
    %v10453 = vunpack.c.l.b16 %v10127
    %v10454 = vunpack.c.h.b16 %v10127
    %v10455 = vunpack.c.l.b16 %v10128
    %v10456 = vunpack.c.h.b16 %v10128
    %v10457 = vunpack.c.l.b16 %v10129
    %v10458 = vunpack.c.h.b16 %v10129
    %v10459 = vunpack.c.l.b16 %v10130
    %v10460 = vunpack.c.h.b16 %v10130
    %v10461 = vunpack.c.l.b16 %v10131
    %v10462 = vunpack.c.h.b16 %v10131
    %v10463 = vunpack.c.l.b16 %v10132
    %v10464 = vunpack.c.h.b16 %v10132
    %v10465 = vunpack.c.l.b16 %v10133
    %v10466 = vunpack.c.h.b16 %v10133
    %v10467 = vunpack.c.l.b16 %v10134
    %v10468 = vunpack.c.h.b16 %v10134
    %v10469 = vunpack.c.l.b16 %v10135
    %v10470 = vunpack.c.h.b16 %v10135
    %v10471 = vunpack.c.l.b16 %v10136
    %v10472 = vunpack.c.h.b16 %v10136
    %v10473 = vunpack.c.l.b16 %v10137
    %v10474 = vunpack.c.h.b16 %v10137
    %v10475 = vunpack.c.l.b16 %v10138
    %v10476 = vunpack.c.h.b16 %v10138
    %v10477 = vunpack.c.l.b16 %v10139
    %v10478 = vunpack.c.h.b16 %v10139
    %v10479 = vunpack.c.l.b16 %v10140
    %v10480 = vunpack.c.h.b16 %v10140
    %v10481 = vunpack.c.l.b16 %v10141
    %v10482 = vunpack.c.h.b16 %v10141
    %v10483 = vunpack.c.l.b16 %v10142
    %v10484 = vunpack.c.h.b16 %v10142
    %v10485 = vunpack.c.l.b16 %v10143
    %v10486 = vunpack.c.h.b16 %v10143
    %v10487 = vunpack.c.l.b16 %v10144
    %v10488 = vunpack.c.h.b16 %v10144
    %v10489 = vunpack.c.l.b16 %v10145
    %v10490 = vunpack.c.h.b16 %v10145
    %v10491 = vunpack.c.l.b16 %v10146
    %v10492 = vunpack.c.h.b16 %v10146
    %v10493 = vunpack.c.l.b16 %v10147
    %v10494 = vunpack.c.h.b16 %v10147
    %v10495 = vunpack.c.l.b16 %v10148
    %v10496 = vunpack.c.h.b16 %v10148
    %v10497 = vunpack.c.l.b16 %v10149
    %v10498 = vunpack.c.h.b16 %v10149
    %v10499 = vunpack.c.l.b16 %v10150
    %v10500 = vunpack.c.h.b16 %v10150
    %v10501 = vunpack.c.l.b16 %v10151
    %v10502 = vunpack.c.h.b16 %v10151
    %v10503 = vunpack.c.l.b16 %v10152
    %v10504 = vunpack.c.h.b16 %v10152
    %v10505 = vunpack.c.l.b16 %v10153
    %v10506 = vunpack.c.h.b16 %v10153
    %v10507 = vunpack.c.l.b16 %v10154
    %v10508 = vunpack.c.h.b16 %v10154
    %v10509 = vunpack.c.l.b16 %v10155
    %v10510 = vunpack.c.h.b16 %v10155
    %v10511 = vunpack.c.l.b16 %v10156
    %v10512 = vunpack.c.h.b16 %v10156
    %v10513 = vunpack.c.l.b16 %v10157
    %v10514 = vunpack.c.h.b16 %v10157
    %v10515 = vunpack.c.l.b16 %v10158
    %v10516 = vunpack.c.h.b16 %v10158
    %v10517 = vunpack.c.l.b16 %v10159
    %v10518 = vunpack.c.h.b16 %v10159
    %v10519 = vunpack.c.l.b16 %v10160
    %v10520 = vunpack.c.h.b16 %v10160
    %v10521 = vunpack.c.l.b16 %v10161
    %v10522 = vunpack.c.h.b16 %v10161
    %v10523 = vunpack.c.l.b16 %v10162
    %v10524 = vunpack.c.h.b16 %v10162
    %v10525 = vunpack.c.l.b16 %v10163
    %v10526 = vunpack.c.h.b16 %v10163
    %v10527 = vunpack.c.l.b16 %v10164
    %v10528 = vunpack.c.h.b16 %v10164
    %v10529 = vunpack.c.l.b16 %v10165
    %v10530 = vunpack.c.h.b16 %v10165
    %v10531 = vunpack.c.l.b16 %v10166
    %v10532 = vunpack.c.h.b16 %v10166
    %v10533 = vunpack.c.l.b16 %v10167
    %v10534 = vunpack.c.h.b16 %v10167
    %v10535 = vunpack.c.l.b16 %v10168
    %v10536 = vunpack.c.h.b16 %v10168
    %v10537 = vunpack.c.l.b16 %v10169
    %v10538 = vunpack.c.h.b16 %v10169
    %v10539 = vunpack.c.l.b16 %v10170
    %v10540 = vunpack.c.h.b16 %v10170
    %v10541 = vunpack.c.l.b16 %v10171
    %v10542 = vunpack.c.h.b16 %v10171
    %v10543 = vunpack.c.l.b16 %v10172
    %v10544 = vunpack.c.h.b16 %v10172
    %v10545 = vunpack.c.l.b16 %v10173
    %v10546 = vunpack.c.h.b16 %v10173
    %v10547 = vunpack.c.l.b16 %v10174
    %v10548 = vunpack.c.h.b16 %v10174
    %v10549 = vunpack.c.l.b16 %v10175
    %v10550 = vunpack.c.h.b16 %v10175
    %v10551 = vunpack.c.l.b16 %v10176
    %v10552 = vunpack.c.h.b16 %v10176
    %v10553 = vunpack.c.l.b16 %v10177
    %v10554 = vunpack.c.h.b16 %v10177
    %v10555 = vunpack.c.l.b16 %v10178
    %v10556 = vunpack.c.h.b16 %v10178
    %v10557 = vunpack.c.l.b16 %v10179
    %v10558 = vunpack.c.h.b16 %v10179
    %v10559 = vunpack.c.l.b16 %v10180
    %v10560 = vunpack.c.h.b16 %v10180
    %v10561 = vunpack.c.l.b16 %v10181
    %v10562 = vunpack.c.h.b16 %v10181
    %v10563 = vunpack.c.l.b16 %v10182
    %v10564 = vunpack.c.h.b16 %v10182
    %v10565 = vunpack.c.l.b16 %v10183
    %v10566 = vunpack.c.h.b16 %v10183
    %v10567 = vunpack.c.l.b16 %v10184
    %v10568 = vunpack.c.h.b16 %v10184
    %v10569 = vpack.c.b16 %v10317, %v10313
    %v10570 = vpack.c.b16 %v10318, %v10314
    %v10571 = vpack.c.b16 %v10319, %v10315
    %v10572 = vpack.c.b16 %v10320, %v10316
    %v10573 = vpack.c.b16 %v10325, %v10321
    %v10574 = vpack.c.b16 %v10326, %v10322
    %v10575 = vpack.c.b16 %v10327, %v10323
    %v10576 = vpack.c.b16 %v10328, %v10324
    %v10577 = vpack.c.b16 %v10333, %v10329
    %v10578 = vpack.c.b16 %v10334, %v10330
    %v10579 = vpack.c.b16 %v10335, %v10331
    %v10580 = vpack.c.b16 %v10336, %v10332
    %v10581 = vpack.c.b16 %v10341, %v10337
    %v10582 = vpack.c.b16 %v10342, %v10338
    %v10583 = vpack.c.b16 %v10343, %v10339
    %v10584 = vpack.c.b16 %v10344, %v10340
    %v10585 = vpack.c.b16 %v10349, %v10345
    %v10586 = vpack.c.b16 %v10350, %v10346
    %v10587 = vpack.c.b16 %v10351, %v10347
    %v10588 = vpack.c.b16 %v10352, %v10348
    %v10589 = vpack.c.b16 %v10357, %v10353
    %v10590 = vpack.c.b16 %v10358, %v10354
    %v10591 = vpack.c.b16 %v10359, %v10355
    %v10592 = vpack.c.b16 %v10360, %v10356
    %v10593 = vpack.c.b16 %v10365, %v10361
    %v10594 = vpack.c.b16 %v10366, %v10362
    %v10595 = vpack.c.b16 %v10367, %v10363
    %v10596 = vpack.c.b16 %v10368, %v10364
    %v10597 = vpack.c.b16 %v10373, %v10369
    %v10598 = vpack.c.b16 %v10374, %v10370
    %v10599 = vpack.c.b16 %v10375, %v10371
    %v10600 = vpack.c.b16 %v10376, %v10372
    %v10601 = vpack.c.b16 %v10381, %v10377
    %v10602 = vpack.c.b16 %v10382, %v10378
    %v10603 = vpack.c.b16 %v10383, %v10379
    %v10604 = vpack.c.b16 %v10384, %v10380
    %v10605 = vpack.c.b16 %v10389, %v10385
    %v10606 = vpack.c.b16 %v10390, %v10386
    %v10607 = vpack.c.b16 %v10391, %v10387
    %v10608 = vpack.c.b16 %v10392, %v10388
    %v10609 = vpack.c.b16 %v10397, %v10393
    %v10610 = vpack.c.b16 %v10398, %v10394
    %v10611 = vpack.c.b16 %v10399, %v10395
    %v10612 = vpack.c.b16 %v10400, %v10396
    %v10613 = vpack.c.b16 %v10405, %v10401
    %v10614 = vpack.c.b16 %v10406, %v10402
    %v10615 = vpack.c.b16 %v10407, %v10403
    %v10616 = vpack.c.b16 %v10408, %v10404
    %v10617 = vpack.c.b16 %v10413, %v10409
    %v10618 = vpack.c.b16 %v10414, %v10410
    %v10619 = vpack.c.b16 %v10415, %v10411
    %v10620 = vpack.c.b16 %v10416, %v10412
    %v10621 = vpack.c.b16 %v10421, %v10417
    %v10622 = vpack.c.b16 %v10422, %v10418
    %v10623 = vpack.c.b16 %v10423, %v10419
    %v10624 = vpack.c.b16 %v10424, %v10420
    %v10625 = vpack.c.b16 %v10429, %v10425
    %v10626 = vpack.c.b16 %v10430, %v10426
    %v10627 = vpack.c.b16 %v10431, %v10427
    %v10628 = vpack.c.b16 %v10432, %v10428
    %v10629 = vpack.c.b16 %v10437, %v10433
    %v10630 = vpack.c.b16 %v10438, %v10434
    %v10631 = vpack.c.b16 %v10439, %v10435
    %v10632 = vpack.c.b16 %v10440, %v10436
    %v10633 = vpack.c.b16 %v10445, %v10441
    %v10634 = vpack.c.b16 %v10446, %v10442
    %v10635 = vpack.c.b16 %v10447, %v10443
    %v10636 = vpack.c.b16 %v10448, %v10444
    %v10637 = vpack.c.b16 %v10453, %v10449
    %v10638 = vpack.c.b16 %v10454, %v10450
    %v10639 = vpack.c.b16 %v10455, %v10451
    %v10640 = vpack.c.b16 %v10456, %v10452
    %v10641 = vpack.c.b16 %v10461, %v10457
    %v10642 = vpack.c.b16 %v10462, %v10458
    %v10643 = vpack.c.b16 %v10463, %v10459
    %v10644 = vpack.c.b16 %v10464, %v10460
    %v10645 = vpack.c.b16 %v10469, %v10465
    %v10646 = vpack.c.b16 %v10470, %v10466
    %v10647 = vpack.c.b16 %v10471, %v10467
    %v10648 = vpack.c.b16 %v10472, %v10468
    %v10649 = vpack.c.b16 %v10477, %v10473
    %v10650 = vpack.c.b16 %v10478, %v10474
    %v10651 = vpack.c.b16 %v10479, %v10475
    %v10652 = vpack.c.b16 %v10480, %v10476
    %v10653 = vpack.c.b16 %v10485, %v10481
    %v10654 = vpack.c.b16 %v10486, %v10482
    %v10655 = vpack.c.b16 %v10487, %v10483
    %v10656 = vpack.c.b16 %v10488, %v10484
    %v10657 = vpack.c.b16 %v10493, %v10489
    %v10658 = vpack.c.b16 %v10494, %v10490
    %v10659 = vpack.c.b16 %v10495, %v10491
    %v10660 = vpack.c.b16 %v10496, %v10492
    %v10661 = vpack.c.b16 %v10501, %v10497
    %v10662 = vpack.c.b16 %v10502, %v10498
    %v10663 = vpack.c.b16 %v10503, %v10499
    %v10664 = vpack.c.b16 %v10504, %v10500
    %v10665 = vpack.c.b16 %v10509, %v10505
    %v10666 = vpack.c.b16 %v10510, %v10506
    %v10667 = vpack.c.b16 %v10511, %v10507
    %v10668 = vpack.c.b16 %v10512, %v10508
    %v10669 = vpack.c.b16 %v10517, %v10513
    %v10670 = vpack.c.b16 %v10518, %v10514
    %v10671 = vpack.c.b16 %v10519, %v10515
    %v10672 = vpack.c.b16 %v10520, %v10516
    %v10673 = vpack.c.b16 %v10525, %v10521
    %v10674 = vpack.c.b16 %v10526, %v10522
    %v10675 = vpack.c.b16 %v10527, %v10523
    %v10676 = vpack.c.b16 %v10528, %v10524
    %v10677 = vpack.c.b16 %v10533, %v10529
    %v10678 = vpack.c.b16 %v10534, %v10530
    %v10679 = vpack.c.b16 %v10535, %v10531
    %v10680 = vpack.c.b16 %v10536, %v10532
    %v10681 = vpack.c.b16 %v10541, %v10537
    %v10682 = vpack.c.b16 %v10542, %v10538
    %v10683 = vpack.c.b16 %v10543, %v10539
    %v10684 = vpack.c.b16 %v10544, %v10540
    %v10685 = vpack.c.b16 %v10549, %v10545
    %v10686 = vpack.c.b16 %v10550, %v10546
    %v10687 = vpack.c.b16 %v10551, %v10547
    %v10688 = vpack.c.b16 %v10552, %v10548
    %v10689 = vpack.c.b16 %v10557, %v10553
    %v10690 = vpack.c.b16 %v10558, %v10554
    %v10691 = vpack.c.b16 %v10559, %v10555
    %v10692 = vpack.c.b16 %v10560, %v10556
    %v10693 = vpack.c.b16 %v10565, %v10561
    %v10694 = vpack.c.b16 %v10566, %v10562
    %v10695 = vpack.c.b16 %v10567, %v10563
    %v10696 = vpack.c.b16 %v10568, %v10564
    %10825 = vmatpush.bf16.msra.mxu0 %v10597
    %10826 = vmatpush.bf16.msra.mxu0 %v10593
    %10827 = vmatpush.bf16.msra.mxu0 %v10589
    %10828 = vmatpush.bf16.msra.mxu0 %v10585
    %10829 = vmatpush.bf16.msra.mxu0 %v10581
    %10830 = vmatpush.bf16.msra.mxu0 %v10577
    %10831 = vmatpush.bf16.msra.mxu0 %v10573
    %10832 = vmatpush.bf16.msra.mxu0 %v10569
    %10833 = vmatmul.bf16.gmra.mxu0 %v10053
    %v10834 = vpop.f32.mrf.mxu0
    %v10835 = vadd.f32 0.0, %v10834
    %v10836 = vpop.f32.mrf.mxu0
    %10837 = vdwg.mxu0
    %10838 = vmatpush.bf16.msra.mxu0 %v10629
    %10839 = vmatpush.bf16.msra.mxu0 %v10625
    %10840 = vmatpush.bf16.msra.mxu0 %v10621
    %10841 = vmatpush.bf16.msra.mxu0 %v10617
    %10842 = vmatpush.bf16.msra.mxu0 %v10613
    %10843 = vmatpush.bf16.msra.mxu0 %v10609
    %10844 = vmatpush.bf16.msra.mxu0 %v10605
    %10845 = vmatpush.bf16.msra.mxu0 %v10601
    %10846 = vmatmul.bf16.gmra.mxu0 %v10054
    %v10847 = vpop.f32.mrf.mxu0
    %v10848 = vadd.f32 %v10835, %v10847
    %v10849 = vpop.f32.mrf.mxu0
    %10850 = vdwg.mxu0
    %10851 = vmatpush.bf16.msra.mxu0 %v10661
    %10852 = vmatpush.bf16.msra.mxu0 %v10657
    %10853 = vmatpush.bf16.msra.mxu0 %v10653
    %10854 = vmatpush.bf16.msra.mxu0 %v10649
    %10855 = vmatpush.bf16.msra.mxu0 %v10645
    %10856 = vmatpush.bf16.msra.mxu0 %v10641
    %10857 = vmatpush.bf16.msra.mxu0 %v10637
    %10858 = vmatpush.bf16.msra.mxu0 %v10633
    %10859 = vmatmul.bf16.gmra.mxu0 %v10055
    %v10860 = vpop.f32.mrf.mxu0
    %v10861 = vadd.f32 %v10848, %v10860
    %v10862 = vpop.f32.mrf.mxu0
    %10863 = vdwg.mxu0
    %10864 = vmatpush.bf16.msra.mxu0 %v10693
    %10865 = vmatpush.bf16.msra.mxu0 %v10689
    %10866 = vmatpush.bf16.msra.mxu0 %v10685
    %10867 = vmatpush.bf16.msra.mxu0 %v10681
    %10868 = vmatpush.bf16.msra.mxu0 %v10677
    %10869 = vmatpush.bf16.msra.mxu0 %v10673
    %10870 = vmatpush.bf16.msra.mxu0 %v10669
    %10871 = vmatpush.bf16.msra.mxu0 %v10665
    %10872 = vmatmul.bf16.gmra.mxu0 %v10056
    %v10873 = vpop.f32.mrf.mxu0
    %v10874 = vadd.f32 %v10861, %v10873
    %v10875 = vpop.f32.mrf.mxu0
    %10876 = vdwg.mxu0
    %10877 = vmatpush.bf16.msra.mxu0 %v10598
    %10878 = vmatpush.bf16.msra.mxu0 %v10594
    %10879 = vmatpush.bf16.msra.mxu0 %v10590
    %10880 = vmatpush.bf16.msra.mxu0 %v10586
    %10881 = vmatpush.bf16.msra.mxu0 %v10582
    %10882 = vmatpush.bf16.msra.mxu0 %v10578
    %10883 = vmatpush.bf16.msra.mxu0 %v10574
    %10884 = vmatpush.bf16.msra.mxu0 %v10570
    %10885 = vmatmul.bf16.gmra.mxu0 %v10053
    %v10886 = vpop.f32.mrf.mxu0
    %v10887 = vadd.f32 0.0, %v10886
    %v10888 = vpop.f32.mrf.mxu0
    %10889 = vdwg.mxu0
    %10890 = vmatpush.bf16.msra.mxu0 %v10630
    %10891 = vmatpush.bf16.msra.mxu0 %v10626
    %10892 = vmatpush.bf16.msra.mxu0 %v10622
    %10893 = vmatpush.bf16.msra.mxu0 %v10618
    %10894 = vmatpush.bf16.msra.mxu0 %v10614
    %10895 = vmatpush.bf16.msra.mxu0 %v10610
    %10896 = vmatpush.bf16.msra.mxu0 %v10606
    %10897 = vmatpush.bf16.msra.mxu0 %v10602
    %10898 = vmatmul.bf16.gmra.mxu0 %v10054
    %v10899 = vpop.f32.mrf.mxu0
    %v10900 = vadd.f32 %v10887, %v10899
    %v10901 = vpop.f32.mrf.mxu0
    %10902 = vdwg.mxu0
    %10903 = vmatpush.bf16.msra.mxu0 %v10662
    %10904 = vmatpush.bf16.msra.mxu0 %v10658
    %10905 = vmatpush.bf16.msra.mxu0 %v10654
    %10906 = vmatpush.bf16.msra.mxu0 %v10650
    %10907 = vmatpush.bf16.msra.mxu0 %v10646
    %10908 = vmatpush.bf16.msra.mxu0 %v10642
    %10909 = vmatpush.bf16.msra.mxu0 %v10638
    %10910 = vmatpush.bf16.msra.mxu0 %v10634
    %10911 = vmatmul.bf16.gmra.mxu0 %v10055
    %v10912 = vpop.f32.mrf.mxu0
    %v10913 = vadd.f32 %v10900, %v10912
    %v10914 = vpop.f32.mrf.mxu0
    %10915 = vdwg.mxu0
    %10916 = vmatpush.bf16.msra.mxu0 %v10694
    %10917 = vmatpush.bf16.msra.mxu0 %v10690
    %10918 = vmatpush.bf16.msra.mxu0 %v10686
    %10919 = vmatpush.bf16.msra.mxu0 %v10682
    %10920 = vmatpush.bf16.msra.mxu0 %v10678
    %10921 = vmatpush.bf16.msra.mxu0 %v10674
    %10922 = vmatpush.bf16.msra.mxu0 %v10670
    %10923 = vmatpush.bf16.msra.mxu0 %v10666
    %10924 = vmatmul.bf16.gmra.mxu0 %v10056
    %v10925 = vpop.f32.mrf.mxu0
    %v10926 = vadd.f32 %v10913, %v10925
    %v10927 = vpop.f32.mrf.mxu0
    %10928 = vdwg.mxu0
    %10929 = vmatpush.bf16.msra.mxu0 %v10599
    %10930 = vmatpush.bf16.msra.mxu0 %v10595
    %10931 = vmatpush.bf16.msra.mxu0 %v10591
    %10932 = vmatpush.bf16.msra.mxu0 %v10587
    %10933 = vmatpush.bf16.msra.mxu0 %v10583
    %10934 = vmatpush.bf16.msra.mxu0 %v10579
    %10935 = vmatpush.bf16.msra.mxu0 %v10575
    %10936 = vmatpush.bf16.msra.mxu0 %v10571
    %10937 = vmatmul.bf16.gmra.mxu0 %v10053
    %v10938 = vpop.f32.mrf.mxu0
    %v10939 = vadd.f32 0.0, %v10938
    %v10940 = vpop.f32.mrf.mxu0
    %10941 = vdwg.mxu0
    %10942 = vmatpush.bf16.msra.mxu0 %v10631
    %10943 = vmatpush.bf16.msra.mxu0 %v10627
    %10944 = vmatpush.bf16.msra.mxu0 %v10623
    %10945 = vmatpush.bf16.msra.mxu0 %v10619
    %10946 = vmatpush.bf16.msra.mxu0 %v10615
    %10947 = vmatpush.bf16.msra.mxu0 %v10611
    %10948 = vmatpush.bf16.msra.mxu0 %v10607
    %10949 = vmatpush.bf16.msra.mxu0 %v10603
    %10950 = vmatmul.bf16.gmra.mxu0 %v10054
    %v10951 = vpop.f32.mrf.mxu0
    %v10952 = vadd.f32 %v10939, %v10951
    %v10953 = vpop.f32.mrf.mxu0
    %10954 = vdwg.mxu0
    %10955 = vmatpush.bf16.msra.mxu0 %v10663
    %10956 = vmatpush.bf16.msra.mxu0 %v10659
    %10957 = vmatpush.bf16.msra.mxu0 %v10655
    %10958 = vmatpush.bf16.msra.mxu0 %v10651
    %10959 = vmatpush.bf16.msra.mxu0 %v10647
    %10960 = vmatpush.bf16.msra.mxu0 %v10643
    %10961 = vmatpush.bf16.msra.mxu0 %v10639
    %10962 = vmatpush.bf16.msra.mxu0 %v10635
    %10963 = vmatmul.bf16.gmra.mxu0 %v10055
    %v10964 = vpop.f32.mrf.mxu0
    %v10965 = vadd.f32 %v10952, %v10964
    %v10966 = vpop.f32.mrf.mxu0
    %10967 = vdwg.mxu0
    %10968 = vmatpush.bf16.msra.mxu0 %v10695
    %10969 = vmatpush.bf16.msra.mxu0 %v10691
    %10970 = vmatpush.bf16.msra.mxu0 %v10687
    %10971 = vmatpush.bf16.msra.mxu0 %v10683
    %10972 = vmatpush.bf16.msra.mxu0 %v10679
    %10973 = vmatpush.bf16.msra.mxu0 %v10675
    %10974 = vmatpush.bf16.msra.mxu0 %v10671
    %10975 = vmatpush.bf16.msra.mxu0 %v10667
    %10976 = vmatmul.bf16.gmra.mxu0 %v10056
    %v10977 = vpop.f32.mrf.mxu0
    %v10978 = vadd.f32 %v10965, %v10977
    %v10979 = vpop.f32.mrf.mxu0
    %10980 = vdwg.mxu0
    %10981 = vmatpush.bf16.msra.mxu0 %v10600
    %10982 = vmatpush.bf16.msra.mxu0 %v10596
    %10983 = vmatpush.bf16.msra.mxu0 %v10592
    %10984 = vmatpush.bf16.msra.mxu0 %v10588
    %10985 = vmatpush.bf16.msra.mxu0 %v10584
    %10986 = vmatpush.bf16.msra.mxu0 %v10580
    %10987 = vmatpush.bf16.msra.mxu0 %v10576
    %10988 = vmatpush.bf16.msra.mxu0 %v10572
    %10989 = vmatmul.bf16.gmra.mxu0 %v10053
    %v10990 = vpop.f32.mrf.mxu0
    %v10991 = vadd.f32 0.0, %v10990
    %v10992 = vpop.f32.mrf.mxu0
    %10993 = vdwg.mxu0
    %10994 = vmatpush.bf16.msra.mxu0 %v10632
    %10995 = vmatpush.bf16.msra.mxu0 %v10628
    %10996 = vmatpush.bf16.msra.mxu0 %v10624
    %10997 = vmatpush.bf16.msra.mxu0 %v10620
    %10998 = vmatpush.bf16.msra.mxu0 %v10616
    %10999 = vmatpush.bf16.msra.mxu0 %v10612
    %11000 = vmatpush.bf16.msra.mxu0 %v10608
    %11001 = vmatpush.bf16.msra.mxu0 %v10604
    %11002 = vmatmul.bf16.gmra.mxu0 %v10054
    %v11003 = vpop.f32.mrf.mxu0
    %v11004 = vadd.f32 %v10991, %v11003
    %v11005 = vpop.f32.mrf.mxu0
    %11006 = vdwg.mxu0
    %11007 = vmatpush.bf16.msra.mxu0 %v10664
    %11008 = vmatpush.bf16.msra.mxu0 %v10660
    %11009 = vmatpush.bf16.msra.mxu0 %v10656
    %11010 = vmatpush.bf16.msra.mxu0 %v10652
    %11011 = vmatpush.bf16.msra.mxu0 %v10648
    %11012 = vmatpush.bf16.msra.mxu0 %v10644
    %11013 = vmatpush.bf16.msra.mxu0 %v10640
    %11014 = vmatpush.bf16.msra.mxu0 %v10636
    %11015 = vmatmul.bf16.gmra.mxu0 %v10055
    %v11016 = vpop.f32.mrf.mxu0
    %v11017 = vadd.f32 %v11004, %v11016
    %v11018 = vpop.f32.mrf.mxu0
    %11019 = vdwg.mxu0
    %11020 = vmatpush.bf16.msra.mxu0 %v10696
    %11021 = vmatpush.bf16.msra.mxu0 %v10692
    %11022 = vmatpush.bf16.msra.mxu0 %v10688
    %11023 = vmatpush.bf16.msra.mxu0 %v10684
    %11024 = vmatpush.bf16.msra.mxu0 %v10680
    %11025 = vmatpush.bf16.msra.mxu0 %v10676
    %11026 = vmatpush.bf16.msra.mxu0 %v10672
    %11027 = vmatpush.bf16.msra.mxu0 %v10668
    %11028 = vmatmul.bf16.gmra.mxu0 %v10056
    %v11029 = vpop.f32.mrf.mxu0
    %v11030 = vadd.f32 %v11017, %v11029
    %v11031 = vpop.f32.mrf.mxu0
    %11032 = vdwg.mxu0
    %v11161 = vunpack.c.l.b16 %v9925
    %v11162 = vunpack.c.h.b16 %v9925
    %v11163 = vunpack.c.l.b16 %v9926
    %v11164 = vunpack.c.h.b16 %v9926
    %v11165 = vunpack.c.l.b16 %v9927
    %v11166 = vunpack.c.h.b16 %v9927
    %v11167 = vunpack.c.l.b16 %v9928
    %v11168 = vunpack.c.h.b16 %v9928
    %v11169 = vunpack.c.l.b16 %v9929
    %v11170 = vunpack.c.h.b16 %v9929
    %v11171 = vunpack.c.l.b16 %v9930
    %v11172 = vunpack.c.h.b16 %v9930
    %v11173 = vunpack.c.l.b16 %v9931
    %v11174 = vunpack.c.h.b16 %v9931
    %v11175 = vunpack.c.l.b16 %v9932
    %v11176 = vunpack.c.h.b16 %v9932
    %v11177 = vunpack.c.l.b16 %v9933
    %v11178 = vunpack.c.h.b16 %v9933
    %v11179 = vunpack.c.l.b16 %v9934
    %v11180 = vunpack.c.h.b16 %v9934
    %v11181 = vunpack.c.l.b16 %v9935
    %v11182 = vunpack.c.h.b16 %v9935
    %v11183 = vunpack.c.l.b16 %v9936
    %v11184 = vunpack.c.h.b16 %v9936
    %v11185 = vunpack.c.l.b16 %v9937
    %v11186 = vunpack.c.h.b16 %v9937
    %v11187 = vunpack.c.l.b16 %v9938
    %v11188 = vunpack.c.h.b16 %v9938
    %v11189 = vunpack.c.l.b16 %v9939
    %v11190 = vunpack.c.h.b16 %v9939
    %v11191 = vunpack.c.l.b16 %v9940
    %v11192 = vunpack.c.h.b16 %v9940
    %v11193 = vunpack.c.l.b16 %v9941
    %v11194 = vunpack.c.h.b16 %v9941
    %v11195 = vunpack.c.l.b16 %v9942
    %v11196 = vunpack.c.h.b16 %v9942
    %v11197 = vunpack.c.l.b16 %v9943
    %v11198 = vunpack.c.h.b16 %v9943
    %v11199 = vunpack.c.l.b16 %v9944
    %v11200 = vunpack.c.h.b16 %v9944
    %v11201 = vunpack.c.l.b16 %v9945
    %v11202 = vunpack.c.h.b16 %v9945
    %v11203 = vunpack.c.l.b16 %v9946
    %v11204 = vunpack.c.h.b16 %v9946
    %v11205 = vunpack.c.l.b16 %v9947
    %v11206 = vunpack.c.h.b16 %v9947
    %v11207 = vunpack.c.l.b16 %v9948
    %v11208 = vunpack.c.h.b16 %v9948
    %v11209 = vunpack.c.l.b16 %v9949
    %v11210 = vunpack.c.h.b16 %v9949
    %v11211 = vunpack.c.l.b16 %v9950
    %v11212 = vunpack.c.h.b16 %v9950
    %v11213 = vunpack.c.l.b16 %v9951
    %v11214 = vunpack.c.h.b16 %v9951
    %v11215 = vunpack.c.l.b16 %v9952
    %v11216 = vunpack.c.h.b16 %v9952
    %v11217 = vunpack.c.l.b16 %v9953
    %v11218 = vunpack.c.h.b16 %v9953
    %v11219 = vunpack.c.l.b16 %v9954
    %v11220 = vunpack.c.h.b16 %v9954
    %v11221 = vunpack.c.l.b16 %v9955
    %v11222 = vunpack.c.h.b16 %v9955
    %v11223 = vunpack.c.l.b16 %v9956
    %v11224 = vunpack.c.h.b16 %v9956
    %v11225 = vunpack.c.l.b16 %v9957
    %v11226 = vunpack.c.h.b16 %v9957
    %v11227 = vunpack.c.l.b16 %v9958
    %v11228 = vunpack.c.h.b16 %v9958
    %v11229 = vunpack.c.l.b16 %v9959
    %v11230 = vunpack.c.h.b16 %v9959
    %v11231 = vunpack.c.l.b16 %v9960
    %v11232 = vunpack.c.h.b16 %v9960
    %v11233 = vunpack.c.l.b16 %v9961
    %v11234 = vunpack.c.h.b16 %v9961
    %v11235 = vunpack.c.l.b16 %v9962
    %v11236 = vunpack.c.h.b16 %v9962
    %v11237 = vunpack.c.l.b16 %v9963
    %v11238 = vunpack.c.h.b16 %v9963
    %v11239 = vunpack.c.l.b16 %v9964
    %v11240 = vunpack.c.h.b16 %v9964
    %v11241 = vunpack.c.l.b16 %v9965
    %v11242 = vunpack.c.h.b16 %v9965
    %v11243 = vunpack.c.l.b16 %v9966
    %v11244 = vunpack.c.h.b16 %v9966
    %v11245 = vunpack.c.l.b16 %v9967
    %v11246 = vunpack.c.h.b16 %v9967
    %v11247 = vunpack.c.l.b16 %v9968
    %v11248 = vunpack.c.h.b16 %v9968
    %v11249 = vunpack.c.l.b16 %v9969
    %v11250 = vunpack.c.h.b16 %v9969
    %v11251 = vunpack.c.l.b16 %v9970
    %v11252 = vunpack.c.h.b16 %v9970
    %v11253 = vunpack.c.l.b16 %v9971
    %v11254 = vunpack.c.h.b16 %v9971
    %v11255 = vunpack.c.l.b16 %v9972
    %v11256 = vunpack.c.h.b16 %v9972
    %v11257 = vunpack.c.l.b16 %v9973
    %v11258 = vunpack.c.h.b16 %v9973
    %v11259 = vunpack.c.l.b16 %v9974
    %v11260 = vunpack.c.h.b16 %v9974
    %v11261 = vunpack.c.l.b16 %v9975
    %v11262 = vunpack.c.h.b16 %v9975
    %v11263 = vunpack.c.l.b16 %v9976
    %v11264 = vunpack.c.h.b16 %v9976
    %v11265 = vunpack.c.l.b16 %v9977
    %v11266 = vunpack.c.h.b16 %v9977
    %v11267 = vunpack.c.l.b16 %v9978
    %v11268 = vunpack.c.h.b16 %v9978
    %v11269 = vunpack.c.l.b16 %v9979
    %v11270 = vunpack.c.h.b16 %v9979
    %v11271 = vunpack.c.l.b16 %v9980
    %v11272 = vunpack.c.h.b16 %v9980
    %v11273 = vunpack.c.l.b16 %v9981
    %v11274 = vunpack.c.h.b16 %v9981
    %v11275 = vunpack.c.l.b16 %v9982
    %v11276 = vunpack.c.h.b16 %v9982
    %v11277 = vunpack.c.l.b16 %v9983
    %v11278 = vunpack.c.h.b16 %v9983
    %v11279 = vunpack.c.l.b16 %v9984
    %v11280 = vunpack.c.h.b16 %v9984
    %v11281 = vunpack.c.l.b16 %v9985
    %v11282 = vunpack.c.h.b16 %v9985
    %v11283 = vunpack.c.l.b16 %v9986
    %v11284 = vunpack.c.h.b16 %v9986
    %v11285 = vunpack.c.l.b16 %v9987
    %v11286 = vunpack.c.h.b16 %v9987
    %v11287 = vunpack.c.l.b16 %v9988
    %v11288 = vunpack.c.h.b16 %v9988
    %v11289 = vunpack.c.l.b16 %v9989
    %v11290 = vunpack.c.h.b16 %v9989
    %v11291 = vunpack.c.l.b16 %v9990
    %v11292 = vunpack.c.h.b16 %v9990
    %v11293 = vunpack.c.l.b16 %v9991
    %v11294 = vunpack.c.h.b16 %v9991
    %v11295 = vunpack.c.l.b16 %v9992
    %v11296 = vunpack.c.h.b16 %v9992
    %v11297 = vunpack.c.l.b16 %v9993
    %v11298 = vunpack.c.h.b16 %v9993
    %v11299 = vunpack.c.l.b16 %v9994
    %v11300 = vunpack.c.h.b16 %v9994
    %v11301 = vunpack.c.l.b16 %v9995
    %v11302 = vunpack.c.h.b16 %v9995
    %v11303 = vunpack.c.l.b16 %v9996
    %v11304 = vunpack.c.h.b16 %v9996
    %v11305 = vunpack.c.l.b16 %v9997
    %v11306 = vunpack.c.h.b16 %v9997
    %v11307 = vunpack.c.l.b16 %v9998
    %v11308 = vunpack.c.h.b16 %v9998
    %v11309 = vunpack.c.l.b16 %v9999
    %v11310 = vunpack.c.h.b16 %v9999
    %v11311 = vunpack.c.l.b16 %v10000
    %v11312 = vunpack.c.h.b16 %v10000
    %v11313 = vunpack.c.l.b16 %v10001
    %v11314 = vunpack.c.h.b16 %v10001
    %v11315 = vunpack.c.l.b16 %v10002
    %v11316 = vunpack.c.h.b16 %v10002
    %v11317 = vunpack.c.l.b16 %v10003
    %v11318 = vunpack.c.h.b16 %v10003
    %v11319 = vunpack.c.l.b16 %v10004
    %v11320 = vunpack.c.h.b16 %v10004
    %v11321 = vunpack.c.l.b16 %v10005
    %v11322 = vunpack.c.h.b16 %v10005
    %v11323 = vunpack.c.l.b16 %v10006
    %v11324 = vunpack.c.h.b16 %v10006
    %v11325 = vunpack.c.l.b16 %v10007
    %v11326 = vunpack.c.h.b16 %v10007
    %v11327 = vunpack.c.l.b16 %v10008
    %v11328 = vunpack.c.h.b16 %v10008
    %v11329 = vunpack.c.l.b16 %v10009
    %v11330 = vunpack.c.h.b16 %v10009
    %v11331 = vunpack.c.l.b16 %v10010
    %v11332 = vunpack.c.h.b16 %v10010
    %v11333 = vunpack.c.l.b16 %v10011
    %v11334 = vunpack.c.h.b16 %v10011
    %v11335 = vunpack.c.l.b16 %v10012
    %v11336 = vunpack.c.h.b16 %v10012
    %v11337 = vunpack.c.l.b16 %v10013
    %v11338 = vunpack.c.h.b16 %v10013
    %v11339 = vunpack.c.l.b16 %v10014
    %v11340 = vunpack.c.h.b16 %v10014
    %v11341 = vunpack.c.l.b16 %v10015
    %v11342 = vunpack.c.h.b16 %v10015
    %v11343 = vunpack.c.l.b16 %v10016
    %v11344 = vunpack.c.h.b16 %v10016
    %v11345 = vunpack.c.l.b16 %v10017
    %v11346 = vunpack.c.h.b16 %v10017
    %v11347 = vunpack.c.l.b16 %v10018
    %v11348 = vunpack.c.h.b16 %v10018
    %v11349 = vunpack.c.l.b16 %v10019
    %v11350 = vunpack.c.h.b16 %v10019
    %v11351 = vunpack.c.l.b16 %v10020
    %v11352 = vunpack.c.h.b16 %v10020
    %v11353 = vunpack.c.l.b16 %v10021
    %v11354 = vunpack.c.h.b16 %v10021
    %v11355 = vunpack.c.l.b16 %v10022
    %v11356 = vunpack.c.h.b16 %v10022
    %v11357 = vunpack.c.l.b16 %v10023
    %v11358 = vunpack.c.h.b16 %v10023
    %v11359 = vunpack.c.l.b16 %v10024
    %v11360 = vunpack.c.h.b16 %v10024
    %v11361 = vunpack.c.l.b16 %v10025
    %v11362 = vunpack.c.h.b16 %v10025
    %v11363 = vunpack.c.l.b16 %v10026
    %v11364 = vunpack.c.h.b16 %v10026
    %v11365 = vunpack.c.l.b16 %v10027
    %v11366 = vunpack.c.h.b16 %v10027
    %v11367 = vunpack.c.l.b16 %v10028
    %v11368 = vunpack.c.h.b16 %v10028
    %v11369 = vunpack.c.l.b16 %v10029
    %v11370 = vunpack.c.h.b16 %v10029
    %v11371 = vunpack.c.l.b16 %v10030
    %v11372 = vunpack.c.h.b16 %v10030
    %v11373 = vunpack.c.l.b16 %v10031
    %v11374 = vunpack.c.h.b16 %v10031
    %v11375 = vunpack.c.l.b16 %v10032
    %v11376 = vunpack.c.h.b16 %v10032
    %v11377 = vunpack.c.l.b16 %v10033
    %v11378 = vunpack.c.h.b16 %v10033
    %v11379 = vunpack.c.l.b16 %v10034
    %v11380 = vunpack.c.h.b16 %v10034
    %v11381 = vunpack.c.l.b16 %v10035
    %v11382 = vunpack.c.h.b16 %v10035
    %v11383 = vunpack.c.l.b16 %v10036
    %v11384 = vunpack.c.h.b16 %v10036
    %v11385 = vunpack.c.l.b16 %v10037
    %v11386 = vunpack.c.h.b16 %v10037
    %v11387 = vunpack.c.l.b16 %v10038
    %v11388 = vunpack.c.h.b16 %v10038
    %v11389 = vunpack.c.l.b16 %v10039
    %v11390 = vunpack.c.h.b16 %v10039
    %v11391 = vunpack.c.l.b16 %v10040
    %v11392 = vunpack.c.h.b16 %v10040
    %v11393 = vunpack.c.l.b16 %v10041
    %v11394 = vunpack.c.h.b16 %v10041
    %v11395 = vunpack.c.l.b16 %v10042
    %v11396 = vunpack.c.h.b16 %v10042
    %v11397 = vunpack.c.l.b16 %v10043
    %v11398 = vunpack.c.h.b16 %v10043
    %v11399 = vunpack.c.l.b16 %v10044
    %v11400 = vunpack.c.h.b16 %v10044
    %v11401 = vunpack.c.l.b16 %v10045
    %v11402 = vunpack.c.h.b16 %v10045
    %v11403 = vunpack.c.l.b16 %v10046
    %v11404 = vunpack.c.h.b16 %v10046
    %v11405 = vunpack.c.l.b16 %v10047
    %v11406 = vunpack.c.h.b16 %v10047
    %v11407 = vunpack.c.l.b16 %v10048
    %v11408 = vunpack.c.h.b16 %v10048
    %v11409 = vunpack.c.l.b16 %v10049
    %v11410 = vunpack.c.h.b16 %v10049
    %v11411 = vunpack.c.l.b16 %v10050
    %v11412 = vunpack.c.h.b16 %v10050
    %v11413 = vunpack.c.l.b16 %v10051
    %v11414 = vunpack.c.h.b16 %v10051
    %v11415 = vunpack.c.l.b16 %v10052
    %v11416 = vunpack.c.h.b16 %v10052
    %v11417 = vpack.c.b16 %v11165, %v11161
    %v11418 = vpack.c.b16 %v11166, %v11162
    %v11419 = vpack.c.b16 %v11167, %v11163
    %v11420 = vpack.c.b16 %v11168, %v11164
    %v11421 = vpack.c.b16 %v11173, %v11169
    %v11422 = vpack.c.b16 %v11174, %v11170
    %v11423 = vpack.c.b16 %v11175, %v11171
    %v11424 = vpack.c.b16 %v11176, %v11172
    %v11425 = vpack.c.b16 %v11181, %v11177
    %v11426 = vpack.c.b16 %v11182, %v11178
    %v11427 = vpack.c.b16 %v11183, %v11179
    %v11428 = vpack.c.b16 %v11184, %v11180
    %v11429 = vpack.c.b16 %v11189, %v11185
    %v11430 = vpack.c.b16 %v11190, %v11186
    %v11431 = vpack.c.b16 %v11191, %v11187
    %v11432 = vpack.c.b16 %v11192, %v11188
    %v11433 = vpack.c.b16 %v11197, %v11193
    %v11434 = vpack.c.b16 %v11198, %v11194
    %v11435 = vpack.c.b16 %v11199, %v11195
    %v11436 = vpack.c.b16 %v11200, %v11196
    %v11437 = vpack.c.b16 %v11205, %v11201
    %v11438 = vpack.c.b16 %v11206, %v11202
    %v11439 = vpack.c.b16 %v11207, %v11203
    %v11440 = vpack.c.b16 %v11208, %v11204
    %v11441 = vpack.c.b16 %v11213, %v11209
    %v11442 = vpack.c.b16 %v11214, %v11210
    %v11443 = vpack.c.b16 %v11215, %v11211
    %v11444 = vpack.c.b16 %v11216, %v11212
    %v11445 = vpack.c.b16 %v11221, %v11217
    %v11446 = vpack.c.b16 %v11222, %v11218
    %v11447 = vpack.c.b16 %v11223, %v11219
    %v11448 = vpack.c.b16 %v11224, %v11220
    %v11449 = vpack.c.b16 %v11229, %v11225
    %v11450 = vpack.c.b16 %v11230, %v11226
    %v11451 = vpack.c.b16 %v11231, %v11227
    %v11452 = vpack.c.b16 %v11232, %v11228
    %v11453 = vpack.c.b16 %v11237, %v11233
    %v11454 = vpack.c.b16 %v11238, %v11234
    %v11455 = vpack.c.b16 %v11239, %v11235
    %v11456 = vpack.c.b16 %v11240, %v11236
    %v11457 = vpack.c.b16 %v11245, %v11241
    %v11458 = vpack.c.b16 %v11246, %v11242
    %v11459 = vpack.c.b16 %v11247, %v11243
    %v11460 = vpack.c.b16 %v11248, %v11244
    %v11461 = vpack.c.b16 %v11253, %v11249
    %v11462 = vpack.c.b16 %v11254, %v11250
    %v11463 = vpack.c.b16 %v11255, %v11251
    %v11464 = vpack.c.b16 %v11256, %v11252
    %v11465 = vpack.c.b16 %v11261, %v11257
    %v11466 = vpack.c.b16 %v11262, %v11258
    %v11467 = vpack.c.b16 %v11263, %v11259
    %v11468 = vpack.c.b16 %v11264, %v11260
    %v11469 = vpack.c.b16 %v11269, %v11265
    %v11470 = vpack.c.b16 %v11270, %v11266
    %v11471 = vpack.c.b16 %v11271, %v11267
    %v11472 = vpack.c.b16 %v11272, %v11268
    %v11473 = vpack.c.b16 %v11277, %v11273
    %v11474 = vpack.c.b16 %v11278, %v11274
    %v11475 = vpack.c.b16 %v11279, %v11275
    %v11476 = vpack.c.b16 %v11280, %v11276
    %v11477 = vpack.c.b16 %v11285, %v11281
    %v11478 = vpack.c.b16 %v11286, %v11282
    %v11479 = vpack.c.b16 %v11287, %v11283
    %v11480 = vpack.c.b16 %v11288, %v11284
    %v11481 = vpack.c.b16 %v11293, %v11289
    %v11482 = vpack.c.b16 %v11294, %v11290
    %v11483 = vpack.c.b16 %v11295, %v11291
    %v11484 = vpack.c.b16 %v11296, %v11292
    %v11485 = vpack.c.b16 %v11301, %v11297
    %v11486 = vpack.c.b16 %v11302, %v11298
    %v11487 = vpack.c.b16 %v11303, %v11299
    %v11488 = vpack.c.b16 %v11304, %v11300
    %v11489 = vpack.c.b16 %v11309, %v11305
    %v11490 = vpack.c.b16 %v11310, %v11306
    %v11491 = vpack.c.b16 %v11311, %v11307
    %v11492 = vpack.c.b16 %v11312, %v11308
    %v11493 = vpack.c.b16 %v11317, %v11313
    %v11494 = vpack.c.b16 %v11318, %v11314
    %v11495 = vpack.c.b16 %v11319, %v11315
    %v11496 = vpack.c.b16 %v11320, %v11316
    %v11497 = vpack.c.b16 %v11325, %v11321
    %v11498 = vpack.c.b16 %v11326, %v11322
    %v11499 = vpack.c.b16 %v11327, %v11323
    %v11500 = vpack.c.b16 %v11328, %v11324
    %v11501 = vpack.c.b16 %v11333, %v11329
    %v11502 = vpack.c.b16 %v11334, %v11330
    %v11503 = vpack.c.b16 %v11335, %v11331
    %v11504 = vpack.c.b16 %v11336, %v11332
    %v11505 = vpack.c.b16 %v11341, %v11337
    %v11506 = vpack.c.b16 %v11342, %v11338
    %v11507 = vpack.c.b16 %v11343, %v11339
    %v11508 = vpack.c.b16 %v11344, %v11340
    %v11509 = vpack.c.b16 %v11349, %v11345
    %v11510 = vpack.c.b16 %v11350, %v11346
    %v11511 = vpack.c.b16 %v11351, %v11347
    %v11512 = vpack.c.b16 %v11352, %v11348
    %v11513 = vpack.c.b16 %v11357, %v11353
    %v11514 = vpack.c.b16 %v11358, %v11354
    %v11515 = vpack.c.b16 %v11359, %v11355
    %v11516 = vpack.c.b16 %v11360, %v11356
    %v11517 = vpack.c.b16 %v11365, %v11361
    %v11518 = vpack.c.b16 %v11366, %v11362
    %v11519 = vpack.c.b16 %v11367, %v11363
    %v11520 = vpack.c.b16 %v11368, %v11364
    %v11521 = vpack.c.b16 %v11373, %v11369
    %v11522 = vpack.c.b16 %v11374, %v11370
    %v11523 = vpack.c.b16 %v11375, %v11371
    %v11524 = vpack.c.b16 %v11376, %v11372
    %v11525 = vpack.c.b16 %v11381, %v11377
    %v11526 = vpack.c.b16 %v11382, %v11378
    %v11527 = vpack.c.b16 %v11383, %v11379
    %v11528 = vpack.c.b16 %v11384, %v11380
    %v11529 = vpack.c.b16 %v11389, %v11385
    %v11530 = vpack.c.b16 %v11390, %v11386
    %v11531 = vpack.c.b16 %v11391, %v11387
    %v11532 = vpack.c.b16 %v11392, %v11388
    %v11533 = vpack.c.b16 %v11397, %v11393
    %v11534 = vpack.c.b16 %v11398, %v11394
    %v11535 = vpack.c.b16 %v11399, %v11395
    %v11536 = vpack.c.b16 %v11400, %v11396
    %v11537 = vpack.c.b16 %v11405, %v11401
    %v11538 = vpack.c.b16 %v11406, %v11402
    %v11539 = vpack.c.b16 %v11407, %v11403
    %v11540 = vpack.c.b16 %v11408, %v11404
    %v11541 = vpack.c.b16 %v11413, %v11409
    %v11542 = vpack.c.b16 %v11414, %v11410
    %v11543 = vpack.c.b16 %v11415, %v11411
    %v11544 = vpack.c.b16 %v11416, %v11412
    %11673 = vmatpush.bf16.msra.mxu0 %v11445
    %11674 = vmatpush.bf16.msra.mxu0 %v11441
    %11675 = vmatpush.bf16.msra.mxu0 %v11437
    %11676 = vmatpush.bf16.msra.mxu0 %v11433
    %11677 = vmatpush.bf16.msra.mxu0 %v11429
    %11678 = vmatpush.bf16.msra.mxu0 %v11425
    %11679 = vmatpush.bf16.msra.mxu0 %v11421
    %11680 = vmatpush.bf16.msra.mxu0 %v11417
    %11681 = vmatmul.bf16.gmra.mxu0 %v9921
    %v11682 = vpop.f32.mrf.mxu0
    %v11683 = vadd.f32 %v10874, %v11682
    %v11684 = vpop.f32.mrf.mxu0
    %11685 = vdwg.mxu0
    %11686 = vmatpush.bf16.msra.mxu0 %v11477
    %11687 = vmatpush.bf16.msra.mxu0 %v11473
    %11688 = vmatpush.bf16.msra.mxu0 %v11469
    %11689 = vmatpush.bf16.msra.mxu0 %v11465
    %11690 = vmatpush.bf16.msra.mxu0 %v11461
    %11691 = vmatpush.bf16.msra.mxu0 %v11457
    %11692 = vmatpush.bf16.msra.mxu0 %v11453
    %11693 = vmatpush.bf16.msra.mxu0 %v11449
    %11694 = vmatmul.bf16.gmra.mxu0 %v9922
    %v11695 = vpop.f32.mrf.mxu0
    %v11696 = vadd.f32 %v11683, %v11695
    %v11697 = vpop.f32.mrf.mxu0
    %11698 = vdwg.mxu0
    %11699 = vmatpush.bf16.msra.mxu0 %v11509
    %11700 = vmatpush.bf16.msra.mxu0 %v11505
    %11701 = vmatpush.bf16.msra.mxu0 %v11501
    %11702 = vmatpush.bf16.msra.mxu0 %v11497
    %11703 = vmatpush.bf16.msra.mxu0 %v11493
    %11704 = vmatpush.bf16.msra.mxu0 %v11489
    %11705 = vmatpush.bf16.msra.mxu0 %v11485
    %11706 = vmatpush.bf16.msra.mxu0 %v11481
    %11707 = vmatmul.bf16.gmra.mxu0 %v9923
    %v11708 = vpop.f32.mrf.mxu0
    %v11709 = vadd.f32 %v11696, %v11708
    %v11710 = vpop.f32.mrf.mxu0
    %11711 = vdwg.mxu0
    %11712 = vmatpush.bf16.msra.mxu0 %v11541
    %11713 = vmatpush.bf16.msra.mxu0 %v11537
    %11714 = vmatpush.bf16.msra.mxu0 %v11533
    %11715 = vmatpush.bf16.msra.mxu0 %v11529
    %11716 = vmatpush.bf16.msra.mxu0 %v11525
    %11717 = vmatpush.bf16.msra.mxu0 %v11521
    %11718 = vmatpush.bf16.msra.mxu0 %v11517
    %11719 = vmatpush.bf16.msra.mxu0 %v11513
    %11720 = vmatmul.bf16.gmra.mxu0 %v9924
    %v11721 = vpop.f32.mrf.mxu0
    %v11722 = vadd.f32 %v11709, %v11721
    %v11723 = vpop.f32.mrf.mxu0
    %11724 = vdwg.mxu0
    %11725 = vmatpush.bf16.msra.mxu0 %v11446
    %11726 = vmatpush.bf16.msra.mxu0 %v11442
    %11727 = vmatpush.bf16.msra.mxu0 %v11438
    %11728 = vmatpush.bf16.msra.mxu0 %v11434
    %11729 = vmatpush.bf16.msra.mxu0 %v11430
    %11730 = vmatpush.bf16.msra.mxu0 %v11426
    %11731 = vmatpush.bf16.msra.mxu0 %v11422
    %11732 = vmatpush.bf16.msra.mxu0 %v11418
    %11733 = vmatmul.bf16.gmra.mxu0 %v9921
    %v11734 = vpop.f32.mrf.mxu0
    %v11735 = vadd.f32 %v10926, %v11734
    %v11736 = vpop.f32.mrf.mxu0
    %11737 = vdwg.mxu0
    %11738 = vmatpush.bf16.msra.mxu0 %v11478
    %11739 = vmatpush.bf16.msra.mxu0 %v11474
    %11740 = vmatpush.bf16.msra.mxu0 %v11470
    %11741 = vmatpush.bf16.msra.mxu0 %v11466
    %11742 = vmatpush.bf16.msra.mxu0 %v11462
    %11743 = vmatpush.bf16.msra.mxu0 %v11458
    %11744 = vmatpush.bf16.msra.mxu0 %v11454
    %11745 = vmatpush.bf16.msra.mxu0 %v11450
    %11746 = vmatmul.bf16.gmra.mxu0 %v9922
    %v11747 = vpop.f32.mrf.mxu0
    %v11748 = vadd.f32 %v11735, %v11747
    %v11749 = vpop.f32.mrf.mxu0
    %11750 = vdwg.mxu0
    %11751 = vmatpush.bf16.msra.mxu0 %v11510
    %11752 = vmatpush.bf16.msra.mxu0 %v11506
    %11753 = vmatpush.bf16.msra.mxu0 %v11502
    %11754 = vmatpush.bf16.msra.mxu0 %v11498
    %11755 = vmatpush.bf16.msra.mxu0 %v11494
    %11756 = vmatpush.bf16.msra.mxu0 %v11490
    %11757 = vmatpush.bf16.msra.mxu0 %v11486
    %11758 = vmatpush.bf16.msra.mxu0 %v11482
    %11759 = vmatmul.bf16.gmra.mxu0 %v9923
    %v11760 = vpop.f32.mrf.mxu0
    %v11761 = vadd.f32 %v11748, %v11760
    %v11762 = vpop.f32.mrf.mxu0
    %11763 = vdwg.mxu0
    %11764 = vmatpush.bf16.msra.mxu0 %v11542
    %11765 = vmatpush.bf16.msra.mxu0 %v11538
    %11766 = vmatpush.bf16.msra.mxu0 %v11534
    %11767 = vmatpush.bf16.msra.mxu0 %v11530
    %11768 = vmatpush.bf16.msra.mxu0 %v11526
    %11769 = vmatpush.bf16.msra.mxu0 %v11522
    %11770 = vmatpush.bf16.msra.mxu0 %v11518
    %11771 = vmatpush.bf16.msra.mxu0 %v11514
    %11772 = vmatmul.bf16.gmra.mxu0 %v9924
    %v11773 = vpop.f32.mrf.mxu0
    %v11774 = vadd.f32 %v11761, %v11773
    %v11775 = vpop.f32.mrf.mxu0
    %11776 = vdwg.mxu0
    %11777 = vmatpush.bf16.msra.mxu0 %v11447
    %11778 = vmatpush.bf16.msra.mxu0 %v11443
    %11779 = vmatpush.bf16.msra.mxu0 %v11439
    %11780 = vmatpush.bf16.msra.mxu0 %v11435
    %11781 = vmatpush.bf16.msra.mxu0 %v11431
    %11782 = vmatpush.bf16.msra.mxu0 %v11427
    %11783 = vmatpush.bf16.msra.mxu0 %v11423
    %11784 = vmatpush.bf16.msra.mxu0 %v11419
    %11785 = vmatmul.bf16.gmra.mxu0 %v9921
    %v11786 = vpop.f32.mrf.mxu0
    %v11787 = vadd.f32 %v10978, %v11786
    %v11788 = vpop.f32.mrf.mxu0
    %11789 = vdwg.mxu0
    %11790 = vmatpush.bf16.msra.mxu0 %v11479
    %11791 = vmatpush.bf16.msra.mxu0 %v11475
    %11792 = vmatpush.bf16.msra.mxu0 %v11471
    %11793 = vmatpush.bf16.msra.mxu0 %v11467
    %11794 = vmatpush.bf16.msra.mxu0 %v11463
    %11795 = vmatpush.bf16.msra.mxu0 %v11459
    %11796 = vmatpush.bf16.msra.mxu0 %v11455
    %11797 = vmatpush.bf16.msra.mxu0 %v11451
    %11798 = vmatmul.bf16.gmra.mxu0 %v9922
    %v11799 = vpop.f32.mrf.mxu0
    %v11800 = vadd.f32 %v11787, %v11799
    %v11801 = vpop.f32.mrf.mxu0
    %11802 = vdwg.mxu0
    %11803 = vmatpush.bf16.msra.mxu0 %v11511
    %11804 = vmatpush.bf16.msra.mxu0 %v11507
    %11805 = vmatpush.bf16.msra.mxu0 %v11503
    %11806 = vmatpush.bf16.msra.mxu0 %v11499
    %11807 = vmatpush.bf16.msra.mxu0 %v11495
    %11808 = vmatpush.bf16.msra.mxu0 %v11491
    %11809 = vmatpush.bf16.msra.mxu0 %v11487
    %11810 = vmatpush.bf16.msra.mxu0 %v11483
    %11811 = vmatmul.bf16.gmra.mxu0 %v9923
    %v11812 = vpop.f32.mrf.mxu0
    %v11813 = vadd.f32 %v11800, %v11812
    %v11814 = vpop.f32.mrf.mxu0
    %11815 = vdwg.mxu0
    %11816 = vmatpush.bf16.msra.mxu0 %v11543
    %11817 = vmatpush.bf16.msra.mxu0 %v11539
    %11818 = vmatpush.bf16.msra.mxu0 %v11535
    %11819 = vmatpush.bf16.msra.mxu0 %v11531
    %11820 = vmatpush.bf16.msra.mxu0 %v11527
    %11821 = vmatpush.bf16.msra.mxu0 %v11523
    %11822 = vmatpush.bf16.msra.mxu0 %v11519
    %11823 = vmatpush.bf16.msra.mxu0 %v11515
    %11824 = vmatmul.bf16.gmra.mxu0 %v9924
    %v11825 = vpop.f32.mrf.mxu0
    %v11826 = vadd.f32 %v11813, %v11825
    %v11827 = vpop.f32.mrf.mxu0
    %11828 = vdwg.mxu0
    %11829 = vmatpush.bf16.msra.mxu0 %v11448
    %11830 = vmatpush.bf16.msra.mxu0 %v11444
    %11831 = vmatpush.bf16.msra.mxu0 %v11440
    %11832 = vmatpush.bf16.msra.mxu0 %v11436
    %11833 = vmatpush.bf16.msra.mxu0 %v11432
    %11834 = vmatpush.bf16.msra.mxu0 %v11428
    %11835 = vmatpush.bf16.msra.mxu0 %v11424
    %11836 = vmatpush.bf16.msra.mxu0 %v11420
    %11837 = vmatmul.bf16.gmra.mxu0 %v9921
    %v11838 = vpop.f32.mrf.mxu0
    %v11839 = vadd.f32 %v11030, %v11838
    %v11840 = vpop.f32.mrf.mxu0
    %11841 = vdwg.mxu0
    %11842 = vmatpush.bf16.msra.mxu0 %v11480
    %11843 = vmatpush.bf16.msra.mxu0 %v11476
    %11844 = vmatpush.bf16.msra.mxu0 %v11472
    %11845 = vmatpush.bf16.msra.mxu0 %v11468
    %11846 = vmatpush.bf16.msra.mxu0 %v11464
    %11847 = vmatpush.bf16.msra.mxu0 %v11460
    %11848 = vmatpush.bf16.msra.mxu0 %v11456
    %11849 = vmatpush.bf16.msra.mxu0 %v11452
    %11850 = vmatmul.bf16.gmra.mxu0 %v9922
    %v11851 = vpop.f32.mrf.mxu0
    %v11852 = vadd.f32 %v11839, %v11851
    %v11853 = vpop.f32.mrf.mxu0
    %11854 = vdwg.mxu0
    %11855 = vmatpush.bf16.msra.mxu0 %v11512
    %11856 = vmatpush.bf16.msra.mxu0 %v11508
    %11857 = vmatpush.bf16.msra.mxu0 %v11504
    %11858 = vmatpush.bf16.msra.mxu0 %v11500
    %11859 = vmatpush.bf16.msra.mxu0 %v11496
    %11860 = vmatpush.bf16.msra.mxu0 %v11492
    %11861 = vmatpush.bf16.msra.mxu0 %v11488
    %11862 = vmatpush.bf16.msra.mxu0 %v11484
    %11863 = vmatmul.bf16.gmra.mxu0 %v9923
    %v11864 = vpop.f32.mrf.mxu0
    %v11865 = vadd.f32 %v11852, %v11864
    %v11866 = vpop.f32.mrf.mxu0
    %11867 = vdwg.mxu0
    %11868 = vmatpush.bf16.msra.mxu0 %v11544
    %11869 = vmatpush.bf16.msra.mxu0 %v11540
    %11870 = vmatpush.bf16.msra.mxu0 %v11536
    %11871 = vmatpush.bf16.msra.mxu0 %v11532
    %11872 = vmatpush.bf16.msra.mxu0 %v11528
    %11873 = vmatpush.bf16.msra.mxu0 %v11524
    %11874 = vmatpush.bf16.msra.mxu0 %v11520
    %11875 = vmatpush.bf16.msra.mxu0 %v11516
    %11876 = vmatmul.bf16.gmra.mxu0 %v9924
    %v11877 = vpop.f32.mrf.mxu0
    %v11878 = vadd.f32 %v11865, %v11877
    %v11879 = vpop.f32.mrf.mxu0
    %11880 = vdwg.mxu0
    %v11881 = vld [vmem:[#allocation16] sm:$0xf]
    %v11883 = vperm.slane %v11881, 0
    %v11884 = vperm.slane %v11881, 1
    %v11885 = vperm.slane %v11881, 2
    %v11886 = vperm.slane %v11881, 3
    %v11891 = vadd.f32 %v11722, %v11883
    %v11892 = vadd.f32 %v11774, %v11884
    %v11893 = vadd.f32 %v11826, %v11885
    %v11894 = vadd.f32 %v11878, %v11886
    %vm11895 = vcmp.gt.f32.partialorder %v11891, 0.0
    %vm11896 = vcmp.gt.f32.partialorder %v11892, 0.0
    %vm11897 = vcmp.gt.f32.partialorder %v11893, 0.0
    %vm11898 = vcmp.gt.f32.partialorder %v11894, 0.0
    %v11899 = vmul.f32 %v11891, 0.2
    %v11900 = vmul.f32 %v11892, 0.2
    %v11901 = vmul.f32 %v11893, 0.2
    %v11902 = vmul.f32 %v11894, 0.2
    %v11903 = vsel %vm11895, %v11891, %v11899
    %v11904 = vsel %vm11896, %v11892, %v11900
    %v11905 = vsel %vm11897, %v11893, %v11901
    %v11906 = vsel %vm11898, %v11894, %v11902
    %v11907 = vpack.c.bf16 %v11903, %v11903
    %v11908 = vpack.c.bf16 %v11904, %v11904
    %v11909 = vpack.c.bf16 %v11905, %v11905
    %v11910 = vpack.c.bf16 %v11906, %v11906
    %v11911 = vld [vmem:[#allocation17] sm:$0xf]
    %v11912 = vld [vmem:[#allocation17 + $0x4] sm:$0xf]
    %v11913 = vld [vmem:[#allocation17 + $0x8] sm:$0xf]
    %v11914 = vld [vmem:[#allocation17 + $0xc] sm:$0xf]
    %v11915 = vld [vmem:[#allocation17 + $0x10] sm:$0xf]
    %v11916 = vld [vmem:[#allocation17 + $0x14] sm:$0xf]
    %v11917 = vld [vmem:[#allocation17 + $0x18] sm:$0xf]
    %v11918 = vld [vmem:[#allocation17 + $0x1c] sm:$0xf]
    %v11919 = vld [vmem:[#allocation17 + $0x20] sm:$0xf]
    %v11920 = vld [vmem:[#allocation17 + $0x24] sm:$0xf]
    %v11921 = vld [vmem:[#allocation17 + $0x28] sm:$0xf]
    %v11922 = vld [vmem:[#allocation17 + $0x2c] sm:$0xf]
    %v11923 = vld [vmem:[#allocation17 + $0x30] sm:$0xf]
    %v11924 = vld [vmem:[#allocation17 + $0x34] sm:$0xf]
    %v11925 = vld [vmem:[#allocation17 + $0x38] sm:$0xf]
    %v11926 = vld [vmem:[#allocation17 + $0x3c] sm:$0xf]
    %v11927 = vld [vmem:[#allocation17 + $0x40] sm:$0xf]
    %v11928 = vld [vmem:[#allocation17 + $0x44] sm:$0xf]
    %v11929 = vld [vmem:[#allocation17 + $0x48] sm:$0xf]
    %v11930 = vld [vmem:[#allocation17 + $0x4c] sm:$0xf]
    %v11931 = vld [vmem:[#allocation17 + $0x50] sm:$0xf]
    %v11932 = vld [vmem:[#allocation17 + $0x54] sm:$0xf]
    %v11933 = vld [vmem:[#allocation17 + $0x58] sm:$0xf]
    %v11934 = vld [vmem:[#allocation17 + $0x5c] sm:$0xf]
    %v11935 = vld [vmem:[#allocation17 + $0x60] sm:$0xf]
    %v11936 = vld [vmem:[#allocation17 + $0x64] sm:$0xf]
    %v11937 = vld [vmem:[#allocation17 + $0x68] sm:$0xf]
    %v11938 = vld [vmem:[#allocation17 + $0x6c] sm:$0xf]
    %v11939 = vld [vmem:[#allocation17 + $0x70] sm:$0xf]
    %v11940 = vld [vmem:[#allocation17 + $0x74] sm:$0xf]
    %v11941 = vld [vmem:[#allocation17 + $0x78] sm:$0xf]
    %v11942 = vld [vmem:[#allocation17 + $0x7c] sm:$0xf]
    %v11943 = vld [vmem:[#allocation17 + $0x80] sm:$0xf]
    %v11944 = vld [vmem:[#allocation17 + $0x84] sm:$0xf]
    %v11945 = vld [vmem:[#allocation17 + $0x88] sm:$0xf]
    %v11946 = vld [vmem:[#allocation17 + $0x8c] sm:$0xf]
    %v11947 = vld [vmem:[#allocation17 + $0x90] sm:$0xf]
    %v11948 = vld [vmem:[#allocation17 + $0x94] sm:$0xf]
    %v11949 = vld [vmem:[#allocation17 + $0x98] sm:$0xf]
    %v11950 = vld [vmem:[#allocation17 + $0x9c] sm:$0xf]
    %v11951 = vld [vmem:[#allocation17 + $0xa0] sm:$0xf]
    %v11952 = vld [vmem:[#allocation17 + $0xa4] sm:$0xf]
    %v11953 = vld [vmem:[#allocation17 + $0xa8] sm:$0xf]
    %v11954 = vld [vmem:[#allocation17 + $0xac] sm:$0xf]
    %v11955 = vld [vmem:[#allocation17 + $0xb0] sm:$0xf]
    %v11956 = vld [vmem:[#allocation17 + $0xb4] sm:$0xf]
    %v11957 = vld [vmem:[#allocation17 + $0xb8] sm:$0xf]
    %v11958 = vld [vmem:[#allocation17 + $0xbc] sm:$0xf]
    %v11959 = vld [vmem:[#allocation17 + $0xc0] sm:$0xf]
    %v11960 = vld [vmem:[#allocation17 + $0xc4] sm:$0xf]
    %v11961 = vld [vmem:[#allocation17 + $0xc8] sm:$0xf]
    %v11962 = vld [vmem:[#allocation17 + $0xcc] sm:$0xf]
    %v11963 = vld [vmem:[#allocation17 + $0xd0] sm:$0xf]
    %v11964 = vld [vmem:[#allocation17 + $0xd4] sm:$0xf]
    %v11965 = vld [vmem:[#allocation17 + $0xd8] sm:$0xf]
    %v11966 = vld [vmem:[#allocation17 + $0xdc] sm:$0xf]
    %v11967 = vld [vmem:[#allocation17 + $0xe0] sm:$0xf]
    %v11968 = vld [vmem:[#allocation17 + $0xe4] sm:$0xf]
    %v11969 = vld [vmem:[#allocation17 + $0xe8] sm:$0xf]
    %v11970 = vld [vmem:[#allocation17 + $0xec] sm:$0xf]
    %v11971 = vld [vmem:[#allocation17 + $0xf0] sm:$0xf]
    %v11972 = vld [vmem:[#allocation17 + $0xf4] sm:$0xf]
    %v11973 = vld [vmem:[#allocation17 + $0xf8] sm:$0xf]
    %v11974 = vld [vmem:[#allocation17 + $0xfc] sm:$0xf]
    %v11975 = vld [vmem:[#allocation19] sm:$0x1]
    %v11977 = vperm.slane %v11975, 0
    %v12043 = vunpack.c.l.b16 %v11911
    %v12044 = vunpack.c.l.b16 %v11912
    %v12045 = vunpack.c.l.b16 %v11913
    %v12046 = vunpack.c.l.b16 %v11914
    %v12047 = vunpack.c.l.b16 %v11915
    %v12048 = vunpack.c.l.b16 %v11916
    %v12049 = vunpack.c.l.b16 %v11917
    %v12050 = vunpack.c.l.b16 %v11918
    %v12051 = vunpack.c.l.b16 %v11919
    %v12052 = vunpack.c.l.b16 %v11920
    %v12053 = vunpack.c.l.b16 %v11921
    %v12054 = vunpack.c.l.b16 %v11922
    %v12055 = vunpack.c.l.b16 %v11923
    %v12056 = vunpack.c.l.b16 %v11924
    %v12057 = vunpack.c.l.b16 %v11925
    %v12058 = vunpack.c.l.b16 %v11926
    %v12059 = vunpack.c.l.b16 %v11927
    %v12060 = vunpack.c.l.b16 %v11928
    %v12061 = vunpack.c.l.b16 %v11929
    %v12062 = vunpack.c.l.b16 %v11930
    %v12063 = vunpack.c.l.b16 %v11931
    %v12064 = vunpack.c.l.b16 %v11932
    %v12065 = vunpack.c.l.b16 %v11933
    %v12066 = vunpack.c.l.b16 %v11934
    %v12067 = vunpack.c.l.b16 %v11935
    %v12068 = vunpack.c.l.b16 %v11936
    %v12069 = vunpack.c.l.b16 %v11937
    %v12070 = vunpack.c.l.b16 %v11938
    %v12071 = vunpack.c.l.b16 %v11939
    %v12072 = vunpack.c.l.b16 %v11940
    %v12073 = vunpack.c.l.b16 %v11941
    %v12074 = vunpack.c.l.b16 %v11942
    %v12075 = vunpack.c.l.b16 %v11943
    %v12076 = vunpack.c.l.b16 %v11944
    %v12077 = vunpack.c.l.b16 %v11945
    %v12078 = vunpack.c.l.b16 %v11946
    %v12079 = vunpack.c.l.b16 %v11947
    %v12080 = vunpack.c.l.b16 %v11948
    %v12081 = vunpack.c.l.b16 %v11949
    %v12082 = vunpack.c.l.b16 %v11950
    %v12083 = vunpack.c.l.b16 %v11951
    %v12084 = vunpack.c.l.b16 %v11952
    %v12085 = vunpack.c.l.b16 %v11953
    %v12086 = vunpack.c.l.b16 %v11954
    %v12087 = vunpack.c.l.b16 %v11955
    %v12088 = vunpack.c.l.b16 %v11956
    %v12089 = vunpack.c.l.b16 %v11957
    %v12090 = vunpack.c.l.b16 %v11958
    %v12091 = vunpack.c.l.b16 %v11959
    %v12092 = vunpack.c.l.b16 %v11960
    %v12093 = vunpack.c.l.b16 %v11961
    %v12094 = vunpack.c.l.b16 %v11962
    %v12095 = vunpack.c.l.b16 %v11963
    %v12096 = vunpack.c.l.b16 %v11964
    %v12097 = vunpack.c.l.b16 %v11965
    %v12098 = vunpack.c.l.b16 %v11966
    %v12099 = vunpack.c.l.b16 %v11967
    %v12100 = vunpack.c.l.b16 %v11968
    %v12101 = vunpack.c.l.b16 %v11969
    %v12102 = vunpack.c.l.b16 %v11970
    %v12103 = vunpack.c.l.b16 %v11971
    %v12104 = vunpack.c.l.b16 %v11972
    %v12105 = vunpack.c.l.b16 %v11973
    %v12106 = vunpack.c.l.b16 %v11974
    %v12107 = vpack.c.b16 %v12044, %v12043
    %v12108 = vpack.c.b16 %v12046, %v12045
    %v12109 = vpack.c.b16 %v12048, %v12047
    %v12110 = vpack.c.b16 %v12050, %v12049
    %v12111 = vpack.c.b16 %v12052, %v12051
    %v12112 = vpack.c.b16 %v12054, %v12053
    %v12113 = vpack.c.b16 %v12056, %v12055
    %v12114 = vpack.c.b16 %v12058, %v12057
    %v12115 = vpack.c.b16 %v12060, %v12059
    %v12116 = vpack.c.b16 %v12062, %v12061
    %v12117 = vpack.c.b16 %v12064, %v12063
    %v12118 = vpack.c.b16 %v12066, %v12065
    %v12119 = vpack.c.b16 %v12068, %v12067
    %v12120 = vpack.c.b16 %v12070, %v12069
    %v12121 = vpack.c.b16 %v12072, %v12071
    %v12122 = vpack.c.b16 %v12074, %v12073
    %v12123 = vpack.c.b16 %v12076, %v12075
    %v12124 = vpack.c.b16 %v12078, %v12077
    %v12125 = vpack.c.b16 %v12080, %v12079
    %v12126 = vpack.c.b16 %v12082, %v12081
    %v12127 = vpack.c.b16 %v12084, %v12083
    %v12128 = vpack.c.b16 %v12086, %v12085
    %v12129 = vpack.c.b16 %v12088, %v12087
    %v12130 = vpack.c.b16 %v12090, %v12089
    %v12131 = vpack.c.b16 %v12092, %v12091
    %v12132 = vpack.c.b16 %v12094, %v12093
    %v12133 = vpack.c.b16 %v12096, %v12095
    %v12134 = vpack.c.b16 %v12098, %v12097
    %v12135 = vpack.c.b16 %v12100, %v12099
    %v12136 = vpack.c.b16 %v12102, %v12101
    %v12137 = vpack.c.b16 %v12104, %v12103
    %v12138 = vpack.c.b16 %v12106, %v12105
    %12171 = vmatpush.bf16.msra.mxu0 %v12114
    %12172 = vmatpush.bf16.msra.mxu0 %v12113
    %12173 = vmatpush.bf16.msra.mxu0 %v12112
    %12174 = vmatpush.bf16.msra.mxu0 %v12111
    %12175 = vmatpush.bf16.msra.mxu0 %v12110
    %12176 = vmatpush.bf16.msra.mxu0 %v12109
    %12177 = vmatpush.bf16.msra.mxu0 %v12108
    %12178 = vmatpush.bf16.msra.mxu0 %v12107
    %12179 = vmatmul.bf16.gmra.mxu0 %v11907
    %v12180 = vpop.f32.mrf.mxu0
    %v12181 = vadd.f32 %v11977, %v12180
    %v12182 = vpop.f32.mrf.mxu0
    %12183 = vdwg.mxu0
    %12184 = vmatpush.bf16.msra.mxu0 %v12122
    %12185 = vmatpush.bf16.msra.mxu0 %v12121
    %12186 = vmatpush.bf16.msra.mxu0 %v12120
    %12187 = vmatpush.bf16.msra.mxu0 %v12119
    %12188 = vmatpush.bf16.msra.mxu0 %v12118
    %12189 = vmatpush.bf16.msra.mxu0 %v12117
    %12190 = vmatpush.bf16.msra.mxu0 %v12116
    %12191 = vmatpush.bf16.msra.mxu0 %v12115
    %12192 = vmatmul.bf16.gmra.mxu0 %v11908
    %v12193 = vpop.f32.mrf.mxu0
    %v12194 = vadd.f32 %v12181, %v12193
    %v12195 = vpop.f32.mrf.mxu0
    %12196 = vdwg.mxu0
    %12197 = vmatpush.bf16.msra.mxu0 %v12130
    %12198 = vmatpush.bf16.msra.mxu0 %v12129
    %12199 = vmatpush.bf16.msra.mxu0 %v12128
    %12200 = vmatpush.bf16.msra.mxu0 %v12127
    %12201 = vmatpush.bf16.msra.mxu0 %v12126
    %12202 = vmatpush.bf16.msra.mxu0 %v12125
    %12203 = vmatpush.bf16.msra.mxu0 %v12124
    %12204 = vmatpush.bf16.msra.mxu0 %v12123
    %12205 = vmatmul.bf16.gmra.mxu0 %v11909
    %v12206 = vpop.f32.mrf.mxu0
    %v12207 = vadd.f32 %v12194, %v12206
    %v12208 = vpop.f32.mrf.mxu0
    %12209 = vdwg.mxu0
    %12210 = vmatpush.bf16.msra.mxu0 %v12138
    %12211 = vmatpush.bf16.msra.mxu0 %v12137
    %12212 = vmatpush.bf16.msra.mxu0 %v12136
    %12213 = vmatpush.bf16.msra.mxu0 %v12135
    %12214 = vmatpush.bf16.msra.mxu0 %v12134
    %12215 = vmatpush.bf16.msra.mxu0 %v12133
    %12216 = vmatpush.bf16.msra.mxu0 %v12132
    %12217 = vmatpush.bf16.msra.mxu0 %v12131
    %12218 = vmatmul.bf16.gmra.mxu0 %v11910
    %v12219 = vpop.f32.mrf.mxu0
    %v12220 = vadd.f32 %v12207, %v12219
    %v12221 = vpop.f32.mrf.mxu0
    %12222 = vdwg.mxu0
    %vm12223 = vcmp.gt.f32.partialorder %v12220, 0.0
    %v12224 = vmul.f32 %v12220, 0.2
    %v12225 = vsel %vm12223, %v12220, %v12224
    %v12226 = vpack.c.bf16 %v12225, %v12225
    %v12227 = vld [vmem:[%s11] sm:$0xf]
    %v12228 = vld [vmem:[%s11 + $0x4] sm:$0xf]
    %v12229 = vld [vmem:[%s11 + $0x8] sm:$0xf]
    %v12230 = vld [vmem:[%s11 + $0xc] sm:$0xf]
    %v12231 = vld [vmem:[%s11 + $0x10] sm:$0xf]
    %v12232 = vld [vmem:[%s11 + $0x14] sm:$0xf]
    %v12233 = vld [vmem:[%s11 + $0x18] sm:$0xf]
    %v12234 = vld [vmem:[%s11 + $0x1c] sm:$0xf]
    %v12235 = vld [vmem:[%s11 + $0x20] sm:$0xf]
    %v12236 = vld [vmem:[%s11 + $0x24] sm:$0xf]
    %v12237 = vld [vmem:[%s11 + $0x28] sm:$0xf]
    %v12238 = vld [vmem:[%s11 + $0x2c] sm:$0xf]
    %v12239 = vld [vmem:[%s11 + $0x30] sm:$0xf]
    %v12240 = vld [vmem:[%s11 + $0x34] sm:$0xf]
    %v12241 = vld [vmem:[%s11 + $0x38] sm:$0xf]
    %v12242 = vld [vmem:[%s11 + $0x3c] sm:$0xf]
    %v12243 = vld [vmem:[#allocation20] sm:$0x1]
    %v12245 = vperm.slane %v12243, 0
    %v12263 = vunpack.c.l.b16 %v12227
    %v12264 = vunpack.c.l.b16 %v12228
    %v12265 = vunpack.c.l.b16 %v12229
    %v12266 = vunpack.c.l.b16 %v12230
    %v12267 = vunpack.c.l.b16 %v12231
    %v12268 = vunpack.c.l.b16 %v12232
    %v12269 = vunpack.c.l.b16 %v12233
    %v12270 = vunpack.c.l.b16 %v12234
    %v12271 = vunpack.c.l.b16 %v12235
    %v12272 = vunpack.c.l.b16 %v12236
    %v12273 = vunpack.c.l.b16 %v12237
    %v12274 = vunpack.c.l.b16 %v12238
    %v12275 = vunpack.c.l.b16 %v12239
    %v12276 = vunpack.c.l.b16 %v12240
    %v12277 = vunpack.c.l.b16 %v12241
    %v12278 = vunpack.c.l.b16 %v12242
    %v12279 = vpack.c.b16 %v12264, %v12263
    %v12280 = vpack.c.b16 %v12266, %v12265
    %v12281 = vpack.c.b16 %v12268, %v12267
    %v12282 = vpack.c.b16 %v12270, %v12269
    %v12283 = vpack.c.b16 %v12272, %v12271
    %v12284 = vpack.c.b16 %v12274, %v12273
    %v12285 = vpack.c.b16 %v12276, %v12275
    %v12286 = vpack.c.b16 %v12278, %v12277
    %12295 = vmatpush.bf16.msra.mxu0 %v12286
    %12296 = vmatpush.bf16.msra.mxu0 %v12285
    %12297 = vmatpush.bf16.msra.mxu0 %v12284
    %12298 = vmatpush.bf16.msra.mxu0 %v12283
    %12299 = vmatpush.bf16.msra.mxu0 %v12282
    %12300 = vmatpush.bf16.msra.mxu0 %v12281
    %12301 = vmatpush.bf16.msra.mxu0 %v12280
    %12302 = vmatpush.bf16.msra.mxu0 %v12279
    %12303 = vmatmul.bf16.gmra.mxu0 %v12226
    %v12304 = vpop.f32.mrf.mxu0
    %v12305 = vadd.f32 %v12245, %v12304
    %v12306 = vpop.f32.mrf.mxu0
    %12307 = vdwg.mxu0
    %vm12308 = vcmp.gt.f32.partialorder %v12305, 0.0
    %v12309 = vmul.f32 %v12305, 0.2
    %v12310 = vsel %vm12308, %v12305, %v12309
    %v12311 = vld [vmem:[#allocation22] sm:$0x1]
    %v12313 = vperm.slane %v12311, 0
    %v12315 = vmul.f32 %v12310, %v12313
    %vm12316 = vcmask 254976
    %v12317 = vsel %vm12316, %v12315, 0.0
    %12318 = vadd.xlane.f32.xlu0 %v12317
    %v12319 = vpop.xlane.xlu0 %12318
    %v12320 = vld [vmem:[#allocation2] sm:$0x1]
    %v12322 = vperm.slane %v12320, 0
    %v12324 = vadd.f32 %v12319, %v12322
    %v12325 = vxor.u32 %v12324, 2147483648
    %v12326 = vmul.f32 %v12325, 1.442695
    %v12327 = vpow.pop %v12326
    %v12328 = vadd.f32 %v12327, 1.0
    %v12329 = vrcp.pop %v12328
    %v12330 = vmul.f32 %v12328, %v12329
    %v12331 = vsub.f32 1.0, %v12330
    %v12332 = vmul.f32 %v12329, %v12331
    %v12333 = vadd.f32 %v12329, %v12332
    %vm12334 = vweird.f32 %v12328
    %vm12335 = vweird.f32 %v12329
    %vm12336 = vmor %vm12334, %vm12335
    %v12337 = vsel %vm12336, %v12329, %v12333
    %v12338 = vand.u32 2147483647, %v12328
    %vm12339 = vcmp.eq.f32.partialorder %v12338, 8.507059e+37
    %v12340 = vand.u32 %v12328, 2147483648
    %v12341 = vor.u32 1.1754944e-38, %v12340
    %v12342 = vsel %vm12339, %v12341, %v12337
    %v12343 = vmul.f32 1.0, %v12342
    %vm12344 = vcmask 1024
    %12345 = vst.msk [vmem:[%s15] sm:$0x3] %vm12344, %v12343
    // Predicated region
    $region114: #{tpu_custom_call.1} parent=1 // pred_check
      _
    $region115: #{tpu_custom_call.1} parent=1 // pred_check_branch
      %12347 = sbr.rel (0) target = $region117
    $region116: #{tpu_custom_call.1} parent=1 // pred_region
      _
    $region117: #{tpu_custom_call.1} parent=1 // pred_fallthru
      _
    // Predicated region
    $region118: #{tpu_custom_call.1} parent=1 // pred_check
      _
    $region119: #{tpu_custom_call.1} parent=1 // pred_check_branch
      %12349 = sbr.rel (0) target = $region121
    $region120: #{tpu_custom_call.1} parent=1 // pred_region
      _
    $region121: #{tpu_custom_call.1} parent=1 // pred_fallthru
      _
    %12350 = vsyncpa [#allocation4], 1
    %12351 = vsyncpa [#allocation6], 1
    %12352 = vsyncpa [#allocation9], 1
    %12353 = vsyncpa [#allocation12], 1
    %12354 = vsyncpa [#allocation15], 1
    %12355 = vsyncpa [#allocation18], 1
    %12356 = vsyncpa [#allocation21], 1

</llo_original>
